<compile_context>
chip_gen: v7x
topology: tpu7x:2x2x1
jax: 0.10.0
libtpu: 0.0.40
codegen_flags: <defaults>
</compile_context>

<pallas_src>
import numpy as np

import jax
import jax.numpy as jnp
from jax.experimental import pallas as pl
from jax.experimental.pallas import tpu as pltpu

# ------------------------- Config (synthetic, small) -------------------------
LATENT_DIM = 16
DEC_CH = (32, 16, 8)      # Config.decoder_channels
OUT_CH = 3                # Config.out_channels
KSIZE = 4                 # Config.kernel_size
BATCH = 2
BN_EPS = 1e-5             # nn.BatchNorm2d default eps

# Padded flat lengths Lp = (H+2)*(W+2) + 2 for the 4x4 / 8x8 / 16x16 grids.
LP0, LP1, LP2 = 38, 102, 326


# ------------------- Static 0/1 placement matrices & masks -------------------
def _fc_placement_np():
    # spatial position s = h*4+w  ->  padded-flat 6x6 position (h+1)*6+(w+1)
    P = np.zeros((16, LP0), np.float32)
    for h in range(4):
        for w in range(4):
            P[h * 4 + w, (h + 1) * 6 + (w + 1)] = 1.0
    return P


def _placement_stacked_np(H, W, final):
    """Phase-stacked scatter matrix (4*H*Wp, cols).

    Row (p, i*Wp + j) (j < W valid) maps to full-resolution pixel
    (2i+ph+off, 2j+pw+off) of the next (optionally zero-padded) grid; rows
    with j >= W are junk phase-output columns and map to nothing.
    """
    Wp = W + 2
    if final:
        Wn, cols, off = 2 * W, (2 * H) * (2 * W), 0
    else:
        Wn, cols, off = 2 * W + 2, (2 * H + 2) * (2 * W + 2) + 2, 1
    P = np.zeros((4, H * Wp, cols), np.float32)
    for p in range(4):
        ph, pw = p // 2, p % 2
        for i in range(H):
            for j in range(W):
                P[p, i * Wp + j, (2 * i + ph + off) * Wn + (2 * j + pw + off)] = 1.0
    return P.reshape(4 * H * Wp, cols)


def _pad_mask_np(Hn, Wn):
    # 1 at interior positions of the zero-padded (Hn+2)x(Wn+2)(+2) flat grid.
    Wp = Wn + 2
    m = np.zeros(((Hn + 2) * Wp + 2,), np.float32)
    for i in range(Hn):
        for j in range(Wn):
            m[(i + 1) * Wp + (j + 1)] = 1.0
    return m


_P0_NP = _fc_placement_np()                       # (16, 38)
_P1_NP = _placement_stacked_np(4, 4, False)       # (96, 102)
_P2_NP = _placement_stacked_np(8, 8, False)       # (320, 326)
_P3_NP = _placement_stacked_np(16, 16, True)      # (1152, 1024)
_MASKS_NP = np.zeros((2, LP2), np.float32)
_MASKS_NP[0, :LP1] = _pad_mask_np(8, 8)
_MASKS_NP[1, :] = _pad_mask_np(16, 16)


# -------------------- ConvTranspose weight prep (host side) ------------------
def _phase9_weights(w_ct):
    """PyTorch ConvTranspose2d weight (Cin, Cout, 4, 4) -> (4*Cout, 9*Cin).

    Row block p = 2*ph + pw is phase (ph, pw); column block t = u*3 + v is the
    3x3-neighborhood tap (u, v) of the padded input.  Phase (ph, pw) only uses
    taps u in {ph, ph+1}, v in {pw, pw+1} with kernel element
    (3-2u+ph, 3-2v+pw); unused taps are zero.
    """
    Cin, Cout = w_ct.shape[0], w_ct.shape[1]
    zero = jnp.zeros((Cout, Cin), w_ct.dtype)
    phase_rows = []
    for ph in range(2):
        for pw in range(2):
            taps = []
            for u in range(3):
                for v in range(3):
                    if ph <= u <= ph + 1 and pw <= v <= pw + 1:
                        taps.append(w_ct[:, :, 3 - 2 * u + ph, 3 - 2 * v + pw].T)
                    else:
                        taps.append(zero)
            phase_rows.append(jnp.concatenate(taps, axis=1))   # (Cout, 9*Cin)
    return jnp.concatenate(phase_rows, axis=0)                 # (4*Cout, 9*Cin)


# ------------------------------ Fused kernel ---------------------------------
def decoder_kernel(zr_ref, wf_ref, bf_ref, w1_ref, w2_ref, w3_ref,
                   aff_ref, mask_ref, p1_ref, p2_ref, p3_ref, o_ref):
    f32, bf16 = jnp.float32, jnp.bfloat16
    B = BATCH
    C0, C1, C2 = DEC_CH

    # ---- Stage 0: fc folded into per-latent (B*C0, 38) planes (VPU FMAs) ----
    # act[(b,c), col] == fc(z)[b, c*16 + s(col)] at interior positions, 0 at
    # the zero-pad ring / tail columns.
    act = bf_ref[...]                                   # (B*C0, 38), bias plane
    zr = zr_ref[...]                                    # (B*C0, LATENT)
    for l in range(LATENT_DIM):
        act = act + zr[:, l:l + 1] * wf_ref[l]

    def deconv_layer(a, cin, cout, H, W, w_ref, p_ref):
        """ConvTranspose2d(k=4, s=2, p=1) + scatter into the next padded grid.

        a:      (B*cin, (H+2)*(W+2)+2)   zero-padded, flat-row-major on lanes
        return: (B*cout, cols)           next padded grid (or final 32*32)
        """
        Wp, HWp = W + 2, H * (W + 2)
        a_img = [a[b * cin:(b + 1) * cin, :] for b in range(B)]
        # Shared 3x3-neighborhood im2col, batch on lanes: (9*cin, B*HWp).
        rhs = jnp.concatenate(
            [jnp.concatenate([a_img[b][:, u * Wp + v: u * Wp + v + HWp]
                              for b in range(B)], axis=1)
             for u in range(3) for v in range(3)], axis=0)
        # One conv dot for all 4 phases and both images.
        y = jnp.dot(w_ref[...], rhs, preferred_element_type=f32)   # (4*cout, B*HWp)
        # Block "transpose": phases -> contraction axis, batch -> sublanes.
        lhs = jnp.concatenate(
            [jnp.concatenate([y[p * cout:(p + 1) * cout, b * HWp:(b + 1) * HWp]
                              for p in range(4)], axis=1)
             for b in range(B)], axis=0).astype(bf16)               # (B*cout, 4*HWp)
        # One bf16 x bf16 placement dot scatters all phases of both images.
        return jnp.dot(lhs, p_ref[...], preferred_element_type=f32)  # (B*cout, cols)

    def bn_relu(x, cout, n_valid, gamma, beta, mask):
        # Training-mode BatchNorm over (N, H, W).  Pad columns of x are exact
        # zeros (zero rows in the placement matrix), so one-pass sums are
        # unaffected; divide by the known valid count.
        rs = x.sum(axis=1, keepdims=True)               # (B*cout, 1)
        rq = (x * x).sum(axis=1, keepdims=True)
        ssum, ssq = rs[0:cout], rq[0:cout]
        for b in range(1, B):
            ssum = ssum + rs[b * cout:(b + 1) * cout]
            ssq = ssq + rq[b * cout:(b + 1) * cout]
        inv_n = 1.0 / float(n_valid)
        mean = ssum * inv_n
        var = ssq * inv_n - mean * mean
        scale = gamma * jax.lax.rsqrt(var + BN_EPS)
        shift = beta - mean * scale
        scale_b = jnp.concatenate([scale] * B, axis=0)
        shift_b = jnp.concatenate([shift] * B, axis=0)
        # Re-zero the pad ring / tail columns after the affine + ReLU.
        return jnp.maximum(x * scale_b + shift_b, 0.0) * mask

    # ---------------- Layer 1: (4,4,32) -> (8,8,16), BN + ReLU ---------------
    x = deconv_layer(act, C0, C1, 4, 4, w1_ref, p1_ref)            # (B*C1, 102)
    act = bn_relu(x, C1, B * 8 * 8,
                  aff_ref[0:C1, :], aff_ref[C1:2 * C1, :],
                  mask_ref[0:1, 0:LP1])

    # ---------------- Layer 2: (8,8,16) -> (16,16,8), BN + ReLU --------------
    x = deconv_layer(act, C1, C2, 8, 8, w2_ref, p2_ref)            # (B*C2, 326)
    act = bn_relu(x, C2, B * 16 * 16,
                  aff_ref[2 * C1:2 * C1 + C2, :],
                  aff_ref[2 * C1 + C2:2 * C1 + 2 * C2, :],
                  mask_ref[1:2, 0:LP2])

    # -------- Layer 3: (16,16,8) -> (32,32,3), bias + tanh, lane-dense -------
    x = deconv_layer(act, C2, OUT_CH, 16, 16, w3_ref, p3_ref)      # (B*3, 1024)
    bias = aff_ref[2 * C1 + 2 * C2:2 * C1 + 2 * C2 + B * OUT_CH, :]
    o_ref[...] = jnp.tanh(x + bias).astype(o_ref.dtype)            # one store


# ------------------------------ Wrapper --------------------------------------
def decoder_forward(z, params):
    B = z.shape[0]
    C0, C1, C2 = DEC_CH

    # One-time parameter/layout prep (tiny; done once at load time in practice).
    p0 = jnp.asarray(_P0_NP)                                       # (16, 38) 0/1
    w_csl = params["fc_w"].reshape(C0, 16, LATENT_DIM)             # (c, s, l)
    wfold = jnp.einsum("csl,sd->lcd", w_csl, p0)                   # (L, C0, 38)
    wfold = jnp.tile(wfold, (1, B, 1))                             # (L, B*C0, 38)
    bfold = jnp.tile(jnp.einsum("cs,sd->cd",
                                params["fc_b"].reshape(C0, 16), p0), (B, 1))
    zrep = jnp.repeat(z, C0, axis=0)                               # (B*C0, L)

    w1_9 = _phase9_weights(params["w1"])                           # (64, 288)
    w2_9 = _phase9_weights(params["w2"])                           # (32, 144)
    w3_9 = _phase9_weights(params["w3"])                           # (12, 72)

    # Packed per-channel affine constants: g1|b1|g2|b2|bias3 (tiled per image).
    affine = jnp.concatenate(
        [params["g1"], params["b1"], params["g2"], params["b2"],
         jnp.tile(params["bias3"], B)]).reshape(-1, 1)             # (54, 1)

    # Static placement matrices (0/1, exact in bf16) and interior masks.
    p1 = jnp.asarray(_P1_NP, dtype=jnp.bfloat16)
    p2 = jnp.asarray(_P2_NP, dtype=jnp.bfloat16)
    p3 = jnp.asarray(_P3_NP, dtype=jnp.bfloat16)
    masks = jnp.asarray(_MASKS_NP)                                 # (2, 326)

    args = (zrep, wfold, bfold, w1_9, w2_9, w3_9, affine, masks, p1, p2, p3)

    out = pl.pallas_call(
        decoder_kernel,
        out_shape=jax.ShapeDtypeStruct((B * OUT_CH, 32 * 32), jnp.float32),
        grid=(1,),
        in_specs=[pl.BlockSpec(a.shape, lambda i, _n=a.ndim: (0,) * _n)
                  for a in args],
        out_specs=pl.BlockSpec((B * OUT_CH, 32 * 32), lambda i: (0, 0)),
        compiler_params=pltpu.CompilerParams(
            dimension_semantics=("arbitrary",),
            vmem_limit_bytes=16 * 1024 * 1024),
    )(*args)
    # (B*3, 1024) is already NCHW memory order; reshape is free.
    return out.reshape(B, OUT_CH, 32, 32)


# --------------------------- Pure-JAX reference -------------------------------
def ref_decoder(z, params):
    B = z.shape[0]
    C0 = DEC_CH[0]
    x = z @ params["fc_w"].T + params["fc_b"]
    x = x.reshape(B, C0, 4, 4)

    def deconv(x, w):
        Bn, C, H, W = x.shape
        xd = jnp.zeros((Bn, C, 2 * H - 1, 2 * W - 1), x.dtype)
        xd = xd.at[:, :, ::2, ::2].set(x)
        xp = jnp.pad(xd, ((0, 0), (0, 0), (2, 2), (2, 2)))
        wf = jnp.flip(w, (2, 3)).transpose(1, 0, 2, 3)
        return jax.lax.conv_general_dilated(
            xp, wf, window_strides=(1, 1), padding="VALID",
            dimension_numbers=("NCHW", "OIHW", "NCHW"))

    def bn_relu(x, g, b):
        mean = x.mean(axis=(0, 2, 3), keepdims=True)
        var = jnp.mean((x - mean) ** 2, axis=(0, 2, 3), keepdims=True)
        xn = (x - mean) * jax.lax.rsqrt(var + BN_EPS)
        return jnp.maximum(xn * g.reshape(1, -1, 1, 1) + b.reshape(1, -1, 1, 1), 0.0)

    x = bn_relu(deconv(x, params["w1"]), params["g1"], params["b1"])
    x = bn_relu(deconv(x, params["w2"]), params["g2"], params["b2"])
    x = jnp.tanh(deconv(x, params["w3"]) + params["bias3"].reshape(1, -1, 1, 1))
    return x


# ------------------------------ Params & main ---------------------------------
def init_params(key):
    ks = jax.random.split(key, 10)
    C0, C1, C2 = DEC_CH
    return {
        "fc_w": 0.1 * jax.random.normal(ks[0], (C0 * 16, LATENT_DIM), jnp.float32),
        "fc_b": 0.1 * jax.random.normal(ks[1], (C0 * 16,), jnp.float32),
        "w1": 0.1 * jax.random.normal(ks[2], (C0, C1, KSIZE, KSIZE), jnp.float32),
        "g1": 1.0 + 0.1 * jax.random.normal(ks[3], (C1,), jnp.float32),
        "b1": 0.1 * jax.random.normal(ks[4], (C1,), jnp.float32),
        "w2": 0.1 * jax.random.normal(ks[5], (C1, C2, KSIZE, KSIZE), jnp.float32),
        "g2": 1.0 + 0.1 * jax.random.normal(ks[6], (C2,), jnp.float32),
        "b2": 0.1 * jax.random.normal(ks[7], (C2,), jnp.float32),
        "w3": 0.1 * jax.random.normal(ks[8], (C2, OUT_CH, KSIZE, KSIZE), jnp.float32),
        "bias3": 0.1 * jax.random.normal(ks[9], (OUT_CH,), jnp.float32),
    }


if __name__ == "__main__":
    key = jax.random.PRNGKey(0)
    k_z, k_p = jax.random.split(key)
    z = jax.random.normal(k_z, (BATCH, LATENT_DIM), jnp.float32)
    params = init_params(k_p)

    out = jax.jit(decoder_forward)(z, params)
    out = jax.block_until_ready(out)

    assert out.shape == (BATCH, OUT_CH, 32, 32), out.shape
    assert bool(jnp.all(jnp.isfinite(out)))
    assert bool(jnp.all(jnp.abs(out) <= 1.0))   # tanh output range

    # Numerical check vs a pure-JAX (PyTorch-semantics) reference.  Tolerance
    # covers default TPU matmul precision plus bf16 rounding of the phase
    # activations before the 0/1 placement dots.
    ref = ref_decoder(z, params)
    max_err = float(jnp.max(jnp.abs(out - ref)))
    assert max_err < 4e-2, f"mismatch vs reference: {max_err}"
    print("KERNEL_OK")
</pallas_src>

<mosaic_0001>
module attributes {stable_mosaic.version = 11 : i64} {
  func.func @decoder_kernel(%arg0: i32, %arg1: memref<64x16xf32, #tpu.memory_space<vmem>>, %arg2: memref<16x64x38xf32, #tpu.memory_space<vmem>>, %arg3: memref<64x38xf32, #tpu.memory_space<vmem>>, %arg4: memref<64x288xf32, #tpu.memory_space<vmem>>, %arg5: memref<32x144xf32, #tpu.memory_space<vmem>>, %arg6: memref<12x72xf32, #tpu.memory_space<vmem>>, %arg7: memref<54x1xf32, #tpu.memory_space<vmem>>, %arg8: memref<2x326xf32, #tpu.memory_space<vmem>>, %arg9: memref<96x102xbf16, #tpu.memory_space<vmem>>, %arg10: memref<320x326xbf16, #tpu.memory_space<vmem>>, %arg11: memref<1152x1024xbf16, #tpu.memory_space<vmem>>, %arg12: memref<6x1024xf32, #tpu.memory_space<vmem>>) attributes {dimension_semantics = [#tpu.dimension_semantics<arbitrary>], iteration_bounds = array<i64: 1>, scalar_prefetch = 0 : i64, scratch_operands = 0 : i64, tpu.core_type = #tpu.core_type<tc>, window_params = [{pipeline_mode = #tpu.pipeline_mode<synchronous>, transform_indices = @transform_0, window_bounds = array<i64: 64, 16>}, {pipeline_mode = #tpu.pipeline_mode<synchronous>, transform_indices = @transform_1, window_bounds = array<i64: 16, 64, 38>}, {pipeline_mode = #tpu.pipeline_mode<synchronous>, transform_indices = @transform_2, window_bounds = array<i64: 64, 38>}, {pipeline_mode = #tpu.pipeline_mode<synchronous>, transform_indices = @transform_3, window_bounds = array<i64: 64, 288>}, {pipeline_mode = #tpu.pipeline_mode<synchronous>, transform_indices = @transform_4, window_bounds = array<i64: 32, 144>}, {pipeline_mode = #tpu.pipeline_mode<synchronous>, transform_indices = @transform_5, window_bounds = array<i64: 12, 72>}, {pipeline_mode = #tpu.pipeline_mode<synchronous>, transform_indices = @transform_6, window_bounds = array<i64: 54, 1>}, {pipeline_mode = #tpu.pipeline_mode<synchronous>, transform_indices = @transform_7, window_bounds = array<i64: 2, 326>}, {pipeline_mode = #tpu.pipeline_mode<synchronous>, transform_indices = @transform_8, window_bounds = array<i64: 96, 102>}, {pipeline_mode = #tpu.pipeline_mode<synchronous>, transform_indices = @transform_9, window_bounds = array<i64: 320, 326>}, {pipeline_mode = #tpu.pipeline_mode<synchronous>, transform_indices = @transform_10, window_bounds = array<i64: 1152, 1024>}, {pipeline_mode = #tpu.pipeline_mode<synchronous>, transform_indices = @transform_11, window_bounds = array<i64: 6, 1024>}]} {
    %c0 = arith.constant 0 : index
    %c0_0 = arith.constant 0 : index
    %0 = vector.load %arg3[%c0, %c0_0] : memref<64x38xf32, #tpu.memory_space<vmem>>, vector<64x38xf32>
    %c0_1 = arith.constant 0 : index
    %c0_2 = arith.constant 0 : index
    %1 = vector.load %arg1[%c0_1, %c0_2] : memref<64x16xf32, #tpu.memory_space<vmem>>, vector<64x16xf32>
    %2 = vector.extract_strided_slice %1 {offsets = [0, 0], sizes = [64, 1], strides = [1, 1]} : vector<64x16xf32> to vector<64x1xf32>
    %c0_3 = arith.constant 0 : index
    %c0_4 = arith.constant 0 : index
    %c0_5 = arith.constant 0 : index
    %3 = vector.load %arg2[%c0_3, %c0_4, %c0_5] : memref<16x64x38xf32, #tpu.memory_space<vmem>>, vector<1x64x38xf32>
    %4 = vector.shape_cast %3 : vector<1x64x38xf32> to vector<64x38xf32>
    %5 = vector.broadcast %2 : vector<64x1xf32> to vector<64x38xf32>
    %6 = arith.mulf %5, %4 : vector<64x38xf32>
    %7 = arith.addf %0, %6 : vector<64x38xf32>
    %8 = vector.extract_strided_slice %1 {offsets = [0, 1], sizes = [64, 1], strides = [1, 1]} : vector<64x16xf32> to vector<64x1xf32>
    %c1 = arith.constant 1 : index
    %c0_6 = arith.constant 0 : index
    %c0_7 = arith.constant 0 : index
    %9 = vector.load %arg2[%c1, %c0_6, %c0_7] : memref<16x64x38xf32, #tpu.memory_space<vmem>>, vector<1x64x38xf32>
    %10 = vector.shape_cast %9 : vector<1x64x38xf32> to vector<64x38xf32>
    %11 = vector.broadcast %8 : vector<64x1xf32> to vector<64x38xf32>
    %12 = arith.mulf %11, %10 : vector<64x38xf32>
    %13 = arith.addf %7, %12 : vector<64x38xf32>
    %14 = vector.extract_strided_slice %1 {offsets = [0, 2], sizes = [64, 1], strides = [1, 1]} : vector<64x16xf32> to vector<64x1xf32>
    %c2 = arith.constant 2 : index
    %c0_8 = arith.constant 0 : index
    %c0_9 = arith.constant 0 : index
    %15 = vector.load %arg2[%c2, %c0_8, %c0_9] : memref<16x64x38xf32, #tpu.memory_space<vmem>>, vector<1x64x38xf32>
    %16 = vector.shape_cast %15 : vector<1x64x38xf32> to vector<64x38xf32>
    %17 = vector.broadcast %14 : vector<64x1xf32> to vector<64x38xf32>
    %18 = arith.mulf %17, %16 : vector<64x38xf32>
    %19 = arith.addf %13, %18 : vector<64x38xf32>
    %20 = vector.extract_strided_slice %1 {offsets = [0, 3], sizes = [64, 1], strides = [1, 1]} : vector<64x16xf32> to vector<64x1xf32>
    %c3 = arith.constant 3 : index
    %c0_10 = arith.constant 0 : index
    %c0_11 = arith.constant 0 : index
    %21 = vector.load %arg2[%c3, %c0_10, %c0_11] : memref<16x64x38xf32, #tpu.memory_space<vmem>>, vector<1x64x38xf32>
    %22 = vector.shape_cast %21 : vector<1x64x38xf32> to vector<64x38xf32>
    %23 = vector.broadcast %20 : vector<64x1xf32> to vector<64x38xf32>
    %24 = arith.mulf %23, %22 : vector<64x38xf32>
    %25 = arith.addf %19, %24 : vector<64x38xf32>
    %26 = vector.extract_strided_slice %1 {offsets = [0, 4], sizes = [64, 1], strides = [1, 1]} : vector<64x16xf32> to vector<64x1xf32>
    %c4 = arith.constant 4 : index
    %c0_12 = arith.constant 0 : index
    %c0_13 = arith.constant 0 : index
    %27 = vector.load %arg2[%c4, %c0_12, %c0_13] : memref<16x64x38xf32, #tpu.memory_space<vmem>>, vector<1x64x38xf32>
    %28 = vector.shape_cast %27 : vector<1x64x38xf32> to vector<64x38xf32>
    %29 = vector.broadcast %26 : vector<64x1xf32> to vector<64x38xf32>
    %30 = arith.mulf %29, %28 : vector<64x38xf32>
    %31 = arith.addf %25, %30 : vector<64x38xf32>
    %32 = vector.extract_strided_slice %1 {offsets = [0, 5], sizes = [64, 1], strides = [1, 1]} : vector<64x16xf32> to vector<64x1xf32>
    %c5 = arith.constant 5 : index
    %c0_14 = arith.constant 0 : index
    %c0_15 = arith.constant 0 : index
    %33 = vector.load %arg2[%c5, %c0_14, %c0_15] : memref<16x64x38xf32, #tpu.memory_space<vmem>>, vector<1x64x38xf32>
    %34 = vector.shape_cast %33 : vector<1x64x38xf32> to vector<64x38xf32>
    %35 = vector.broadcast %32 : vector<64x1xf32> to vector<64x38xf32>
    %36 = arith.mulf %35, %34 : vector<64x38xf32>
    %37 = arith.addf %31, %36 : vector<64x38xf32>
    %38 = vector.extract_strided_slice %1 {offsets = [0, 6], sizes = [64, 1], strides = [1, 1]} : vector<64x16xf32> to vector<64x1xf32>
    %c6 = arith.constant 6 : index
    %c0_16 = arith.constant 0 : index
    %c0_17 = arith.constant 0 : index
    %39 = vector.load %arg2[%c6, %c0_16, %c0_17] : memref<16x64x38xf32, #tpu.memory_space<vmem>>, vector<1x64x38xf32>
    %40 = vector.shape_cast %39 : vector<1x64x38xf32> to vector<64x38xf32>
    %41 = vector.broadcast %38 : vector<64x1xf32> to vector<64x38xf32>
    %42 = arith.mulf %41, %40 : vector<64x38xf32>
    %43 = arith.addf %37, %42 : vector<64x38xf32>
    %44 = vector.extract_strided_slice %1 {offsets = [0, 7], sizes = [64, 1], strides = [1, 1]} : vector<64x16xf32> to vector<64x1xf32>
    %c7 = arith.constant 7 : index
    %c0_18 = arith.constant 0 : index
    %c0_19 = arith.constant 0 : index
    %45 = vector.load %arg2[%c7, %c0_18, %c0_19] : memref<16x64x38xf32, #tpu.memory_space<vmem>>, vector<1x64x38xf32>
    %46 = vector.shape_cast %45 : vector<1x64x38xf32> to vector<64x38xf32>
    %47 = vector.broadcast %44 : vector<64x1xf32> to vector<64x38xf32>
    %48 = arith.mulf %47, %46 : vector<64x38xf32>
    %49 = arith.addf %43, %48 : vector<64x38xf32>
    %50 = vector.extract_strided_slice %1 {offsets = [0, 8], sizes = [64, 1], strides = [1, 1]} : vector<64x16xf32> to vector<64x1xf32>
    %c8 = arith.constant 8 : index
    %c0_20 = arith.constant 0 : index
    %c0_21 = arith.constant 0 : index
    %51 = vector.load %arg2[%c8, %c0_20, %c0_21] : memref<16x64x38xf32, #tpu.memory_space<vmem>>, vector<1x64x38xf32>
    %52 = vector.shape_cast %51 : vector<1x64x38xf32> to vector<64x38xf32>
    %53 = vector.broadcast %50 : vector<64x1xf32> to vector<64x38xf32>
    %54 = arith.mulf %53, %52 : vector<64x38xf32>
    %55 = arith.addf %49, %54 : vector<64x38xf32>
    %56 = vector.extract_strided_slice %1 {offsets = [0, 9], sizes = [64, 1], strides = [1, 1]} : vector<64x16xf32> to vector<64x1xf32>
    %c9 = arith.constant 9 : index
    %c0_22 = arith.constant 0 : index
    %c0_23 = arith.constant 0 : index
    %57 = vector.load %arg2[%c9, %c0_22, %c0_23] : memref<16x64x38xf32, #tpu.memory_space<vmem>>, vector<1x64x38xf32>
    %58 = vector.shape_cast %57 : vector<1x64x38xf32> to vector<64x38xf32>
    %59 = vector.broadcast %56 : vector<64x1xf32> to vector<64x38xf32>
    %60 = arith.mulf %59, %58 : vector<64x38xf32>
    %61 = arith.addf %55, %60 : vector<64x38xf32>
    %62 = vector.extract_strided_slice %1 {offsets = [0, 10], sizes = [64, 1], strides = [1, 1]} : vector<64x16xf32> to vector<64x1xf32>
    %c10 = arith.constant 10 : index
    %c0_24 = arith.constant 0 : index
    %c0_25 = arith.constant 0 : index
    %63 = vector.load %arg2[%c10, %c0_24, %c0_25] : memref<16x64x38xf32, #tpu.memory_space<vmem>>, vector<1x64x38xf32>
    %64 = vector.shape_cast %63 : vector<1x64x38xf32> to vector<64x38xf32>
    %65 = vector.broadcast %62 : vector<64x1xf32> to vector<64x38xf32>
    %66 = arith.mulf %65, %64 : vector<64x38xf32>
    %67 = arith.addf %61, %66 : vector<64x38xf32>
    %68 = vector.extract_strided_slice %1 {offsets = [0, 11], sizes = [64, 1], strides = [1, 1]} : vector<64x16xf32> to vector<64x1xf32>
    %c11 = arith.constant 11 : index
    %c0_26 = arith.constant 0 : index
    %c0_27 = arith.constant 0 : index
    %69 = vector.load %arg2[%c11, %c0_26, %c0_27] : memref<16x64x38xf32, #tpu.memory_space<vmem>>, vector<1x64x38xf32>
    %70 = vector.shape_cast %69 : vector<1x64x38xf32> to vector<64x38xf32>
    %71 = vector.broadcast %68 : vector<64x1xf32> to vector<64x38xf32>
    %72 = arith.mulf %71, %70 : vector<64x38xf32>
    %73 = arith.addf %67, %72 : vector<64x38xf32>
    %74 = vector.extract_strided_slice %1 {offsets = [0, 12], sizes = [64, 1], strides = [1, 1]} : vector<64x16xf32> to vector<64x1xf32>
    %c12 = arith.constant 12 : index
    %c0_28 = arith.constant 0 : index
    %c0_29 = arith.constant 0 : index
    %75 = vector.load %arg2[%c12, %c0_28, %c0_29] : memref<16x64x38xf32, #tpu.memory_space<vmem>>, vector<1x64x38xf32>
    %76 = vector.shape_cast %75 : vector<1x64x38xf32> to vector<64x38xf32>
    %77 = vector.broadcast %74 : vector<64x1xf32> to vector<64x38xf32>
    %78 = arith.mulf %77, %76 : vector<64x38xf32>
    %79 = arith.addf %73, %78 : vector<64x38xf32>
    %80 = vector.extract_strided_slice %1 {offsets = [0, 13], sizes = [64, 1], strides = [1, 1]} : vector<64x16xf32> to vector<64x1xf32>
    %c13 = arith.constant 13 : index
    %c0_30 = arith.constant 0 : index
    %c0_31 = arith.constant 0 : index
    %81 = vector.load %arg2[%c13, %c0_30, %c0_31] : memref<16x64x38xf32, #tpu.memory_space<vmem>>, vector<1x64x38xf32>
    %82 = vector.shape_cast %81 : vector<1x64x38xf32> to vector<64x38xf32>
    %83 = vector.broadcast %80 : vector<64x1xf32> to vector<64x38xf32>
    %84 = arith.mulf %83, %82 : vector<64x38xf32>
    %85 = arith.addf %79, %84 : vector<64x38xf32>
    %86 = vector.extract_strided_slice %1 {offsets = [0, 14], sizes = [64, 1], strides = [1, 1]} : vector<64x16xf32> to vector<64x1xf32>
    %c14 = arith.constant 14 : index
    %c0_32 = arith.constant 0 : index
    %c0_33 = arith.constant 0 : index
    %87 = vector.load %arg2[%c14, %c0_32, %c0_33] : memref<16x64x38xf32, #tpu.memory_space<vmem>>, vector<1x64x38xf32>
    %88 = vector.shape_cast %87 : vector<1x64x38xf32> to vector<64x38xf32>
    %89 = vector.broadcast %86 : vector<64x1xf32> to vector<64x38xf32>
    %90 = arith.mulf %89, %88 : vector<64x38xf32>
    %91 = arith.addf %85, %90 : vector<64x38xf32>
    %92 = vector.extract_strided_slice %1 {offsets = [0, 15], sizes = [64, 1], strides = [1, 1]} : vector<64x16xf32> to vector<64x1xf32>
    %c15 = arith.constant 15 : index
    %c0_34 = arith.constant 0 : index
    %c0_35 = arith.constant 0 : index
    %93 = vector.load %arg2[%c15, %c0_34, %c0_35] : memref<16x64x38xf32, #tpu.memory_space<vmem>>, vector<1x64x38xf32>
    %94 = vector.shape_cast %93 : vector<1x64x38xf32> to vector<64x38xf32>
    %95 = vector.broadcast %92 : vector<64x1xf32> to vector<64x38xf32>
    %96 = arith.mulf %95, %94 : vector<64x38xf32>
    %97 = arith.addf %91, %96 : vector<64x38xf32>
    %98 = vector.extract_strided_slice %97 {offsets = [0, 0], sizes = [32, 38], strides = [1, 1]} : vector<64x38xf32> to vector<32x38xf32>
    %99 = vector.extract_strided_slice %97 {offsets = [32, 0], sizes = [32, 38], strides = [1, 1]} : vector<64x38xf32> to vector<32x38xf32>
    %100 = vector.extract_strided_slice %98 {offsets = [0, 0], sizes = [32, 24], strides = [1, 1]} : vector<32x38xf32> to vector<32x24xf32>
    %101 = vector.extract_strided_slice %99 {offsets = [0, 0], sizes = [32, 24], strides = [1, 1]} : vector<32x38xf32> to vector<32x24xf32>
    %102 = tpu.concatenate %100, %101 in 1 : vector<32x24xf32>, vector<32x24xf32> -> vector<32x48xf32>
    %103 = vector.extract_strided_slice %98 {offsets = [0, 1], sizes = [32, 24], strides = [1, 1]} : vector<32x38xf32> to vector<32x24xf32>
    %104 = vector.extract_strided_slice %99 {offsets = [0, 1], sizes = [32, 24], strides = [1, 1]} : vector<32x38xf32> to vector<32x24xf32>
    %105 = tpu.concatenate %103, %104 in 1 : vector<32x24xf32>, vector<32x24xf32> -> vector<32x48xf32>
    %106 = vector.extract_strided_slice %98 {offsets = [0, 2], sizes = [32, 24], strides = [1, 1]} : vector<32x38xf32> to vector<32x24xf32>
    %107 = vector.extract_strided_slice %99 {offsets = [0, 2], sizes = [32, 24], strides = [1, 1]} : vector<32x38xf32> to vector<32x24xf32>
    %108 = tpu.concatenate %106, %107 in 1 : vector<32x24xf32>, vector<32x24xf32> -> vector<32x48xf32>
    %109 = vector.extract_strided_slice %98 {offsets = [0, 6], sizes = [32, 24], strides = [1, 1]} : vector<32x38xf32> to vector<32x24xf32>
    %110 = vector.extract_strided_slice %99 {offsets = [0, 6], sizes = [32, 24], strides = [1, 1]} : vector<32x38xf32> to vector<32x24xf32>
    %111 = tpu.concatenate %109, %110 in 1 : vector<32x24xf32>, vector<32x24xf32> -> vector<32x48xf32>
    %112 = vector.extract_strided_slice %98 {offsets = [0, 7], sizes = [32, 24], strides = [1, 1]} : vector<32x38xf32> to vector<32x24xf32>
    %113 = vector.extract_strided_slice %99 {offsets = [0, 7], sizes = [32, 24], strides = [1, 1]} : vector<32x38xf32> to vector<32x24xf32>
    %114 = tpu.concatenate %112, %113 in 1 : vector<32x24xf32>, vector<32x24xf32> -> vector<32x48xf32>
    %115 = vector.extract_strided_slice %98 {offsets = [0, 8], sizes = [32, 24], strides = [1, 1]} : vector<32x38xf32> to vector<32x24xf32>
    %116 = vector.extract_strided_slice %99 {offsets = [0, 8], sizes = [32, 24], strides = [1, 1]} : vector<32x38xf32> to vector<32x24xf32>
    %117 = tpu.concatenate %115, %116 in 1 : vector<32x24xf32>, vector<32x24xf32> -> vector<32x48xf32>
    %118 = vector.extract_strided_slice %98 {offsets = [0, 12], sizes = [32, 24], strides = [1, 1]} : vector<32x38xf32> to vector<32x24xf32>
    %119 = vector.extract_strided_slice %99 {offsets = [0, 12], sizes = [32, 24], strides = [1, 1]} : vector<32x38xf32> to vector<32x24xf32>
    %120 = tpu.concatenate %118, %119 in 1 : vector<32x24xf32>, vector<32x24xf32> -> vector<32x48xf32>
    %121 = vector.extract_strided_slice %98 {offsets = [0, 13], sizes = [32, 24], strides = [1, 1]} : vector<32x38xf32> to vector<32x24xf32>
    %122 = vector.extract_strided_slice %99 {offsets = [0, 13], sizes = [32, 24], strides = [1, 1]} : vector<32x38xf32> to vector<32x24xf32>
    %123 = tpu.concatenate %121, %122 in 1 : vector<32x24xf32>, vector<32x24xf32> -> vector<32x48xf32>
    %124 = vector.extract_strided_slice %98 {offsets = [0, 14], sizes = [32, 24], strides = [1, 1]} : vector<32x38xf32> to vector<32x24xf32>
    %125 = vector.extract_strided_slice %99 {offsets = [0, 14], sizes = [32, 24], strides = [1, 1]} : vector<32x38xf32> to vector<32x24xf32>
    %126 = tpu.concatenate %124, %125 in 1 : vector<32x24xf32>, vector<32x24xf32> -> vector<32x48xf32>
    %127 = tpu.concatenate %102, %105, %108, %111, %114, %117, %120, %123, %126 in 0 : vector<32x48xf32>, vector<32x48xf32>, vector<32x48xf32>, vector<32x48xf32>, vector<32x48xf32>, vector<32x48xf32>, vector<32x48xf32>, vector<32x48xf32>, vector<32x48xf32> -> vector<288x48xf32>
    %c0_36 = arith.constant 0 : index
    %c0_37 = arith.constant 0 : index
    %128 = vector.load %arg4[%c0_36, %c0_37] : memref<64x288xf32, #tpu.memory_space<vmem>>, vector<64x288xf32>
    %cst = arith.constant dense<0.000000e+00> : vector<64x48xf32>
    %129 = tpu.matmul %128, %127, %cst {dimension_numbers = #tpu.dot_dimension_numbers<[1], [0], [0], [1], [0, 0, 1, 1], [], []>} : vector<64x288xf32>, vector<288x48xf32>, vector<64x48xf32> -> vector<64x48xf32>
    %130 = vector.extract_strided_slice %129 {offsets = [0, 0], sizes = [16, 24], strides = [1, 1]} : vector<64x48xf32> to vector<16x24xf32>
    %131 = vector.extract_strided_slice %129 {offsets = [16, 0], sizes = [16, 24], strides = [1, 1]} : vector<64x48xf32> to vector<16x24xf32>
    %132 = vector.extract_strided_slice %129 {offsets = [32, 0], sizes = [16, 24], strides = [1, 1]} : vector<64x48xf32> to vector<16x24xf32>
    %133 = vector.extract_strided_slice %129 {offsets = [48, 0], sizes = [16, 24], strides = [1, 1]} : vector<64x48xf32> to vector<16x24xf32>
    %134 = tpu.concatenate %130, %131, %132, %133 in 1 : vector<16x24xf32>, vector<16x24xf32>, vector<16x24xf32>, vector<16x24xf32> -> vector<16x96xf32>
    %135 = vector.extract_strided_slice %129 {offsets = [0, 24], sizes = [16, 24], strides = [1, 1]} : vector<64x48xf32> to vector<16x24xf32>
    %136 = vector.extract_strided_slice %129 {offsets = [16, 24], sizes = [16, 24], strides = [1, 1]} : vector<64x48xf32> to vector<16x24xf32>
    %137 = vector.extract_strided_slice %129 {offsets = [32, 24], sizes = [16, 24], strides = [1, 1]} : vector<64x48xf32> to vector<16x24xf32>
    %138 = vector.extract_strided_slice %129 {offsets = [48, 24], sizes = [16, 24], strides = [1, 1]} : vector<64x48xf32> to vector<16x24xf32>
    %139 = tpu.concatenate %135, %136, %137, %138 in 1 : vector<16x24xf32>, vector<16x24xf32>, vector<16x24xf32>, vector<16x24xf32> -> vector<16x96xf32>
    %140 = tpu.concatenate %134, %139 in 0 : vector<16x96xf32>, vector<16x96xf32> -> vector<32x96xf32>
    %141 = arith.truncf %140 : vector<32x96xf32> to vector<32x96xbf16>
    %c0_38 = arith.constant 0 : index
    %c0_39 = arith.constant 0 : index
    %142 = vector.load %arg9[%c0_38, %c0_39] : memref<96x102xbf16, #tpu.memory_space<vmem>>, vector<96x102xbf16>
    %cst_40 = arith.constant dense<0.000000e+00> : vector<32x102xf32>
    %143 = tpu.matmul %141, %142, %cst_40 {dimension_numbers = #tpu.dot_dimension_numbers<[1], [0], [0], [1], [0, 0, 1, 1], [], []>} : vector<32x96xbf16>, vector<96x102xbf16>, vector<32x102xf32> -> vector<32x102xf32>
    %c0_41 = arith.constant 0 : index
    %c0_42 = arith.constant 0 : index
    %144 = vector.load %arg7[%c0_41, %c0_42] : memref<54x1xf32, #tpu.memory_space<vmem>>, vector<16x1xf32>
    %c16 = arith.constant 16 : index
    %c0_43 = arith.constant 0 : index
    %145 = vector.load %arg7[%c16, %c0_43] : memref<54x1xf32, #tpu.memory_space<vmem>>, vector<16x1xf32>
    %c0_44 = arith.constant 0 : index
    %c0_45 = arith.constant 0 : index
    %146 = vector.load %arg8[%c0_44, %c0_45] : memref<2x326xf32, #tpu.memory_space<vmem>>, vector<1x102xf32>
    %cst_46 = arith.constant dense<0.000000e+00> : vector<32xf32>
    %147 = vector.multi_reduction <add>, %143, %cst_46 [1] : vector<32x102xf32> to vector<32xf32>
    %148 = vector.shape_cast %147 : vector<32xf32> to vector<32x1xf32>
    %149 = arith.mulf %143, %143 : vector<32x102xf32>
    %cst_47 = arith.constant dense<0.000000e+00> : vector<32xf32>
    %150 = vector.multi_reduction <add>, %149, %cst_47 [1] : vector<32x102xf32> to vector<32xf32>
    %151 = vector.shape_cast %150 : vector<32xf32> to vector<32x1xf32>
    %152 = vector.extract_strided_slice %148 {offsets = [0, 0], sizes = [16, 1], strides = [1, 1]} : vector<32x1xf32> to vector<16x1xf32>
    %153 = vector.extract_strided_slice %151 {offsets = [0, 0], sizes = [16, 1], strides = [1, 1]} : vector<32x1xf32> to vector<16x1xf32>
    %154 = vector.extract_strided_slice %148 {offsets = [16, 0], sizes = [16, 1], strides = [1, 1]} : vector<32x1xf32> to vector<16x1xf32>
    %155 = arith.addf %152, %154 : vector<16x1xf32>
    %156 = vector.extract_strided_slice %151 {offsets = [16, 0], sizes = [16, 1], strides = [1, 1]} : vector<32x1xf32> to vector<16x1xf32>
    %157 = arith.addf %153, %156 : vector<16x1xf32>
    %cst_48 = arith.constant 7.812500e-03 : f32
    %158 = vector.broadcast %cst_48 : f32 to vector<16x1xf32>
    %159 = arith.mulf %155, %158 : vector<16x1xf32>
    %cst_49 = arith.constant 7.812500e-03 : f32
    %160 = vector.broadcast %cst_49 : f32 to vector<16x1xf32>
    %161 = arith.mulf %157, %160 : vector<16x1xf32>
    %162 = arith.mulf %159, %159 : vector<16x1xf32>
    %163 = arith.subf %161, %162 : vector<16x1xf32>
    %cst_50 = arith.constant 9.99999974E-6 : f32
    %164 = vector.broadcast %cst_50 : f32 to vector<16x1xf32>
    %165 = arith.addf %163, %164 : vector<16x1xf32>
    %166 = math.rsqrt %165 : vector<16x1xf32>
    %167 = arith.mulf %144, %166 : vector<16x1xf32>
    %168 = arith.mulf %159, %167 : vector<16x1xf32>
    %169 = arith.subf %145, %168 : vector<16x1xf32>
    %170 = tpu.concatenate %167, %167 in 0 : vector<16x1xf32>, vector<16x1xf32> -> vector<32x1xf32>
    %171 = tpu.concatenate %169, %169 in 0 : vector<16x1xf32>, vector<16x1xf32> -> vector<32x1xf32>
    %172 = vector.broadcast %170 : vector<32x1xf32> to vector<32x102xf32>
    %173 = arith.mulf %143, %172 : vector<32x102xf32>
    %174 = vector.broadcast %171 : vector<32x1xf32> to vector<32x102xf32>
    %175 = arith.addf %173, %174 : vector<32x102xf32>
    %cst_51 = arith.constant 0.000000e+00 : f32
    %176 = vector.broadcast %cst_51 : f32 to vector<32x102xf32>
    %177 = arith.maximumf %175, %176 : vector<32x102xf32>
    %178 = vector.broadcast %146 : vector<1x102xf32> to vector<32x102xf32>
    %179 = arith.mulf %177, %178 : vector<32x102xf32>
    %180 = vector.extract_strided_slice %179 {offsets = [0, 0], sizes = [16, 102], strides = [1, 1]} : vector<32x102xf32> to vector<16x102xf32>
    %181 = vector.extract_strided_slice %179 {offsets = [16, 0], sizes = [16, 102], strides = [1, 1]} : vector<32x102xf32> to vector<16x102xf32>
    %182 = vector.extract_strided_slice %180 {offsets = [0, 0], sizes = [16, 80], strides = [1, 1]} : vector<16x102xf32> to vector<16x80xf32>
    %183 = vector.extract_strided_slice %181 {offsets = [0, 0], sizes = [16, 80], strides = [1, 1]} : vector<16x102xf32> to vector<16x80xf32>
    %184 = tpu.concatenate %182, %183 in 1 : vector<16x80xf32>, vector<16x80xf32> -> vector<16x160xf32>
    %185 = vector.extract_strided_slice %180 {offsets = [0, 1], sizes = [16, 80], strides = [1, 1]} : vector<16x102xf32> to vector<16x80xf32>
    %186 = vector.extract_strided_slice %181 {offsets = [0, 1], sizes = [16, 80], strides = [1, 1]} : vector<16x102xf32> to vector<16x80xf32>
    %187 = tpu.concatenate %185, %186 in 1 : vector<16x80xf32>, vector<16x80xf32> -> vector<16x160xf32>
    %188 = vector.extract_strided_slice %180 {offsets = [0, 2], sizes = [16, 80], strides = [1, 1]} : vector<16x102xf32> to vector<16x80xf32>
    %189 = vector.extract_strided_slice %181 {offsets = [0, 2], sizes = [16, 80], strides = [1, 1]} : vector<16x102xf32> to vector<16x80xf32>
    %190 = tpu.concatenate %188, %189 in 1 : vector<16x80xf32>, vector<16x80xf32> -> vector<16x160xf32>
    %191 = vector.extract_strided_slice %180 {offsets = [0, 10], sizes = [16, 80], strides = [1, 1]} : vector<16x102xf32> to vector<16x80xf32>
    %192 = vector.extract_strided_slice %181 {offsets = [0, 10], sizes = [16, 80], strides = [1, 1]} : vector<16x102xf32> to vector<16x80xf32>
    %193 = tpu.concatenate %191, %192 in 1 : vector<16x80xf32>, vector<16x80xf32> -> vector<16x160xf32>
    %194 = vector.extract_strided_slice %180 {offsets = [0, 11], sizes = [16, 80], strides = [1, 1]} : vector<16x102xf32> to vector<16x80xf32>
    %195 = vector.extract_strided_slice %181 {offsets = [0, 11], sizes = [16, 80], strides = [1, 1]} : vector<16x102xf32> to vector<16x80xf32>
    %196 = tpu.concatenate %194, %195 in 1 : vector<16x80xf32>, vector<16x80xf32> -> vector<16x160xf32>
    %197 = vector.extract_strided_slice %180 {offsets = [0, 12], sizes = [16, 80], strides = [1, 1]} : vector<16x102xf32> to vector<16x80xf32>
    %198 = vector.extract_strided_slice %181 {offsets = [0, 12], sizes = [16, 80], strides = [1, 1]} : vector<16x102xf32> to vector<16x80xf32>
    %199 = tpu.concatenate %197, %198 in 1 : vector<16x80xf32>, vector<16x80xf32> -> vector<16x160xf32>
    %200 = vector.extract_strided_slice %180 {offsets = [0, 20], sizes = [16, 80], strides = [1, 1]} : vector<16x102xf32> to vector<16x80xf32>
    %201 = vector.extract_strided_slice %181 {offsets = [0, 20], sizes = [16, 80], strides = [1, 1]} : vector<16x102xf32> to vector<16x80xf32>
    %202 = tpu.concatenate %200, %201 in 1 : vector<16x80xf32>, vector<16x80xf32> -> vector<16x160xf32>
    %203 = vector.extract_strided_slice %180 {offsets = [0, 21], sizes = [16, 80], strides = [1, 1]} : vector<16x102xf32> to vector<16x80xf32>
    %204 = vector.extract_strided_slice %181 {offsets = [0, 21], sizes = [16, 80], strides = [1, 1]} : vector<16x102xf32> to vector<16x80xf32>
    %205 = tpu.concatenate %203, %204 in 1 : vector<16x80xf32>, vector<16x80xf32> -> vector<16x160xf32>
    %206 = vector.extract_strided_slice %180 {offsets = [0, 22], sizes = [16, 80], strides = [1, 1]} : vector<16x102xf32> to vector<16x80xf32>
    %207 = vector.extract_strided_slice %181 {offsets = [0, 22], sizes = [16, 80], strides = [1, 1]} : vector<16x102xf32> to vector<16x80xf32>
    %208 = tpu.concatenate %206, %207 in 1 : vector<16x80xf32>, vector<16x80xf32> -> vector<16x160xf32>
    %209 = tpu.concatenate %184, %187, %190, %193, %196, %199, %202, %205, %208 in 0 : vector<16x160xf32>, vector<16x160xf32>, vector<16x160xf32>, vector<16x160xf32>, vector<16x160xf32>, vector<16x160xf32>, vector<16x160xf32>, vector<16x160xf32>, vector<16x160xf32> -> vector<144x160xf32>
    %c0_52 = arith.constant 0 : index
    %c0_53 = arith.constant 0 : index
    %210 = vector.load %arg5[%c0_52, %c0_53] : memref<32x144xf32, #tpu.memory_space<vmem>>, vector<32x144xf32>
    %cst_54 = arith.constant dense<0.000000e+00> : vector<32x160xf32>
    %211 = tpu.matmul %210, %209, %cst_54 {dimension_numbers = #tpu.dot_dimension_numbers<[1], [0], [0], [1], [0, 0, 1, 1], [], []>} : vector<32x144xf32>, vector<144x160xf32>, vector<32x160xf32> -> vector<32x160xf32>
    %212 = vector.extract_strided_slice %211 {offsets = [0, 0], sizes = [8, 80], strides = [1, 1]} : vector<32x160xf32> to vector<8x80xf32>
    %213 = vector.extract_strided_slice %211 {offsets = [8, 0], sizes = [8, 80], strides = [1, 1]} : vector<32x160xf32> to vector<8x80xf32>
    %214 = vector.extract_strided_slice %211 {offsets = [16, 0], sizes = [8, 80], strides = [1, 1]} : vector<32x160xf32> to vector<8x80xf32>
    %215 = vector.extract_strided_slice %211 {offsets = [24, 0], sizes = [8, 80], strides = [1, 1]} : vector<32x160xf32> to vector<8x80xf32>
    %216 = tpu.concatenate %212, %213, %214, %215 in 1 : vector<8x80xf32>, vector<8x80xf32>, vector<8x80xf32>, vector<8x80xf32> -> vector<8x320xf32>
    %217 = vector.extract_strided_slice %211 {offsets = [0, 80], sizes = [8, 80], strides = [1, 1]} : vector<32x160xf32> to vector<8x80xf32>
    %218 = vector.extract_strided_slice %211 {offsets = [8, 80], sizes = [8, 80], strides = [1, 1]} : vector<32x160xf32> to vector<8x80xf32>
    %219 = vector.extract_strided_slice %211 {offsets = [16, 80], sizes = [8, 80], strides = [1, 1]} : vector<32x160xf32> to vector<8x80xf32>
    %220 = vector.extract_strided_slice %211 {offsets = [24, 80], sizes = [8, 80], strides = [1, 1]} : vector<32x160xf32> to vector<8x80xf32>
    %221 = tpu.concatenate %217, %218, %219, %220 in 1 : vector<8x80xf32>, vector<8x80xf32>, vector<8x80xf32>, vector<8x80xf32> -> vector<8x320xf32>
    %222 = tpu.concatenate %216, %221 in 0 : vector<8x320xf32>, vector<8x320xf32> -> vector<16x320xf32>
    %223 = arith.truncf %222 : vector<16x320xf32> to vector<16x320xbf16>
    %c0_55 = arith.constant 0 : index
    %c0_56 = arith.constant 0 : index
    %224 = vector.load %arg10[%c0_55, %c0_56] : memref<320x326xbf16, #tpu.memory_space<vmem>>, vector<320x326xbf16>
    %cst_57 = arith.constant dense<0.000000e+00> : vector<16x326xf32>
    %225 = tpu.matmul %223, %224, %cst_57 {dimension_numbers = #tpu.dot_dimension_numbers<[1], [0], [0], [1], [0, 0, 1, 1], [], []>} : vector<16x320xbf16>, vector<320x326xbf16>, vector<16x326xf32> -> vector<16x326xf32>
    %c32 = arith.constant 32 : index
    %c0_58 = arith.constant 0 : index
    %226 = vector.load %arg7[%c32, %c0_58] : memref<54x1xf32, #tpu.memory_space<vmem>>, vector<8x1xf32>
    %c40 = arith.constant 40 : index
    %c0_59 = arith.constant 0 : index
    %227 = vector.load %arg7[%c40, %c0_59] : memref<54x1xf32, #tpu.memory_space<vmem>>, vector<8x1xf32>
    %c1_60 = arith.constant 1 : index
    %c0_61 = arith.constant 0 : index
    %228 = vector.load %arg8[%c1_60, %c0_61] : memref<2x326xf32, #tpu.memory_space<vmem>>, vector<1x326xf32>
    %cst_62 = arith.constant dense<0.000000e+00> : vector<16xf32>
    %229 = vector.multi_reduction <add>, %225, %cst_62 [1] : vector<16x326xf32> to vector<16xf32>
    %230 = vector.shape_cast %229 : vector<16xf32> to vector<16x1xf32>
    %231 = arith.mulf %225, %225 : vector<16x326xf32>
    %cst_63 = arith.constant dense<0.000000e+00> : vector<16xf32>
    %232 = vector.multi_reduction <add>, %231, %cst_63 [1] : vector<16x326xf32> to vector<16xf32>
    %233 = vector.shape_cast %232 : vector<16xf32> to vector<16x1xf32>
    %234 = vector.extract_strided_slice %230 {offsets = [0, 0], sizes = [8, 1], strides = [1, 1]} : vector<16x1xf32> to vector<8x1xf32>
    %235 = vector.extract_strided_slice %233 {offsets = [0, 0], sizes = [8, 1], strides = [1, 1]} : vector<16x1xf32> to vector<8x1xf32>
    %236 = vector.extract_strided_slice %230 {offsets = [8, 0], sizes = [8, 1], strides = [1, 1]} : vector<16x1xf32> to vector<8x1xf32>
    %237 = arith.addf %234, %236 : vector<8x1xf32>
    %238 = vector.extract_strided_slice %233 {offsets = [8, 0], sizes = [8, 1], strides = [1, 1]} : vector<16x1xf32> to vector<8x1xf32>
    %239 = arith.addf %235, %238 : vector<8x1xf32>
    %cst_64 = arith.constant 0.001953125 : f32
    %240 = vector.broadcast %cst_64 : f32 to vector<8x1xf32>
    %241 = arith.mulf %237, %240 : vector<8x1xf32>
    %cst_65 = arith.constant 0.001953125 : f32
    %242 = vector.broadcast %cst_65 : f32 to vector<8x1xf32>
    %243 = arith.mulf %239, %242 : vector<8x1xf32>
    %244 = arith.mulf %241, %241 : vector<8x1xf32>
    %245 = arith.subf %243, %244 : vector<8x1xf32>
    %cst_66 = arith.constant 9.99999974E-6 : f32
    %246 = vector.broadcast %cst_66 : f32 to vector<8x1xf32>
    %247 = arith.addf %245, %246 : vector<8x1xf32>
    %248 = math.rsqrt %247 : vector<8x1xf32>
    %249 = arith.mulf %226, %248 : vector<8x1xf32>
    %250 = arith.mulf %241, %249 : vector<8x1xf32>
    %251 = arith.subf %227, %250 : vector<8x1xf32>
    %252 = tpu.concatenate %249, %249 in 0 : vector<8x1xf32>, vector<8x1xf32> -> vector<16x1xf32>
    %253 = tpu.concatenate %251, %251 in 0 : vector<8x1xf32>, vector<8x1xf32> -> vector<16x1xf32>
    %254 = vector.broadcast %252 : vector<16x1xf32> to vector<16x326xf32>
    %255 = arith.mulf %225, %254 : vector<16x326xf32>
    %256 = vector.broadcast %253 : vector<16x1xf32> to vector<16x326xf32>
    %257 = arith.addf %255, %256 : vector<16x326xf32>
    %cst_67 = arith.constant 0.000000e+00 : f32
    %258 = vector.broadcast %cst_67 : f32 to vector<16x326xf32>
    %259 = arith.maximumf %257, %258 : vector<16x326xf32>
    %260 = vector.broadcast %228 : vector<1x326xf32> to vector<16x326xf32>
    %261 = arith.mulf %259, %260 : vector<16x326xf32>
    %262 = vector.extract_strided_slice %261 {offsets = [0, 0], sizes = [8, 326], strides = [1, 1]} : vector<16x326xf32> to vector<8x326xf32>
    %263 = vector.extract_strided_slice %261 {offsets = [8, 0], sizes = [8, 326], strides = [1, 1]} : vector<16x326xf32> to vector<8x326xf32>
    %264 = vector.extract_strided_slice %262 {offsets = [0, 0], sizes = [8, 288], strides = [1, 1]} : vector<8x326xf32> to vector<8x288xf32>
    %265 = vector.extract_strided_slice %263 {offsets = [0, 0], sizes = [8, 288], strides = [1, 1]} : vector<8x326xf32> to vector<8x288xf32>
    %266 = tpu.concatenate %264, %265 in 1 : vector<8x288xf32>, vector<8x288xf32> -> vector<8x576xf32>
    %267 = vector.extract_strided_slice %262 {offsets = [0, 1], sizes = [8, 288], strides = [1, 1]} : vector<8x326xf32> to vector<8x288xf32>
    %268 = vector.extract_strided_slice %263 {offsets = [0, 1], sizes = [8, 288], strides = [1, 1]} : vector<8x326xf32> to vector<8x288xf32>
    %269 = tpu.concatenate %267, %268 in 1 : vector<8x288xf32>, vector<8x288xf32> -> vector<8x576xf32>
    %270 = vector.extract_strided_slice %262 {offsets = [0, 2], sizes = [8, 288], strides = [1, 1]} : vector<8x326xf32> to vector<8x288xf32>
    %271 = vector.extract_strided_slice %263 {offsets = [0, 2], sizes = [8, 288], strides = [1, 1]} : vector<8x326xf32> to vector<8x288xf32>
    %272 = tpu.concatenate %270, %271 in 1 : vector<8x288xf32>, vector<8x288xf32> -> vector<8x576xf32>
    %273 = vector.extract_strided_slice %262 {offsets = [0, 18], sizes = [8, 288], strides = [1, 1]} : vector<8x326xf32> to vector<8x288xf32>
    %274 = vector.extract_strided_slice %263 {offsets = [0, 18], sizes = [8, 288], strides = [1, 1]} : vector<8x326xf32> to vector<8x288xf32>
    %275 = tpu.concatenate %273, %274 in 1 : vector<8x288xf32>, vector<8x288xf32> -> vector<8x576xf32>
    %276 = vector.extract_strided_slice %262 {offsets = [0, 19], sizes = [8, 288], strides = [1, 1]} : vector<8x326xf32> to vector<8x288xf32>
    %277 = vector.extract_strided_slice %263 {offsets = [0, 19], sizes = [8, 288], strides = [1, 1]} : vector<8x326xf32> to vector<8x288xf32>
    %278 = tpu.concatenate %276, %277 in 1 : vector<8x288xf32>, vector<8x288xf32> -> vector<8x576xf32>
    %279 = vector.extract_strided_slice %262 {offsets = [0, 20], sizes = [8, 288], strides = [1, 1]} : vector<8x326xf32> to vector<8x288xf32>
    %280 = vector.extract_strided_slice %263 {offsets = [0, 20], sizes = [8, 288], strides = [1, 1]} : vector<8x326xf32> to vector<8x288xf32>
    %281 = tpu.concatenate %279, %280 in 1 : vector<8x288xf32>, vector<8x288xf32> -> vector<8x576xf32>
    %282 = vector.extract_strided_slice %262 {offsets = [0, 36], sizes = [8, 288], strides = [1, 1]} : vector<8x326xf32> to vector<8x288xf32>
    %283 = vector.extract_strided_slice %263 {offsets = [0, 36], sizes = [8, 288], strides = [1, 1]} : vector<8x326xf32> to vector<8x288xf32>
    %284 = tpu.concatenate %282, %283 in 1 : vector<8x288xf32>, vector<8x288xf32> -> vector<8x576xf32>
    %285 = vector.extract_strided_slice %262 {offsets = [0, 37], sizes = [8, 288], strides = [1, 1]} : vector<8x326xf32> to vector<8x288xf32>
    %286 = vector.extract_strided_slice %263 {offsets = [0, 37], sizes = [8, 288], strides = [1, 1]} : vector<8x326xf32> to vector<8x288xf32>
    %287 = tpu.concatenate %285, %286 in 1 : vector<8x288xf32>, vector<8x288xf32> -> vector<8x576xf32>
    %288 = vector.extract_strided_slice %262 {offsets = [0, 38], sizes = [8, 288], strides = [1, 1]} : vector<8x326xf32> to vector<8x288xf32>
    %289 = vector.extract_strided_slice %263 {offsets = [0, 38], sizes = [8, 288], strides = [1, 1]} : vector<8x326xf32> to vector<8x288xf32>
    %290 = tpu.concatenate %288, %289 in 1 : vector<8x288xf32>, vector<8x288xf32> -> vector<8x576xf32>
    %291 = tpu.concatenate %266, %269, %272, %275, %278, %281, %284, %287, %290 in 0 : vector<8x576xf32>, vector<8x576xf32>, vector<8x576xf32>, vector<8x576xf32>, vector<8x576xf32>, vector<8x576xf32>, vector<8x576xf32>, vector<8x576xf32>, vector<8x576xf32> -> vector<72x576xf32>
    %c0_68 = arith.constant 0 : index
    %c0_69 = arith.constant 0 : index
    %292 = vector.load %arg6[%c0_68, %c0_69] : memref<12x72xf32, #tpu.memory_space<vmem>>, vector<12x72xf32>
    %cst_70 = arith.constant dense<0.000000e+00> : vector<12x576xf32>
    %293 = tpu.matmul %292, %291, %cst_70 {dimension_numbers = #tpu.dot_dimension_numbers<[1], [0], [0], [1], [0, 0, 1, 1], [], []>} : vector<12x72xf32>, vector<72x576xf32>, vector<12x576xf32> -> vector<12x576xf32>
    %294 = vector.extract_strided_slice %293 {offsets = [0, 0], sizes = [3, 288], strides = [1, 1]} : vector<12x576xf32> to vector<3x288xf32>
    %295 = vector.extract_strided_slice %293 {offsets = [3, 0], sizes = [3, 288], strides = [1, 1]} : vector<12x576xf32> to vector<3x288xf32>
    %296 = vector.extract_strided_slice %293 {offsets = [6, 0], sizes = [3, 288], strides = [1, 1]} : vector<12x576xf32> to vector<3x288xf32>
    %297 = vector.extract_strided_slice %293 {offsets = [9, 0], sizes = [3, 288], strides = [1, 1]} : vector<12x576xf32> to vector<3x288xf32>
    %298 = tpu.concatenate %294, %295, %296, %297 in 1 : vector<3x288xf32>, vector<3x288xf32>, vector<3x288xf32>, vector<3x288xf32> -> vector<3x1152xf32>
    %299 = vector.extract_strided_slice %293 {offsets = [0, 288], sizes = [3, 288], strides = [1, 1]} : vector<12x576xf32> to vector<3x288xf32>
    %300 = vector.extract_strided_slice %293 {offsets = [3, 288], sizes = [3, 288], strides = [1, 1]} : vector<12x576xf32> to vector<3x288xf32>
    %301 = vector.extract_strided_slice %293 {offsets = [6, 288], sizes = [3, 288], strides = [1, 1]} : vector<12x576xf32> to vector<3x288xf32>
    %302 = vector.extract_strided_slice %293 {offsets = [9, 288], sizes = [3, 288], strides = [1, 1]} : vector<12x576xf32> to vector<3x288xf32>
    %303 = tpu.concatenate %299, %300, %301, %302 in 1 : vector<3x288xf32>, vector<3x288xf32>, vector<3x288xf32>, vector<3x288xf32> -> vector<3x1152xf32>
    %304 = tpu.concatenate %298, %303 in 0 : vector<3x1152xf32>, vector<3x1152xf32> -> vector<6x1152xf32>
    %305 = arith.truncf %304 : vector<6x1152xf32> to vector<6x1152xbf16>
    %c0_71 = arith.constant 0 : index
    %c0_72 = arith.constant 0 : index
    %306 = vector.load %arg11[%c0_71, %c0_72] : memref<1152x1024xbf16, #tpu.memory_space<vmem>>, vector<1152x1024xbf16>
    %cst_73 = arith.constant dense<0.000000e+00> : vector<6x1024xf32>
    %307 = tpu.matmul %305, %306, %cst_73 {dimension_numbers = #tpu.dot_dimension_numbers<[1], [0], [0], [1], [0, 0, 1, 1], [], []>} : vector<6x1152xbf16>, vector<1152x1024xbf16>, vector<6x1024xf32> -> vector<6x1024xf32>
    %c48 = arith.constant 48 : index
    %c0_74 = arith.constant 0 : index
    %308 = vector.load %arg7[%c48, %c0_74] : memref<54x1xf32, #tpu.memory_space<vmem>>, vector<6x1xf32>
    %309 = vector.broadcast %308 : vector<6x1xf32> to vector<6x1024xf32>
    %310 = arith.addf %307, %309 : vector<6x1024xf32>
    %311 = math.tanh %310 : vector<6x1024xf32>
    %c0_75 = arith.constant 0 : index
    %c0_76 = arith.constant 0 : index
    %312 = vector.load %arg12[%c0_75, %c0_76] : memref<6x1024xf32, #tpu.memory_space<vmem>>, vector<6x1024xf32>
    tpu.vector_store %arg12[%c0_75, %c0_76], %311 {strides = array<i32>} : memref<6x1024xf32, #tpu.memory_space<vmem>>, vector<6x1024xf32>,
    return
  }
  func.func @transform_0(%arg0: i32) -> (i32, i32) {
    %c0_i32 = arith.constant 0 : i32
    %c0_i32_0 = arith.constant 0 : i32
    %c0_i32_1 = arith.constant 0 : i32
    return %c0_i32, %c0_i32_0 : i32, i32
  }
  func.func @transform_1(%arg0: i32) -> (i32, i32, i32) {
    %c0_i32 = arith.constant 0 : i32
    %c0_i32_0 = arith.constant 0 : i32
    %c0_i32_1 = arith.constant 0 : i32
    %c0_i32_2 = arith.constant 0 : i32
    return %c0_i32, %c0_i32_0, %c0_i32_1 : i32, i32, i32
  }
  func.func @transform_2(%arg0: i32) -> (i32, i32) {
    %c0_i32 = arith.constant 0 : i32
    %c0_i32_0 = arith.constant 0 : i32
    %c0_i32_1 = arith.constant 0 : i32
    return %c0_i32, %c0_i32_0 : i32, i32
  }
  func.func @transform_3(%arg0: i32) -> (i32, i32) {
    %c0_i32 = arith.constant 0 : i32
    %c0_i32_0 = arith.constant 0 : i32
    %c0_i32_1 = arith.constant 0 : i32
    return %c0_i32, %c0_i32_0 : i32, i32
  }
  func.func @transform_4(%arg0: i32) -> (i32, i32) {
    %c0_i32 = arith.constant 0 : i32
    %c0_i32_0 = arith.constant 0 : i32
    %c0_i32_1 = arith.constant 0 : i32
    return %c0_i32, %c0_i32_0 : i32, i32
  }
  func.func @transform_5(%arg0: i32) -> (i32, i32) {
    %c0_i32 = arith.constant 0 : i32
    %c0_i32_0 = arith.constant 0 : i32
    %c0_i32_1 = arith.constant 0 : i32
    return %c0_i32, %c0_i32_0 : i32, i32
  }
  func.func @transform_6(%arg0: i32) -> (i32, i32) {
    %c0_i32 = arith.constant 0 : i32
    %c0_i32_0 = arith.constant 0 : i32
    %c0_i32_1 = arith.constant 0 : i32
    return %c0_i32, %c0_i32_0 : i32, i32
  }
  func.func @transform_7(%arg0: i32) -> (i32, i32) {
    %c0_i32 = arith.constant 0 : i32
    %c0_i32_0 = arith.constant 0 : i32
    %c0_i32_1 = arith.constant 0 : i32
    return %c0_i32, %c0_i32_0 : i32, i32
  }
  func.func @transform_8(%arg0: i32) -> (i32, i32) {
    %c0_i32 = arith.constant 0 : i32
    %c0_i32_0 = arith.constant 0 : i32
    %c0_i32_1 = arith.constant 0 : i32
    return %c0_i32, %c0_i32_0 : i32, i32
  }
  func.func @transform_9(%arg0: i32) -> (i32, i32) {
    %c0_i32 = arith.constant 0 : i32
    %c0_i32_0 = arith.constant 0 : i32
    %c0_i32_1 = arith.constant 0 : i32
    return %c0_i32, %c0_i32_0 : i32, i32
  }
  func.func @transform_10(%arg0: i32) -> (i32, i32) {
    %c0_i32 = arith.constant 0 : i32
    %c0_i32_0 = arith.constant 0 : i32
    %c0_i32_1 = arith.constant 0 : i32
    return %c0_i32, %c0_i32_0 : i32, i32
  }
  func.func @transform_11(%arg0: i32) -> (i32, i32) {
    %c0_i32 = arith.constant 0 : i32
    %c0_i32_0 = arith.constant 0 : i32
    %c0_i32_1 = arith.constant 0 : i32
    return %c0_i32, %c0_i32_0 : i32, i32
  }
}

</mosaic_0001>

<llo_original>
// kernel: tile.29
$region0: #{tile.29}
  %s0 = inlined_call_operand.vmem [shape: f32[2,3], index: 0, kind: input, shape index: {}]
  %s1 = inlined_call_operand.vmem [shape: f32[6], index: 1, kind: output, shape index: {}]
  $region1: #{tile.29} parent=0
    #allocation0 [shape = 'u8[4096]{0}', space=vmem, size = 0x1000, scoped, tag = 'scoped mem for output reshape']
    #allocation1 [shape = 'u8[4096]{0}', space=vmem, size = 0x1000, scoped, tag = 'scoped mem for input reshape']
    %s3 = sshllo.u32 0, 2
    %v4 = vld [vmem:[%s0] sm:%s3]
    %5 = vst [vmem:[#allocation1] sm:%s3] %v4
    %v6 = vld [vmem:[#allocation1] sm:$0x1]
    %vm7 = vcmask 23552
    %8 = vst.msk [vmem:[#allocation0] sm:$0x1] %vm7, %v6
    %s9 = scalar_lea.vmem [#allocation1], 1
    %v10 = vld [vmem:[%s9] sm:$0x1]
    %11 = vrot.lane.b32.xlu0 %v10, 3
    %v12 = vpop.permute.xlu0 %11
    %vm13 = vcmask 48152
    %14 = vst.msk [vmem:[#allocation0] sm:$0x1] %vm13, %v12
    %s16 = sshllo.u32 0, 1
    %v18 = vld [vmem:[#allocation0] sm:%s16]
    %s19 = sshllo.u32 0, 1
    %20 = vst [vmem:[%s1] sm:%s19] %v18

// kernel: tile.28
$region0: #{tile.28}
  #allocation2 [shape = 's32[1]{0}', space=sflag, size = 0x4, scoped, tag = 'scoped memory for tile.28']
  %s0 = inlined_call_operand.hbm [shape: f32[3], index: 0, kind: input, shape index: {}]
  %s1 = inlined_call_operand.vmem [shape: f32[2,3], index: 1, kind: output, shape index: {}]
  $region1: #{tile.28} parent=0
    #allocation0 [shape = 'u8[512]{0}', space=vmem, size = 0x400, scoped, tag = 'operand span for operand 0']
    #allocation1 [shape = 's32[1]{0}', space=sflag, size = 0x4, scoped, tag = 'scoped memory for tile.28']
    %2 = vsyncpa [#allocation1], 0
    // Predicated region
    $region2: #{tile.28} parent=1 // pred_check
      _
    $region3: #{tile.28} parent=1 // pred_check_branch
      %4 = sbr.rel (0) target = $region5
    $region4: #{tile.28} parent=1 // pred_region
      %s6 = ssub.s32 16, 16
      %7 = vsyncadd [#allocation1], %s6
      %s9 = sshll.u32 [#allocation0], 4
      %s10 = int_to_ptr.vmem [resolvable:$true] %s9
      %12 = dma.hbm_to_vmem [thread:$0]  %s0, 16, %s10, [#allocation1]
    $region5: #{tile.28} parent=1 // pred_fallthru
      _
    // Predicated region
    $region6: #{tile.28} parent=1 // pred_check
      _
    $region7: #{tile.28} parent=1 // pred_check_branch
      %14 = sbr.rel (0) target = $region9
    $region8: #{tile.28} parent=1 // pred_region
      %15 = dma.done [#allocation1], 16
    $region9: #{tile.28} parent=1 // pred_fallthru
      _
    %v16 = vld [vmem:[#allocation0] ss:$0 sm:$0xff]
    %17 = vst [vmem:[%s1] sm:$0x3] %v16
    %18 = vsyncpa [#allocation1], 1

// kernel: decoder_forward.1
$region0: #{decoder_forward.1}
  #allocation0 [shape = 'u32[]', space=smem, size = 0x4, offset = 0x4, fixed_abs, tag = 'smem constant byte address 0x4 - core index']
  #allocation1 [shape = 'u32[144,128]{1,0:T(1,128)}', space=vmem, size = 0x12000, scoped, tag = 'internal scratch']
  %s0 = inlined_call_operand.vmem [shape: f32[64,16], index: 0, kind: input, shape index: {}]
  %s1 = inlined_call_operand.vmem [shape: f32[16,64,38], index: 1, kind: input, shape index: {}]
  %s2 = inlined_call_operand.vmem [shape: f32[64,38], index: 2, kind: input, shape index: {}]
  %s3 = inlined_call_operand.vmem [shape: f32[64,288], index: 3, kind: input, shape index: {}]
  %s4 = inlined_call_operand.vmem [shape: f32[32,144], index: 4, kind: input, shape index: {}]
  %s5 = inlined_call_operand.vmem [shape: f32[12,72], index: 5, kind: input, shape index: {}]
  %s6 = inlined_call_operand.vmem [shape: f32[54,1], index: 6, kind: input, shape index: {}]
  %s7 = inlined_call_operand.vmem [shape: f32[2,326], index: 7, kind: input, shape index: {}]
  %s8 = inlined_call_operand.vmem [shape: bf16[96,102], index: 8, kind: input, shape index: {}]
  %s9 = inlined_call_operand.vmem [shape: bf16[320,326], index: 9, kind: input, shape index: {}]
  %s10 = inlined_call_operand.vmem [shape: bf16[1152,1024], index: 10, kind: input, shape index: {}]
  %s11 = inlined_call_operand.vmem [shape: f32[6,1024], index: 11, kind: output, shape index: {}]
  %s12 = sld [smem:[#allocation0]]
  $region54: #{decoder_forward.1} parent=0
    _
  %s14 = ssub.s32 1, %s12
  %s15 = scalar_select 0, %s14, %s12
  // Predicated region
  $region2: #{decoder_forward.1} parent=0 // pred_check
    _
  $region3: #{decoder_forward.1} parent=0 // pred_check_branch
    %17 = sbr.rel (0) target = $region5
  $region4: #{decoder_forward.1} parent=0 // pred_region
    _
  $region5: #{decoder_forward.1} parent=0 // pred_fallthru
    _
  // Predicated region
  $region6: #{decoder_forward.1} parent=0 // pred_check
    _
  $region7: #{decoder_forward.1} parent=0 // pred_check_branch
    %19 = sbr.rel (0) target = $region9
  $region8: #{decoder_forward.1} parent=0 // pred_region
    _
  $region9: #{decoder_forward.1} parent=0 // pred_fallthru
    _
  // Predicated region
  $region10: #{decoder_forward.1} parent=0 // pred_check
    _
  $region11: #{decoder_forward.1} parent=0 // pred_check_branch
    %21 = sbr.rel (0) target = $region13
  $region12: #{decoder_forward.1} parent=0 // pred_region
    _
  $region13: #{decoder_forward.1} parent=0 // pred_fallthru
    _
  // Predicated region
  $region14: #{decoder_forward.1} parent=0 // pred_check
    _
  $region15: #{decoder_forward.1} parent=0 // pred_check_branch
    %23 = sbr.rel (0) target = $region17
  $region16: #{decoder_forward.1} parent=0 // pred_region
    _
  $region17: #{decoder_forward.1} parent=0 // pred_fallthru
    _
  // Predicated region
  $region18: #{decoder_forward.1} parent=0 // pred_check
    _
  $region19: #{decoder_forward.1} parent=0 // pred_check_branch
    %25 = sbr.rel (0) target = $region21
  $region20: #{decoder_forward.1} parent=0 // pred_region
    _
  $region21: #{decoder_forward.1} parent=0 // pred_fallthru
    _
  // Predicated region
  $region22: #{decoder_forward.1} parent=0 // pred_check
    _
  $region23: #{decoder_forward.1} parent=0 // pred_check_branch
    %27 = sbr.rel (0) target = $region25
  $region24: #{decoder_forward.1} parent=0 // pred_region
    _
  $region25: #{decoder_forward.1} parent=0 // pred_fallthru
    _
  // Predicated region
  $region26: #{decoder_forward.1} parent=0 // pred_check
    _
  $region27: #{decoder_forward.1} parent=0 // pred_check_branch
    %29 = sbr.rel (0) target = $region29
  $region28: #{decoder_forward.1} parent=0 // pred_region
    _
  $region29: #{decoder_forward.1} parent=0 // pred_fallthru
    _
  // Predicated region
  $region30: #{decoder_forward.1} parent=0 // pred_check
    _
  $region31: #{decoder_forward.1} parent=0 // pred_check_branch
    %31 = sbr.rel (0) target = $region33
  $region32: #{decoder_forward.1} parent=0 // pred_region
    _
  $region33: #{decoder_forward.1} parent=0 // pred_fallthru
    _
  // Predicated region
  $region34: #{decoder_forward.1} parent=0 // pred_check
    _
  $region35: #{decoder_forward.1} parent=0 // pred_check_branch
    %33 = sbr.rel (0) target = $region37
  $region36: #{decoder_forward.1} parent=0 // pred_region
    _
  $region37: #{decoder_forward.1} parent=0 // pred_fallthru
    _
  // Predicated region
  $region38: #{decoder_forward.1} parent=0 // pred_check
    _
  $region39: #{decoder_forward.1} parent=0 // pred_check_branch
    %35 = sbr.rel (0) target = $region41
  $region40: #{decoder_forward.1} parent=0 // pred_region
    _
  $region41: #{decoder_forward.1} parent=0 // pred_fallthru
    _
  // Predicated region
  $region42: #{decoder_forward.1} parent=0 // pred_check
    _
  $region43: #{decoder_forward.1} parent=0 // pred_check_branch
    %37 = sbr.rel (0) target = $region45
  $region44: #{decoder_forward.1} parent=0 // pred_region
    _
  $region45: #{decoder_forward.1} parent=0 // pred_fallthru
    _
  %v39 = vld [vmem:[%s2] sm:$0xff]
  %v40 = vld [vmem:[%s2 + $0x8] sm:$0xff]
  %v41 = vld [vmem:[%s2 + $0x10] sm:$0xff]
  %v42 = vld [vmem:[%s2 + $0x18] sm:$0xff]
  %v43 = vld [vmem:[%s2 + $0x20] sm:$0xff]
  %v44 = vld [vmem:[%s2 + $0x28] sm:$0xff]
  %v45 = vld [vmem:[%s2 + $0x30] sm:$0xff]
  %v46 = vld [vmem:[%s2 + $0x38] sm:$0xff]
  %v47 = vld [vmem:[%s0] sm:$0xff]
  %v48 = vld [vmem:[%s0 + $0x8] sm:$0xff]
  %v49 = vld [vmem:[%s0 + $0x10] sm:$0xff]
  %v50 = vld [vmem:[%s0 + $0x18] sm:$0xff]
  %v51 = vld [vmem:[%s0 + $0x20] sm:$0xff]
  %v52 = vld [vmem:[%s0 + $0x28] sm:$0xff]
  %v53 = vld [vmem:[%s0 + $0x30] sm:$0xff]
  %v54 = vld [vmem:[%s0 + $0x38] sm:$0xff]
  %v55 = vld [vmem:[%s1] sm:$0xff]
  %v56 = vld [vmem:[%s1 + $0x8] sm:$0xff]
  %v57 = vld [vmem:[%s1 + $0x10] sm:$0xff]
  %v58 = vld [vmem:[%s1 + $0x18] sm:$0xff]
  %v59 = vld [vmem:[%s1 + $0x20] sm:$0xff]
  %v60 = vld [vmem:[%s1 + $0x28] sm:$0xff]
  %v61 = vld [vmem:[%s1 + $0x30] sm:$0xff]
  %v62 = vld [vmem:[%s1 + $0x38] sm:$0xff]
  %64 = vset.pattern.permute.xlu0 0
  %65 = vperm.xlu0 %64, %v47
  %v66 = vpop.permute.xlu0 %65
  %69 = vset.pattern.permute.xlu0 0
  %70 = vperm.xlu0 %69, %v48
  %v71 = vpop.permute.xlu0 %70
  %74 = vset.pattern.permute.xlu0 0
  %75 = vperm.xlu0 %74, %v49
  %v76 = vpop.permute.xlu0 %75
  %79 = vset.pattern.permute.xlu0 0
  %80 = vperm.xlu0 %79, %v50
  %v81 = vpop.permute.xlu0 %80
  %84 = vset.pattern.permute.xlu0 0
  %85 = vperm.xlu0 %84, %v51
  %v86 = vpop.permute.xlu0 %85
  %89 = vset.pattern.permute.xlu0 0
  %90 = vperm.xlu0 %89, %v52
  %v91 = vpop.permute.xlu0 %90
  %94 = vset.pattern.permute.xlu0 0
  %95 = vperm.xlu0 %94, %v53
  %v96 = vpop.permute.xlu0 %95
  %99 = vset.pattern.permute.xlu0 0
  %100 = vperm.xlu0 %99, %v54
  %v101 = vpop.permute.xlu0 %100
  %v103 = vmul.f32 %v66, %v55
  %v104 = vmul.f32 %v71, %v56
  %v105 = vmul.f32 %v76, %v57
  %v106 = vmul.f32 %v81, %v58
  %v107 = vmul.f32 %v86, %v59
  %v108 = vmul.f32 %v91, %v60
  %v109 = vmul.f32 %v96, %v61
  %v110 = vmul.f32 %v101, %v62
  %v111 = vadd.f32 %v39, %v103
  %v112 = vadd.f32 %v40, %v104
  %v113 = vadd.f32 %v41, %v105
  %v114 = vadd.f32 %v42, %v106
  %v115 = vadd.f32 %v43, %v107
  %v116 = vadd.f32 %v44, %v108
  %v117 = vadd.f32 %v45, %v109
  %v118 = vadd.f32 %v46, %v110
  %s119 = scalar_lea.vmem %s1, 64
  %v120 = vld [vmem:[%s119] sm:$0xff]
  %v121 = vld [vmem:[%s119 + $0x8] sm:$0xff]
  %v122 = vld [vmem:[%s119 + $0x10] sm:$0xff]
  %v123 = vld [vmem:[%s119 + $0x18] sm:$0xff]
  %v124 = vld [vmem:[%s119 + $0x20] sm:$0xff]
  %v125 = vld [vmem:[%s119 + $0x28] sm:$0xff]
  %v126 = vld [vmem:[%s119 + $0x30] sm:$0xff]
  %v127 = vld [vmem:[%s119 + $0x38] sm:$0xff]
  %128 = vset.pattern.permute.xlu0 1
  %129 = vperm.xlu0 %128, %v47
  %v130 = vpop.permute.xlu0 %129
  %132 = vset.pattern.permute.xlu0 1
  %133 = vperm.xlu0 %132, %v48
  %v134 = vpop.permute.xlu0 %133
  %136 = vset.pattern.permute.xlu0 1
  %137 = vperm.xlu0 %136, %v49
  %v138 = vpop.permute.xlu0 %137
  %140 = vset.pattern.permute.xlu0 1
  %141 = vperm.xlu0 %140, %v50
  %v142 = vpop.permute.xlu0 %141
  %144 = vset.pattern.permute.xlu0 1
  %145 = vperm.xlu0 %144, %v51
  %v146 = vpop.permute.xlu0 %145
  %148 = vset.pattern.permute.xlu0 1
  %149 = vperm.xlu0 %148, %v52
  %v150 = vpop.permute.xlu0 %149
  %152 = vset.pattern.permute.xlu0 1
  %153 = vperm.xlu0 %152, %v53
  %v154 = vpop.permute.xlu0 %153
  %156 = vset.pattern.permute.xlu0 1
  %157 = vperm.xlu0 %156, %v54
  %v158 = vpop.permute.xlu0 %157
  %v160 = vmul.f32 %v130, %v120
  %v161 = vmul.f32 %v134, %v121
  %v162 = vmul.f32 %v138, %v122
  %v163 = vmul.f32 %v142, %v123
  %v164 = vmul.f32 %v146, %v124
  %v165 = vmul.f32 %v150, %v125
  %v166 = vmul.f32 %v154, %v126
  %v167 = vmul.f32 %v158, %v127
  %v168 = vadd.f32 %v111, %v160
  %v169 = vadd.f32 %v112, %v161
  %v170 = vadd.f32 %v113, %v162
  %v171 = vadd.f32 %v114, %v163
  %v172 = vadd.f32 %v115, %v164
  %v173 = vadd.f32 %v116, %v165
  %v174 = vadd.f32 %v117, %v166
  %v175 = vadd.f32 %v118, %v167
  %s176 = scalar_lea.vmem %s1, 128
  %v177 = vld [vmem:[%s176] sm:$0xff]
  %v178 = vld [vmem:[%s176 + $0x8] sm:$0xff]
  %v179 = vld [vmem:[%s176 + $0x10] sm:$0xff]
  %v180 = vld [vmem:[%s176 + $0x18] sm:$0xff]
  %v181 = vld [vmem:[%s176 + $0x20] sm:$0xff]
  %v182 = vld [vmem:[%s176 + $0x28] sm:$0xff]
  %v183 = vld [vmem:[%s176 + $0x30] sm:$0xff]
  %v184 = vld [vmem:[%s176 + $0x38] sm:$0xff]
  %185 = vset.pattern.permute.xlu0 2
  %186 = vperm.xlu0 %185, %v47
  %v187 = vpop.permute.xlu0 %186
  %189 = vset.pattern.permute.xlu0 2
  %190 = vperm.xlu0 %189, %v48
  %v191 = vpop.permute.xlu0 %190
  %193 = vset.pattern.permute.xlu0 2
  %194 = vperm.xlu0 %193, %v49
  %v195 = vpop.permute.xlu0 %194
  %197 = vset.pattern.permute.xlu0 2
  %198 = vperm.xlu0 %197, %v50
  %v199 = vpop.permute.xlu0 %198
  %201 = vset.pattern.permute.xlu0 2
  %202 = vperm.xlu0 %201, %v51
  %v203 = vpop.permute.xlu0 %202
  %205 = vset.pattern.permute.xlu0 2
  %206 = vperm.xlu0 %205, %v52
  %v207 = vpop.permute.xlu0 %206
  %209 = vset.pattern.permute.xlu0 2
  %210 = vperm.xlu0 %209, %v53
  %v211 = vpop.permute.xlu0 %210
  %213 = vset.pattern.permute.xlu0 2
  %214 = vperm.xlu0 %213, %v54
  %v215 = vpop.permute.xlu0 %214
  %v217 = vmul.f32 %v187, %v177
  %v218 = vmul.f32 %v191, %v178
  %v219 = vmul.f32 %v195, %v179
  %v220 = vmul.f32 %v199, %v180
  %v221 = vmul.f32 %v203, %v181
  %v222 = vmul.f32 %v207, %v182
  %v223 = vmul.f32 %v211, %v183
  %v224 = vmul.f32 %v215, %v184
  %v225 = vadd.f32 %v168, %v217
  %v226 = vadd.f32 %v169, %v218
  %v227 = vadd.f32 %v170, %v219
  %v228 = vadd.f32 %v171, %v220
  %v229 = vadd.f32 %v172, %v221
  %v230 = vadd.f32 %v173, %v222
  %v231 = vadd.f32 %v174, %v223
  %v232 = vadd.f32 %v175, %v224
  %s233 = scalar_lea.vmem %s1, 192
  %v234 = vld [vmem:[%s233] sm:$0xff]
  %v235 = vld [vmem:[%s233 + $0x8] sm:$0xff]
  %v236 = vld [vmem:[%s233 + $0x10] sm:$0xff]
  %v237 = vld [vmem:[%s233 + $0x18] sm:$0xff]
  %v238 = vld [vmem:[%s233 + $0x20] sm:$0xff]
  %v239 = vld [vmem:[%s233 + $0x28] sm:$0xff]
  %v240 = vld [vmem:[%s233 + $0x30] sm:$0xff]
  %v241 = vld [vmem:[%s233 + $0x38] sm:$0xff]
  %242 = vset.pattern.permute.xlu0 3
  %243 = vperm.xlu0 %242, %v47
  %v244 = vpop.permute.xlu0 %243
  %246 = vset.pattern.permute.xlu0 3
  %247 = vperm.xlu0 %246, %v48
  %v248 = vpop.permute.xlu0 %247
  %250 = vset.pattern.permute.xlu0 3
  %251 = vperm.xlu0 %250, %v49
  %v252 = vpop.permute.xlu0 %251
  %254 = vset.pattern.permute.xlu0 3
  %255 = vperm.xlu0 %254, %v50
  %v256 = vpop.permute.xlu0 %255
  %258 = vset.pattern.permute.xlu0 3
  %259 = vperm.xlu0 %258, %v51
  %v260 = vpop.permute.xlu0 %259
  %262 = vset.pattern.permute.xlu0 3
  %263 = vperm.xlu0 %262, %v52
  %v264 = vpop.permute.xlu0 %263
  %266 = vset.pattern.permute.xlu0 3
  %267 = vperm.xlu0 %266, %v53
  %v268 = vpop.permute.xlu0 %267
  %270 = vset.pattern.permute.xlu0 3
  %271 = vperm.xlu0 %270, %v54
  %v272 = vpop.permute.xlu0 %271
  %v274 = vmul.f32 %v244, %v234
  %v275 = vmul.f32 %v248, %v235
  %v276 = vmul.f32 %v252, %v236
  %v277 = vmul.f32 %v256, %v237
  %v278 = vmul.f32 %v260, %v238
  %v279 = vmul.f32 %v264, %v239
  %v280 = vmul.f32 %v268, %v240
  %v281 = vmul.f32 %v272, %v241
  %v282 = vadd.f32 %v225, %v274
  %v283 = vadd.f32 %v226, %v275
  %v284 = vadd.f32 %v227, %v276
  %v285 = vadd.f32 %v228, %v277
  %v286 = vadd.f32 %v229, %v278
  %v287 = vadd.f32 %v230, %v279
  %v288 = vadd.f32 %v231, %v280
  %v289 = vadd.f32 %v232, %v281
  %s290 = scalar_lea.vmem %s1, 256
  %v291 = vld [vmem:[%s290] sm:$0xff]
  %v292 = vld [vmem:[%s290 + $0x8] sm:$0xff]
  %v293 = vld [vmem:[%s290 + $0x10] sm:$0xff]
  %v294 = vld [vmem:[%s290 + $0x18] sm:$0xff]
  %v295 = vld [vmem:[%s290 + $0x20] sm:$0xff]
  %v296 = vld [vmem:[%s290 + $0x28] sm:$0xff]
  %v297 = vld [vmem:[%s290 + $0x30] sm:$0xff]
  %v298 = vld [vmem:[%s290 + $0x38] sm:$0xff]
  %299 = vset.pattern.permute.xlu0 4
  %300 = vperm.xlu0 %299, %v47
  %v301 = vpop.permute.xlu0 %300
  %303 = vset.pattern.permute.xlu0 4
  %304 = vperm.xlu0 %303, %v48
  %v305 = vpop.permute.xlu0 %304
  %307 = vset.pattern.permute.xlu0 4
  %308 = vperm.xlu0 %307, %v49
  %v309 = vpop.permute.xlu0 %308
  %311 = vset.pattern.permute.xlu0 4
  %312 = vperm.xlu0 %311, %v50
  %v313 = vpop.permute.xlu0 %312
  %315 = vset.pattern.permute.xlu0 4
  %316 = vperm.xlu0 %315, %v51
  %v317 = vpop.permute.xlu0 %316
  %319 = vset.pattern.permute.xlu0 4
  %320 = vperm.xlu0 %319, %v52
  %v321 = vpop.permute.xlu0 %320
  %323 = vset.pattern.permute.xlu0 4
  %324 = vperm.xlu0 %323, %v53
  %v325 = vpop.permute.xlu0 %324
  %327 = vset.pattern.permute.xlu0 4
  %328 = vperm.xlu0 %327, %v54
  %v329 = vpop.permute.xlu0 %328
  %v331 = vmul.f32 %v301, %v291
  %v332 = vmul.f32 %v305, %v292
  %v333 = vmul.f32 %v309, %v293
  %v334 = vmul.f32 %v313, %v294
  %v335 = vmul.f32 %v317, %v295
  %v336 = vmul.f32 %v321, %v296
  %v337 = vmul.f32 %v325, %v297
  %v338 = vmul.f32 %v329, %v298
  %v339 = vadd.f32 %v282, %v331
  %v340 = vadd.f32 %v283, %v332
  %v341 = vadd.f32 %v284, %v333
  %v342 = vadd.f32 %v285, %v334
  %v343 = vadd.f32 %v286, %v335
  %v344 = vadd.f32 %v287, %v336
  %v345 = vadd.f32 %v288, %v337
  %v346 = vadd.f32 %v289, %v338
  %s347 = scalar_lea.vmem %s1, 320
  %v348 = vld [vmem:[%s347] sm:$0xff]
  %v349 = vld [vmem:[%s347 + $0x8] sm:$0xff]
  %v350 = vld [vmem:[%s347 + $0x10] sm:$0xff]
  %v351 = vld [vmem:[%s347 + $0x18] sm:$0xff]
  %v352 = vld [vmem:[%s347 + $0x20] sm:$0xff]
  %v353 = vld [vmem:[%s347 + $0x28] sm:$0xff]
  %v354 = vld [vmem:[%s347 + $0x30] sm:$0xff]
  %v355 = vld [vmem:[%s347 + $0x38] sm:$0xff]
  %356 = vset.pattern.permute.xlu0 5
  %357 = vperm.xlu0 %356, %v47
  %v358 = vpop.permute.xlu0 %357
  %360 = vset.pattern.permute.xlu0 5
  %361 = vperm.xlu0 %360, %v48
  %v362 = vpop.permute.xlu0 %361
  %364 = vset.pattern.permute.xlu0 5
  %365 = vperm.xlu0 %364, %v49
  %v366 = vpop.permute.xlu0 %365
  %368 = vset.pattern.permute.xlu0 5
  %369 = vperm.xlu0 %368, %v50
  %v370 = vpop.permute.xlu0 %369
  %372 = vset.pattern.permute.xlu0 5
  %373 = vperm.xlu0 %372, %v51
  %v374 = vpop.permute.xlu0 %373
  %376 = vset.pattern.permute.xlu0 5
  %377 = vperm.xlu0 %376, %v52
  %v378 = vpop.permute.xlu0 %377
  %380 = vset.pattern.permute.xlu0 5
  %381 = vperm.xlu0 %380, %v53
  %v382 = vpop.permute.xlu0 %381
  %384 = vset.pattern.permute.xlu0 5
  %385 = vperm.xlu0 %384, %v54
  %v386 = vpop.permute.xlu0 %385
  %v388 = vmul.f32 %v358, %v348
  %v389 = vmul.f32 %v362, %v349
  %v390 = vmul.f32 %v366, %v350
  %v391 = vmul.f32 %v370, %v351
  %v392 = vmul.f32 %v374, %v352
  %v393 = vmul.f32 %v378, %v353
  %v394 = vmul.f32 %v382, %v354
  %v395 = vmul.f32 %v386, %v355
  %v396 = vadd.f32 %v339, %v388
  %v397 = vadd.f32 %v340, %v389
  %v398 = vadd.f32 %v341, %v390
  %v399 = vadd.f32 %v342, %v391
  %v400 = vadd.f32 %v343, %v392
  %v401 = vadd.f32 %v344, %v393
  %v402 = vadd.f32 %v345, %v394
  %v403 = vadd.f32 %v346, %v395
  %s404 = scalar_lea.vmem %s1, 384
  %v405 = vld [vmem:[%s404] sm:$0xff]
  %v406 = vld [vmem:[%s404 + $0x8] sm:$0xff]
  %v407 = vld [vmem:[%s404 + $0x10] sm:$0xff]
  %v408 = vld [vmem:[%s404 + $0x18] sm:$0xff]
  %v409 = vld [vmem:[%s404 + $0x20] sm:$0xff]
  %v410 = vld [vmem:[%s404 + $0x28] sm:$0xff]
  %v411 = vld [vmem:[%s404 + $0x30] sm:$0xff]
  %v412 = vld [vmem:[%s404 + $0x38] sm:$0xff]
  %413 = vset.pattern.permute.xlu0 6
  %414 = vperm.xlu0 %413, %v47
  %v415 = vpop.permute.xlu0 %414
  %417 = vset.pattern.permute.xlu0 6
  %418 = vperm.xlu0 %417, %v48
  %v419 = vpop.permute.xlu0 %418
  %421 = vset.pattern.permute.xlu0 6
  %422 = vperm.xlu0 %421, %v49
  %v423 = vpop.permute.xlu0 %422
  %425 = vset.pattern.permute.xlu0 6
  %426 = vperm.xlu0 %425, %v50
  %v427 = vpop.permute.xlu0 %426
  %429 = vset.pattern.permute.xlu0 6
  %430 = vperm.xlu0 %429, %v51
  %v431 = vpop.permute.xlu0 %430
  %433 = vset.pattern.permute.xlu0 6
  %434 = vperm.xlu0 %433, %v52
  %v435 = vpop.permute.xlu0 %434
  %437 = vset.pattern.permute.xlu0 6
  %438 = vperm.xlu0 %437, %v53
  %v439 = vpop.permute.xlu0 %438
  %441 = vset.pattern.permute.xlu0 6
  %442 = vperm.xlu0 %441, %v54
  %v443 = vpop.permute.xlu0 %442
  %v445 = vmul.f32 %v415, %v405
  %v446 = vmul.f32 %v419, %v406
  %v447 = vmul.f32 %v423, %v407
  %v448 = vmul.f32 %v427, %v408
  %v449 = vmul.f32 %v431, %v409
  %v450 = vmul.f32 %v435, %v410
  %v451 = vmul.f32 %v439, %v411
  %v452 = vmul.f32 %v443, %v412
  %v453 = vadd.f32 %v396, %v445
  %v454 = vadd.f32 %v397, %v446
  %v455 = vadd.f32 %v398, %v447
  %v456 = vadd.f32 %v399, %v448
  %v457 = vadd.f32 %v400, %v449
  %v458 = vadd.f32 %v401, %v450
  %v459 = vadd.f32 %v402, %v451
  %v460 = vadd.f32 %v403, %v452
  %s461 = scalar_lea.vmem %s1, 448
  %v462 = vld [vmem:[%s461] sm:$0xff]
  %v463 = vld [vmem:[%s461 + $0x8] sm:$0xff]
  %v464 = vld [vmem:[%s461 + $0x10] sm:$0xff]
  %v465 = vld [vmem:[%s461 + $0x18] sm:$0xff]
  %v466 = vld [vmem:[%s461 + $0x20] sm:$0xff]
  %v467 = vld [vmem:[%s461 + $0x28] sm:$0xff]
  %v468 = vld [vmem:[%s461 + $0x30] sm:$0xff]
  %v469 = vld [vmem:[%s461 + $0x38] sm:$0xff]
  %470 = vset.pattern.permute.xlu0 7
  %471 = vperm.xlu0 %470, %v47
  %v472 = vpop.permute.xlu0 %471
  %474 = vset.pattern.permute.xlu0 7
  %475 = vperm.xlu0 %474, %v48
  %v476 = vpop.permute.xlu0 %475
  %478 = vset.pattern.permute.xlu0 7
  %479 = vperm.xlu0 %478, %v49
  %v480 = vpop.permute.xlu0 %479
  %482 = vset.pattern.permute.xlu0 7
  %483 = vperm.xlu0 %482, %v50
  %v484 = vpop.permute.xlu0 %483
  %486 = vset.pattern.permute.xlu0 7
  %487 = vperm.xlu0 %486, %v51
  %v488 = vpop.permute.xlu0 %487
  %490 = vset.pattern.permute.xlu0 7
  %491 = vperm.xlu0 %490, %v52
  %v492 = vpop.permute.xlu0 %491
  %494 = vset.pattern.permute.xlu0 7
  %495 = vperm.xlu0 %494, %v53
  %v496 = vpop.permute.xlu0 %495
  %498 = vset.pattern.permute.xlu0 7
  %499 = vperm.xlu0 %498, %v54
  %v500 = vpop.permute.xlu0 %499
  %v502 = vmul.f32 %v472, %v462
  %v503 = vmul.f32 %v476, %v463
  %v504 = vmul.f32 %v480, %v464
  %v505 = vmul.f32 %v484, %v465
  %v506 = vmul.f32 %v488, %v466
  %v507 = vmul.f32 %v492, %v467
  %v508 = vmul.f32 %v496, %v468
  %v509 = vmul.f32 %v500, %v469
  %v510 = vadd.f32 %v453, %v502
  %v511 = vadd.f32 %v454, %v503
  %v512 = vadd.f32 %v455, %v504
  %v513 = vadd.f32 %v456, %v505
  %v514 = vadd.f32 %v457, %v506
  %v515 = vadd.f32 %v458, %v507
  %v516 = vadd.f32 %v459, %v508
  %v517 = vadd.f32 %v460, %v509
  %s518 = scalar_lea.vmem %s1, 512
  %v519 = vld [vmem:[%s518] sm:$0xff]
  %v520 = vld [vmem:[%s518 + $0x8] sm:$0xff]
  %v521 = vld [vmem:[%s518 + $0x10] sm:$0xff]
  %v522 = vld [vmem:[%s518 + $0x18] sm:$0xff]
  %v523 = vld [vmem:[%s518 + $0x20] sm:$0xff]
  %v524 = vld [vmem:[%s518 + $0x28] sm:$0xff]
  %v525 = vld [vmem:[%s518 + $0x30] sm:$0xff]
  %v526 = vld [vmem:[%s518 + $0x38] sm:$0xff]
  %527 = vset.pattern.permute.xlu0 8
  %528 = vperm.xlu0 %527, %v47
  %v529 = vpop.permute.xlu0 %528
  %531 = vset.pattern.permute.xlu0 8
  %532 = vperm.xlu0 %531, %v48
  %v533 = vpop.permute.xlu0 %532
  %535 = vset.pattern.permute.xlu0 8
  %536 = vperm.xlu0 %535, %v49
  %v537 = vpop.permute.xlu0 %536
  %539 = vset.pattern.permute.xlu0 8
  %540 = vperm.xlu0 %539, %v50
  %v541 = vpop.permute.xlu0 %540
  %543 = vset.pattern.permute.xlu0 8
  %544 = vperm.xlu0 %543, %v51
  %v545 = vpop.permute.xlu0 %544
  %547 = vset.pattern.permute.xlu0 8
  %548 = vperm.xlu0 %547, %v52
  %v549 = vpop.permute.xlu0 %548
  %551 = vset.pattern.permute.xlu0 8
  %552 = vperm.xlu0 %551, %v53
  %v553 = vpop.permute.xlu0 %552
  %555 = vset.pattern.permute.xlu0 8
  %556 = vperm.xlu0 %555, %v54
  %v557 = vpop.permute.xlu0 %556
  %v559 = vmul.f32 %v529, %v519
  %v560 = vmul.f32 %v533, %v520
  %v561 = vmul.f32 %v537, %v521
  %v562 = vmul.f32 %v541, %v522
  %v563 = vmul.f32 %v545, %v523
  %v564 = vmul.f32 %v549, %v524
  %v565 = vmul.f32 %v553, %v525
  %v566 = vmul.f32 %v557, %v526
  %v567 = vadd.f32 %v510, %v559
  %v568 = vadd.f32 %v511, %v560
  %v569 = vadd.f32 %v512, %v561
  %v570 = vadd.f32 %v513, %v562
  %v571 = vadd.f32 %v514, %v563
  %v572 = vadd.f32 %v515, %v564
  %v573 = vadd.f32 %v516, %v565
  %v574 = vadd.f32 %v517, %v566
  %s575 = scalar_lea.vmem %s1, 576
  %v576 = vld [vmem:[%s575] sm:$0xff]
  %v577 = vld [vmem:[%s575 + $0x8] sm:$0xff]
  %v578 = vld [vmem:[%s575 + $0x10] sm:$0xff]
  %v579 = vld [vmem:[%s575 + $0x18] sm:$0xff]
  %v580 = vld [vmem:[%s575 + $0x20] sm:$0xff]
  %v581 = vld [vmem:[%s575 + $0x28] sm:$0xff]
  %v582 = vld [vmem:[%s575 + $0x30] sm:$0xff]
  %v583 = vld [vmem:[%s575 + $0x38] sm:$0xff]
  %584 = vset.pattern.permute.xlu0 9
  %585 = vperm.xlu0 %584, %v47
  %v586 = vpop.permute.xlu0 %585
  %588 = vset.pattern.permute.xlu0 9
  %589 = vperm.xlu0 %588, %v48
  %v590 = vpop.permute.xlu0 %589
  %592 = vset.pattern.permute.xlu0 9
  %593 = vperm.xlu0 %592, %v49
  %v594 = vpop.permute.xlu0 %593
  %596 = vset.pattern.permute.xlu0 9
  %597 = vperm.xlu0 %596, %v50
  %v598 = vpop.permute.xlu0 %597
  %600 = vset.pattern.permute.xlu0 9
  %601 = vperm.xlu0 %600, %v51
  %v602 = vpop.permute.xlu0 %601
  %604 = vset.pattern.permute.xlu0 9
  %605 = vperm.xlu0 %604, %v52
  %v606 = vpop.permute.xlu0 %605
  %608 = vset.pattern.permute.xlu0 9
  %609 = vperm.xlu0 %608, %v53
  %v610 = vpop.permute.xlu0 %609
  %612 = vset.pattern.permute.xlu0 9
  %613 = vperm.xlu0 %612, %v54
  %v614 = vpop.permute.xlu0 %613
  %v616 = vmul.f32 %v586, %v576
  %v617 = vmul.f32 %v590, %v577
  %v618 = vmul.f32 %v594, %v578
  %v619 = vmul.f32 %v598, %v579
  %v620 = vmul.f32 %v602, %v580
  %v621 = vmul.f32 %v606, %v581
  %v622 = vmul.f32 %v610, %v582
  %v623 = vmul.f32 %v614, %v583
  %v624 = vadd.f32 %v567, %v616
  %v625 = vadd.f32 %v568, %v617
  %v626 = vadd.f32 %v569, %v618
  %v627 = vadd.f32 %v570, %v619
  %v628 = vadd.f32 %v571, %v620
  %v629 = vadd.f32 %v572, %v621
  %v630 = vadd.f32 %v573, %v622
  %v631 = vadd.f32 %v574, %v623
  %s632 = scalar_lea.vmem %s1, 640
  %v633 = vld [vmem:[%s632] sm:$0xff]
  %v634 = vld [vmem:[%s632 + $0x8] sm:$0xff]
  %v635 = vld [vmem:[%s632 + $0x10] sm:$0xff]
  %v636 = vld [vmem:[%s632 + $0x18] sm:$0xff]
  %v637 = vld [vmem:[%s632 + $0x20] sm:$0xff]
  %v638 = vld [vmem:[%s632 + $0x28] sm:$0xff]
  %v639 = vld [vmem:[%s632 + $0x30] sm:$0xff]
  %v640 = vld [vmem:[%s632 + $0x38] sm:$0xff]
  %641 = vset.pattern.permute.xlu0 10
  %642 = vperm.xlu0 %641, %v47
  %v643 = vpop.permute.xlu0 %642
  %645 = vset.pattern.permute.xlu0 10
  %646 = vperm.xlu0 %645, %v48
  %v647 = vpop.permute.xlu0 %646
  %649 = vset.pattern.permute.xlu0 10
  %650 = vperm.xlu0 %649, %v49
  %v651 = vpop.permute.xlu0 %650
  %653 = vset.pattern.permute.xlu0 10
  %654 = vperm.xlu0 %653, %v50
  %v655 = vpop.permute.xlu0 %654
  %657 = vset.pattern.permute.xlu0 10
  %658 = vperm.xlu0 %657, %v51
  %v659 = vpop.permute.xlu0 %658
  %661 = vset.pattern.permute.xlu0 10
  %662 = vperm.xlu0 %661, %v52
  %v663 = vpop.permute.xlu0 %662
  %665 = vset.pattern.permute.xlu0 10
  %666 = vperm.xlu0 %665, %v53
  %v667 = vpop.permute.xlu0 %666
  %669 = vset.pattern.permute.xlu0 10
  %670 = vperm.xlu0 %669, %v54
  %v671 = vpop.permute.xlu0 %670
  %v673 = vmul.f32 %v643, %v633
  %v674 = vmul.f32 %v647, %v634
  %v675 = vmul.f32 %v651, %v635
  %v676 = vmul.f32 %v655, %v636
  %v677 = vmul.f32 %v659, %v637
  %v678 = vmul.f32 %v663, %v638
  %v679 = vmul.f32 %v667, %v639
  %v680 = vmul.f32 %v671, %v640
  %v681 = vadd.f32 %v624, %v673
  %v682 = vadd.f32 %v625, %v674
  %v683 = vadd.f32 %v626, %v675
  %v684 = vadd.f32 %v627, %v676
  %v685 = vadd.f32 %v628, %v677
  %v686 = vadd.f32 %v629, %v678
  %v687 = vadd.f32 %v630, %v679
  %v688 = vadd.f32 %v631, %v680
  %s689 = scalar_lea.vmem %s1, 704
  %v690 = vld [vmem:[%s689] sm:$0xff]
  %v691 = vld [vmem:[%s689 + $0x8] sm:$0xff]
  %v692 = vld [vmem:[%s689 + $0x10] sm:$0xff]
  %v693 = vld [vmem:[%s689 + $0x18] sm:$0xff]
  %v694 = vld [vmem:[%s689 + $0x20] sm:$0xff]
  %v695 = vld [vmem:[%s689 + $0x28] sm:$0xff]
  %v696 = vld [vmem:[%s689 + $0x30] sm:$0xff]
  %v697 = vld [vmem:[%s689 + $0x38] sm:$0xff]
  %698 = vset.pattern.permute.xlu0 11
  %699 = vperm.xlu0 %698, %v47
  %v700 = vpop.permute.xlu0 %699
  %702 = vset.pattern.permute.xlu0 11
  %703 = vperm.xlu0 %702, %v48
  %v704 = vpop.permute.xlu0 %703
  %706 = vset.pattern.permute.xlu0 11
  %707 = vperm.xlu0 %706, %v49
  %v708 = vpop.permute.xlu0 %707
  %710 = vset.pattern.permute.xlu0 11
  %711 = vperm.xlu0 %710, %v50
  %v712 = vpop.permute.xlu0 %711
  %714 = vset.pattern.permute.xlu0 11
  %715 = vperm.xlu0 %714, %v51
  %v716 = vpop.permute.xlu0 %715
  %718 = vset.pattern.permute.xlu0 11
  %719 = vperm.xlu0 %718, %v52
  %v720 = vpop.permute.xlu0 %719
  %722 = vset.pattern.permute.xlu0 11
  %723 = vperm.xlu0 %722, %v53
  %v724 = vpop.permute.xlu0 %723
  %726 = vset.pattern.permute.xlu0 11
  %727 = vperm.xlu0 %726, %v54
  %v728 = vpop.permute.xlu0 %727
  %v730 = vmul.f32 %v700, %v690
  %v731 = vmul.f32 %v704, %v691
  %v732 = vmul.f32 %v708, %v692
  %v733 = vmul.f32 %v712, %v693
  %v734 = vmul.f32 %v716, %v694
  %v735 = vmul.f32 %v720, %v695
  %v736 = vmul.f32 %v724, %v696
  %v737 = vmul.f32 %v728, %v697
  %v738 = vadd.f32 %v681, %v730
  %v739 = vadd.f32 %v682, %v731
  %v740 = vadd.f32 %v683, %v732
  %v741 = vadd.f32 %v684, %v733
  %v742 = vadd.f32 %v685, %v734
  %v743 = vadd.f32 %v686, %v735
  %v744 = vadd.f32 %v687, %v736
  %v745 = vadd.f32 %v688, %v737
  %s746 = scalar_lea.vmem %s1, 768
  %v747 = vld [vmem:[%s746] sm:$0xff]
  %v748 = vld [vmem:[%s746 + $0x8] sm:$0xff]
  %v749 = vld [vmem:[%s746 + $0x10] sm:$0xff]
  %v750 = vld [vmem:[%s746 + $0x18] sm:$0xff]
  %v751 = vld [vmem:[%s746 + $0x20] sm:$0xff]
  %v752 = vld [vmem:[%s746 + $0x28] sm:$0xff]
  %v753 = vld [vmem:[%s746 + $0x30] sm:$0xff]
  %v754 = vld [vmem:[%s746 + $0x38] sm:$0xff]
  %755 = vset.pattern.permute.xlu0 12
  %756 = vperm.xlu0 %755, %v47
  %v757 = vpop.permute.xlu0 %756
  %759 = vset.pattern.permute.xlu0 12
  %760 = vperm.xlu0 %759, %v48
  %v761 = vpop.permute.xlu0 %760
  %763 = vset.pattern.permute.xlu0 12
  %764 = vperm.xlu0 %763, %v49
  %v765 = vpop.permute.xlu0 %764
  %767 = vset.pattern.permute.xlu0 12
  %768 = vperm.xlu0 %767, %v50
  %v769 = vpop.permute.xlu0 %768
  %771 = vset.pattern.permute.xlu0 12
  %772 = vperm.xlu0 %771, %v51
  %v773 = vpop.permute.xlu0 %772
  %775 = vset.pattern.permute.xlu0 12
  %776 = vperm.xlu0 %775, %v52
  %v777 = vpop.permute.xlu0 %776
  %779 = vset.pattern.permute.xlu0 12
  %780 = vperm.xlu0 %779, %v53
  %v781 = vpop.permute.xlu0 %780
  %783 = vset.pattern.permute.xlu0 12
  %784 = vperm.xlu0 %783, %v54
  %v785 = vpop.permute.xlu0 %784
  %v787 = vmul.f32 %v757, %v747
  %v788 = vmul.f32 %v761, %v748
  %v789 = vmul.f32 %v765, %v749
  %v790 = vmul.f32 %v769, %v750
  %v791 = vmul.f32 %v773, %v751
  %v792 = vmul.f32 %v777, %v752
  %v793 = vmul.f32 %v781, %v753
  %v794 = vmul.f32 %v785, %v754
  %v795 = vadd.f32 %v738, %v787
  %v796 = vadd.f32 %v739, %v788
  %v797 = vadd.f32 %v740, %v789
  %v798 = vadd.f32 %v741, %v790
  %v799 = vadd.f32 %v742, %v791
  %v800 = vadd.f32 %v743, %v792
  %v801 = vadd.f32 %v744, %v793
  %v802 = vadd.f32 %v745, %v794
  %s803 = scalar_lea.vmem %s1, 832
  %v804 = vld [vmem:[%s803] sm:$0xff]
  %v805 = vld [vmem:[%s803 + $0x8] sm:$0xff]
  %v806 = vld [vmem:[%s803 + $0x10] sm:$0xff]
  %v807 = vld [vmem:[%s803 + $0x18] sm:$0xff]
  %v808 = vld [vmem:[%s803 + $0x20] sm:$0xff]
  %v809 = vld [vmem:[%s803 + $0x28] sm:$0xff]
  %v810 = vld [vmem:[%s803 + $0x30] sm:$0xff]
  %v811 = vld [vmem:[%s803 + $0x38] sm:$0xff]
  %812 = vset.pattern.permute.xlu0 13
  %813 = vperm.xlu0 %812, %v47
  %v814 = vpop.permute.xlu0 %813
  %816 = vset.pattern.permute.xlu0 13
  %817 = vperm.xlu0 %816, %v48
  %v818 = vpop.permute.xlu0 %817
  %820 = vset.pattern.permute.xlu0 13
  %821 = vperm.xlu0 %820, %v49
  %v822 = vpop.permute.xlu0 %821
  %824 = vset.pattern.permute.xlu0 13
  %825 = vperm.xlu0 %824, %v50
  %v826 = vpop.permute.xlu0 %825
  %828 = vset.pattern.permute.xlu0 13
  %829 = vperm.xlu0 %828, %v51
  %v830 = vpop.permute.xlu0 %829
  %832 = vset.pattern.permute.xlu0 13
  %833 = vperm.xlu0 %832, %v52
  %v834 = vpop.permute.xlu0 %833
  %836 = vset.pattern.permute.xlu0 13
  %837 = vperm.xlu0 %836, %v53
  %v838 = vpop.permute.xlu0 %837
  %840 = vset.pattern.permute.xlu0 13
  %841 = vperm.xlu0 %840, %v54
  %v842 = vpop.permute.xlu0 %841
  %v844 = vmul.f32 %v814, %v804
  %v845 = vmul.f32 %v818, %v805
  %v846 = vmul.f32 %v822, %v806
  %v847 = vmul.f32 %v826, %v807
  %v848 = vmul.f32 %v830, %v808
  %v849 = vmul.f32 %v834, %v809
  %v850 = vmul.f32 %v838, %v810
  %v851 = vmul.f32 %v842, %v811
  %v852 = vadd.f32 %v795, %v844
  %v853 = vadd.f32 %v796, %v845
  %v854 = vadd.f32 %v797, %v846
  %v855 = vadd.f32 %v798, %v847
  %v856 = vadd.f32 %v799, %v848
  %v857 = vadd.f32 %v800, %v849
  %v858 = vadd.f32 %v801, %v850
  %v859 = vadd.f32 %v802, %v851
  %s860 = scalar_lea.vmem %s1, 896
  %v861 = vld [vmem:[%s860] sm:$0xff]
  %v862 = vld [vmem:[%s860 + $0x8] sm:$0xff]
  %v863 = vld [vmem:[%s860 + $0x10] sm:$0xff]
  %v864 = vld [vmem:[%s860 + $0x18] sm:$0xff]
  %v865 = vld [vmem:[%s860 + $0x20] sm:$0xff]
  %v866 = vld [vmem:[%s860 + $0x28] sm:$0xff]
  %v867 = vld [vmem:[%s860 + $0x30] sm:$0xff]
  %v868 = vld [vmem:[%s860 + $0x38] sm:$0xff]
  %869 = vset.pattern.permute.xlu0 14
  %870 = vperm.xlu0 %869, %v47
  %v871 = vpop.permute.xlu0 %870
  %873 = vset.pattern.permute.xlu0 14
  %874 = vperm.xlu0 %873, %v48
  %v875 = vpop.permute.xlu0 %874
  %877 = vset.pattern.permute.xlu0 14
  %878 = vperm.xlu0 %877, %v49
  %v879 = vpop.permute.xlu0 %878
  %881 = vset.pattern.permute.xlu0 14
  %882 = vperm.xlu0 %881, %v50
  %v883 = vpop.permute.xlu0 %882
  %885 = vset.pattern.permute.xlu0 14
  %886 = vperm.xlu0 %885, %v51
  %v887 = vpop.permute.xlu0 %886
  %889 = vset.pattern.permute.xlu0 14
  %890 = vperm.xlu0 %889, %v52
  %v891 = vpop.permute.xlu0 %890
  %893 = vset.pattern.permute.xlu0 14
  %894 = vperm.xlu0 %893, %v53
  %v895 = vpop.permute.xlu0 %894
  %897 = vset.pattern.permute.xlu0 14
  %898 = vperm.xlu0 %897, %v54
  %v899 = vpop.permute.xlu0 %898
  %v901 = vmul.f32 %v871, %v861
  %v902 = vmul.f32 %v875, %v862
  %v903 = vmul.f32 %v879, %v863
  %v904 = vmul.f32 %v883, %v864
  %v905 = vmul.f32 %v887, %v865
  %v906 = vmul.f32 %v891, %v866
  %v907 = vmul.f32 %v895, %v867
  %v908 = vmul.f32 %v899, %v868
  %v909 = vadd.f32 %v852, %v901
  %v910 = vadd.f32 %v853, %v902
  %v911 = vadd.f32 %v854, %v903
  %v912 = vadd.f32 %v855, %v904
  %v913 = vadd.f32 %v856, %v905
  %v914 = vadd.f32 %v857, %v906
  %v915 = vadd.f32 %v858, %v907
  %v916 = vadd.f32 %v859, %v908
  %s917 = scalar_lea.vmem %s1, 960
  %v918 = vld [vmem:[%s917] sm:$0xff]
  %v919 = vld [vmem:[%s917 + $0x8] sm:$0xff]
  %v920 = vld [vmem:[%s917 + $0x10] sm:$0xff]
  %v921 = vld [vmem:[%s917 + $0x18] sm:$0xff]
  %v922 = vld [vmem:[%s917 + $0x20] sm:$0xff]
  %v923 = vld [vmem:[%s917 + $0x28] sm:$0xff]
  %v924 = vld [vmem:[%s917 + $0x30] sm:$0xff]
  %v925 = vld [vmem:[%s917 + $0x38] sm:$0xff]
  %926 = vset.pattern.permute.xlu0 15
  %927 = vperm.xlu0 %926, %v47
  %v928 = vpop.permute.xlu0 %927
  %930 = vset.pattern.permute.xlu0 15
  %931 = vperm.xlu0 %930, %v48
  %v932 = vpop.permute.xlu0 %931
  %934 = vset.pattern.permute.xlu0 15
  %935 = vperm.xlu0 %934, %v49
  %v936 = vpop.permute.xlu0 %935
  %938 = vset.pattern.permute.xlu0 15
  %939 = vperm.xlu0 %938, %v50
  %v940 = vpop.permute.xlu0 %939
  %942 = vset.pattern.permute.xlu0 15
  %943 = vperm.xlu0 %942, %v51
  %v944 = vpop.permute.xlu0 %943
  %946 = vset.pattern.permute.xlu0 15
  %947 = vperm.xlu0 %946, %v52
  %v948 = vpop.permute.xlu0 %947
  %950 = vset.pattern.permute.xlu0 15
  %951 = vperm.xlu0 %950, %v53
  %v952 = vpop.permute.xlu0 %951
  %954 = vset.pattern.permute.xlu0 15
  %955 = vperm.xlu0 %954, %v54
  %v956 = vpop.permute.xlu0 %955
  %v958 = vmul.f32 %v928, %v918
  %v959 = vmul.f32 %v932, %v919
  %v960 = vmul.f32 %v936, %v920
  %v961 = vmul.f32 %v940, %v921
  %v962 = vmul.f32 %v944, %v922
  %v963 = vmul.f32 %v948, %v923
  %v964 = vmul.f32 %v952, %v924
  %v965 = vmul.f32 %v956, %v925
  %v966 = vadd.f32 %v909, %v958
  %v967 = vadd.f32 %v910, %v959
  %v968 = vadd.f32 %v911, %v960
  %v969 = vadd.f32 %v912, %v961
  %v970 = vadd.f32 %v913, %v962
  %v971 = vadd.f32 %v914, %v963
  %v972 = vadd.f32 %v915, %v964
  %v973 = vadd.f32 %v916, %v965
  %978 = vrot.lane.b32.xlu0 %v970, 24
  %v979 = vpop.permute.xlu0 %978
  %980 = vrot.lane.b32.xlu0 %v971, 24
  %v981 = vpop.permute.xlu0 %980
  %982 = vrot.lane.b32.xlu0 %v972, 24
  %v983 = vpop.permute.xlu0 %982
  %984 = vrot.lane.b32.xlu0 %v973, 24
  %v985 = vpop.permute.xlu0 %984
  %vm990 = vcmask 195584
  %v991 = vsel %vm990, %v966, %v979
  %v992 = vsel %vm990, %v967, %v981
  %v993 = vsel %vm990, %v968, %v983
  %v994 = vsel %vm990, %v969, %v985
  %999 = vrot.lane.b32.xlu0 %v966, 127
  %v1000 = vpop.permute.xlu0 %999
  %1001 = vrot.lane.b32.xlu0 %v967, 127
  %v1002 = vpop.permute.xlu0 %1001
  %1003 = vrot.lane.b32.xlu0 %v968, 127
  %v1004 = vpop.permute.xlu0 %1003
  %1005 = vrot.lane.b32.xlu0 %v969, 127
  %v1006 = vpop.permute.xlu0 %1005
  %1011 = vrot.lane.b32.xlu0 %v970, 23
  %v1012 = vpop.permute.xlu0 %1011
  %1013 = vrot.lane.b32.xlu0 %v971, 23
  %v1014 = vpop.permute.xlu0 %1013
  %1015 = vrot.lane.b32.xlu0 %v972, 23
  %v1016 = vpop.permute.xlu0 %1015
  %1017 = vrot.lane.b32.xlu0 %v973, 23
  %v1018 = vpop.permute.xlu0 %1017
  %v1023 = vsel %vm990, %v1000, %v1012
  %v1024 = vsel %vm990, %v1002, %v1014
  %v1025 = vsel %vm990, %v1004, %v1016
  %v1026 = vsel %vm990, %v1006, %v1018
  %1027 = vrot.lane.b32.xlu0 %v966, 126
  %v1028 = vpop.permute.xlu0 %1027
  %1029 = vrot.lane.b32.xlu0 %v967, 126
  %v1030 = vpop.permute.xlu0 %1029
  %1031 = vrot.lane.b32.xlu0 %v968, 126
  %v1032 = vpop.permute.xlu0 %1031
  %1033 = vrot.lane.b32.xlu0 %v969, 126
  %v1034 = vpop.permute.xlu0 %1033
  %1039 = vrot.lane.b32.xlu0 %v970, 22
  %v1040 = vpop.permute.xlu0 %1039
  %1041 = vrot.lane.b32.xlu0 %v971, 22
  %v1042 = vpop.permute.xlu0 %1041
  %1043 = vrot.lane.b32.xlu0 %v972, 22
  %v1044 = vpop.permute.xlu0 %1043
  %1045 = vrot.lane.b32.xlu0 %v973, 22
  %v1046 = vpop.permute.xlu0 %1045
  %v1051 = vsel %vm990, %v1028, %v1040
  %v1052 = vsel %vm990, %v1030, %v1042
  %v1053 = vsel %vm990, %v1032, %v1044
  %v1054 = vsel %vm990, %v1034, %v1046
  %1055 = vrot.lane.b32.xlu0 %v966, 122
  %v1056 = vpop.permute.xlu0 %1055
  %1057 = vrot.lane.b32.xlu0 %v967, 122
  %v1058 = vpop.permute.xlu0 %1057
  %1059 = vrot.lane.b32.xlu0 %v968, 122
  %v1060 = vpop.permute.xlu0 %1059
  %1061 = vrot.lane.b32.xlu0 %v969, 122
  %v1062 = vpop.permute.xlu0 %1061
  %1067 = vrot.lane.b32.xlu0 %v970, 18
  %v1068 = vpop.permute.xlu0 %1067
  %1069 = vrot.lane.b32.xlu0 %v971, 18
  %v1070 = vpop.permute.xlu0 %1069
  %1071 = vrot.lane.b32.xlu0 %v972, 18
  %v1072 = vpop.permute.xlu0 %1071
  %1073 = vrot.lane.b32.xlu0 %v973, 18
  %v1074 = vpop.permute.xlu0 %1073
  %v1079 = vsel %vm990, %v1056, %v1068
  %v1080 = vsel %vm990, %v1058, %v1070
  %v1081 = vsel %vm990, %v1060, %v1072
  %v1082 = vsel %vm990, %v1062, %v1074
  %1083 = vrot.lane.b32.xlu0 %v966, 121
  %v1084 = vpop.permute.xlu0 %1083
  %1085 = vrot.lane.b32.xlu0 %v967, 121
  %v1086 = vpop.permute.xlu0 %1085
  %1087 = vrot.lane.b32.xlu0 %v968, 121
  %v1088 = vpop.permute.xlu0 %1087
  %1089 = vrot.lane.b32.xlu0 %v969, 121
  %v1090 = vpop.permute.xlu0 %1089
  %1095 = vrot.lane.b32.xlu0 %v970, 17
  %v1096 = vpop.permute.xlu0 %1095
  %1097 = vrot.lane.b32.xlu0 %v971, 17
  %v1098 = vpop.permute.xlu0 %1097
  %1099 = vrot.lane.b32.xlu0 %v972, 17
  %v1100 = vpop.permute.xlu0 %1099
  %1101 = vrot.lane.b32.xlu0 %v973, 17
  %v1102 = vpop.permute.xlu0 %1101
  %v1107 = vsel %vm990, %v1084, %v1096
  %v1108 = vsel %vm990, %v1086, %v1098
  %v1109 = vsel %vm990, %v1088, %v1100
  %v1110 = vsel %vm990, %v1090, %v1102
  %1111 = vrot.lane.b32.xlu0 %v966, 120
  %v1112 = vpop.permute.xlu0 %1111
  %1113 = vrot.lane.b32.xlu0 %v967, 120
  %v1114 = vpop.permute.xlu0 %1113
  %1115 = vrot.lane.b32.xlu0 %v968, 120
  %v1116 = vpop.permute.xlu0 %1115
  %1117 = vrot.lane.b32.xlu0 %v969, 120
  %v1118 = vpop.permute.xlu0 %1117
  %1123 = vrot.lane.b32.xlu0 %v970, 16
  %v1124 = vpop.permute.xlu0 %1123
  %1125 = vrot.lane.b32.xlu0 %v971, 16
  %v1126 = vpop.permute.xlu0 %1125
  %1127 = vrot.lane.b32.xlu0 %v972, 16
  %v1128 = vpop.permute.xlu0 %1127
  %1129 = vrot.lane.b32.xlu0 %v973, 16
  %v1130 = vpop.permute.xlu0 %1129
  %v1135 = vsel %vm990, %v1112, %v1124
  %v1136 = vsel %vm990, %v1114, %v1126
  %v1137 = vsel %vm990, %v1116, %v1128
  %v1138 = vsel %vm990, %v1118, %v1130
  %1139 = vrot.lane.b32.xlu0 %v966, 116
  %v1140 = vpop.permute.xlu0 %1139
  %1141 = vrot.lane.b32.xlu0 %v967, 116
  %v1142 = vpop.permute.xlu0 %1141
  %1143 = vrot.lane.b32.xlu0 %v968, 116
  %v1144 = vpop.permute.xlu0 %1143
  %1145 = vrot.lane.b32.xlu0 %v969, 116
  %v1146 = vpop.permute.xlu0 %1145
  %1151 = vrot.lane.b32.xlu0 %v970, 12
  %v1152 = vpop.permute.xlu0 %1151
  %1153 = vrot.lane.b32.xlu0 %v971, 12
  %v1154 = vpop.permute.xlu0 %1153
  %1155 = vrot.lane.b32.xlu0 %v972, 12
  %v1156 = vpop.permute.xlu0 %1155
  %1157 = vrot.lane.b32.xlu0 %v973, 12
  %v1158 = vpop.permute.xlu0 %1157
  %v1163 = vsel %vm990, %v1140, %v1152
  %v1164 = vsel %vm990, %v1142, %v1154
  %v1165 = vsel %vm990, %v1144, %v1156
  %v1166 = vsel %vm990, %v1146, %v1158
  %1167 = vrot.lane.b32.xlu0 %v966, 115
  %v1168 = vpop.permute.xlu0 %1167
  %1169 = vrot.lane.b32.xlu0 %v967, 115
  %v1170 = vpop.permute.xlu0 %1169
  %1171 = vrot.lane.b32.xlu0 %v968, 115
  %v1172 = vpop.permute.xlu0 %1171
  %1173 = vrot.lane.b32.xlu0 %v969, 115
  %v1174 = vpop.permute.xlu0 %1173
  %1179 = vrot.lane.b32.xlu0 %v970, 11
  %v1180 = vpop.permute.xlu0 %1179
  %1181 = vrot.lane.b32.xlu0 %v971, 11
  %v1182 = vpop.permute.xlu0 %1181
  %1183 = vrot.lane.b32.xlu0 %v972, 11
  %v1184 = vpop.permute.xlu0 %1183
  %1185 = vrot.lane.b32.xlu0 %v973, 11
  %v1186 = vpop.permute.xlu0 %1185
  %v1191 = vsel %vm990, %v1168, %v1180
  %v1192 = vsel %vm990, %v1170, %v1182
  %v1193 = vsel %vm990, %v1172, %v1184
  %v1194 = vsel %vm990, %v1174, %v1186
  %1195 = vrot.lane.b32.xlu0 %v966, 114
  %v1196 = vpop.permute.xlu0 %1195
  %1197 = vrot.lane.b32.xlu0 %v967, 114
  %v1198 = vpop.permute.xlu0 %1197
  %1199 = vrot.lane.b32.xlu0 %v968, 114
  %v1200 = vpop.permute.xlu0 %1199
  %1201 = vrot.lane.b32.xlu0 %v969, 114
  %v1202 = vpop.permute.xlu0 %1201
  %1207 = vrot.lane.b32.xlu0 %v970, 10
  %v1208 = vpop.permute.xlu0 %1207
  %1209 = vrot.lane.b32.xlu0 %v971, 10
  %v1210 = vpop.permute.xlu0 %1209
  %1211 = vrot.lane.b32.xlu0 %v972, 10
  %v1212 = vpop.permute.xlu0 %1211
  %1213 = vrot.lane.b32.xlu0 %v973, 10
  %v1214 = vpop.permute.xlu0 %1213
  %v1219 = vsel %vm990, %v1196, %v1208
  %v1220 = vsel %vm990, %v1198, %v1210
  %v1221 = vsel %vm990, %v1200, %v1212
  %v1222 = vsel %vm990, %v1202, %v1214
  %v1223 = vld [vmem:[%s3] sm:$0xff]
  %v1224 = vld [vmem:[%s3 + $0x8] sm:$0xff]
  %v1225 = vld [vmem:[%s3 + $0x10] sm:$0xff]
  %v1226 = vld [vmem:[%s3 + $0x18] sm:$0xff]
  %v1227 = vld [vmem:[%s3 + $0x20] sm:$0xff]
  %v1228 = vld [vmem:[%s3 + $0x28] sm:$0xff]
  %v1229 = vld [vmem:[%s3 + $0x30] sm:$0xff]
  %v1230 = vld [vmem:[%s3 + $0x38] sm:$0xff]
  %v1231 = vld [vmem:[%s3 + $0x40] sm:$0xff]
  %v1232 = vld [vmem:[%s3 + $0x48] sm:$0xff]
  %v1233 = vld [vmem:[%s3 + $0x50] sm:$0xff]
  %v1234 = vld [vmem:[%s3 + $0x58] sm:$0xff]
  %v1235 = vld [vmem:[%s3 + $0x60] sm:$0xff]
  %v1236 = vld [vmem:[%s3 + $0x68] sm:$0xff]
  %v1237 = vld [vmem:[%s3 + $0x70] sm:$0xff]
  %v1238 = vld [vmem:[%s3 + $0x78] sm:$0xff]
  %v1239 = vld [vmem:[%s3 + $0x80] sm:$0xff]
  %v1240 = vld [vmem:[%s3 + $0x88] sm:$0xff]
  %v1241 = vld [vmem:[%s3 + $0x90] sm:$0xff]
  %v1242 = vld [vmem:[%s3 + $0x98] sm:$0xff]
  %v1243 = vld [vmem:[%s3 + $0xa0] sm:$0xff]
  %v1244 = vld [vmem:[%s3 + $0xa8] sm:$0xff]
  %v1245 = vld [vmem:[%s3 + $0xb0] sm:$0xff]
  %v1246 = vld [vmem:[%s3 + $0xb8] sm:$0xff]
  %vm1247 = vcmask 261120
  %v1249 = vsel %vm1247, %v1225, 0
  %v1252 = vsel %vm1247, %v1228, 0
  %v1255 = vsel %vm1247, %v1231, 0
  %v1258 = vsel %vm1247, %v1234, 0
  %v1261 = vsel %vm1247, %v1237, 0
  %v1264 = vsel %vm1247, %v1240, 0
  %v1267 = vsel %vm1247, %v1243, 0
  %v1270 = vsel %vm1247, %v1246, 0
  %1272 = vmatprep.subr.mxu0 0.0
  %1273 = vmatpush1.msra.mxu0 %v991
  %1274 = vmatprep.subr.mxu0 0.0
  %1275 = vmatpush1.msra.mxu0 %v992
  %1276 = vmatprep.subr.mxu0 0.0
  %1277 = vmatpush1.msra.mxu0 %v993
  %1278 = vmatprep.subr.mxu0 0.0
  %1279 = vmatpush1.msra.mxu0 %v994
  %1280 = vmatprep.subr.mxu0 0.0
  %1281 = vmatpush1.msra.mxu0 %v1023
  %1282 = vmatprep.subr.mxu0 0.0
  %1283 = vmatpush1.msra.mxu0 %v1024
  %1284 = vmatprep.subr.mxu0 0.0
  %1285 = vmatpush1.msra.mxu0 %v1025
  %1286 = vmatprep.subr.mxu0 0.0
  %1287 = vmatpush1.msra.mxu0 %v1026
  %1288 = vmatprep.subr.mxu0 0.0
  %1289 = vmatpush1.msra.mxu0 %v1051
  %1290 = vmatprep.subr.mxu0 0.0
  %1291 = vmatpush1.msra.mxu0 %v1052
  %1292 = vmatprep.subr.mxu0 0.0
  %1293 = vmatpush1.msra.mxu0 %v1053
  %1294 = vmatprep.subr.mxu0 0.0
  %1295 = vmatpush1.msra.mxu0 %v1054
  %1296 = vmatprep.subr.mxu0 0.0
  %1297 = vmatpush1.msra.mxu0 %v1079
  %1298 = vmatprep.subr.mxu0 0.0
  %1299 = vmatpush1.msra.mxu0 %v1080
  %1300 = vmatprep.subr.mxu0 0.0
  %1301 = vmatpush1.msra.mxu0 %v1081
  %1302 = vmatprep.subr.mxu0 0.0
  %1303 = vmatpush1.msra.mxu0 %v1082
  %1304 = vmatprep.subr.mxu0 0.0
  %1305 = vmatpush1.msra.mxu0 %v1107
  %1306 = vmatprep.subr.mxu0 0.0
  %1307 = vmatpush1.msra.mxu0 %v1108
  %1308 = vmatprep.subr.mxu0 0.0
  %1309 = vmatpush1.msra.mxu0 %v1109
  %1310 = vmatprep.subr.mxu0 0.0
  %1311 = vmatpush1.msra.mxu0 %v1110
  %1312 = vmatprep.subr.mxu0 0.0
  %1313 = vmatpush1.msra.mxu0 %v1135
  %1314 = vmatprep.subr.mxu0 0.0
  %1315 = vmatpush1.msra.mxu0 %v1136
  %1316 = vmatprep.subr.mxu0 0.0
  %1317 = vmatpush1.msra.mxu0 %v1137
  %1318 = vmatprep.subr.mxu0 0.0
  %1319 = vmatpush1.msra.mxu0 %v1138
  %1320 = vmatprep.subr.mxu0 0.0
  %1321 = vmatpush1.msra.mxu0 %v1163
  %1322 = vmatprep.subr.mxu0 0.0
  %1323 = vmatpush1.msra.mxu0 %v1164
  %1324 = vmatprep.subr.mxu0 0.0
  %1325 = vmatpush1.msra.mxu0 %v1165
  %1326 = vmatprep.subr.mxu0 0.0
  %1327 = vmatpush1.msra.mxu0 %v1166
  %1328 = vmatprep.subr.mxu0 0.0
  %1329 = vmatpush1.msra.mxu0 %v1191
  %1330 = vmatprep.subr.mxu0 0.0
  %1331 = vmatpush1.msra.mxu0 %v1192
  %1332 = vmatprep.subr.mxu0 0.0
  %1333 = vmatpush1.msra.mxu0 %v1193
  %1334 = vmatprep.subr.mxu0 0.0
  %1335 = vmatpush1.msra.mxu0 %v1194
  %1336 = vmatprep.mubr.f32.mxu0 %v1224
  %1337 = vmatmul.mubr.f32.gmra.mrb[0].mxu0 %v1223
  %v1338 = vpop.f32.mrb[0].mxu0
  %v1339 = vadd.f32 0.0, %v1338
  %v1340 = vpop.f32.mrb[0].mxu0
  %1341 = vmatprep.mubr.f32.mxu0 %v1227
  %1342 = vmatmul.mubr.f32.gmra.mrb[0].mxu0 %v1226
  %v1343 = vpop.f32.mrb[0].mxu0
  %v1344 = vadd.f32 0.0, %v1343
  %v1345 = vpop.f32.mrb[0].mxu0
  %1346 = vmatprep.mubr.f32.mxu0 %v1230
  %1347 = vmatmul.mubr.f32.gmra.mrb[0].mxu0 %v1229
  %v1348 = vpop.f32.mrb[0].mxu0
  %v1349 = vadd.f32 0.0, %v1348
  %v1350 = vpop.f32.mrb[0].mxu0
  %1351 = vmatprep.mubr.f32.mxu0 %v1233
  %1352 = vmatmul.mubr.f32.gmra.mrb[0].mxu0 %v1232
  %v1353 = vpop.f32.mrb[0].mxu0
  %v1354 = vadd.f32 0.0, %v1353
  %v1355 = vpop.f32.mrb[0].mxu0
  %1356 = vmatprep.mubr.f32.mxu0 %v1236
  %1357 = vmatmul.mubr.f32.gmra.mrb[0].mxu0 %v1235
  %v1358 = vpop.f32.mrb[0].mxu0
  %v1359 = vadd.f32 0.0, %v1358
  %v1360 = vpop.f32.mrb[0].mxu0
  %1361 = vmatprep.mubr.f32.mxu0 %v1239
  %1362 = vmatmul.mubr.f32.gmra.mrb[0].mxu0 %v1238
  %v1363 = vpop.f32.mrb[0].mxu0
  %v1364 = vadd.f32 0.0, %v1363
  %v1365 = vpop.f32.mrb[0].mxu0
  %1366 = vmatprep.mubr.f32.mxu0 %v1242
  %1367 = vmatmul.mubr.f32.gmra.mrb[0].mxu0 %v1241
  %v1368 = vpop.f32.mrb[0].mxu0
  %v1369 = vadd.f32 0.0, %v1368
  %v1370 = vpop.f32.mrb[0].mxu0
  %1371 = vmatprep.mubr.f32.mxu0 %v1245
  %1372 = vmatmul.mubr.f32.gmra.mrb[0].mxu0 %v1244
  %v1373 = vpop.f32.mrb[0].mxu0
  %v1374 = vadd.f32 0.0, %v1373
  %v1375 = vpop.f32.mrb[0].mxu0
  %1376 = vdwg.mxu0
  %1377 = vmatprep.subr.mxu0 0.0
  %1378 = vmatpush1.msra.mxu0 %v1219
  %1379 = vmatprep.subr.mxu0 0.0
  %1380 = vmatpush1.msra.mxu0 %v1220
  %1381 = vmatprep.subr.mxu0 0.0
  %1382 = vmatpush1.msra.mxu0 %v1221
  %1383 = vmatprep.subr.mxu0 0.0
  %1384 = vmatpush1.msra.mxu0 %v1222
  %1385 = vmatprep.subr.mxu0 0.0
  %1386 = vmatpush1.msra.mxu0 0.0
  %1387 = vmatprep.subr.mxu0 0.0
  %1388 = vmatpush1.msra.mxu0 0.0
  %1389 = vmatprep.subr.mxu0 0.0
  %1390 = vmatpush1.msra.mxu0 0.0
  %1391 = vmatprep.subr.mxu0 0.0
  %1392 = vmatpush1.msra.mxu0 0.0
  %1393 = vmatprep.subr.mxu0 0.0
  %1394 = vmatpush1.msra.mxu0 0.0
  %1395 = vmatprep.subr.mxu0 0.0
  %1396 = vmatpush1.msra.mxu0 0.0
  %1397 = vmatprep.subr.mxu0 0.0
  %1398 = vmatpush1.msra.mxu0 0.0
  %1399 = vmatprep.subr.mxu0 0.0
  %1400 = vmatpush1.msra.mxu0 0.0
  %1401 = vmatprep.subr.mxu0 0.0
  %1402 = vmatpush1.msra.mxu0 0.0
  %1403 = vmatprep.subr.mxu0 0.0
  %1404 = vmatpush1.msra.mxu0 0.0
  %1405 = vmatprep.subr.mxu0 0.0
  %1406 = vmatpush1.msra.mxu0 0.0
  %1407 = vmatprep.subr.mxu0 0.0
  %1408 = vmatpush1.msra.mxu0 0.0
  %1409 = vmatprep.subr.mxu0 0.0
  %1410 = vmatpush1.msra.mxu0 0.0
  %1411 = vmatprep.subr.mxu0 0.0
  %1412 = vmatpush1.msra.mxu0 0.0
  %1413 = vmatprep.subr.mxu0 0.0
  %1414 = vmatpush1.msra.mxu0 0.0
  %1415 = vmatprep.subr.mxu0 0.0
  %1416 = vmatpush1.msra.mxu0 0.0
  %1417 = vmatprep.subr.mxu0 0.0
  %1418 = vmatpush1.msra.mxu0 0.0
  %1419 = vmatprep.subr.mxu0 0.0
  %1420 = vmatpush1.msra.mxu0 0.0
  %1421 = vmatprep.subr.mxu0 0.0
  %1422 = vmatpush1.msra.mxu0 0.0
  %1423 = vmatprep.subr.mxu0 0.0
  %1424 = vmatpush1.msra.mxu0 0.0
  %1425 = vmatprep.subr.mxu0 0.0
  %1426 = vmatpush1.msra.mxu0 0.0
  %1427 = vmatprep.subr.mxu0 0.0
  %1428 = vmatpush1.msra.mxu0 0.0
  %1429 = vmatprep.subr.mxu0 0.0
  %1430 = vmatpush1.msra.mxu0 0.0
  %1431 = vmatprep.subr.mxu0 0.0
  %1432 = vmatpush1.msra.mxu0 0.0
  %1433 = vmatprep.subr.mxu0 0.0
  %1434 = vmatpush1.msra.mxu0 0.0
  %1435 = vmatprep.subr.mxu0 0.0
  %1436 = vmatpush1.msra.mxu0 0.0
  %1437 = vmatprep.subr.mxu0 0.0
  %1438 = vmatpush1.msra.mxu0 0.0
  %1439 = vmatprep.subr.mxu0 0.0
  %1440 = vmatpush1.msra.mxu0 0.0
  %1441 = vmatprep.mubr.f32.mxu0 0.0
  %1442 = vmatmul.mubr.f32.gmra.mrb[0].mxu0 %v1249
  %v1443 = vpop.f32.mrb[0].mxu0
  %v1444 = vadd.f32 %v1339, %v1443
  %v1445 = vpop.f32.mrb[0].mxu0
  %1446 = vmatprep.mubr.f32.mxu0 0.0
  %1447 = vmatmul.mubr.f32.gmra.mrb[0].mxu0 %v1252
  %v1448 = vpop.f32.mrb[0].mxu0
  %v1449 = vadd.f32 %v1344, %v1448
  %v1450 = vpop.f32.mrb[0].mxu0
  %1451 = vmatprep.mubr.f32.mxu0 0.0
  %1452 = vmatmul.mubr.f32.gmra.mrb[0].mxu0 %v1255
  %v1453 = vpop.f32.mrb[0].mxu0
  %v1454 = vadd.f32 %v1349, %v1453
  %v1455 = vpop.f32.mrb[0].mxu0
  %1456 = vmatprep.mubr.f32.mxu0 0.0
  %1457 = vmatmul.mubr.f32.gmra.mrb[0].mxu0 %v1258
  %v1458 = vpop.f32.mrb[0].mxu0
  %v1459 = vadd.f32 %v1354, %v1458
  %v1460 = vpop.f32.mrb[0].mxu0
  %1461 = vmatprep.mubr.f32.mxu0 0.0
  %1462 = vmatmul.mubr.f32.gmra.mrb[0].mxu0 %v1261
  %v1463 = vpop.f32.mrb[0].mxu0
  %v1464 = vadd.f32 %v1359, %v1463
  %v1465 = vpop.f32.mrb[0].mxu0
  %1466 = vmatprep.mubr.f32.mxu0 0.0
  %1467 = vmatmul.mubr.f32.gmra.mrb[0].mxu0 %v1264
  %v1468 = vpop.f32.mrb[0].mxu0
  %v1469 = vadd.f32 %v1364, %v1468
  %v1470 = vpop.f32.mrb[0].mxu0
  %1471 = vmatprep.mubr.f32.mxu0 0.0
  %1472 = vmatmul.mubr.f32.gmra.mrb[0].mxu0 %v1267
  %v1473 = vpop.f32.mrb[0].mxu0
  %v1474 = vadd.f32 %v1369, %v1473
  %v1475 = vpop.f32.mrb[0].mxu0
  %1476 = vmatprep.mubr.f32.mxu0 0.0
  %1477 = vmatmul.mubr.f32.gmra.mrb[0].mxu0 %v1270
  %v1478 = vpop.f32.mrb[0].mxu0
  %v1479 = vadd.f32 %v1374, %v1478
  %v1480 = vpop.f32.mrb[0].mxu0
  %1481 = vdwg.mxu0
  %1484 = vrot.lane.b32.xlu0 %v1454, 24
  %v1485 = vpop.permute.xlu0 %1484
  %1486 = vrot.lane.b32.xlu0 %v1459, 24
  %v1487 = vpop.permute.xlu0 %1486
  %1492 = vrot.lane.b32.xlu0 %v1464, 48
  %v1493 = vpop.permute.xlu0 %1492
  %1494 = vrot.lane.b32.xlu0 %v1469, 48
  %v1495 = vpop.permute.xlu0 %1494
  %1500 = vrot.lane.b32.xlu0 %v1474, 72
  %v1501 = vpop.permute.xlu0 %1500
  %1502 = vrot.lane.b32.xlu0 %v1479, 72
  %v1503 = vpop.permute.xlu0 %1502
  %v1506 = vsel %vm990, %v1444, %v1485
  %v1507 = vsel %vm990, %v1449, %v1487
  %vm1508 = vcmask 392192
  %v1509 = vsel %vm1508, %v1506, %v1493
  %v1510 = vsel %vm1508, %v1507, %v1495
  %vm1511 = vcmask 588800
  %v1512 = vsel %vm1511, %v1509, %v1501
  %v1513 = vsel %vm1511, %v1510, %v1503
  %1516 = vrot.lane.b32.xlu0 %v1444, 104
  %v1517 = vpop.permute.xlu0 %1516
  %1518 = vrot.lane.b32.xlu0 %v1449, 104
  %v1519 = vpop.permute.xlu0 %1518
  %1522 = vrot.lane.b32.xlu0 %v1464, 24
  %v1523 = vpop.permute.xlu0 %1522
  %1524 = vrot.lane.b32.xlu0 %v1469, 24
  %v1525 = vpop.permute.xlu0 %1524
  %1528 = vrot.lane.b32.xlu0 %v1474, 48
  %v1529 = vpop.permute.xlu0 %1528
  %1530 = vrot.lane.b32.xlu0 %v1479, 48
  %v1531 = vpop.permute.xlu0 %1530
  %v1534 = vsel %vm990, %v1517, %v1454
  %v1535 = vsel %vm990, %v1519, %v1459
  %v1536 = vsel %vm1508, %v1534, %v1523
  %v1537 = vsel %vm1508, %v1535, %v1525
  %v1538 = vsel %vm1511, %v1536, %v1529
  %v1539 = vsel %vm1511, %v1537, %v1531
  %v1540 = vpack.c.bf16 %v1513, %v1512
  %v1541 = vpack.c.bf16 %v1539, %v1538
  %v1542 = vld [vmem:[%s8] sm:$0xf]
  %v1543 = vld [vmem:[%s8 + $0x4] sm:$0xf]
  %v1544 = vld [vmem:[%s8 + $0x8] sm:$0xf]
  %v1545 = vld [vmem:[%s8 + $0xc] sm:$0xf]
  %v1546 = vld [vmem:[%s8 + $0x10] sm:$0xf]
  %v1547 = vld [vmem:[%s8 + $0x14] sm:$0xf]
  %v1548 = vld [vmem:[%s8 + $0x18] sm:$0xf]
  %v1549 = vld [vmem:[%s8 + $0x1c] sm:$0xf]
  %v1550 = vld [vmem:[%s8 + $0x20] sm:$0xf]
  %v1551 = vld [vmem:[%s8 + $0x24] sm:$0xf]
  %v1552 = vld [vmem:[%s8 + $0x28] sm:$0xf]
  %v1553 = vld [vmem:[%s8 + $0x2c] sm:$0xf]
  %v1566 = vunpack.c.l.b16 %v1542
  %v1567 = vunpack.c.l.b16 %v1543
  %v1568 = vunpack.c.l.b16 %v1544
  %v1569 = vunpack.c.l.b16 %v1545
  %v1570 = vunpack.c.l.b16 %v1546
  %v1571 = vunpack.c.l.b16 %v1547
  %v1572 = vunpack.c.l.b16 %v1548
  %v1573 = vunpack.c.l.b16 %v1549
  %v1574 = vunpack.c.l.b16 %v1550
  %v1575 = vunpack.c.l.b16 %v1551
  %v1576 = vunpack.c.l.b16 %v1552
  %v1577 = vunpack.c.l.b16 %v1553
  %v1578 = vpack.c.b16 %v1567, %v1566
  %v1579 = vpack.c.b16 %v1569, %v1568
  %v1580 = vpack.c.b16 %v1571, %v1570
  %v1581 = vpack.c.b16 %v1573, %v1572
  %v1582 = vpack.c.b16 %v1575, %v1574
  %v1583 = vpack.c.b16 %v1577, %v1576
  %vm1590 = vcmask 785408
  %v1592 = vsel %vm1590, %v1540, 0
  %v1595 = vsel %vm1590, %v1541, 0
  %1597 = vmatprep.subr.bf16.mxu0 0
  %1598 = vmatpush1.bf16.msra.mxu0 %v1578
  %1599 = vmatprep.subr.bf16.mxu0 0
  %1600 = vmatpush1.bf16.msra.mxu0 %v1579
  %1601 = vmatprep.subr.bf16.mxu0 0
  %1602 = vmatpush1.bf16.msra.mxu0 %v1580
  %1603 = vmatprep.subr.bf16.mxu0 0
  %1604 = vmatpush1.bf16.msra.mxu0 %v1581
  %1605 = vmatprep.subr.bf16.mxu0 0
  %1606 = vmatpush1.bf16.msra.mxu0 %v1582
  %1607 = vmatprep.subr.bf16.mxu0 0
  %1608 = vmatpush1.bf16.msra.mxu0 %v1583
  %1609 = vmatprep.subr.bf16.mxu0 0
  %1610 = vmatpush1.bf16.msra.mxu0 0
  %1611 = vmatprep.subr.bf16.mxu0 0
  %1612 = vmatpush1.bf16.msra.mxu0 0
  %1613 = vmatprep.subr.bf16.mxu0 0
  %1614 = vmatpush1.bf16.msra.mxu0 0
  %1615 = vmatprep.subr.bf16.mxu0 0
  %1616 = vmatpush1.bf16.msra.mxu0 0
  %1617 = vmatprep.subr.bf16.mxu0 0
  %1618 = vmatpush1.bf16.msra.mxu0 0
  %1619 = vmatprep.subr.bf16.mxu0 0
  %1620 = vmatpush1.bf16.msra.mxu0 0
  %1621 = vmatprep.subr.bf16.mxu0 0
  %1622 = vmatpush1.bf16.msra.mxu0 0
  %1623 = vmatprep.subr.bf16.mxu0 0
  %1624 = vmatpush1.bf16.msra.mxu0 0
  %1625 = vmatprep.subr.bf16.mxu0 0
  %1626 = vmatpush1.bf16.msra.mxu0 0
  %1627 = vmatprep.subr.bf16.mxu0 0
  %1628 = vmatpush1.bf16.msra.mxu0 0
  %1629 = vmatprep.mubr.bf16.mxu0 0
  %1630 = vmatmul.mubr.bf16.gmra.mrb[0].mxu0 %v1592
  %v1631 = vpop.f32.mrb[0].mxu0
  %v1632 = vadd.f32 0.0, %v1631
  %v1633 = vpop.f32.mrb[0].mxu0
  %v1634 = vpop.f32.mrb[0].mxu0
  %v1635 = vadd.f32 0.0, %v1634
  %v1636 = vpop.f32.mrb[0].mxu0
  %1637 = vmatprep.mubr.bf16.mxu0 0
  %1638 = vmatmul.mubr.bf16.gmra.mrb[0].mxu0 %v1595
  %v1639 = vpop.f32.mrb[0].mxu0
  %v1640 = vadd.f32 0.0, %v1639
  %v1641 = vpop.f32.mrb[0].mxu0
  %v1642 = vpop.f32.mrb[0].mxu0
  %v1643 = vadd.f32 0.0, %v1642
  %v1644 = vpop.f32.mrb[0].mxu0
  %1645 = vdwg.mxu0
  %v1646 = vld [vmem:[%s6] sm:$0xff]
  %v1647 = vld [vmem:[%s6 + $0x8] sm:$0xff]
  %v1648 = vld [vmem:[%s6 + $0x10] sm:$0xff]
  %v1649 = vld [vmem:[%s6 + $0x18] sm:$0xff]
  %v1650 = vld [vmem:[%s7] sm:$0x1]
  %vm1651 = vcmask 834560
  %v1652 = vsel %vm1651, %v1632, 0.0
  %1653 = vadd.xlane.f32.xlu0 %v1652
  %v1654 = vpop.xlane.xlu0 %1653
  %v1655 = vsel %vm1651, %v1635, 0.0
  %1656 = vadd.xlane.f32.xlu0 %v1655
  %v1657 = vpop.xlane.xlu0 %1656
  %v1658 = vsel %vm1651, %v1640, 0.0
  %1659 = vadd.xlane.f32.xlu0 %v1658
  %v1660 = vpop.xlane.xlu0 %1659
  %v1661 = vsel %vm1651, %v1643, 0.0
  %1662 = vadd.xlane.f32.xlu0 %v1661
  %v1663 = vpop.xlane.xlu0 %1662
  %v1664 = vmul.f32 %v1632, %v1632
  %v1665 = vmul.f32 %v1635, %v1635
  %v1666 = vmul.f32 %v1640, %v1640
  %v1667 = vmul.f32 %v1643, %v1643
  %v1668 = vsel %vm1651, %v1664, 0.0
  %1669 = vadd.xlane.f32.xlu0 %v1668
  %v1670 = vpop.xlane.xlu0 %1669
  %v1671 = vsel %vm1651, %v1665, 0.0
  %1672 = vadd.xlane.f32.xlu0 %v1671
  %v1673 = vpop.xlane.xlu0 %1672
  %v1674 = vsel %vm1651, %v1666, 0.0
  %1675 = vadd.xlane.f32.xlu0 %v1674
  %v1676 = vpop.xlane.xlu0 %1675
  %v1677 = vsel %vm1651, %v1667, 0.0
  %1678 = vadd.xlane.f32.xlu0 %v1677
  %v1679 = vpop.xlane.xlu0 %1678
  %v1680 = vadd.f32 %v1654, %v1660
  %v1681 = vadd.f32 %v1657, %v1663
  %v1682 = vadd.f32 %v1670, %v1676
  %v1683 = vadd.f32 %v1673, %v1679
  %v1684 = vmul.f32 %v1680, 0.0078125
  %v1685 = vmul.f32 %v1681, 0.0078125
  %v1686 = vmul.f32 %v1682, 0.0078125
  %v1687 = vmul.f32 %v1683, 0.0078125
  %v1688 = vmul.f32 %v1684, %v1684
  %v1689 = vmul.f32 %v1685, %v1685
  %v1690 = vsub.f32 %v1686, %v1688
  %v1691 = vsub.f32 %v1687, %v1689
  %v1692 = vadd.f32 %v1690, 1e-05
  %v1693 = vadd.f32 %v1691, 1e-05
  %v1694 = vrsqrt.pop %v1692
  %v1695 = vrsqrt.pop %v1693
  %v1696 = vmul.f32 %v1646, %v1694
  %v1697 = vmul.f32 %v1647, %v1695
  %v1698 = vmul.f32 %v1684, %v1696
  %v1699 = vmul.f32 %v1685, %v1697
  %v1700 = vsub.f32 %v1648, %v1698
  %v1701 = vsub.f32 %v1649, %v1699
  %1703 = vset.pattern.permute.xlu0 0
  %1704 = vperm.xlu0 %1703, %v1696
  %v1705 = vpop.permute.xlu0 %1704
  %1708 = vset.pattern.permute.xlu0 0
  %1709 = vperm.xlu0 %1708, %v1697
  %v1710 = vpop.permute.xlu0 %1709
  %v1712 = vmul.f32 %v1632, %v1705
  %v1713 = vmul.f32 %v1635, %v1710
  %v1714 = vmul.f32 %v1640, %v1705
  %v1715 = vmul.f32 %v1643, %v1710
  %1717 = vset.pattern.permute.xlu0 0
  %1718 = vperm.xlu0 %1717, %v1700
  %v1719 = vpop.permute.xlu0 %1718
  %1722 = vset.pattern.permute.xlu0 0
  %1723 = vperm.xlu0 %1722, %v1701
  %v1724 = vpop.permute.xlu0 %1723
  %v1726 = vadd.f32 %v1712, %v1719
  %v1727 = vadd.f32 %v1713, %v1724
  %v1728 = vadd.f32 %v1714, %v1719
  %v1729 = vadd.f32 %v1715, %v1724
  %v1730 = vmax.f32 %v1726, 0.0
  %v1731 = vmax.f32 %v1727, 0.0
  %v1732 = vmax.f32 %v1728, 0.0
  %v1733 = vmax.f32 %v1729, 0.0
  %v1734 = vlaneseq
  %v1735 = vshrl.u32 %v1734, 7
  %v1736 = vsub.s32 0, %v1735
  %v1737 = vrot.slane %v1650, %v1736
  %v1738 = vmul.f32 %v1730, %v1737
  %v1739 = vmul.f32 %v1731, %v1737
  %v1740 = vmul.f32 %v1732, %v1737
  %v1741 = vmul.f32 %v1733, %v1737
  %1744 = vrot.lane.b32.xlu0 %v1740, 80
  %v1745 = vpop.permute.xlu0 %1744
  %1746 = vrot.lane.b32.xlu0 %v1741, 80
  %v1747 = vpop.permute.xlu0 %1746
  %vm1750 = vcmask 654336
  %v1751 = vsel %vm1750, %v1738, %v1745
  %v1752 = vsel %vm1750, %v1739, %v1747
  %1755 = vrot.lane.b32.xlu0 %v1738, 127
  %v1756 = vpop.permute.xlu0 %1755
  %1757 = vrot.lane.b32.xlu0 %v1739, 127
  %v1758 = vpop.permute.xlu0 %1757
  %1761 = vrot.lane.b32.xlu0 %v1740, 79
  %v1762 = vpop.permute.xlu0 %1761
  %1763 = vrot.lane.b32.xlu0 %v1741, 79
  %v1764 = vpop.permute.xlu0 %1763
  %v1767 = vsel %vm1750, %v1756, %v1762
  %v1768 = vsel %vm1750, %v1758, %v1764
  %1769 = vrot.lane.b32.xlu0 %v1738, 126
  %v1770 = vpop.permute.xlu0 %1769
  %1771 = vrot.lane.b32.xlu0 %v1739, 126
  %v1772 = vpop.permute.xlu0 %1771
  %1775 = vrot.lane.b32.xlu0 %v1740, 78
  %v1776 = vpop.permute.xlu0 %1775
  %1777 = vrot.lane.b32.xlu0 %v1741, 78
  %v1778 = vpop.permute.xlu0 %1777
  %v1781 = vsel %vm1750, %v1770, %v1776
  %v1782 = vsel %vm1750, %v1772, %v1778
  %1783 = vrot.lane.b32.xlu0 %v1738, 118
  %v1784 = vpop.permute.xlu0 %1783
  %1785 = vrot.lane.b32.xlu0 %v1739, 118
  %v1786 = vpop.permute.xlu0 %1785
  %1789 = vrot.lane.b32.xlu0 %v1740, 70
  %v1790 = vpop.permute.xlu0 %1789
  %1791 = vrot.lane.b32.xlu0 %v1741, 70
  %v1792 = vpop.permute.xlu0 %1791
  %v1795 = vsel %vm1750, %v1784, %v1790
  %v1796 = vsel %vm1750, %v1786, %v1792
  %1797 = vrot.lane.b32.xlu0 %v1738, 117
  %v1798 = vpop.permute.xlu0 %1797
  %1799 = vrot.lane.b32.xlu0 %v1739, 117
  %v1800 = vpop.permute.xlu0 %1799
  %1803 = vrot.lane.b32.xlu0 %v1740, 69
  %v1804 = vpop.permute.xlu0 %1803
  %1805 = vrot.lane.b32.xlu0 %v1741, 69
  %v1806 = vpop.permute.xlu0 %1805
  %v1809 = vsel %vm1750, %v1798, %v1804
  %v1810 = vsel %vm1750, %v1800, %v1806
  %1811 = vrot.lane.b32.xlu0 %v1738, 116
  %v1812 = vpop.permute.xlu0 %1811
  %1813 = vrot.lane.b32.xlu0 %v1739, 116
  %v1814 = vpop.permute.xlu0 %1813
  %1817 = vrot.lane.b32.xlu0 %v1740, 68
  %v1818 = vpop.permute.xlu0 %1817
  %1819 = vrot.lane.b32.xlu0 %v1741, 68
  %v1820 = vpop.permute.xlu0 %1819
  %v1823 = vsel %vm1750, %v1812, %v1818
  %v1824 = vsel %vm1750, %v1814, %v1820
  %1825 = vrot.lane.b32.xlu0 %v1738, 108
  %v1826 = vpop.permute.xlu0 %1825
  %1827 = vrot.lane.b32.xlu0 %v1739, 108
  %v1828 = vpop.permute.xlu0 %1827
  %1831 = vrot.lane.b32.xlu0 %v1740, 60
  %v1832 = vpop.permute.xlu0 %1831
  %1833 = vrot.lane.b32.xlu0 %v1741, 60
  %v1834 = vpop.permute.xlu0 %1833
  %v1837 = vsel %vm1750, %v1826, %v1832
  %v1838 = vsel %vm1750, %v1828, %v1834
  %1839 = vrot.lane.b32.xlu0 %v1738, 107
  %v1840 = vpop.permute.xlu0 %1839
  %1841 = vrot.lane.b32.xlu0 %v1739, 107
  %v1842 = vpop.permute.xlu0 %1841
  %1845 = vrot.lane.b32.xlu0 %v1740, 59
  %v1846 = vpop.permute.xlu0 %1845
  %1847 = vrot.lane.b32.xlu0 %v1741, 59
  %v1848 = vpop.permute.xlu0 %1847
  %v1851 = vsel %vm1750, %v1840, %v1846
  %v1852 = vsel %vm1750, %v1842, %v1848
  %1853 = vrot.lane.b32.xlu0 %v1738, 106
  %v1854 = vpop.permute.xlu0 %1853
  %1855 = vrot.lane.b32.xlu0 %v1739, 106
  %v1856 = vpop.permute.xlu0 %1855
  %1859 = vrot.lane.b32.xlu0 %v1740, 58
  %v1860 = vpop.permute.xlu0 %1859
  %1861 = vrot.lane.b32.xlu0 %v1741, 58
  %v1862 = vpop.permute.xlu0 %1861
  %v1865 = vsel %vm1750, %v1854, %v1860
  %v1866 = vsel %vm1750, %v1856, %v1862
  %v1867 = vld [vmem:[%s4] sm:$0xff]
  %v1868 = vld [vmem:[%s4 + $0x8] sm:$0xff]
  %v1869 = vld [vmem:[%s4 + $0x10] sm:$0xff]
  %v1870 = vld [vmem:[%s4 + $0x18] sm:$0xff]
  %v1871 = vld [vmem:[%s4 + $0x20] sm:$0xff]
  %v1872 = vld [vmem:[%s4 + $0x28] sm:$0xff]
  %v1873 = vld [vmem:[%s4 + $0x30] sm:$0xff]
  %v1874 = vld [vmem:[%s4 + $0x38] sm:$0xff]
  %vm1875 = vcmask 130048
  %v1877 = vsel %vm1875, %v1868, 0
  %v1880 = vsel %vm1875, %v1870, 0
  %v1883 = vsel %vm1875, %v1872, 0
  %v1886 = vsel %vm1875, %v1874, 0
  %1888 = vmatprep.subr.mxu0 %v1745
  %1889 = vmatpush1.msra.mxu0 %v1751
  %1890 = vmatprep.subr.mxu0 %v1747
  %1891 = vmatpush1.msra.mxu0 %v1752
  %1892 = vmatprep.subr.mxu0 %v1762
  %1893 = vmatpush1.msra.mxu0 %v1767
  %1894 = vmatprep.subr.mxu0 %v1764
  %1895 = vmatpush1.msra.mxu0 %v1768
  %1896 = vmatprep.subr.mxu0 %v1776
  %1897 = vmatpush1.msra.mxu0 %v1781
  %1898 = vmatprep.subr.mxu0 %v1778
  %1899 = vmatpush1.msra.mxu0 %v1782
  %1900 = vmatprep.subr.mxu0 %v1790
  %1901 = vmatpush1.msra.mxu0 %v1795
  %1902 = vmatprep.subr.mxu0 %v1792
  %1903 = vmatpush1.msra.mxu0 %v1796
  %1904 = vmatprep.subr.mxu0 %v1804
  %1905 = vmatpush1.msra.mxu0 %v1809
  %1906 = vmatprep.subr.mxu0 %v1806
  %1907 = vmatpush1.msra.mxu0 %v1810
  %1908 = vmatprep.subr.mxu0 %v1818
  %1909 = vmatpush1.msra.mxu0 %v1823
  %1910 = vmatprep.subr.mxu0 %v1820
  %1911 = vmatpush1.msra.mxu0 %v1824
  %1912 = vmatprep.subr.mxu0 %v1832
  %1913 = vmatpush1.msra.mxu0 %v1837
  %1914 = vmatprep.subr.mxu0 %v1834
  %1915 = vmatpush1.msra.mxu0 %v1838
  %1916 = vmatprep.subr.mxu0 %v1846
  %1917 = vmatpush1.msra.mxu0 %v1851
  %1918 = vmatprep.subr.mxu0 %v1848
  %1919 = vmatpush1.msra.mxu0 %v1852
  %1920 = vmatprep.subr.mxu0 %v1860
  %1921 = vmatpush1.msra.mxu0 %v1865
  %1922 = vmatprep.subr.mxu0 %v1862
  %1923 = vmatpush1.msra.mxu0 %v1866
  %1924 = vmatprep.subr.mxu0 0.0
  %1925 = vmatpush1.msra.mxu0 0.0
  %1926 = vmatprep.subr.mxu0 0.0
  %1927 = vmatpush1.msra.mxu0 0.0
  %1928 = vmatprep.subr.mxu0 0.0
  %1929 = vmatpush1.msra.mxu0 0.0
  %1930 = vmatprep.subr.mxu0 0.0
  %1931 = vmatpush1.msra.mxu0 0.0
  %1932 = vmatprep.subr.mxu0 0.0
  %1933 = vmatpush1.msra.mxu0 0.0
  %1934 = vmatprep.subr.mxu0 0.0
  %1935 = vmatpush1.msra.mxu0 0.0
  %1936 = vmatprep.subr.mxu0 0.0
  %1937 = vmatpush1.msra.mxu0 0.0
  %1938 = vmatprep.subr.mxu0 0.0
  %1939 = vmatpush1.msra.mxu0 0.0
  %1940 = vmatprep.subr.mxu0 0.0
  %1941 = vmatpush1.msra.mxu0 0.0
  %1942 = vmatprep.subr.mxu0 0.0
  %1943 = vmatpush1.msra.mxu0 0.0
  %1944 = vmatprep.subr.mxu0 0.0
  %1945 = vmatpush1.msra.mxu0 0.0
  %1946 = vmatprep.subr.mxu0 0.0
  %1947 = vmatpush1.msra.mxu0 0.0
  %1948 = vmatprep.subr.mxu0 0.0
  %1949 = vmatpush1.msra.mxu0 0.0
  %1950 = vmatprep.subr.mxu0 0.0
  %1951 = vmatpush1.msra.mxu0 0.0
  %1952 = vmatprep.mubr.f32.mxu0 %v1877
  %1953 = vmatmul.mubr.f32.gmra.mrb[0].mxu0 %v1867
  %v1954 = vpop.f32.mrb[0].mxu0
  %v1955 = vadd.f32 0.0, %v1954
  %v1956 = vpop.f32.mrb[0].mxu0
  %v1957 = vadd.f32 0.0, %v1956
  %1958 = vmatprep.mubr.f32.mxu0 %v1880
  %1959 = vmatmul.mubr.f32.gmra.mrb[0].mxu0 %v1869
  %v1960 = vpop.f32.mrb[0].mxu0
  %v1961 = vadd.f32 0.0, %v1960
  %v1962 = vpop.f32.mrb[0].mxu0
  %v1963 = vadd.f32 0.0, %v1962
  %1964 = vmatprep.mubr.f32.mxu0 %v1883
  %1965 = vmatmul.mubr.f32.gmra.mrb[0].mxu0 %v1871
  %v1966 = vpop.f32.mrb[0].mxu0
  %v1967 = vadd.f32 0.0, %v1966
  %v1968 = vpop.f32.mrb[0].mxu0
  %v1969 = vadd.f32 0.0, %v1968
  %1970 = vmatprep.mubr.f32.mxu0 %v1886
  %1971 = vmatmul.mubr.f32.gmra.mrb[0].mxu0 %v1873
  %v1972 = vpop.f32.mrb[0].mxu0
  %v1973 = vadd.f32 0.0, %v1972
  %v1974 = vpop.f32.mrb[0].mxu0
  %v1975 = vadd.f32 0.0, %v1974
  %1976 = vdwg.mxu0
  %1978 = vrot.lane.b32.xlu0 %v1961, 80
  %v1979 = vpop.permute.xlu0 %1978
  %1982 = vrot.lane.b32.xlu0 %v1967, 32
  %v1983 = vpop.permute.xlu0 %1982
  %1986 = vrot.lane.b32.xlu0 %v1973, 112
  %v1987 = vpop.permute.xlu0 %1986
  %v1989 = vsel %vm1750, %v1955, %v1979
  %v1990 = vsel %vm1247, %v1979, %v1983
  %vm1991 = vcmask 916480
  %v1992 = vsel %vm1991, %v1990, %v1987
  %1995 = vrot.lane.b32.xlu0 %v1955, 48
  %v1996 = vpop.permute.xlu0 %1995
  %1997 = vrot.lane.b32.xlu0 %v1957, 48
  %v1998 = vpop.permute.xlu0 %1997
  %v1999 = vsel %vm1508, %v1996, %v1998
  %2002 = vrot.lane.b32.xlu0 %v1967, 80
  %v2003 = vpop.permute.xlu0 %2002
  %2004 = vrot.lane.b32.xlu0 %v1969, 80
  %v2005 = vpop.permute.xlu0 %2004
  %v2006 = vsel %vm1750, %v2003, %v2005
  %2009 = vrot.lane.b32.xlu0 %v1973, 32
  %v2010 = vpop.permute.xlu0 %2009
  %2011 = vrot.lane.b32.xlu0 %v1975, 32
  %v2012 = vpop.permute.xlu0 %2011
  %v2013 = vsel %vm1247, %v2010, %v2012
  %v2016 = vsel %vm1750, %v1999, %v1961
  %v2017 = vsel %vm1247, %v1963, %v2006
  %v2018 = vsel %vm1991, %v2017, %v2010
  %v2019 = vpack.c.bf16 %v2016, %v1989
  %v2020 = vpack.c.bf16 %v2018, %v1992
  %v2021 = vpack.c.bf16 %v2013, %v1987
  %v2022 = vld [vmem:[%s9] sm:$0xff]
  %v2023 = vld [vmem:[%s9 + $0x8] sm:$0xf]
  %v2024 = vld [vmem:[%s9 + $0xc] sm:$0xff]
  %v2025 = vld [vmem:[%s9 + $0x14] sm:$0xf]
  %v2026 = vld [vmem:[%s9 + $0x18] sm:$0xff]
  %v2027 = vld [vmem:[%s9 + $0x20] sm:$0xf]
  %v2028 = vld [vmem:[%s9 + $0x24] sm:$0xff]
  %v2029 = vld [vmem:[%s9 + $0x2c] sm:$0xf]
  %v2030 = vld [vmem:[%s9 + $0x30] sm:$0xff]
  %v2031 = vld [vmem:[%s9 + $0x38] sm:$0xf]
  %v2032 = vld [vmem:[%s9 + $0x3c] sm:$0xff]
  %v2033 = vld [vmem:[%s9 + $0x44] sm:$0xf]
  %v2034 = vld [vmem:[%s9 + $0x48] sm:$0xff]
  %v2035 = vld [vmem:[%s9 + $0x50] sm:$0xf]
  %v2036 = vld [vmem:[%s9 + $0x54] sm:$0xff]
  %v2037 = vld [vmem:[%s9 + $0x5c] sm:$0xf]
  %v2038 = vld [vmem:[%s9 + $0x60] sm:$0xff]
  %v2039 = vld [vmem:[%s9 + $0x68] sm:$0xf]
  %v2040 = vld [vmem:[%s9 + $0x6c] sm:$0xff]
  %v2041 = vld [vmem:[%s9 + $0x74] sm:$0xf]
  %v2042 = vld [vmem:[%s9 + $0x78] sm:$0xff]
  %v2043 = vld [vmem:[%s9 + $0x80] sm:$0xf]
  %v2044 = vld [vmem:[%s9 + $0x84] sm:$0xff]
  %v2045 = vld [vmem:[%s9 + $0x8c] sm:$0xf]
  %v2046 = vld [vmem:[%s9 + $0x90] sm:$0xff]
  %v2047 = vld [vmem:[%s9 + $0x98] sm:$0xf]
  %v2048 = vld [vmem:[%s9 + $0x9c] sm:$0xff]
  %v2049 = vld [vmem:[%s9 + $0xa4] sm:$0xf]
  %v2050 = vld [vmem:[%s9 + $0xa8] sm:$0xff]
  %v2051 = vld [vmem:[%s9 + $0xb0] sm:$0xf]
  %v2052 = vld [vmem:[%s9 + $0xb4] sm:$0xff]
  %v2053 = vld [vmem:[%s9 + $0xbc] sm:$0xf]
  %v2054 = vld [vmem:[%s9 + $0xc0] sm:$0xff]
  %v2055 = vld [vmem:[%s9 + $0xc8] sm:$0xf]
  %v2056 = vld [vmem:[%s9 + $0xcc] sm:$0xff]
  %v2057 = vld [vmem:[%s9 + $0xd4] sm:$0xf]
  %v2058 = vld [vmem:[%s9 + $0xd8] sm:$0xff]
  %v2059 = vld [vmem:[%s9 + $0xe0] sm:$0xf]
  %v2060 = vld [vmem:[%s9 + $0xe4] sm:$0xff]
  %v2061 = vld [vmem:[%s9 + $0xec] sm:$0xf]
  %v2062 = vld [vmem:[%s9 + $0xf0] sm:$0xff]
  %v2063 = vld [vmem:[%s9 + $0xf8] sm:$0xf]
  %v2064 = vld [vmem:[%s9 + $0xfc] sm:$0xff]
  %v2065 = vld [vmem:[%s9 + $0x104] sm:$0xf]
  %v2066 = vld [vmem:[%s9 + $0x108] sm:$0xff]
  %v2067 = vld [vmem:[%s9 + $0x110] sm:$0xf]
  %v2068 = vld [vmem:[%s9 + $0x114] sm:$0xff]
  %v2069 = vld [vmem:[%s9 + $0x11c] sm:$0xf]
  %v2070 = vld [vmem:[%s9 + $0x120] sm:$0xff]
  %v2071 = vld [vmem:[%s9 + $0x128] sm:$0xf]
  %v2072 = vld [vmem:[%s9 + $0x12c] sm:$0xff]
  %v2073 = vld [vmem:[%s9 + $0x134] sm:$0xf]
  %v2074 = vld [vmem:[%s9 + $0x138] sm:$0xff]
  %v2075 = vld [vmem:[%s9 + $0x140] sm:$0xf]
  %v2076 = vld [vmem:[%s9 + $0x144] sm:$0xff]
  %v2077 = vld [vmem:[%s9 + $0x14c] sm:$0xf]
  %v2078 = vld [vmem:[%s9 + $0x150] sm:$0xff]
  %v2079 = vld [vmem:[%s9 + $0x158] sm:$0xf]
  %v2080 = vld [vmem:[%s9 + $0x15c] sm:$0xff]
  %v2081 = vld [vmem:[%s9 + $0x164] sm:$0xf]
  %v2082 = vld [vmem:[%s9 + $0x168] sm:$0xff]
  %v2083 = vld [vmem:[%s9 + $0x170] sm:$0xf]
  %v2084 = vld [vmem:[%s9 + $0x174] sm:$0xff]
  %v2085 = vld [vmem:[%s9 + $0x17c] sm:$0xf]
  %v2086 = vld [vmem:[%s9 + $0x180] sm:$0xff]
  %v2087 = vld [vmem:[%s9 + $0x188] sm:$0xf]
  %v2088 = vld [vmem:[%s9 + $0x18c] sm:$0xff]
  %v2089 = vld [vmem:[%s9 + $0x194] sm:$0xf]
  %v2090 = vld [vmem:[%s9 + $0x198] sm:$0xff]
  %v2091 = vld [vmem:[%s9 + $0x1a0] sm:$0xf]
  %v2092 = vld [vmem:[%s9 + $0x1a4] sm:$0xff]
  %v2093 = vld [vmem:[%s9 + $0x1ac] sm:$0xf]
  %v2094 = vld [vmem:[%s9 + $0x1b0] sm:$0xff]
  %v2095 = vld [vmem:[%s9 + $0x1b8] sm:$0xf]
  %v2096 = vld [vmem:[%s9 + $0x1bc] sm:$0xff]
  %v2097 = vld [vmem:[%s9 + $0x1c4] sm:$0xf]
  %v2098 = vld [vmem:[%s9 + $0x1c8] sm:$0xff]
  %v2099 = vld [vmem:[%s9 + $0x1d0] sm:$0xf]
  %v2100 = vld [vmem:[%s9 + $0x1d4] sm:$0xff]
  %v2101 = vld [vmem:[%s9 + $0x1dc] sm:$0xf]
  %v2182 = vunpack.c.l.b16 %v2022
  %v2183 = vunpack.c.h.b16 %v2022
  %v2184 = vunpack.c.l.b16 %v2023
  %v2185 = vunpack.c.l.b16 %v2024
  %v2186 = vunpack.c.h.b16 %v2024
  %v2187 = vunpack.c.l.b16 %v2025
  %v2188 = vunpack.c.l.b16 %v2026
  %v2189 = vunpack.c.h.b16 %v2026
  %v2190 = vunpack.c.l.b16 %v2027
  %v2191 = vunpack.c.l.b16 %v2028
  %v2192 = vunpack.c.h.b16 %v2028
  %v2193 = vunpack.c.l.b16 %v2029
  %v2194 = vunpack.c.l.b16 %v2030
  %v2195 = vunpack.c.h.b16 %v2030
  %v2196 = vunpack.c.l.b16 %v2031
  %v2197 = vunpack.c.l.b16 %v2032
  %v2198 = vunpack.c.h.b16 %v2032
  %v2199 = vunpack.c.l.b16 %v2033
  %v2200 = vunpack.c.l.b16 %v2034
  %v2201 = vunpack.c.h.b16 %v2034
  %v2202 = vunpack.c.l.b16 %v2035
  %v2203 = vunpack.c.l.b16 %v2036
  %v2204 = vunpack.c.h.b16 %v2036
  %v2205 = vunpack.c.l.b16 %v2037
  %v2206 = vunpack.c.l.b16 %v2038
  %v2207 = vunpack.c.h.b16 %v2038
  %v2208 = vunpack.c.l.b16 %v2039
  %v2209 = vunpack.c.l.b16 %v2040
  %v2210 = vunpack.c.h.b16 %v2040
  %v2211 = vunpack.c.l.b16 %v2041
  %v2212 = vunpack.c.l.b16 %v2042
  %v2213 = vunpack.c.h.b16 %v2042
  %v2214 = vunpack.c.l.b16 %v2043
  %v2215 = vunpack.c.l.b16 %v2044
  %v2216 = vunpack.c.h.b16 %v2044
  %v2217 = vunpack.c.l.b16 %v2045
  %v2218 = vunpack.c.l.b16 %v2046
  %v2219 = vunpack.c.h.b16 %v2046
  %v2220 = vunpack.c.l.b16 %v2047
  %v2221 = vunpack.c.l.b16 %v2048
  %v2222 = vunpack.c.h.b16 %v2048
  %v2223 = vunpack.c.l.b16 %v2049
  %v2224 = vunpack.c.l.b16 %v2050
  %v2225 = vunpack.c.h.b16 %v2050
  %v2226 = vunpack.c.l.b16 %v2051
  %v2227 = vunpack.c.l.b16 %v2052
  %v2228 = vunpack.c.h.b16 %v2052
  %v2229 = vunpack.c.l.b16 %v2053
  %v2230 = vunpack.c.l.b16 %v2054
  %v2231 = vunpack.c.h.b16 %v2054
  %v2232 = vunpack.c.l.b16 %v2055
  %v2233 = vunpack.c.l.b16 %v2056
  %v2234 = vunpack.c.h.b16 %v2056
  %v2235 = vunpack.c.l.b16 %v2057
  %v2236 = vunpack.c.l.b16 %v2058
  %v2237 = vunpack.c.h.b16 %v2058
  %v2238 = vunpack.c.l.b16 %v2059
  %v2239 = vunpack.c.l.b16 %v2060
  %v2240 = vunpack.c.h.b16 %v2060
  %v2241 = vunpack.c.l.b16 %v2061
  %v2242 = vunpack.c.l.b16 %v2062
  %v2243 = vunpack.c.h.b16 %v2062
  %v2244 = vunpack.c.l.b16 %v2063
  %v2245 = vunpack.c.l.b16 %v2064
  %v2246 = vunpack.c.h.b16 %v2064
  %v2247 = vunpack.c.l.b16 %v2065
  %v2248 = vunpack.c.l.b16 %v2066
  %v2249 = vunpack.c.h.b16 %v2066
  %v2250 = vunpack.c.l.b16 %v2067
  %v2251 = vunpack.c.l.b16 %v2068
  %v2252 = vunpack.c.h.b16 %v2068
  %v2253 = vunpack.c.l.b16 %v2069
  %v2254 = vunpack.c.l.b16 %v2070
  %v2255 = vunpack.c.h.b16 %v2070
  %v2256 = vunpack.c.l.b16 %v2071
  %v2257 = vunpack.c.l.b16 %v2072
  %v2258 = vunpack.c.h.b16 %v2072
  %v2259 = vunpack.c.l.b16 %v2073
  %v2260 = vunpack.c.l.b16 %v2074
  %v2261 = vunpack.c.h.b16 %v2074
  %v2262 = vunpack.c.l.b16 %v2075
  %v2263 = vunpack.c.l.b16 %v2076
  %v2264 = vunpack.c.h.b16 %v2076
  %v2265 = vunpack.c.l.b16 %v2077
  %v2266 = vunpack.c.l.b16 %v2078
  %v2267 = vunpack.c.h.b16 %v2078
  %v2268 = vunpack.c.l.b16 %v2079
  %v2269 = vunpack.c.l.b16 %v2080
  %v2270 = vunpack.c.h.b16 %v2080
  %v2271 = vunpack.c.l.b16 %v2081
  %v2272 = vunpack.c.l.b16 %v2082
  %v2273 = vunpack.c.h.b16 %v2082
  %v2274 = vunpack.c.l.b16 %v2083
  %v2275 = vunpack.c.l.b16 %v2084
  %v2276 = vunpack.c.h.b16 %v2084
  %v2277 = vunpack.c.l.b16 %v2085
  %v2278 = vunpack.c.l.b16 %v2086
  %v2279 = vunpack.c.h.b16 %v2086
  %v2280 = vunpack.c.l.b16 %v2087
  %v2281 = vunpack.c.l.b16 %v2088
  %v2282 = vunpack.c.h.b16 %v2088
  %v2283 = vunpack.c.l.b16 %v2089
  %v2284 = vunpack.c.l.b16 %v2090
  %v2285 = vunpack.c.h.b16 %v2090
  %v2286 = vunpack.c.l.b16 %v2091
  %v2287 = vunpack.c.l.b16 %v2092
  %v2288 = vunpack.c.h.b16 %v2092
  %v2289 = vunpack.c.l.b16 %v2093
  %v2290 = vunpack.c.l.b16 %v2094
  %v2291 = vunpack.c.h.b16 %v2094
  %v2292 = vunpack.c.l.b16 %v2095
  %v2293 = vunpack.c.l.b16 %v2096
  %v2294 = vunpack.c.h.b16 %v2096
  %v2295 = vunpack.c.l.b16 %v2097
  %v2296 = vunpack.c.l.b16 %v2098
  %v2297 = vunpack.c.h.b16 %v2098
  %v2298 = vunpack.c.l.b16 %v2099
  %v2299 = vunpack.c.l.b16 %v2100
  %v2300 = vunpack.c.h.b16 %v2100
  %v2301 = vunpack.c.l.b16 %v2101
  %v2302 = vpack.c.b16 %v2185, %v2182
  %v2303 = vpack.c.b16 %v2186, %v2183
  %v2304 = vpack.c.b16 %v2187, %v2184
  %v2305 = vpack.c.b16 %v2191, %v2188
  %v2306 = vpack.c.b16 %v2192, %v2189
  %v2307 = vpack.c.b16 %v2193, %v2190
  %v2308 = vpack.c.b16 %v2197, %v2194
  %v2309 = vpack.c.b16 %v2198, %v2195
  %v2310 = vpack.c.b16 %v2199, %v2196
  %v2311 = vpack.c.b16 %v2203, %v2200
  %v2312 = vpack.c.b16 %v2204, %v2201
  %v2313 = vpack.c.b16 %v2205, %v2202
  %v2314 = vpack.c.b16 %v2209, %v2206
  %v2315 = vpack.c.b16 %v2210, %v2207
  %v2316 = vpack.c.b16 %v2211, %v2208
  %v2317 = vpack.c.b16 %v2215, %v2212
  %v2318 = vpack.c.b16 %v2216, %v2213
  %v2319 = vpack.c.b16 %v2217, %v2214
  %v2320 = vpack.c.b16 %v2221, %v2218
  %v2321 = vpack.c.b16 %v2222, %v2219
  %v2322 = vpack.c.b16 %v2223, %v2220
  %v2323 = vpack.c.b16 %v2227, %v2224
  %v2324 = vpack.c.b16 %v2228, %v2225
  %v2325 = vpack.c.b16 %v2229, %v2226
  %v2326 = vpack.c.b16 %v2233, %v2230
  %v2327 = vpack.c.b16 %v2234, %v2231
  %v2328 = vpack.c.b16 %v2235, %v2232
  %v2329 = vpack.c.b16 %v2239, %v2236
  %v2330 = vpack.c.b16 %v2240, %v2237
  %v2331 = vpack.c.b16 %v2241, %v2238
  %v2332 = vpack.c.b16 %v2245, %v2242
  %v2333 = vpack.c.b16 %v2246, %v2243
  %v2334 = vpack.c.b16 %v2247, %v2244
  %v2335 = vpack.c.b16 %v2251, %v2248
  %v2336 = vpack.c.b16 %v2252, %v2249
  %v2337 = vpack.c.b16 %v2253, %v2250
  %v2338 = vpack.c.b16 %v2257, %v2254
  %v2339 = vpack.c.b16 %v2258, %v2255
  %v2340 = vpack.c.b16 %v2259, %v2256
  %v2341 = vpack.c.b16 %v2263, %v2260
  %v2342 = vpack.c.b16 %v2264, %v2261
  %v2343 = vpack.c.b16 %v2265, %v2262
  %v2344 = vpack.c.b16 %v2269, %v2266
  %v2345 = vpack.c.b16 %v2270, %v2267
  %v2346 = vpack.c.b16 %v2271, %v2268
  %v2347 = vpack.c.b16 %v2275, %v2272
  %v2348 = vpack.c.b16 %v2276, %v2273
  %v2349 = vpack.c.b16 %v2277, %v2274
  %v2350 = vpack.c.b16 %v2281, %v2278
  %v2351 = vpack.c.b16 %v2282, %v2279
  %v2352 = vpack.c.b16 %v2283, %v2280
  %v2353 = vpack.c.b16 %v2287, %v2284
  %v2354 = vpack.c.b16 %v2288, %v2285
  %v2355 = vpack.c.b16 %v2289, %v2286
  %v2356 = vpack.c.b16 %v2293, %v2290
  %v2357 = vpack.c.b16 %v2294, %v2291
  %v2358 = vpack.c.b16 %v2295, %v2292
  %v2359 = vpack.c.b16 %v2299, %v2296
  %v2360 = vpack.c.b16 %v2300, %v2297
  %v2361 = vpack.c.b16 %v2301, %v2298
  %vm2422 = vcmask 523264
  %v2424 = vsel %vm2422, %v2021, 0
  %2426 = vmatprep.subr.bf16.mxu0 %v2303
  %2427 = vmatpush1.bf16.msra.mxu0 %v2302
  %2428 = vmatprep.subr.bf16.mxu0 %v2306
  %2429 = vmatpush1.bf16.msra.mxu0 %v2305
  %2430 = vmatprep.subr.bf16.mxu0 %v2309
  %2431 = vmatpush1.bf16.msra.mxu0 %v2308
  %2432 = vmatprep.subr.bf16.mxu0 %v2312
  %2433 = vmatpush1.bf16.msra.mxu0 %v2311
  %2434 = vmatprep.subr.bf16.mxu0 %v2315
  %2435 = vmatpush1.bf16.msra.mxu0 %v2314
  %2436 = vmatprep.subr.bf16.mxu0 %v2318
  %2437 = vmatpush1.bf16.msra.mxu0 %v2317
  %2438 = vmatprep.subr.bf16.mxu0 %v2321
  %2439 = vmatpush1.bf16.msra.mxu0 %v2320
  %2440 = vmatprep.subr.bf16.mxu0 %v2324
  %2441 = vmatpush1.bf16.msra.mxu0 %v2323
  %2442 = vmatprep.subr.bf16.mxu0 %v2327
  %2443 = vmatpush1.bf16.msra.mxu0 %v2326
  %2444 = vmatprep.subr.bf16.mxu0 %v2330
  %2445 = vmatpush1.bf16.msra.mxu0 %v2329
  %2446 = vmatprep.subr.bf16.mxu0 %v2333
  %2447 = vmatpush1.bf16.msra.mxu0 %v2332
  %2448 = vmatprep.subr.bf16.mxu0 %v2336
  %2449 = vmatpush1.bf16.msra.mxu0 %v2335
  %2450 = vmatprep.subr.bf16.mxu0 %v2339
  %2451 = vmatpush1.bf16.msra.mxu0 %v2338
  %2452 = vmatprep.subr.bf16.mxu0 %v2342
  %2453 = vmatpush1.bf16.msra.mxu0 %v2341
  %2454 = vmatprep.subr.bf16.mxu0 %v2345
  %2455 = vmatpush1.bf16.msra.mxu0 %v2344
  %2456 = vmatprep.subr.bf16.mxu0 %v2348
  %2457 = vmatpush1.bf16.msra.mxu0 %v2347
  %2458 = vmatprep.mubr.bf16.mxu0 %v2020
  %2459 = vmatmul.mubr.bf16.gmra.mrb[0].mxu0 %v2019
  %v2460 = vpop.f32.mrb[0].mxu0
  %v2461 = vadd.f32 0.0, %v2460
  %v2462 = vpop.f32.mrb[0].mxu0
  %v2463 = vadd.f32 0.0, %v2462
  %v2464 = vpop.f32.mrb[0].mxu0
  %v2465 = vadd.f32 0.0, %v2464
  %v2466 = vpop.f32.mrb[0].mxu0
  %v2467 = vadd.f32 0.0, %v2466
  %2468 = vdwg.mxu0
  %2469 = vmatprep.subr.bf16.mxu0 %v2351
  %2470 = vmatpush1.bf16.msra.mxu0 %v2350
  %2471 = vmatprep.subr.bf16.mxu0 %v2354
  %2472 = vmatpush1.bf16.msra.mxu0 %v2353
  %2473 = vmatprep.subr.bf16.mxu0 %v2357
  %2474 = vmatpush1.bf16.msra.mxu0 %v2356
  %2475 = vmatprep.subr.bf16.mxu0 %v2360
  %2476 = vmatpush1.bf16.msra.mxu0 %v2359
  %2477 = vmatprep.subr.bf16.mxu0 0
  %2478 = vmatpush1.bf16.msra.mxu0 0
  %2479 = vmatprep.subr.bf16.mxu0 0
  %2480 = vmatpush1.bf16.msra.mxu0 0
  %2481 = vmatprep.subr.bf16.mxu0 0
  %2482 = vmatpush1.bf16.msra.mxu0 0
  %2483 = vmatprep.subr.bf16.mxu0 0
  %2484 = vmatpush1.bf16.msra.mxu0 0
  %2485 = vmatprep.subr.bf16.mxu0 0
  %2486 = vmatpush1.bf16.msra.mxu0 0
  %2487 = vmatprep.subr.bf16.mxu0 0
  %2488 = vmatpush1.bf16.msra.mxu0 0
  %2489 = vmatprep.subr.bf16.mxu0 0
  %2490 = vmatpush1.bf16.msra.mxu0 0
  %2491 = vmatprep.subr.bf16.mxu0 0
  %2492 = vmatpush1.bf16.msra.mxu0 0
  %2493 = vmatprep.subr.bf16.mxu0 0
  %2494 = vmatpush1.bf16.msra.mxu0 0
  %2495 = vmatprep.subr.bf16.mxu0 0
  %2496 = vmatpush1.bf16.msra.mxu0 0
  %2497 = vmatprep.subr.bf16.mxu0 0
  %2498 = vmatpush1.bf16.msra.mxu0 0
  %2499 = vmatprep.subr.bf16.mxu0 0
  %2500 = vmatpush1.bf16.msra.mxu0 0
  %2501 = vmatprep.mubr.bf16.mxu0 0
  %2502 = vmatmul.mubr.bf16.gmra.mrb[0].mxu0 %v2424
  %v2503 = vpop.f32.mrb[0].mxu0
  %v2504 = vadd.f32 %v2461, %v2503
  %v2505 = vpop.f32.mrb[0].mxu0
  %v2506 = vadd.f32 %v2463, %v2505
  %v2507 = vpop.f32.mrb[0].mxu0
  %v2508 = vadd.f32 %v2465, %v2507
  %v2509 = vpop.f32.mrb[0].mxu0
  %v2510 = vadd.f32 %v2467, %v2509
  %2511 = vdwg.mxu0
  %2512 = vmatprep.subr.bf16.mxu0 0
  %2513 = vmatpush1.bf16.msra.mxu0 %v2304
  %2514 = vmatprep.subr.bf16.mxu0 0
  %2515 = vmatpush1.bf16.msra.mxu0 %v2307
  %2516 = vmatprep.subr.bf16.mxu0 0
  %2517 = vmatpush1.bf16.msra.mxu0 %v2310
  %2518 = vmatprep.subr.bf16.mxu0 0
  %2519 = vmatpush1.bf16.msra.mxu0 %v2313
  %2520 = vmatprep.subr.bf16.mxu0 0
  %2521 = vmatpush1.bf16.msra.mxu0 %v2316
  %2522 = vmatprep.subr.bf16.mxu0 0
  %2523 = vmatpush1.bf16.msra.mxu0 %v2319
  %2524 = vmatprep.subr.bf16.mxu0 0
  %2525 = vmatpush1.bf16.msra.mxu0 %v2322
  %2526 = vmatprep.subr.bf16.mxu0 0
  %2527 = vmatpush1.bf16.msra.mxu0 %v2325
  %2528 = vmatprep.subr.bf16.mxu0 0
  %2529 = vmatpush1.bf16.msra.mxu0 %v2328
  %2530 = vmatprep.subr.bf16.mxu0 0
  %2531 = vmatpush1.bf16.msra.mxu0 %v2331
  %2532 = vmatprep.subr.bf16.mxu0 0
  %2533 = vmatpush1.bf16.msra.mxu0 %v2334
  %2534 = vmatprep.subr.bf16.mxu0 0
  %2535 = vmatpush1.bf16.msra.mxu0 %v2337
  %2536 = vmatprep.subr.bf16.mxu0 0
  %2537 = vmatpush1.bf16.msra.mxu0 %v2340
  %2538 = vmatprep.subr.bf16.mxu0 0
  %2539 = vmatpush1.bf16.msra.mxu0 %v2343
  %2540 = vmatprep.subr.bf16.mxu0 0
  %2541 = vmatpush1.bf16.msra.mxu0 %v2346
  %2542 = vmatprep.subr.bf16.mxu0 0
  %2543 = vmatpush1.bf16.msra.mxu0 %v2349
  %2544 = vmatprep.mubr.bf16.mxu0 %v2020
  %2545 = vmatmul.mubr.bf16.gmra.mrb[0].mxu0 %v2019
  %v2546 = vpop.f32.mrb[0].mxu0
  %v2547 = vadd.f32 0.0, %v2546
  %v2548 = vpop.f32.mrb[0].mxu0
  %v2549 = vpop.f32.mrb[0].mxu0
  %v2550 = vadd.f32 0.0, %v2549
  %v2551 = vpop.f32.mrb[0].mxu0
  %2552 = vdwg.mxu0
  %2553 = vmatprep.subr.bf16.mxu0 0
  %2554 = vmatpush1.bf16.msra.mxu0 %v2352
  %2555 = vmatprep.subr.bf16.mxu0 0
  %2556 = vmatpush1.bf16.msra.mxu0 %v2355
  %2557 = vmatprep.subr.bf16.mxu0 0
  %2558 = vmatpush1.bf16.msra.mxu0 %v2358
  %2559 = vmatprep.subr.bf16.mxu0 0
  %2560 = vmatpush1.bf16.msra.mxu0 %v2361
  %2561 = vmatprep.subr.bf16.mxu0 0
  %2562 = vmatpush1.bf16.msra.mxu0 0
  %2563 = vmatprep.subr.bf16.mxu0 0
  %2564 = vmatpush1.bf16.msra.mxu0 0
  %2565 = vmatprep.subr.bf16.mxu0 0
  %2566 = vmatpush1.bf16.msra.mxu0 0
  %2567 = vmatprep.subr.bf16.mxu0 0
  %2568 = vmatpush1.bf16.msra.mxu0 0
  %2569 = vmatprep.subr.bf16.mxu0 0
  %2570 = vmatpush1.bf16.msra.mxu0 0
  %2571 = vmatprep.subr.bf16.mxu0 0
  %2572 = vmatpush1.bf16.msra.mxu0 0
  %2573 = vmatprep.subr.bf16.mxu0 0
  %2574 = vmatpush1.bf16.msra.mxu0 0
  %2575 = vmatprep.subr.bf16.mxu0 0
  %2576 = vmatpush1.bf16.msra.mxu0 0
  %2577 = vmatprep.subr.bf16.mxu0 0
  %2578 = vmatpush1.bf16.msra.mxu0 0
  %2579 = vmatprep.subr.bf16.mxu0 0
  %2580 = vmatpush1.bf16.msra.mxu0 0
  %2581 = vmatprep.subr.bf16.mxu0 0
  %2582 = vmatpush1.bf16.msra.mxu0 0
  %2583 = vmatprep.subr.bf16.mxu0 0
  %2584 = vmatpush1.bf16.msra.mxu0 0
  %2585 = vmatprep.mubr.bf16.mxu0 0
  %2586 = vmatmul.mubr.bf16.gmra.mrb[0].mxu0 %v2424
  %v2587 = vpop.f32.mrb[0].mxu0
  %v2588 = vadd.f32 %v2547, %v2587
  %v2589 = vpop.f32.mrb[0].mxu0
  %v2590 = vpop.f32.mrb[0].mxu0
  %v2591 = vadd.f32 %v2550, %v2590
  %v2592 = vpop.f32.mrb[0].mxu0
  %2593 = vdwg.mxu0
  %v2594 = vld [vmem:[%s6 + $0x20] sm:$0xff]
  %v2595 = vld [vmem:[%s6 + $0x28] sm:$0xff]
  %s2596 = scalar_lea.vmem %s7, 1
  %v2597 = vld [vmem:[%s2596] ss:$2 sm:$0x7]
  %v2598 = vadd.f32 %v2504, %v2506
  %vm2599 = vcmask 572416
  %v2600 = vsel %vm2599, %v2588, 0.0
  %v2601 = vadd.f32 %v2598, %v2600
  %2602 = vadd.xlane.f32.xlu0 %v2601
  %v2603 = vpop.xlane.xlu0 %2602
  %v2604 = vadd.f32 %v2508, %v2510
  %v2605 = vsel %vm2599, %v2591, 0.0
  %v2606 = vadd.f32 %v2604, %v2605
  %2607 = vadd.xlane.f32.xlu0 %v2606
  %v2608 = vpop.xlane.xlu0 %2607
  %v2609 = vmul.f32 %v2504, %v2504
  %v2610 = vmul.f32 %v2506, %v2506
  %v2611 = vmul.f32 %v2588, %v2588
  %v2612 = vmul.f32 %v2508, %v2508
  %v2613 = vmul.f32 %v2510, %v2510
  %v2614 = vmul.f32 %v2591, %v2591
  %v2615 = vadd.f32 %v2609, %v2610
  %v2616 = vsel %vm2599, %v2611, 0.0
  %v2617 = vadd.f32 %v2615, %v2616
  %2618 = vadd.xlane.f32.xlu0 %v2617
  %v2619 = vpop.xlane.xlu0 %2618
  %v2620 = vadd.f32 %v2612, %v2613
  %v2621 = vsel %vm2599, %v2614, 0.0
  %v2622 = vadd.f32 %v2620, %v2621
  %2623 = vadd.xlane.f32.xlu0 %v2622
  %v2624 = vpop.xlane.xlu0 %2623
  %v2625 = vadd.f32 %v2603, %v2608
  %v2626 = vadd.f32 %v2619, %v2624
  %v2627 = vmul.f32 %v2625, 0.001953125
  %v2628 = vmul.f32 %v2626, 0.001953125
  %v2629 = vmul.f32 %v2627, %v2627
  %v2630 = vsub.f32 %v2628, %v2629
  %v2631 = vadd.f32 %v2630, 1e-05
  %v2632 = vrsqrt.pop %v2631
  %v2633 = vmul.f32 %v2594, %v2632
  %v2634 = vmul.f32 %v2627, %v2633
  %v2635 = vsub.f32 %v2595, %v2634
  %2637 = vset.pattern.permute.xlu0 0
  %2638 = vperm.xlu0 %2637, %v2633
  %v2639 = vpop.permute.xlu0 %2638
  %v2641 = vmul.f32 %v2504, %v2639
  %v2642 = vmul.f32 %v2506, %v2639
  %v2643 = vmul.f32 %v2588, %v2639
  %v2644 = vmul.f32 %v2508, %v2639
  %v2645 = vmul.f32 %v2510, %v2639
  %v2646 = vmul.f32 %v2591, %v2639
  %2648 = vset.pattern.permute.xlu0 0
  %2649 = vperm.xlu0 %2648, %v2635
  %v2650 = vpop.permute.xlu0 %2649
  %v2652 = vadd.f32 %v2641, %v2650
  %v2653 = vadd.f32 %v2642, %v2650
  %v2654 = vadd.f32 %v2643, %v2650
  %v2655 = vadd.f32 %v2644, %v2650
  %v2656 = vadd.f32 %v2645, %v2650
  %v2657 = vadd.f32 %v2646, %v2650
  %v2658 = vmax.f32 %v2652, 0.0
  %v2659 = vmax.f32 %v2653, 0.0
  %v2660 = vmax.f32 %v2654, 0.0
  %v2661 = vmax.f32 %v2655, 0.0
  %v2662 = vmax.f32 %v2656, 0.0
  %v2663 = vmax.f32 %v2657, 0.0
  %v2665 = vlaneseq
  %v2666 = vshrl.u32 %v2665, 7
  %v2667 = vsub.s32 0, %v2666
  %v2668 = vrot.slane %v2597, %v2667
  %v2669 = vlaneseq
  %v2670 = vshrl.u32 %v2669, 7
  %v2671 = vsub.s32 1, %v2670
  %v2672 = vrot.slane %v2597, %v2671
  %v2673 = vlaneseq
  %v2674 = vshrl.u32 %v2673, 7
  %v2675 = vsub.s32 2, %v2674
  %v2676 = vrot.slane %v2597, %v2675
  %v2680 = vmul.f32 %v2658, %v2668
  %v2681 = vmul.f32 %v2659, %v2672
  %v2682 = vmul.f32 %v2660, %v2676
  %v2683 = vmul.f32 %v2661, %v2668
  %v2684 = vmul.f32 %v2662, %v2672
  %v2685 = vmul.f32 %v2663, %v2676
  %2689 = vrot.lane.b32.xlu0 %v2683, 32
  %v2690 = vpop.permute.xlu0 %2689
  %2691 = vrot.lane.b32.xlu0 %v2684, 32
  %v2692 = vpop.permute.xlu0 %2691
  %2693 = vrot.lane.b32.xlu0 %v2685, 32
  %v2694 = vpop.permute.xlu0 %2693
  %v2695 = vsel %vm1247, %v2690, %v2692
  %v2696 = vsel %vm1247, %v2692, %v2694
  %v2700 = vsel %vm1247, %v2682, %v2690
  %2704 = vrot.lane.b32.xlu0 %v2680, 127
  %v2705 = vpop.permute.xlu0 %2704
  %2706 = vrot.lane.b32.xlu0 %v2681, 127
  %v2707 = vpop.permute.xlu0 %2706
  %2708 = vrot.lane.b32.xlu0 %v2682, 127
  %v2709 = vpop.permute.xlu0 %2708
  %vm2710 = vcmask 1039360
  %v2711 = vsel %vm2710, %v2705, %v2707
  %v2712 = vsel %vm2710, %v2707, %v2709
  %2716 = vrot.lane.b32.xlu0 %v2683, 31
  %v2717 = vpop.permute.xlu0 %2716
  %2718 = vrot.lane.b32.xlu0 %v2684, 31
  %v2719 = vpop.permute.xlu0 %2718
  %2720 = vrot.lane.b32.xlu0 %v2685, 31
  %v2721 = vpop.permute.xlu0 %2720
  %vm2722 = vcmask 252928
  %v2723 = vsel %vm2722, %v2717, %v2719
  %v2724 = vsel %vm2722, %v2719, %v2721
  %v2728 = vsel %vm1247, %v2709, %v2717
  %2729 = vrot.lane.b32.xlu0 %v2680, 126
  %v2730 = vpop.permute.xlu0 %2729
  %2731 = vrot.lane.b32.xlu0 %v2681, 126
  %v2732 = vpop.permute.xlu0 %2731
  %2733 = vrot.lane.b32.xlu0 %v2682, 126
  %v2734 = vpop.permute.xlu0 %2733
  %vm2735 = vcmask 1031168
  %v2736 = vsel %vm2735, %v2730, %v2732
  %v2737 = vsel %vm2735, %v2732, %v2734
  %2741 = vrot.lane.b32.xlu0 %v2683, 30
  %v2742 = vpop.permute.xlu0 %2741
  %2743 = vrot.lane.b32.xlu0 %v2684, 30
  %v2744 = vpop.permute.xlu0 %2743
  %2745 = vrot.lane.b32.xlu0 %v2685, 30
  %v2746 = vpop.permute.xlu0 %2745
  %vm2747 = vcmask 244736
  %v2748 = vsel %vm2747, %v2742, %v2744
  %v2749 = vsel %vm2747, %v2744, %v2746
  %v2753 = vsel %vm1247, %v2734, %v2742
  %2754 = vrot.lane.b32.xlu0 %v2680, 110
  %v2755 = vpop.permute.xlu0 %2754
  %2756 = vrot.lane.b32.xlu0 %v2681, 110
  %v2757 = vpop.permute.xlu0 %2756
  %2758 = vrot.lane.b32.xlu0 %v2682, 110
  %v2759 = vpop.permute.xlu0 %2758
  %vm2760 = vcmask 900096
  %v2761 = vsel %vm2760, %v2755, %v2757
  %v2762 = vsel %vm2760, %v2757, %v2759
  %2766 = vrot.lane.b32.xlu0 %v2683, 14
  %v2767 = vpop.permute.xlu0 %2766
  %2768 = vrot.lane.b32.xlu0 %v2684, 14
  %v2769 = vpop.permute.xlu0 %2768
  %2770 = vrot.lane.b32.xlu0 %v2685, 14
  %v2771 = vpop.permute.xlu0 %2770
  %vm2772 = vcmask 113664
  %v2773 = vsel %vm2772, %v2767, %v2769
  %v2774 = vsel %vm2772, %v2769, %v2771
  %v2778 = vsel %vm1247, %v2759, %v2767
  %2779 = vrot.lane.b32.xlu0 %v2680, 109
  %v2780 = vpop.permute.xlu0 %2779
  %2781 = vrot.lane.b32.xlu0 %v2681, 109
  %v2782 = vpop.permute.xlu0 %2781
  %2783 = vrot.lane.b32.xlu0 %v2682, 109
  %v2784 = vpop.permute.xlu0 %2783
  %vm2785 = vcmask 891904
  %v2786 = vsel %vm2785, %v2780, %v2782
  %v2787 = vsel %vm2785, %v2782, %v2784
  %2791 = vrot.lane.b32.xlu0 %v2683, 13
  %v2792 = vpop.permute.xlu0 %2791
  %2793 = vrot.lane.b32.xlu0 %v2684, 13
  %v2794 = vpop.permute.xlu0 %2793
  %2795 = vrot.lane.b32.xlu0 %v2685, 13
  %v2796 = vpop.permute.xlu0 %2795
  %vm2797 = vcmask 105472
  %v2798 = vsel %vm2797, %v2792, %v2794
  %v2799 = vsel %vm2797, %v2794, %v2796
  %v2803 = vsel %vm1247, %v2784, %v2792
  %2804 = vrot.lane.b32.xlu0 %v2680, 108
  %v2805 = vpop.permute.xlu0 %2804
  %2806 = vrot.lane.b32.xlu0 %v2681, 108
  %v2807 = vpop.permute.xlu0 %2806
  %2808 = vrot.lane.b32.xlu0 %v2682, 108
  %v2809 = vpop.permute.xlu0 %2808
  %vm2810 = vcmask 883712
  %v2811 = vsel %vm2810, %v2805, %v2807
  %v2812 = vsel %vm2810, %v2807, %v2809
  %2816 = vrot.lane.b32.xlu0 %v2683, 12
  %v2817 = vpop.permute.xlu0 %2816
  %2818 = vrot.lane.b32.xlu0 %v2684, 12
  %v2819 = vpop.permute.xlu0 %2818
  %2820 = vrot.lane.b32.xlu0 %v2685, 12
  %v2821 = vpop.permute.xlu0 %2820
  %vm2822 = vcmask 97280
  %v2823 = vsel %vm2822, %v2817, %v2819
  %v2824 = vsel %vm2822, %v2819, %v2821
  %v2828 = vsel %vm1247, %v2809, %v2817
  %2829 = vrot.lane.b32.xlu0 %v2680, 92
  %v2830 = vpop.permute.xlu0 %2829
  %2831 = vrot.lane.b32.xlu0 %v2681, 92
  %v2832 = vpop.permute.xlu0 %2831
  %2833 = vrot.lane.b32.xlu0 %v2682, 92
  %v2834 = vpop.permute.xlu0 %2833
  %vm2835 = vcmask 752640
  %v2836 = vsel %vm2835, %v2830, %v2832
  %v2837 = vsel %vm2835, %v2832, %v2834
  %2841 = vrot.lane.b32.xlu0 %v2683, 124
  %v2842 = vpop.permute.xlu0 %2841
  %2843 = vrot.lane.b32.xlu0 %v2684, 124
  %v2844 = vpop.permute.xlu0 %2843
  %2845 = vrot.lane.b32.xlu0 %v2685, 124
  %v2846 = vpop.permute.xlu0 %2845
  %vm2847 = vcmask 1014784
  %v2848 = vsel %vm2847, %v2842, %v2844
  %v2849 = vsel %vm2847, %v2844, %v2846
  %v2853 = vsel %vm1247, %v2834, %v2848
  %2854 = vrot.lane.b32.xlu0 %v2680, 91
  %v2855 = vpop.permute.xlu0 %2854
  %2856 = vrot.lane.b32.xlu0 %v2681, 91
  %v2857 = vpop.permute.xlu0 %2856
  %2858 = vrot.lane.b32.xlu0 %v2682, 91
  %v2859 = vpop.permute.xlu0 %2858
  %vm2860 = vcmask 744448
  %v2861 = vsel %vm2860, %v2855, %v2857
  %v2862 = vsel %vm2860, %v2857, %v2859
  %2866 = vrot.lane.b32.xlu0 %v2683, 123
  %v2867 = vpop.permute.xlu0 %2866
  %2868 = vrot.lane.b32.xlu0 %v2684, 123
  %v2869 = vpop.permute.xlu0 %2868
  %2870 = vrot.lane.b32.xlu0 %v2685, 123
  %v2871 = vpop.permute.xlu0 %2870
  %vm2872 = vcmask 1006592
  %v2873 = vsel %vm2872, %v2867, %v2869
  %v2874 = vsel %vm2872, %v2869, %v2871
  %v2878 = vsel %vm1247, %v2859, %v2873
  %2879 = vrot.lane.b32.xlu0 %v2680, 90
  %v2880 = vpop.permute.xlu0 %2879
  %2881 = vrot.lane.b32.xlu0 %v2681, 90
  %v2882 = vpop.permute.xlu0 %2881
  %2883 = vrot.lane.b32.xlu0 %v2682, 90
  %v2884 = vpop.permute.xlu0 %2883
  %vm2885 = vcmask 736256
  %v2886 = vsel %vm2885, %v2880, %v2882
  %v2887 = vsel %vm2885, %v2882, %v2884
  %2891 = vrot.lane.b32.xlu0 %v2683, 122
  %v2892 = vpop.permute.xlu0 %2891
  %2893 = vrot.lane.b32.xlu0 %v2684, 122
  %v2894 = vpop.permute.xlu0 %2893
  %2895 = vrot.lane.b32.xlu0 %v2685, 122
  %v2896 = vpop.permute.xlu0 %2895
  %vm2897 = vcmask 998400
  %v2898 = vsel %vm2897, %v2892, %v2894
  %v2899 = vsel %vm2897, %v2894, %v2896
  %v2903 = vsel %vm1247, %v2884, %v2898
  %v2904 = vld [vmem:[%s5] sm:$0xff]
  %v2905 = vld [vmem:[%s5 + $0x8] sm:$0xf]
  %v2907 = vsel %vm1511, %v2904, 0
  %v2910 = vsel %vm1511, %v2905, 0
  %2912 = vmatprep.subr.mxu0 %v2681
  %2913 = vmatpush1.msra.mxu0 %v2680
  %2914 = vmatprep.subr.mxu0 %v2712
  %2915 = vmatpush1.msra.mxu0 %v2711
  %2916 = vmatprep.subr.mxu0 %v2737
  %2917 = vmatpush1.msra.mxu0 %v2736
  %2918 = vmatprep.subr.mxu0 %v2762
  %2919 = vmatpush1.msra.mxu0 %v2761
  %2920 = vmatprep.subr.mxu0 %v2787
  %2921 = vmatpush1.msra.mxu0 %v2786
  %2922 = vmatprep.subr.mxu0 %v2812
  %2923 = vmatpush1.msra.mxu0 %v2811
  %2924 = vmatprep.subr.mxu0 %v2837
  %2925 = vmatpush1.msra.mxu0 %v2836
  %2926 = vmatprep.subr.mxu0 %v2862
  %2927 = vmatpush1.msra.mxu0 %v2861
  %2928 = vmatprep.subr.mxu0 %v2887
  %2929 = vmatpush1.msra.mxu0 %v2886
  %2930 = vmatprep.subr.mxu0 0.0
  %2931 = vmatpush1.msra.mxu0 0.0
  %2932 = vmatprep.subr.mxu0 0.0
  %2933 = vmatpush1.msra.mxu0 0.0
  %2934 = vmatprep.subr.mxu0 0.0
  %2935 = vmatpush1.msra.mxu0 0.0
  %2936 = vmatprep.subr.mxu0 0.0
  %2937 = vmatpush1.msra.mxu0 0.0
  %2938 = vmatprep.subr.mxu0 0.0
  %2939 = vmatpush1.msra.mxu0 0.0
  %2940 = vmatprep.subr.mxu0 0.0
  %2941 = vmatpush1.msra.mxu0 0.0
  %2942 = vmatprep.subr.mxu0 0.0
  %2943 = vmatpush1.msra.mxu0 0.0
  %2944 = vmatprep.subr.mxu0 0.0
  %2945 = vmatpush1.msra.mxu0 0.0
  %2946 = vmatprep.subr.mxu0 0.0
  %2947 = vmatpush1.msra.mxu0 0.0
  %2948 = vmatprep.subr.mxu0 0.0
  %2949 = vmatpush1.msra.mxu0 0.0
  %2950 = vmatprep.subr.mxu0 0.0
  %2951 = vmatpush1.msra.mxu0 0.0
  %2952 = vmatprep.subr.mxu0 0.0
  %2953 = vmatpush1.msra.mxu0 0.0
  %2954 = vmatprep.subr.mxu0 0.0
  %2955 = vmatpush1.msra.mxu0 0.0
  %2956 = vmatprep.subr.mxu0 0.0
  %2957 = vmatpush1.msra.mxu0 0.0
  %2958 = vmatprep.subr.mxu0 0.0
  %2959 = vmatpush1.msra.mxu0 0.0
  %2960 = vmatprep.subr.mxu0 0.0
  %2961 = vmatpush1.msra.mxu0 0.0
  %2962 = vmatprep.subr.mxu0 0.0
  %2963 = vmatpush1.msra.mxu0 0.0
  %2964 = vmatprep.subr.mxu0 0.0
  %2965 = vmatpush1.msra.mxu0 0.0
  %2966 = vmatprep.subr.mxu0 0.0
  %2967 = vmatpush1.msra.mxu0 0.0
  %2968 = vmatprep.subr.mxu0 0.0
  %2969 = vmatpush1.msra.mxu0 0.0
  %2970 = vmatprep.subr.mxu0 0.0
  %2971 = vmatpush1.msra.mxu0 0.0
  %2972 = vmatprep.subr.mxu0 0.0
  %2973 = vmatpush1.msra.mxu0 0.0
  %2974 = vmatprep.subr.mxu0 0.0
  %2975 = vmatpush1.msra.mxu0 0.0
  %2976 = vmatprep.mubr.f32.mxu0 0.0
  %2977 = vmatmul.mubr.f32.gmra.mrb[0].mxu0 %v2907
  %v2978 = vpop.f32.mrb[0].mxu0
  %v2979 = vadd.f32 0.0, %v2978
  %v2980 = vpop.f32.mrb[0].mxu0
  %v2981 = vadd.f32 0.0, %v2980
  %2982 = vmatprep.mubr.f32.mxu0 0.0
  %2983 = vmatmul.mubr.f32.gmra.mrb[0].mxu0 %v2910
  %v2984 = vpop.f32.mrb[0].mxu0
  %v2985 = vadd.f32 0.0, %v2984
  %v2986 = vpop.f32.mrb[0].mxu0
  %v2987 = vadd.f32 0.0, %v2986
  %2988 = vdwg.mxu0
  %2989 = vmatprep.subr.mxu0 %v2695
  %2990 = vmatpush1.msra.mxu0 %v2700
  %2991 = vmatprep.subr.mxu0 %v2723
  %2992 = vmatpush1.msra.mxu0 %v2728
  %2993 = vmatprep.subr.mxu0 %v2748
  %2994 = vmatpush1.msra.mxu0 %v2753
  %2995 = vmatprep.subr.mxu0 %v2773
  %2996 = vmatpush1.msra.mxu0 %v2778
  %2997 = vmatprep.subr.mxu0 %v2798
  %2998 = vmatpush1.msra.mxu0 %v2803
  %2999 = vmatprep.subr.mxu0 %v2823
  %3000 = vmatpush1.msra.mxu0 %v2828
  %3001 = vmatprep.subr.mxu0 %v2849
  %3002 = vmatpush1.msra.mxu0 %v2853
  %3003 = vmatprep.subr.mxu0 %v2874
  %3004 = vmatpush1.msra.mxu0 %v2878
  %3005 = vmatprep.subr.mxu0 %v2899
  %3006 = vmatpush1.msra.mxu0 %v2903
  %3007 = vmatprep.subr.mxu0 0.0
  %3008 = vmatpush1.msra.mxu0 0.0
  %3009 = vmatprep.subr.mxu0 0.0
  %3010 = vmatpush1.msra.mxu0 0.0
  %3011 = vmatprep.subr.mxu0 0.0
  %3012 = vmatpush1.msra.mxu0 0.0
  %3013 = vmatprep.subr.mxu0 0.0
  %3014 = vmatpush1.msra.mxu0 0.0
  %3015 = vmatprep.subr.mxu0 0.0
  %3016 = vmatpush1.msra.mxu0 0.0
  %3017 = vmatprep.subr.mxu0 0.0
  %3018 = vmatpush1.msra.mxu0 0.0
  %3019 = vmatprep.subr.mxu0 0.0
  %3020 = vmatpush1.msra.mxu0 0.0
  %3021 = vmatprep.subr.mxu0 0.0
  %3022 = vmatpush1.msra.mxu0 0.0
  %3023 = vmatprep.subr.mxu0 0.0
  %3024 = vmatpush1.msra.mxu0 0.0
  %3025 = vmatprep.subr.mxu0 0.0
  %3026 = vmatpush1.msra.mxu0 0.0
  %3027 = vmatprep.subr.mxu0 0.0
  %3028 = vmatpush1.msra.mxu0 0.0
  %3029 = vmatprep.subr.mxu0 0.0
  %3030 = vmatpush1.msra.mxu0 0.0
  %3031 = vmatprep.subr.mxu0 0.0
  %3032 = vmatpush1.msra.mxu0 0.0
  %3033 = vmatprep.subr.mxu0 0.0
  %3034 = vmatpush1.msra.mxu0 0.0
  %3035 = vmatprep.subr.mxu0 0.0
  %3036 = vmatpush1.msra.mxu0 0.0
  %3037 = vmatprep.subr.mxu0 0.0
  %3038 = vmatpush1.msra.mxu0 0.0
  %3039 = vmatprep.subr.mxu0 0.0
  %3040 = vmatpush1.msra.mxu0 0.0
  %3041 = vmatprep.subr.mxu0 0.0
  %3042 = vmatpush1.msra.mxu0 0.0
  %3043 = vmatprep.subr.mxu0 0.0
  %3044 = vmatpush1.msra.mxu0 0.0
  %3045 = vmatprep.subr.mxu0 0.0
  %3046 = vmatpush1.msra.mxu0 0.0
  %3047 = vmatprep.subr.mxu0 0.0
  %3048 = vmatpush1.msra.mxu0 0.0
  %3049 = vmatprep.subr.mxu0 0.0
  %3050 = vmatpush1.msra.mxu0 0.0
  %3051 = vmatprep.subr.mxu0 0.0
  %3052 = vmatpush1.msra.mxu0 0.0
  %3053 = vmatprep.mubr.f32.mxu0 0.0
  %3054 = vmatmul.mubr.f32.gmra.mrb[0].mxu0 %v2907
  %v3055 = vpop.f32.mrb[0].mxu0
  %v3056 = vadd.f32 0.0, %v3055
  %v3057 = vpop.f32.mrb[0].mxu0
  %v3058 = vadd.f32 0.0, %v3057
  %3059 = vmatprep.mubr.f32.mxu0 0.0
  %3060 = vmatmul.mubr.f32.gmra.mrb[0].mxu0 %v2910
  %v3061 = vpop.f32.mrb[0].mxu0
  %v3062 = vadd.f32 0.0, %v3061
  %v3063 = vpop.f32.mrb[0].mxu0
  %v3064 = vadd.f32 0.0, %v3063
  %3065 = vdwg.mxu0
  %3066 = vmatprep.subr.mxu0 0.0
  %3067 = vmatpush1.msra.mxu0 %v2696
  %3068 = vmatprep.subr.mxu0 0.0
  %3069 = vmatpush1.msra.mxu0 %v2724
  %3070 = vmatprep.subr.mxu0 0.0
  %3071 = vmatpush1.msra.mxu0 %v2749
  %3072 = vmatprep.subr.mxu0 0.0
  %3073 = vmatpush1.msra.mxu0 %v2774
  %3074 = vmatprep.subr.mxu0 0.0
  %3075 = vmatpush1.msra.mxu0 %v2799
  %3076 = vmatprep.subr.mxu0 0.0
  %3077 = vmatpush1.msra.mxu0 %v2824
  %3078 = vmatprep.subr.mxu0 0.0
  %3079 = vmatpush1.msra.mxu0 %v2846
  %3080 = vmatprep.subr.mxu0 0.0
  %3081 = vmatpush1.msra.mxu0 %v2871
  %3082 = vmatprep.subr.mxu0 0.0
  %3083 = vmatpush1.msra.mxu0 %v2896
  %3084 = vmatprep.subr.mxu0 0.0
  %3085 = vmatpush1.msra.mxu0 0.0
  %3086 = vmatprep.subr.mxu0 0.0
  %3087 = vmatpush1.msra.mxu0 0.0
  %3088 = vmatprep.subr.mxu0 0.0
  %3089 = vmatpush1.msra.mxu0 0.0
  %3090 = vmatprep.subr.mxu0 0.0
  %3091 = vmatpush1.msra.mxu0 0.0
  %3092 = vmatprep.subr.mxu0 0.0
  %3093 = vmatpush1.msra.mxu0 0.0
  %3094 = vmatprep.subr.mxu0 0.0
  %3095 = vmatpush1.msra.mxu0 0.0
  %3096 = vmatprep.subr.mxu0 0.0
  %3097 = vmatpush1.msra.mxu0 0.0
  %3098 = vmatprep.subr.mxu0 0.0
  %3099 = vmatpush1.msra.mxu0 0.0
  %3100 = vmatprep.subr.mxu0 0.0
  %3101 = vmatpush1.msra.mxu0 0.0
  %3102 = vmatprep.subr.mxu0 0.0
  %3103 = vmatpush1.msra.mxu0 0.0
  %3104 = vmatprep.subr.mxu0 0.0
  %3105 = vmatpush1.msra.mxu0 0.0
  %3106 = vmatprep.subr.mxu0 0.0
  %3107 = vmatpush1.msra.mxu0 0.0
  %3108 = vmatprep.subr.mxu0 0.0
  %3109 = vmatpush1.msra.mxu0 0.0
  %3110 = vmatprep.subr.mxu0 0.0
  %3111 = vmatpush1.msra.mxu0 0.0
  %3112 = vmatprep.subr.mxu0 0.0
  %3113 = vmatpush1.msra.mxu0 0.0
  %3114 = vmatprep.subr.mxu0 0.0
  %3115 = vmatpush1.msra.mxu0 0.0
  %3116 = vmatprep.subr.mxu0 0.0
  %3117 = vmatpush1.msra.mxu0 0.0
  %3118 = vmatprep.subr.mxu0 0.0
  %3119 = vmatpush1.msra.mxu0 0.0
  %3120 = vmatprep.subr.mxu0 0.0
  %3121 = vmatpush1.msra.mxu0 0.0
  %3122 = vmatprep.subr.mxu0 0.0
  %3123 = vmatpush1.msra.mxu0 0.0
  %3124 = vmatprep.subr.mxu0 0.0
  %3125 = vmatpush1.msra.mxu0 0.0
  %3126 = vmatprep.subr.mxu0 0.0
  %3127 = vmatpush1.msra.mxu0 0.0
  %3128 = vmatprep.subr.mxu0 0.0
  %3129 = vmatpush1.msra.mxu0 0.0
  %3130 = vmatprep.mubr.f32.mxu0 0.0
  %3131 = vmatmul.mubr.f32.gmra.mrb[0].mxu0 %v2907
  %v3132 = vpop.f32.mrb[0].mxu0
  %v3133 = vadd.f32 0.0, %v3132
  %v3134 = vpop.f32.mrb[0].mxu0
  %3135 = vmatprep.mubr.f32.mxu0 0.0
  %3136 = vmatmul.mubr.f32.gmra.mrb[0].mxu0 %v2910
  %v3137 = vpop.f32.mrb[0].mxu0
  %v3138 = vadd.f32 0.0, %v3137
  %v3139 = vpop.f32.mrb[0].mxu0
  %3140 = vdwg.mxu0
  %v3144 = vrot.slane %v2979, 3
  %v3145 = vrot.slane %v2981, 3
  %v3146 = vrot.slane %v3056, 3
  %3147 = vrot.lane.b32.xlu0 %v3144, 32
  %v3148 = vpop.permute.xlu0 %3147
  %3149 = vrot.lane.b32.xlu0 %v3145, 32
  %v3150 = vpop.permute.xlu0 %3149
  %3151 = vrot.lane.b32.xlu0 %v3146, 32
  %v3152 = vpop.permute.xlu0 %3151
  %v3153 = vsel %vm1247, %v3148, %v3150
  %v3154 = vsel %vm1247, %v3150, %v3152
  %vm3161 = vcmask 1041408
  %v3162 = vrot.slane %v2979, 6
  %v3163 = vrot.slane %v2985, 6
  %v3164 = vsel %vm3161, %v3162, %v3163
  %v3165 = vrot.slane %v2981, 6
  %v3166 = vrot.slane %v2987, 6
  %v3167 = vsel %vm3161, %v3165, %v3166
  %v3168 = vrot.slane %v3056, 6
  %v3169 = vrot.slane %v3062, 6
  %v3170 = vsel %vm3161, %v3168, %v3169
  %3171 = vrot.lane.b32.xlu0 %v3164, 64
  %v3172 = vpop.permute.xlu0 %3171
  %3173 = vrot.lane.b32.xlu0 %v3167, 64
  %v3174 = vpop.permute.xlu0 %3173
  %3175 = vrot.lane.b32.xlu0 %v3170, 64
  %v3176 = vpop.permute.xlu0 %3175
  %v3177 = vsel %vm2422, %v3172, %v3174
  %v3178 = vsel %vm2422, %v3174, %v3176
  %v3182 = vrot.slane %v2985, 1
  %v3183 = vrot.slane %v2987, 1
  %v3184 = vrot.slane %v3062, 1
  %3185 = vrot.lane.b32.xlu0 %v3182, 96
  %v3186 = vpop.permute.xlu0 %3185
  %3187 = vrot.lane.b32.xlu0 %v3183, 96
  %v3188 = vpop.permute.xlu0 %3187
  %3189 = vrot.lane.b32.xlu0 %v3184, 96
  %v3190 = vpop.permute.xlu0 %3189
  %v3191 = vsel %vm1590, %v3186, %v3188
  %v3192 = vsel %vm1590, %v3188, %v3190
  %v3196 = vsel %vm1247, %v3056, %v3148
  %v3197 = vsel %vm2422, %v3154, %v3172
  %v3198 = vsel %vm1590, %v3178, %v3186
  %3201 = vrot.lane.b32.xlu0 %v3056, 96
  %v3202 = vpop.permute.xlu0 %3201
  %3203 = vrot.lane.b32.xlu0 %v3058, 96
  %v3204 = vpop.permute.xlu0 %3203
  %3205 = vrot.lane.b32.xlu0 %v3133, 96
  %v3206 = vpop.permute.xlu0 %3205
  %v3207 = vsel %vm1590, %v3202, %v3204
  %v3208 = vsel %vm1590, %v3204, %v3206
  %v3210 = vrot.slane %v3058, 3
  %v3211 = vrot.slane %v3133, 3
  %v3216 = vrot.slane %v3058, 6
  %v3217 = vrot.slane %v3064, 6
  %v3218 = vsel %vm3161, %v3216, %v3217
  %v3219 = vrot.slane %v3133, 6
  %v3220 = vrot.slane %v3138, 6
  %v3221 = vsel %vm3161, %v3219, %v3220
  %3222 = vrot.lane.b32.xlu0 %v3170, 32
  %v3223 = vpop.permute.xlu0 %3222
  %3224 = vrot.lane.b32.xlu0 %v3218, 32
  %v3225 = vpop.permute.xlu0 %3224
  %3226 = vrot.lane.b32.xlu0 %v3221, 32
  %v3227 = vpop.permute.xlu0 %3226
  %v3228 = vsel %vm1247, %v3223, %v3225
  %v3229 = vsel %vm1247, %v3225, %v3227
  %v3232 = vrot.slane %v3064, 1
  %v3233 = vrot.slane %v3138, 1
  %3234 = vrot.lane.b32.xlu0 %v3184, 64
  %v3235 = vpop.permute.xlu0 %3234
  %3236 = vrot.lane.b32.xlu0 %v3232, 64
  %v3237 = vpop.permute.xlu0 %3236
  %3238 = vrot.lane.b32.xlu0 %v3233, 64
  %v3239 = vpop.permute.xlu0 %3238
  %v3240 = vsel %vm2422, %v3235, %v3237
  %v3241 = vsel %vm2422, %v3237, %v3239
  %v3243 = vsel %vm1247, %v3206, %v3146
  %v3244 = vsel %vm2422, %v3211, %v3223
  %v3245 = vsel %vm1590, %v3229, %v3235
  %v3249 = vrot.slane %v3207, 5
  %v3250 = vrot.slane %v3208, 5
  %v3251 = vrot.slane %v3243, 5
  %v3252 = vrot.slane %v3210, 5
  %v3253 = vrot.slane %v3244, 5
  %v3254 = vrot.slane %v3228, 5
  %v3255 = vrot.slane %v3245, 5
  %v3256 = vrot.slane %v3240, 5
  %v3257 = vrot.slane %v3241, 5
  %vm3267 = vcmask 1042432
  %v3268 = vsel %vm3267, %v2979, %v3249
  %v3269 = vsel %vm3267, %v2981, %v3250
  %v3270 = vsel %vm3267, %v3196, %v3251
  %v3271 = vsel %vm3267, %v3153, %v3252
  %v3272 = vsel %vm3267, %v3197, %v3253
  %v3273 = vsel %vm3267, %v3177, %v3254
  %v3274 = vsel %vm3267, %v3198, %v3255
  %v3275 = vsel %vm3267, %v3191, %v3256
  %v3276 = vsel %vm3267, %v3192, %v3257
  %v3277 = vpack.c.bf16 %v3268, %v3268
  %v3278 = vpack.c.bf16 %v3269, %v3269
  %v3279 = vpack.c.bf16 %v3270, %v3270
  %v3280 = vpack.c.bf16 %v3271, %v3271
  %v3281 = vpack.c.bf16 %v3272, %v3272
  %v3282 = vpack.c.bf16 %v3273, %v3273
  %v3283 = vpack.c.bf16 %v3274, %v3274
  %v3284 = vpack.c.bf16 %v3275, %v3275
  %v3285 = vpack.c.bf16 %v3276, %v3276
  %v3286 = vld [vmem:[%s10] sm:$0xff]
  %v3287 = vld [vmem:[%s10 + $0x8] sm:$0xff]
  %v3288 = vld [vmem:[%s10 + $0x10] sm:$0xff]
  %v3289 = vld [vmem:[%s10 + $0x18] sm:$0xff]
  %v3290 = vld [vmem:[%s10 + $0x20] sm:$0xff]
  %v3291 = vld [vmem:[%s10 + $0x28] sm:$0xff]
  %v3292 = vld [vmem:[%s10 + $0x30] sm:$0xff]
  %v3293 = vld [vmem:[%s10 + $0x38] sm:$0xff]
  %v3294 = vld [vmem:[%s10 + $0x40] sm:$0xff]
  %v3295 = vld [vmem:[%s10 + $0x48] sm:$0xff]
  %v3296 = vld [vmem:[%s10 + $0x50] sm:$0xff]
  %v3297 = vld [vmem:[%s10 + $0x58] sm:$0xff]
  %v3298 = vld [vmem:[%s10 + $0x60] sm:$0xff]
  %v3299 = vld [vmem:[%s10 + $0x68] sm:$0xff]
  %v3300 = vld [vmem:[%s10 + $0x70] sm:$0xff]
  %v3301 = vld [vmem:[%s10 + $0x78] sm:$0xff]
  %v3302 = vld [vmem:[%s10 + $0x80] sm:$0xff]
  %v3303 = vld [vmem:[%s10 + $0x88] sm:$0xff]
  %v3304 = vld [vmem:[%s10 + $0x90] sm:$0xff]
  %v3305 = vld [vmem:[%s10 + $0x98] sm:$0xff]
  %v3306 = vld [vmem:[%s10 + $0xa0] sm:$0xff]
  %v3307 = vld [vmem:[%s10 + $0xa8] sm:$0xff]
  %v3308 = vld [vmem:[%s10 + $0xb0] sm:$0xff]
  %v3309 = vld [vmem:[%s10 + $0xb8] sm:$0xff]
  %v3310 = vld [vmem:[%s10 + $0xc0] sm:$0xff]
  %v3311 = vld [vmem:[%s10 + $0xc8] sm:$0xff]
  %v3312 = vld [vmem:[%s10 + $0xd0] sm:$0xff]
  %v3313 = vld [vmem:[%s10 + $0xd8] sm:$0xff]
  %v3314 = vld [vmem:[%s10 + $0xe0] sm:$0xff]
  %v3315 = vld [vmem:[%s10 + $0xe8] sm:$0xff]
  %v3316 = vld [vmem:[%s10 + $0xf0] sm:$0xff]
  %v3317 = vld [vmem:[%s10 + $0xf8] sm:$0xff]
  %v3318 = vld [vmem:[%s10 + $0x100] sm:$0xff]
  %v3319 = vld [vmem:[%s10 + $0x108] sm:$0xff]
  %v3320 = vld [vmem:[%s10 + $0x110] sm:$0xff]
  %v3321 = vld [vmem:[%s10 + $0x118] sm:$0xff]
  %v3322 = vld [vmem:[%s10 + $0x120] sm:$0xff]
  %v3323 = vld [vmem:[%s10 + $0x128] sm:$0xff]
  %v3324 = vld [vmem:[%s10 + $0x130] sm:$0xff]
  %v3325 = vld [vmem:[%s10 + $0x138] sm:$0xff]
  %v3326 = vld [vmem:[%s10 + $0x140] sm:$0xff]
  %v3327 = vld [vmem:[%s10 + $0x148] sm:$0xff]
  %v3328 = vld [vmem:[%s10 + $0x150] sm:$0xff]
  %v3329 = vld [vmem:[%s10 + $0x158] sm:$0xff]
  %v3330 = vld [vmem:[%s10 + $0x160] sm:$0xff]
  %v3331 = vld [vmem:[%s10 + $0x168] sm:$0xff]
  %v3332 = vld [vmem:[%s10 + $0x170] sm:$0xff]
  %v3333 = vld [vmem:[%s10 + $0x178] sm:$0xff]
  %v3334 = vld [vmem:[%s10 + $0x180] sm:$0xff]
  %v3335 = vld [vmem:[%s10 + $0x188] sm:$0xff]
  %v3336 = vld [vmem:[%s10 + $0x190] sm:$0xff]
  %v3337 = vld [vmem:[%s10 + $0x198] sm:$0xff]
  %v3338 = vld [vmem:[%s10 + $0x1a0] sm:$0xff]
  %v3339 = vld [vmem:[%s10 + $0x1a8] sm:$0xff]
  %v3340 = vld [vmem:[%s10 + $0x1b0] sm:$0xff]
  %v3341 = vld [vmem:[%s10 + $0x1b8] sm:$0xff]
  %v3342 = vld [vmem:[%s10 + $0x1c0] sm:$0xff]
  %v3343 = vld [vmem:[%s10 + $0x1c8] sm:$0xff]
  %v3344 = vld [vmem:[%s10 + $0x1d0] sm:$0xff]
  %v3345 = vld [vmem:[%s10 + $0x1d8] sm:$0xff]
  %v3346 = vld [vmem:[%s10 + $0x1e0] sm:$0xff]
  %v3347 = vld [vmem:[%s10 + $0x1e8] sm:$0xff]
  %v3348 = vld [vmem:[%s10 + $0x1f0] sm:$0xff]
  %v3349 = vld [vmem:[%s10 + $0x1f8] sm:$0xff]
  %v3350 = vld [vmem:[%s10 + $0x200] sm:$0xff]
  %v3351 = vld [vmem:[%s10 + $0x208] sm:$0xff]
  %v3352 = vld [vmem:[%s10 + $0x210] sm:$0xff]
  %v3353 = vld [vmem:[%s10 + $0x218] sm:$0xff]
  %v3354 = vld [vmem:[%s10 + $0x220] sm:$0xff]
  %v3355 = vld [vmem:[%s10 + $0x228] sm:$0xff]
  %v3356 = vld [vmem:[%s10 + $0x230] sm:$0xff]
  %v3357 = vld [vmem:[%s10 + $0x238] sm:$0xff]
  %v3358 = vld [vmem:[%s10 + $0x240] sm:$0xff]
  %v3359 = vld [vmem:[%s10 + $0x248] sm:$0xff]
  %v3360 = vld [vmem:[%s10 + $0x250] sm:$0xff]
  %v3361 = vld [vmem:[%s10 + $0x258] sm:$0xff]
  %v3362 = vld [vmem:[%s10 + $0x260] sm:$0xff]
  %v3363 = vld [vmem:[%s10 + $0x268] sm:$0xff]
  %v3364 = vld [vmem:[%s10 + $0x270] sm:$0xff]
  %v3365 = vld [vmem:[%s10 + $0x278] sm:$0xff]
  %v3366 = vld [vmem:[%s10 + $0x280] sm:$0xff]
  %v3367 = vld [vmem:[%s10 + $0x288] sm:$0xff]
  %v3368 = vld [vmem:[%s10 + $0x290] sm:$0xff]
  %v3369 = vld [vmem:[%s10 + $0x298] sm:$0xff]
  %v3370 = vld [vmem:[%s10 + $0x2a0] sm:$0xff]
  %v3371 = vld [vmem:[%s10 + $0x2a8] sm:$0xff]
  %v3372 = vld [vmem:[%s10 + $0x2b0] sm:$0xff]
  %v3373 = vld [vmem:[%s10 + $0x2b8] sm:$0xff]
  %v3374 = vld [vmem:[%s10 + $0x2c0] sm:$0xff]
  %v3375 = vld [vmem:[%s10 + $0x2c8] sm:$0xff]
  %v3376 = vld [vmem:[%s10 + $0x2d0] sm:$0xff]
  %v3377 = vld [vmem:[%s10 + $0x2d8] sm:$0xff]
  %v3378 = vld [vmem:[%s10 + $0x2e0] sm:$0xff]
  %v3379 = vld [vmem:[%s10 + $0x2e8] sm:$0xff]
  %v3380 = vld [vmem:[%s10 + $0x2f0] sm:$0xff]
  %v3381 = vld [vmem:[%s10 + $0x2f8] sm:$0xff]
  %v3382 = vld [vmem:[%s10 + $0x300] sm:$0xff]
  %v3383 = vld [vmem:[%s10 + $0x308] sm:$0xff]
  %v3384 = vld [vmem:[%s10 + $0x310] sm:$0xff]
  %v3385 = vld [vmem:[%s10 + $0x318] sm:$0xff]
  %v3386 = vld [vmem:[%s10 + $0x320] sm:$0xff]
  %v3387 = vld [vmem:[%s10 + $0x328] sm:$0xff]
  %v3388 = vld [vmem:[%s10 + $0x330] sm:$0xff]
  %v3389 = vld [vmem:[%s10 + $0x338] sm:$0xff]
  %v3390 = vld [vmem:[%s10 + $0x340] sm:$0xff]
  %v3391 = vld [vmem:[%s10 + $0x348] sm:$0xff]
  %v3392 = vld [vmem:[%s10 + $0x350] sm:$0xff]
  %v3393 = vld [vmem:[%s10 + $0x358] sm:$0xff]
  %v3394 = vld [vmem:[%s10 + $0x360] sm:$0xff]
  %v3395 = vld [vmem:[%s10 + $0x368] sm:$0xff]
  %v3396 = vld [vmem:[%s10 + $0x370] sm:$0xff]
  %v3397 = vld [vmem:[%s10 + $0x378] sm:$0xff]
  %v3398 = vld [vmem:[%s10 + $0x380] sm:$0xff]
  %v3399 = vld [vmem:[%s10 + $0x388] sm:$0xff]
  %v3400 = vld [vmem:[%s10 + $0x390] sm:$0xff]
  %v3401 = vld [vmem:[%s10 + $0x398] sm:$0xff]
  %v3402 = vld [vmem:[%s10 + $0x3a0] sm:$0xff]
  %v3403 = vld [vmem:[%s10 + $0x3a8] sm:$0xff]
  %v3404 = vld [vmem:[%s10 + $0x3b0] sm:$0xff]
  %v3405 = vld [vmem:[%s10 + $0x3b8] sm:$0xff]
  %v3406 = vld [vmem:[%s10 + $0x3c0] sm:$0xff]
  %v3407 = vld [vmem:[%s10 + $0x3c8] sm:$0xff]
  %v3408 = vld [vmem:[%s10 + $0x3d0] sm:$0xff]
  %v3409 = vld [vmem:[%s10 + $0x3d8] sm:$0xff]
  %v3410 = vld [vmem:[%s10 + $0x3e0] sm:$0xff]
  %v3411 = vld [vmem:[%s10 + $0x3e8] sm:$0xff]
  %v3412 = vld [vmem:[%s10 + $0x3f0] sm:$0xff]
  %v3413 = vld [vmem:[%s10 + $0x3f8] sm:$0xff]
  %v3414 = vld [vmem:[%s10 + $0x400] sm:$0xff]
  %v3415 = vld [vmem:[%s10 + $0x408] sm:$0xff]
  %v3416 = vld [vmem:[%s10 + $0x410] sm:$0xff]
  %v3417 = vld [vmem:[%s10 + $0x418] sm:$0xff]
  %v3418 = vld [vmem:[%s10 + $0x420] sm:$0xff]
  %v3419 = vld [vmem:[%s10 + $0x428] sm:$0xff]
  %v3420 = vld [vmem:[%s10 + $0x430] sm:$0xff]
  %v3421 = vld [vmem:[%s10 + $0x438] sm:$0xff]
  %v3422 = vld [vmem:[%s10 + $0x440] sm:$0xff]
  %v3423 = vld [vmem:[%s10 + $0x448] sm:$0xff]
  %v3424 = vld [vmem:[%s10 + $0x450] sm:$0xff]
  %v3425 = vld [vmem:[%s10 + $0x458] sm:$0xff]
  %v3426 = vld [vmem:[%s10 + $0x460] sm:$0xff]
  %v3427 = vld [vmem:[%s10 + $0x468] sm:$0xff]
  %v3428 = vld [vmem:[%s10 + $0x470] sm:$0xff]
  %v3429 = vld [vmem:[%s10 + $0x478] sm:$0xff]
  %v3430 = vld [vmem:[%s10 + $0x480] sm:$0xff]
  %v3431 = vld [vmem:[%s10 + $0x488] sm:$0xff]
  %v3432 = vld [vmem:[%s10 + $0x490] sm:$0xff]
  %v3433 = vld [vmem:[%s10 + $0x498] sm:$0xff]
  %v3434 = vld [vmem:[%s10 + $0x4a0] sm:$0xff]
  %v3435 = vld [vmem:[%s10 + $0x4a8] sm:$0xff]
  %v3436 = vld [vmem:[%s10 + $0x4b0] sm:$0xff]
  %v3437 = vld [vmem:[%s10 + $0x4b8] sm:$0xff]
  %v3438 = vld [vmem:[%s10 + $0x4c0] sm:$0xff]
  %v3439 = vld [vmem:[%s10 + $0x4c8] sm:$0xff]
  %v3440 = vld [vmem:[%s10 + $0x4d0] sm:$0xff]
  %v3441 = vld [vmem:[%s10 + $0x4d8] sm:$0xff]
  %v3442 = vld [vmem:[%s10 + $0x4e0] sm:$0xff]
  %v3443 = vld [vmem:[%s10 + $0x4e8] sm:$0xff]
  %v3444 = vld [vmem:[%s10 + $0x4f0] sm:$0xff]
  %v3445 = vld [vmem:[%s10 + $0x4f8] sm:$0xff]
  %v3446 = vld [vmem:[%s10 + $0x500] sm:$0xff]
  %v3447 = vld [vmem:[%s10 + $0x508] sm:$0xff]
  %v3448 = vld [vmem:[%s10 + $0x510] sm:$0xff]
  %v3449 = vld [vmem:[%s10 + $0x518] sm:$0xff]
  %v3450 = vld [vmem:[%s10 + $0x520] sm:$0xff]
  %v3451 = vld [vmem:[%s10 + $0x528] sm:$0xff]
  %v3452 = vld [vmem:[%s10 + $0x530] sm:$0xff]
  %v3453 = vld [vmem:[%s10 + $0x538] sm:$0xff]
  %v3454 = vld [vmem:[%s10 + $0x540] sm:$0xff]
  %v3455 = vld [vmem:[%s10 + $0x548] sm:$0xff]
  %v3456 = vld [vmem:[%s10 + $0x550] sm:$0xff]
  %v3457 = vld [vmem:[%s10 + $0x558] sm:$0xff]
  %v3458 = vld [vmem:[%s10 + $0x560] sm:$0xff]
  %v3459 = vld [vmem:[%s10 + $0x568] sm:$0xff]
  %v3460 = vld [vmem:[%s10 + $0x570] sm:$0xff]
  %v3461 = vld [vmem:[%s10 + $0x578] sm:$0xff]
  %v3462 = vld [vmem:[%s10 + $0x580] sm:$0xff]
  %v3463 = vld [vmem:[%s10 + $0x588] sm:$0xff]
  %v3464 = vld [vmem:[%s10 + $0x590] sm:$0xff]
  %v3465 = vld [vmem:[%s10 + $0x598] sm:$0xff]
  %v3466 = vld [vmem:[%s10 + $0x5a0] sm:$0xff]
  %v3467 = vld [vmem:[%s10 + $0x5a8] sm:$0xff]
  %v3468 = vld [vmem:[%s10 + $0x5b0] sm:$0xff]
  %v3469 = vld [vmem:[%s10 + $0x5b8] sm:$0xff]
  %v3470 = vld [vmem:[%s10 + $0x5c0] sm:$0xff]
  %v3471 = vld [vmem:[%s10 + $0x5c8] sm:$0xff]
  %v3472 = vld [vmem:[%s10 + $0x5d0] sm:$0xff]
  %v3473 = vld [vmem:[%s10 + $0x5d8] sm:$0xff]
  %v3474 = vld [vmem:[%s10 + $0x5e0] sm:$0xff]
  %v3475 = vld [vmem:[%s10 + $0x5e8] sm:$0xff]
  %v3476 = vld [vmem:[%s10 + $0x5f0] sm:$0xff]
  %v3477 = vld [vmem:[%s10 + $0x5f8] sm:$0xff]
  %v3478 = vld [vmem:[%s10 + $0x600] sm:$0xff]
  %v3479 = vld [vmem:[%s10 + $0x608] sm:$0xff]
  %v3480 = vld [vmem:[%s10 + $0x610] sm:$0xff]
  %v3481 = vld [vmem:[%s10 + $0x618] sm:$0xff]
  %v3482 = vld [vmem:[%s10 + $0x620] sm:$0xff]
  %v3483 = vld [vmem:[%s10 + $0x628] sm:$0xff]
  %v3484 = vld [vmem:[%s10 + $0x630] sm:$0xff]
  %v3485 = vld [vmem:[%s10 + $0x638] sm:$0xff]
  %v3486 = vld [vmem:[%s10 + $0x640] sm:$0xff]
  %v3487 = vld [vmem:[%s10 + $0x648] sm:$0xff]
  %v3488 = vld [vmem:[%s10 + $0x650] sm:$0xff]
  %v3489 = vld [vmem:[%s10 + $0x658] sm:$0xff]
  %v3490 = vld [vmem:[%s10 + $0x660] sm:$0xff]
  %v3491 = vld [vmem:[%s10 + $0x668] sm:$0xff]
  %v3492 = vld [vmem:[%s10 + $0x670] sm:$0xff]
  %v3493 = vld [vmem:[%s10 + $0x678] sm:$0xff]
  %v3494 = vld [vmem:[%s10 + $0x680] sm:$0xff]
  %v3495 = vld [vmem:[%s10 + $0x688] sm:$0xff]
  %v3496 = vld [vmem:[%s10 + $0x690] sm:$0xff]
  %v3497 = vld [vmem:[%s10 + $0x698] sm:$0xff]
  %v3498 = vld [vmem:[%s10 + $0x6a0] sm:$0xff]
  %v3499 = vld [vmem:[%s10 + $0x6a8] sm:$0xff]
  %v3500 = vld [vmem:[%s10 + $0x6b0] sm:$0xff]
  %v3501 = vld [vmem:[%s10 + $0x6b8] sm:$0xff]
  %v3502 = vld [vmem:[%s10 + $0x6c0] sm:$0xff]
  %v3503 = vld [vmem:[%s10 + $0x6c8] sm:$0xff]
  %v3504 = vld [vmem:[%s10 + $0x6d0] sm:$0xff]
  %v3505 = vld [vmem:[%s10 + $0x6d8] sm:$0xff]
  %v3506 = vld [vmem:[%s10 + $0x6e0] sm:$0xff]
  %v3507 = vld [vmem:[%s10 + $0x6e8] sm:$0xff]
  %v3508 = vld [vmem:[%s10 + $0x6f0] sm:$0xff]
  %v3509 = vld [vmem:[%s10 + $0x6f8] sm:$0xff]
  %v3510 = vld [vmem:[%s10 + $0x700] sm:$0xff]
  %v3511 = vld [vmem:[%s10 + $0x708] sm:$0xff]
  %v3512 = vld [vmem:[%s10 + $0x710] sm:$0xff]
  %v3513 = vld [vmem:[%s10 + $0x718] sm:$0xff]
  %v3514 = vld [vmem:[%s10 + $0x720] sm:$0xff]
  %v3515 = vld [vmem:[%s10 + $0x728] sm:$0xff]
  %v3516 = vld [vmem:[%s10 + $0x730] sm:$0xff]
  %v3517 = vld [vmem:[%s10 + $0x738] sm:$0xff]
  %v3518 = vld [vmem:[%s10 + $0x740] sm:$0xff]
  %v3519 = vld [vmem:[%s10 + $0x748] sm:$0xff]
  %v3520 = vld [vmem:[%s10 + $0x750] sm:$0xff]
  %v3521 = vld [vmem:[%s10 + $0x758] sm:$0xff]
  %v3522 = vld [vmem:[%s10 + $0x760] sm:$0xff]
  %v3523 = vld [vmem:[%s10 + $0x768] sm:$0xff]
  %v3524 = vld [vmem:[%s10 + $0x770] sm:$0xff]
  %v3525 = vld [vmem:[%s10 + $0x778] sm:$0xff]
  %v3526 = vld [vmem:[%s10 + $0x780] sm:$0xff]
  %v3527 = vld [vmem:[%s10 + $0x788] sm:$0xff]
  %v3528 = vld [vmem:[%s10 + $0x790] sm:$0xff]
  %v3529 = vld [vmem:[%s10 + $0x798] sm:$0xff]
  %v3530 = vld [vmem:[%s10 + $0x7a0] sm:$0xff]
  %v3531 = vld [vmem:[%s10 + $0x7a8] sm:$0xff]
  %v3532 = vld [vmem:[%s10 + $0x7b0] sm:$0xff]
  %v3533 = vld [vmem:[%s10 + $0x7b8] sm:$0xff]
  %v3534 = vld [vmem:[%s10 + $0x7c0] sm:$0xff]
  %v3535 = vld [vmem:[%s10 + $0x7c8] sm:$0xff]
  %v3536 = vld [vmem:[%s10 + $0x7d0] sm:$0xff]
  %v3537 = vld [vmem:[%s10 + $0x7d8] sm:$0xff]
  %v3538 = vld [vmem:[%s10 + $0x7e0] sm:$0xff]
  %v3539 = vld [vmem:[%s10 + $0x7e8] sm:$0xff]
  %v3540 = vld [vmem:[%s10 + $0x7f0] sm:$0xff]
  %v3541 = vld [vmem:[%s10 + $0x7f8] sm:$0xff]
  %v3542 = vld [vmem:[%s10 + $0x800] sm:$0xff]
  %v3543 = vld [vmem:[%s10 + $0x808] sm:$0xff]
  %v3544 = vld [vmem:[%s10 + $0x810] sm:$0xff]
  %v3545 = vld [vmem:[%s10 + $0x818] sm:$0xff]
  %v3546 = vld [vmem:[%s10 + $0x820] sm:$0xff]
  %v3547 = vld [vmem:[%s10 + $0x828] sm:$0xff]
  %v3548 = vld [vmem:[%s10 + $0x830] sm:$0xff]
  %v3549 = vld [vmem:[%s10 + $0x838] sm:$0xff]
  %v3550 = vld [vmem:[%s10 + $0x840] sm:$0xff]
  %v3551 = vld [vmem:[%s10 + $0x848] sm:$0xff]
  %v3552 = vld [vmem:[%s10 + $0x850] sm:$0xff]
  %v3553 = vld [vmem:[%s10 + $0x858] sm:$0xff]
  %v3554 = vld [vmem:[%s10 + $0x860] sm:$0xff]
  %v3555 = vld [vmem:[%s10 + $0x868] sm:$0xff]
  %v3556 = vld [vmem:[%s10 + $0x870] sm:$0xff]
  %v3557 = vld [vmem:[%s10 + $0x878] sm:$0xff]
  %v3558 = vld [vmem:[%s10 + $0x880] sm:$0xff]
  %v3559 = vld [vmem:[%s10 + $0x888] sm:$0xff]
  %v3560 = vld [vmem:[%s10 + $0x890] sm:$0xff]
  %v3561 = vld [vmem:[%s10 + $0x898] sm:$0xff]
  %v3562 = vld [vmem:[%s10 + $0x8a0] sm:$0xff]
  %v3563 = vld [vmem:[%s10 + $0x8a8] sm:$0xff]
  %v3564 = vld [vmem:[%s10 + $0x8b0] sm:$0xff]
  %v3565 = vld [vmem:[%s10 + $0x8b8] sm:$0xff]
  %v3566 = vld [vmem:[%s10 + $0x8c0] sm:$0xff]
  %v3567 = vld [vmem:[%s10 + $0x8c8] sm:$0xff]
  %v3568 = vld [vmem:[%s10 + $0x8d0] sm:$0xff]
  %v3569 = vld [vmem:[%s10 + $0x8d8] sm:$0xff]
  %v3570 = vld [vmem:[%s10 + $0x8e0] sm:$0xff]
  %v3571 = vld [vmem:[%s10 + $0x8e8] sm:$0xff]
  %v3572 = vld [vmem:[%s10 + $0x8f0] sm:$0xff]
  %v3573 = vld [vmem:[%s10 + $0x8f8] sm:$0xff]
  %v3574 = vld [vmem:[%s10 + $0x900] sm:$0xff]
  %v3575 = vld [vmem:[%s10 + $0x908] sm:$0xff]
  %v3576 = vld [vmem:[%s10 + $0x910] sm:$0xff]
  %v3577 = vld [vmem:[%s10 + $0x918] sm:$0xff]
  %v3578 = vld [vmem:[%s10 + $0x920] sm:$0xff]
  %v3579 = vld [vmem:[%s10 + $0x928] sm:$0xff]
  %v3580 = vld [vmem:[%s10 + $0x930] sm:$0xff]
  %v3581 = vld [vmem:[%s10 + $0x938] sm:$0xff]
  %v3582 = vld [vmem:[%s10 + $0x940] sm:$0xff]
  %v3583 = vld [vmem:[%s10 + $0x948] sm:$0xff]
  %v3584 = vld [vmem:[%s10 + $0x950] sm:$0xff]
  %v3585 = vld [vmem:[%s10 + $0x958] sm:$0xff]
  %v3586 = vld [vmem:[%s10 + $0x960] sm:$0xff]
  %v3587 = vld [vmem:[%s10 + $0x968] sm:$0xff]
  %v3588 = vld [vmem:[%s10 + $0x970] sm:$0xff]
  %v3589 = vld [vmem:[%s10 + $0x978] sm:$0xff]
  %v3590 = vld [vmem:[%s10 + $0x980] sm:$0xff]
  %v3591 = vld [vmem:[%s10 + $0x988] sm:$0xff]
  %v3592 = vld [vmem:[%s10 + $0x990] sm:$0xff]
  %v3593 = vld [vmem:[%s10 + $0x998] sm:$0xff]
  %v3594 = vld [vmem:[%s10 + $0x9a0] sm:$0xff]
  %v3595 = vld [vmem:[%s10 + $0x9a8] sm:$0xff]
  %v3596 = vld [vmem:[%s10 + $0x9b0] sm:$0xff]
  %v3597 = vld [vmem:[%s10 + $0x9b8] sm:$0xff]
  %v3598 = vld [vmem:[%s10 + $0x9c0] sm:$0xff]
  %v3599 = vld [vmem:[%s10 + $0x9c8] sm:$0xff]
  %v3600 = vld [vmem:[%s10 + $0x9d0] sm:$0xff]
  %v3601 = vld [vmem:[%s10 + $0x9d8] sm:$0xff]
  %v3602 = vld [vmem:[%s10 + $0x9e0] sm:$0xff]
  %v3603 = vld [vmem:[%s10 + $0x9e8] sm:$0xff]
  %v3604 = vld [vmem:[%s10 + $0x9f0] sm:$0xff]
  %v3605 = vld [vmem:[%s10 + $0x9f8] sm:$0xff]
  %v3606 = vld [vmem:[%s10 + $0xa00] sm:$0xff]
  %v3607 = vld [vmem:[%s10 + $0xa08] sm:$0xff]
  %v3608 = vld [vmem:[%s10 + $0xa10] sm:$0xff]
  %v3609 = vld [vmem:[%s10 + $0xa18] sm:$0xff]
  %v3610 = vld [vmem:[%s10 + $0xa20] sm:$0xff]
  %v3611 = vld [vmem:[%s10 + $0xa28] sm:$0xff]
  %v3612 = vld [vmem:[%s10 + $0xa30] sm:$0xff]
  %v3613 = vld [vmem:[%s10 + $0xa38] sm:$0xff]
  %v3614 = vld [vmem:[%s10 + $0xa40] sm:$0xff]
  %v3615 = vld [vmem:[%s10 + $0xa48] sm:$0xff]
  %v3616 = vld [vmem:[%s10 + $0xa50] sm:$0xff]
  %v3617 = vld [vmem:[%s10 + $0xa58] sm:$0xff]
  %v3618 = vld [vmem:[%s10 + $0xa60] sm:$0xff]
  %v3619 = vld [vmem:[%s10 + $0xa68] sm:$0xff]
  %v3620 = vld [vmem:[%s10 + $0xa70] sm:$0xff]
  %v3621 = vld [vmem:[%s10 + $0xa78] sm:$0xff]
  %v3622 = vld [vmem:[%s10 + $0xa80] sm:$0xff]
  %v3623 = vld [vmem:[%s10 + $0xa88] sm:$0xff]
  %v3624 = vld [vmem:[%s10 + $0xa90] sm:$0xff]
  %v3625 = vld [vmem:[%s10 + $0xa98] sm:$0xff]
  %v3626 = vld [vmem:[%s10 + $0xaa0] sm:$0xff]
  %v3627 = vld [vmem:[%s10 + $0xaa8] sm:$0xff]
  %v3628 = vld [vmem:[%s10 + $0xab0] sm:$0xff]
  %v3629 = vld [vmem:[%s10 + $0xab8] sm:$0xff]
  %v3630 = vld [vmem:[%s10 + $0xac0] sm:$0xff]
  %v3631 = vld [vmem:[%s10 + $0xac8] sm:$0xff]
  %v3632 = vld [vmem:[%s10 + $0xad0] sm:$0xff]
  %v3633 = vld [vmem:[%s10 + $0xad8] sm:$0xff]
  %v3634 = vld [vmem:[%s10 + $0xae0] sm:$0xff]
  %v3635 = vld [vmem:[%s10 + $0xae8] sm:$0xff]
  %v3636 = vld [vmem:[%s10 + $0xaf0] sm:$0xff]
  %v3637 = vld [vmem:[%s10 + $0xaf8] sm:$0xff]
  %v3638 = vld [vmem:[%s10 + $0xb00] sm:$0xff]
  %v3639 = vld [vmem:[%s10 + $0xb08] sm:$0xff]
  %v3640 = vld [vmem:[%s10 + $0xb10] sm:$0xff]
  %v3641 = vld [vmem:[%s10 + $0xb18] sm:$0xff]
  %v3642 = vld [vmem:[%s10 + $0xb20] sm:$0xff]
  %v3643 = vld [vmem:[%s10 + $0xb28] sm:$0xff]
  %v3644 = vld [vmem:[%s10 + $0xb30] sm:$0xff]
  %v3645 = vld [vmem:[%s10 + $0xb38] sm:$0xff]
  %v3646 = vld [vmem:[%s10 + $0xb40] sm:$0xff]
  %v3647 = vld [vmem:[%s10 + $0xb48] sm:$0xff]
  %v3648 = vld [vmem:[%s10 + $0xb50] sm:$0xff]
  %v3649 = vld [vmem:[%s10 + $0xb58] sm:$0xff]
  %v3650 = vld [vmem:[%s10 + $0xb60] sm:$0xff]
  %v3651 = vld [vmem:[%s10 + $0xb68] sm:$0xff]
  %v3652 = vld [vmem:[%s10 + $0xb70] sm:$0xff]
  %v3653 = vld [vmem:[%s10 + $0xb78] sm:$0xff]
  %v3654 = vld [vmem:[%s10 + $0xb80] sm:$0xff]
  %v3655 = vld [vmem:[%s10 + $0xb88] sm:$0xff]
  %v3656 = vld [vmem:[%s10 + $0xb90] sm:$0xff]
  %v3657 = vld [vmem:[%s10 + $0xb98] sm:$0xff]
  %v3658 = vld [vmem:[%s10 + $0xba0] sm:$0xff]
  %v3659 = vld [vmem:[%s10 + $0xba8] sm:$0xff]
  %v3660 = vld [vmem:[%s10 + $0xbb0] sm:$0xff]
  %v3661 = vld [vmem:[%s10 + $0xbb8] sm:$0xff]
  %v3662 = vld [vmem:[%s10 + $0xbc0] sm:$0xff]
  %v3663 = vld [vmem:[%s10 + $0xbc8] sm:$0xff]
  %v3664 = vld [vmem:[%s10 + $0xbd0] sm:$0xff]
  %v3665 = vld [vmem:[%s10 + $0xbd8] sm:$0xff]
  %v3666 = vld [vmem:[%s10 + $0xbe0] sm:$0xff]
  %v3667 = vld [vmem:[%s10 + $0xbe8] sm:$0xff]
  %v3668 = vld [vmem:[%s10 + $0xbf0] sm:$0xff]
  %v3669 = vld [vmem:[%s10 + $0xbf8] sm:$0xff]
  %v3670 = vld [vmem:[%s10 + $0xc00] sm:$0xff]
  %v3671 = vld [vmem:[%s10 + $0xc08] sm:$0xff]
  %v3672 = vld [vmem:[%s10 + $0xc10] sm:$0xff]
  %v3673 = vld [vmem:[%s10 + $0xc18] sm:$0xff]
  %v3674 = vld [vmem:[%s10 + $0xc20] sm:$0xff]
  %v3675 = vld [vmem:[%s10 + $0xc28] sm:$0xff]
  %v3676 = vld [vmem:[%s10 + $0xc30] sm:$0xff]
  %v3677 = vld [vmem:[%s10 + $0xc38] sm:$0xff]
  %v3678 = vld [vmem:[%s10 + $0xc40] sm:$0xff]
  %v3679 = vld [vmem:[%s10 + $0xc48] sm:$0xff]
  %v3680 = vld [vmem:[%s10 + $0xc50] sm:$0xff]
  %v3681 = vld [vmem:[%s10 + $0xc58] sm:$0xff]
  %v3682 = vld [vmem:[%s10 + $0xc60] sm:$0xff]
  %v3683 = vld [vmem:[%s10 + $0xc68] sm:$0xff]
  %v3684 = vld [vmem:[%s10 + $0xc70] sm:$0xff]
  %v3685 = vld [vmem:[%s10 + $0xc78] sm:$0xff]
  %v3686 = vld [vmem:[%s10 + $0xc80] sm:$0xff]
  %v3687 = vld [vmem:[%s10 + $0xc88] sm:$0xff]
  %v3688 = vld [vmem:[%s10 + $0xc90] sm:$0xff]
  %v3689 = vld [vmem:[%s10 + $0xc98] sm:$0xff]
  %v3690 = vld [vmem:[%s10 + $0xca0] sm:$0xff]
  %v3691 = vld [vmem:[%s10 + $0xca8] sm:$0xff]
  %v3692 = vld [vmem:[%s10 + $0xcb0] sm:$0xff]
  %v3693 = vld [vmem:[%s10 + $0xcb8] sm:$0xff]
  %v3694 = vld [vmem:[%s10 + $0xcc0] sm:$0xff]
  %v3695 = vld [vmem:[%s10 + $0xcc8] sm:$0xff]
  %v3696 = vld [vmem:[%s10 + $0xcd0] sm:$0xff]
  %v3697 = vld [vmem:[%s10 + $0xcd8] sm:$0xff]
  %v3698 = vld [vmem:[%s10 + $0xce0] sm:$0xff]
  %v3699 = vld [vmem:[%s10 + $0xce8] sm:$0xff]
  %v3700 = vld [vmem:[%s10 + $0xcf0] sm:$0xff]
  %v3701 = vld [vmem:[%s10 + $0xcf8] sm:$0xff]
  %v3702 = vld [vmem:[%s10 + $0xd00] sm:$0xff]
  %v3703 = vld [vmem:[%s10 + $0xd08] sm:$0xff]
  %v3704 = vld [vmem:[%s10 + $0xd10] sm:$0xff]
  %v3705 = vld [vmem:[%s10 + $0xd18] sm:$0xff]
  %v3706 = vld [vmem:[%s10 + $0xd20] sm:$0xff]
  %v3707 = vld [vmem:[%s10 + $0xd28] sm:$0xff]
  %v3708 = vld [vmem:[%s10 + $0xd30] sm:$0xff]
  %v3709 = vld [vmem:[%s10 + $0xd38] sm:$0xff]
  %v3710 = vld [vmem:[%s10 + $0xd40] sm:$0xff]
  %v3711 = vld [vmem:[%s10 + $0xd48] sm:$0xff]
  %v3712 = vld [vmem:[%s10 + $0xd50] sm:$0xff]
  %v3713 = vld [vmem:[%s10 + $0xd58] sm:$0xff]
  %v3714 = vld [vmem:[%s10 + $0xd60] sm:$0xff]
  %v3715 = vld [vmem:[%s10 + $0xd68] sm:$0xff]
  %v3716 = vld [vmem:[%s10 + $0xd70] sm:$0xff]
  %v3717 = vld [vmem:[%s10 + $0xd78] sm:$0xff]
  %v3718 = vld [vmem:[%s10 + $0xd80] sm:$0xff]
  %v3719 = vld [vmem:[%s10 + $0xd88] sm:$0xff]
  %v3720 = vld [vmem:[%s10 + $0xd90] sm:$0xff]
  %v3721 = vld [vmem:[%s10 + $0xd98] sm:$0xff]
  %v3722 = vld [vmem:[%s10 + $0xda0] sm:$0xff]
  %v3723 = vld [vmem:[%s10 + $0xda8] sm:$0xff]
  %v3724 = vld [vmem:[%s10 + $0xdb0] sm:$0xff]
  %v3725 = vld [vmem:[%s10 + $0xdb8] sm:$0xff]
  %v3726 = vld [vmem:[%s10 + $0xdc0] sm:$0xff]
  %v3727 = vld [vmem:[%s10 + $0xdc8] sm:$0xff]
  %v3728 = vld [vmem:[%s10 + $0xdd0] sm:$0xff]
  %v3729 = vld [vmem:[%s10 + $0xdd8] sm:$0xff]
  %v3730 = vld [vmem:[%s10 + $0xde0] sm:$0xff]
  %v3731 = vld [vmem:[%s10 + $0xde8] sm:$0xff]
  %v3732 = vld [vmem:[%s10 + $0xdf0] sm:$0xff]
  %v3733 = vld [vmem:[%s10 + $0xdf8] sm:$0xff]
  %v3734 = vld [vmem:[%s10 + $0xe00] sm:$0xff]
  %v3735 = vld [vmem:[%s10 + $0xe08] sm:$0xff]
  %v3736 = vld [vmem:[%s10 + $0xe10] sm:$0xff]
  %v3737 = vld [vmem:[%s10 + $0xe18] sm:$0xff]
  %v3738 = vld [vmem:[%s10 + $0xe20] sm:$0xff]
  %v3739 = vld [vmem:[%s10 + $0xe28] sm:$0xff]
  %v3740 = vld [vmem:[%s10 + $0xe30] sm:$0xff]
  %v3741 = vld [vmem:[%s10 + $0xe38] sm:$0xff]
  %v3742 = vld [vmem:[%s10 + $0xe40] sm:$0xff]
  %v3743 = vld [vmem:[%s10 + $0xe48] sm:$0xff]
  %v3744 = vld [vmem:[%s10 + $0xe50] sm:$0xff]
  %v3745 = vld [vmem:[%s10 + $0xe58] sm:$0xff]
  %v3746 = vld [vmem:[%s10 + $0xe60] sm:$0xff]
  %v3747 = vld [vmem:[%s10 + $0xe68] sm:$0xff]
  %v3748 = vld [vmem:[%s10 + $0xe70] sm:$0xff]
  %v3749 = vld [vmem:[%s10 + $0xe78] sm:$0xff]
  %v3750 = vld [vmem:[%s10 + $0xe80] sm:$0xff]
  %v3751 = vld [vmem:[%s10 + $0xe88] sm:$0xff]
  %v3752 = vld [vmem:[%s10 + $0xe90] sm:$0xff]
  %v3753 = vld [vmem:[%s10 + $0xe98] sm:$0xff]
  %v3754 = vld [vmem:[%s10 + $0xea0] sm:$0xff]
  %v3755 = vld [vmem:[%s10 + $0xea8] sm:$0xff]
  %v3756 = vld [vmem:[%s10 + $0xeb0] sm:$0xff]
  %v3757 = vld [vmem:[%s10 + $0xeb8] sm:$0xff]
  %v3758 = vld [vmem:[%s10 + $0xec0] sm:$0xff]
  %v3759 = vld [vmem:[%s10 + $0xec8] sm:$0xff]
  %v3760 = vld [vmem:[%s10 + $0xed0] sm:$0xff]
  %v3761 = vld [vmem:[%s10 + $0xed8] sm:$0xff]
  %v3762 = vld [vmem:[%s10 + $0xee0] sm:$0xff]
  %v3763 = vld [vmem:[%s10 + $0xee8] sm:$0xff]
  %v3764 = vld [vmem:[%s10 + $0xef0] sm:$0xff]
  %v3765 = vld [vmem:[%s10 + $0xef8] sm:$0xff]
  %v3766 = vld [vmem:[%s10 + $0xf00] sm:$0xff]
  %v3767 = vld [vmem:[%s10 + $0xf08] sm:$0xff]
  %v3768 = vld [vmem:[%s10 + $0xf10] sm:$0xff]
  %v3769 = vld [vmem:[%s10 + $0xf18] sm:$0xff]
  %v3770 = vld [vmem:[%s10 + $0xf20] sm:$0xff]
  %v3771 = vld [vmem:[%s10 + $0xf28] sm:$0xff]
  %v3772 = vld [vmem:[%s10 + $0xf30] sm:$0xff]
  %v3773 = vld [vmem:[%s10 + $0xf38] sm:$0xff]
  %v3774 = vld [vmem:[%s10 + $0xf40] sm:$0xff]
  %v3775 = vld [vmem:[%s10 + $0xf48] sm:$0xff]
  %v3776 = vld [vmem:[%s10 + $0xf50] sm:$0xff]
  %v3777 = vld [vmem:[%s10 + $0xf58] sm:$0xff]
  %v3778 = vld [vmem:[%s10 + $0xf60] sm:$0xff]
  %v3779 = vld [vmem:[%s10 + $0xf68] sm:$0xff]
  %v3780 = vld [vmem:[%s10 + $0xf70] sm:$0xff]
  %v3781 = vld [vmem:[%s10 + $0xf78] sm:$0xff]
  %v3782 = vld [vmem:[%s10 + $0xf80] sm:$0xff]
  %v3783 = vld [vmem:[%s10 + $0xf88] sm:$0xff]
  %v3784 = vld [vmem:[%s10 + $0xf90] sm:$0xff]
  %v3785 = vld [vmem:[%s10 + $0xf98] sm:$0xff]
  %v3786 = vld [vmem:[%s10 + $0xfa0] sm:$0xff]
  %v3787 = vld [vmem:[%s10 + $0xfa8] sm:$0xff]
  %v3788 = vld [vmem:[%s10 + $0xfb0] sm:$0xff]
  %v3789 = vld [vmem:[%s10 + $0xfb8] sm:$0xff]
  %v3790 = vld [vmem:[%s10 + $0xfc0] sm:$0xff]
  %v3791 = vld [vmem:[%s10 + $0xfc8] sm:$0xff]
  %v3792 = vld [vmem:[%s10 + $0xfd0] sm:$0xff]
  %v3793 = vld [vmem:[%s10 + $0xfd8] sm:$0xff]
  %v3794 = vld [vmem:[%s10 + $0xfe0] sm:$0xff]
  %v3795 = vld [vmem:[%s10 + $0xfe8] sm:$0xff]
  %v3796 = vld [vmem:[%s10 + $0xff0] sm:$0xff]
  %v3797 = vld [vmem:[%s10 + $0xff8] sm:$0xff]
  %v3798 = vld [vmem:[%s10 + $0x1000] sm:$0xff]
  %v3799 = vld [vmem:[%s10 + $0x1008] sm:$0xff]
  %v3800 = vld [vmem:[%s10 + $0x1010] sm:$0xff]
  %v3801 = vld [vmem:[%s10 + $0x1018] sm:$0xff]
  %v3802 = vld [vmem:[%s10 + $0x1020] sm:$0xff]
  %v3803 = vld [vmem:[%s10 + $0x1028] sm:$0xff]
  %v3804 = vld [vmem:[%s10 + $0x1030] sm:$0xff]
  %v3805 = vld [vmem:[%s10 + $0x1038] sm:$0xff]
  %v3806 = vld [vmem:[%s10 + $0x1040] sm:$0xff]
  %v3807 = vld [vmem:[%s10 + $0x1048] sm:$0xff]
  %v3808 = vld [vmem:[%s10 + $0x1050] sm:$0xff]
  %v3809 = vld [vmem:[%s10 + $0x1058] sm:$0xff]
  %v3810 = vld [vmem:[%s10 + $0x1060] sm:$0xff]
  %v3811 = vld [vmem:[%s10 + $0x1068] sm:$0xff]
  %v3812 = vld [vmem:[%s10 + $0x1070] sm:$0xff]
  %v3813 = vld [vmem:[%s10 + $0x1078] sm:$0xff]
  %v3814 = vld [vmem:[%s10 + $0x1080] sm:$0xff]
  %v3815 = vld [vmem:[%s10 + $0x1088] sm:$0xff]
  %v3816 = vld [vmem:[%s10 + $0x1090] sm:$0xff]
  %v3817 = vld [vmem:[%s10 + $0x1098] sm:$0xff]
  %v3818 = vld [vmem:[%s10 + $0x10a0] sm:$0xff]
  %v3819 = vld [vmem:[%s10 + $0x10a8] sm:$0xff]
  %v3820 = vld [vmem:[%s10 + $0x10b0] sm:$0xff]
  %v3821 = vld [vmem:[%s10 + $0x10b8] sm:$0xff]
  %v3822 = vld [vmem:[%s10 + $0x10c0] sm:$0xff]
  %v3823 = vld [vmem:[%s10 + $0x10c8] sm:$0xff]
  %v3824 = vld [vmem:[%s10 + $0x10d0] sm:$0xff]
  %v3825 = vld [vmem:[%s10 + $0x10d8] sm:$0xff]
  %v3826 = vld [vmem:[%s10 + $0x10e0] sm:$0xff]
  %v3827 = vld [vmem:[%s10 + $0x10e8] sm:$0xff]
  %v3828 = vld [vmem:[%s10 + $0x10f0] sm:$0xff]
  %v3829 = vld [vmem:[%s10 + $0x10f8] sm:$0xff]
  %v3830 = vld [vmem:[%s10 + $0x1100] sm:$0xff]
  %v3831 = vld [vmem:[%s10 + $0x1108] sm:$0xff]
  %v3832 = vld [vmem:[%s10 + $0x1110] sm:$0xff]
  %v3833 = vld [vmem:[%s10 + $0x1118] sm:$0xff]
  %v3834 = vld [vmem:[%s10 + $0x1120] sm:$0xff]
  %v3835 = vld [vmem:[%s10 + $0x1128] sm:$0xff]
  %v3836 = vld [vmem:[%s10 + $0x1130] sm:$0xff]
  %v3837 = vld [vmem:[%s10 + $0x1138] sm:$0xff]
  %v3838 = vld [vmem:[%s10 + $0x1140] sm:$0xff]
  %v3839 = vld [vmem:[%s10 + $0x1148] sm:$0xff]
  %v3840 = vld [vmem:[%s10 + $0x1150] sm:$0xff]
  %v3841 = vld [vmem:[%s10 + $0x1158] sm:$0xff]
  %v3842 = vld [vmem:[%s10 + $0x1160] sm:$0xff]
  %v3843 = vld [vmem:[%s10 + $0x1168] sm:$0xff]
  %v3844 = vld [vmem:[%s10 + $0x1170] sm:$0xff]
  %v3845 = vld [vmem:[%s10 + $0x1178] sm:$0xff]
  %v3846 = vld [vmem:[%s10 + $0x1180] sm:$0xff]
  %v3847 = vld [vmem:[%s10 + $0x1188] sm:$0xff]
  %v3848 = vld [vmem:[%s10 + $0x1190] sm:$0xff]
  %v3849 = vld [vmem:[%s10 + $0x1198] sm:$0xff]
  %v3850 = vld [vmem:[%s10 + $0x11a0] sm:$0xff]
  %v3851 = vld [vmem:[%s10 + $0x11a8] sm:$0xff]
  %v3852 = vld [vmem:[%s10 + $0x11b0] sm:$0xff]
  %v3853 = vld [vmem:[%s10 + $0x11b8] sm:$0xff]
  %v3854 = vld [vmem:[%s10 + $0x11c0] sm:$0xff]
  %v3855 = vld [vmem:[%s10 + $0x11c8] sm:$0xff]
  %v3856 = vld [vmem:[%s10 + $0x11d0] sm:$0xff]
  %v3857 = vld [vmem:[%s10 + $0x11d8] sm:$0xff]
  %v3858 = vld [vmem:[%s10 + $0x11e0] sm:$0xff]
  %v3859 = vld [vmem:[%s10 + $0x11e8] sm:$0xff]
  %v3860 = vld [vmem:[%s10 + $0x11f0] sm:$0xff]
  %v3861 = vld [vmem:[%s10 + $0x11f8] sm:$0xff]
  %v3862 = vld [vmem:[%s6 + $0x30] sm:$0x3f]
  %3864 = vset.pattern.permute.xlu0 0
  %3865 = vperm.xlu0 %3864, %v3862
  %v3866 = vpop.permute.xlu0 %3865
  %v4444 = vunpack.c.l.b16 %v3286
  %v4445 = vunpack.c.h.b16 %v3286
  %v4446 = vunpack.c.l.b16 %v3287
  %v4447 = vunpack.c.h.b16 %v3287
  %v4448 = vunpack.c.l.b16 %v3288
  %v4449 = vunpack.c.h.b16 %v3288
  %v4450 = vunpack.c.l.b16 %v3289
  %v4451 = vunpack.c.h.b16 %v3289
  %v4452 = vunpack.c.l.b16 %v3290
  %v4453 = vunpack.c.h.b16 %v3290
  %v4454 = vunpack.c.l.b16 %v3291
  %v4455 = vunpack.c.h.b16 %v3291
  %v4456 = vunpack.c.l.b16 %v3292
  %v4457 = vunpack.c.h.b16 %v3292
  %v4458 = vunpack.c.l.b16 %v3293
  %v4459 = vunpack.c.h.b16 %v3293
  %v4460 = vunpack.c.l.b16 %v3294
  %v4461 = vunpack.c.h.b16 %v3294
  %v4462 = vunpack.c.l.b16 %v3295
  %v4463 = vunpack.c.h.b16 %v3295
  %v4464 = vunpack.c.l.b16 %v3296
  %v4465 = vunpack.c.h.b16 %v3296
  %v4466 = vunpack.c.l.b16 %v3297
  %v4467 = vunpack.c.h.b16 %v3297
  %v4468 = vunpack.c.l.b16 %v3298
  %v4469 = vunpack.c.h.b16 %v3298
  %v4470 = vunpack.c.l.b16 %v3299
  %v4471 = vunpack.c.h.b16 %v3299
  %v4472 = vunpack.c.l.b16 %v3300
  %v4473 = vunpack.c.h.b16 %v3300
  %v4474 = vunpack.c.l.b16 %v3301
  %v4475 = vunpack.c.h.b16 %v3301
  %v4476 = vunpack.c.l.b16 %v3302
  %v4477 = vunpack.c.h.b16 %v3302
  %v4478 = vunpack.c.l.b16 %v3303
  %v4479 = vunpack.c.h.b16 %v3303
  %v4480 = vunpack.c.l.b16 %v3304
  %v4481 = vunpack.c.h.b16 %v3304
  %v4482 = vunpack.c.l.b16 %v3305
  %v4483 = vunpack.c.h.b16 %v3305
  %v4484 = vunpack.c.l.b16 %v3306
  %v4485 = vunpack.c.h.b16 %v3306
  %v4486 = vunpack.c.l.b16 %v3307
  %v4487 = vunpack.c.h.b16 %v3307
  %v4488 = vunpack.c.l.b16 %v3308
  %v4489 = vunpack.c.h.b16 %v3308
  %v4490 = vunpack.c.l.b16 %v3309
  %v4491 = vunpack.c.h.b16 %v3309
  %v4492 = vunpack.c.l.b16 %v3310
  %v4493 = vunpack.c.h.b16 %v3310
  %v4494 = vunpack.c.l.b16 %v3311
  %v4495 = vunpack.c.h.b16 %v3311
  %v4496 = vunpack.c.l.b16 %v3312
  %v4497 = vunpack.c.h.b16 %v3312
  %v4498 = vunpack.c.l.b16 %v3313
  %v4499 = vunpack.c.h.b16 %v3313
  %v4500 = vunpack.c.l.b16 %v3314
  %v4501 = vunpack.c.h.b16 %v3314
  %v4502 = vunpack.c.l.b16 %v3315
  %v4503 = vunpack.c.h.b16 %v3315
  %v4504 = vunpack.c.l.b16 %v3316
  %v4505 = vunpack.c.h.b16 %v3316
  %v4506 = vunpack.c.l.b16 %v3317
  %v4507 = vunpack.c.h.b16 %v3317
  %v4508 = vunpack.c.l.b16 %v3318
  %v4509 = vunpack.c.h.b16 %v3318
  %v4510 = vunpack.c.l.b16 %v3319
  %v4511 = vunpack.c.h.b16 %v3319
  %v4512 = vunpack.c.l.b16 %v3320
  %v4513 = vunpack.c.h.b16 %v3320
  %v4514 = vunpack.c.l.b16 %v3321
  %v4515 = vunpack.c.h.b16 %v3321
  %v4516 = vunpack.c.l.b16 %v3322
  %v4517 = vunpack.c.h.b16 %v3322
  %v4518 = vunpack.c.l.b16 %v3323
  %v4519 = vunpack.c.h.b16 %v3323
  %v4520 = vunpack.c.l.b16 %v3324
  %v4521 = vunpack.c.h.b16 %v3324
  %v4522 = vunpack.c.l.b16 %v3325
  %v4523 = vunpack.c.h.b16 %v3325
  %v4524 = vunpack.c.l.b16 %v3326
  %v4525 = vunpack.c.h.b16 %v3326
  %v4526 = vunpack.c.l.b16 %v3327
  %v4527 = vunpack.c.h.b16 %v3327
  %v4528 = vunpack.c.l.b16 %v3328
  %v4529 = vunpack.c.h.b16 %v3328
  %v4530 = vunpack.c.l.b16 %v3329
  %v4531 = vunpack.c.h.b16 %v3329
  %v4532 = vunpack.c.l.b16 %v3330
  %v4533 = vunpack.c.h.b16 %v3330
  %v4534 = vunpack.c.l.b16 %v3331
  %v4535 = vunpack.c.h.b16 %v3331
  %v4536 = vunpack.c.l.b16 %v3332
  %v4537 = vunpack.c.h.b16 %v3332
  %v4538 = vunpack.c.l.b16 %v3333
  %v4539 = vunpack.c.h.b16 %v3333
  %v4540 = vunpack.c.l.b16 %v3334
  %v4541 = vunpack.c.h.b16 %v3334
  %v4542 = vunpack.c.l.b16 %v3335
  %v4543 = vunpack.c.h.b16 %v3335
  %v4544 = vunpack.c.l.b16 %v3336
  %v4545 = vunpack.c.h.b16 %v3336
  %v4546 = vunpack.c.l.b16 %v3337
  %v4547 = vunpack.c.h.b16 %v3337
  %v4548 = vunpack.c.l.b16 %v3338
  %v4549 = vunpack.c.h.b16 %v3338
  %v4550 = vunpack.c.l.b16 %v3339
  %v4551 = vunpack.c.h.b16 %v3339
  %v4552 = vunpack.c.l.b16 %v3340
  %v4553 = vunpack.c.h.b16 %v3340
  %v4554 = vunpack.c.l.b16 %v3341
  %v4555 = vunpack.c.h.b16 %v3341
  %v4556 = vunpack.c.l.b16 %v3342
  %v4557 = vunpack.c.h.b16 %v3342
  %v4558 = vunpack.c.l.b16 %v3343
  %v4559 = vunpack.c.h.b16 %v3343
  %v4560 = vunpack.c.l.b16 %v3344
  %v4561 = vunpack.c.h.b16 %v3344
  %v4562 = vunpack.c.l.b16 %v3345
  %v4563 = vunpack.c.h.b16 %v3345
  %v4564 = vunpack.c.l.b16 %v3346
  %v4565 = vunpack.c.h.b16 %v3346
  %v4566 = vunpack.c.l.b16 %v3347
  %v4567 = vunpack.c.h.b16 %v3347
  %v4568 = vunpack.c.l.b16 %v3348
  %v4569 = vunpack.c.h.b16 %v3348
  %v4570 = vunpack.c.l.b16 %v3349
  %v4571 = vunpack.c.h.b16 %v3349
  %v4572 = vunpack.c.l.b16 %v3350
  %v4573 = vunpack.c.h.b16 %v3350
  %v4574 = vunpack.c.l.b16 %v3351
  %v4575 = vunpack.c.h.b16 %v3351
  %v4576 = vunpack.c.l.b16 %v3352
  %v4577 = vunpack.c.h.b16 %v3352
  %v4578 = vunpack.c.l.b16 %v3353
  %v4579 = vunpack.c.h.b16 %v3353
  %v4580 = vunpack.c.l.b16 %v3354
  %v4581 = vunpack.c.h.b16 %v3354
  %v4582 = vunpack.c.l.b16 %v3355
  %v4583 = vunpack.c.h.b16 %v3355
  %v4584 = vunpack.c.l.b16 %v3356
  %v4585 = vunpack.c.h.b16 %v3356
  %v4586 = vunpack.c.l.b16 %v3357
  %v4587 = vunpack.c.h.b16 %v3357
  %v4588 = vunpack.c.l.b16 %v3358
  %v4589 = vunpack.c.h.b16 %v3358
  %v4590 = vunpack.c.l.b16 %v3359
  %v4591 = vunpack.c.h.b16 %v3359
  %v4592 = vunpack.c.l.b16 %v3360
  %v4593 = vunpack.c.h.b16 %v3360
  %v4594 = vunpack.c.l.b16 %v3361
  %v4595 = vunpack.c.h.b16 %v3361
  %v4596 = vunpack.c.l.b16 %v3362
  %v4597 = vunpack.c.h.b16 %v3362
  %v4598 = vunpack.c.l.b16 %v3363
  %v4599 = vunpack.c.h.b16 %v3363
  %v4600 = vunpack.c.l.b16 %v3364
  %v4601 = vunpack.c.h.b16 %v3364
  %v4602 = vunpack.c.l.b16 %v3365
  %v4603 = vunpack.c.h.b16 %v3365
  %v4604 = vunpack.c.l.b16 %v3366
  %v4605 = vunpack.c.h.b16 %v3366
  %v4606 = vunpack.c.l.b16 %v3367
  %v4607 = vunpack.c.h.b16 %v3367
  %v4608 = vunpack.c.l.b16 %v3368
  %v4609 = vunpack.c.h.b16 %v3368
  %v4610 = vunpack.c.l.b16 %v3369
  %v4611 = vunpack.c.h.b16 %v3369
  %v4612 = vunpack.c.l.b16 %v3370
  %v4613 = vunpack.c.h.b16 %v3370
  %v4614 = vunpack.c.l.b16 %v3371
  %v4615 = vunpack.c.h.b16 %v3371
  %v4616 = vunpack.c.l.b16 %v3372
  %v4617 = vunpack.c.h.b16 %v3372
  %v4618 = vunpack.c.l.b16 %v3373
  %v4619 = vunpack.c.h.b16 %v3373
  %v4620 = vunpack.c.l.b16 %v3374
  %v4621 = vunpack.c.h.b16 %v3374
  %v4622 = vunpack.c.l.b16 %v3375
  %v4623 = vunpack.c.h.b16 %v3375
  %v4624 = vunpack.c.l.b16 %v3376
  %v4625 = vunpack.c.h.b16 %v3376
  %v4626 = vunpack.c.l.b16 %v3377
  %v4627 = vunpack.c.h.b16 %v3377
  %v4628 = vunpack.c.l.b16 %v3378
  %v4629 = vunpack.c.h.b16 %v3378
  %v4630 = vunpack.c.l.b16 %v3379
  %v4631 = vunpack.c.h.b16 %v3379
  %v4632 = vunpack.c.l.b16 %v3380
  %v4633 = vunpack.c.h.b16 %v3380
  %v4634 = vunpack.c.l.b16 %v3381
  %v4635 = vunpack.c.h.b16 %v3381
  %v4636 = vunpack.c.l.b16 %v3382
  %v4637 = vunpack.c.h.b16 %v3382
  %v4638 = vunpack.c.l.b16 %v3383
  %v4639 = vunpack.c.h.b16 %v3383
  %v4640 = vunpack.c.l.b16 %v3384
  %v4641 = vunpack.c.h.b16 %v3384
  %v4642 = vunpack.c.l.b16 %v3385
  %v4643 = vunpack.c.h.b16 %v3385
  %v4644 = vunpack.c.l.b16 %v3386
  %v4645 = vunpack.c.h.b16 %v3386
  %v4646 = vunpack.c.l.b16 %v3387
  %v4647 = vunpack.c.h.b16 %v3387
  %v4648 = vunpack.c.l.b16 %v3388
  %v4649 = vunpack.c.h.b16 %v3388
  %v4650 = vunpack.c.l.b16 %v3389
  %v4651 = vunpack.c.h.b16 %v3389
  %v4652 = vunpack.c.l.b16 %v3390
  %v4653 = vunpack.c.h.b16 %v3390
  %v4654 = vunpack.c.l.b16 %v3391
  %v4655 = vunpack.c.h.b16 %v3391
  %v4656 = vunpack.c.l.b16 %v3392
  %v4657 = vunpack.c.h.b16 %v3392
  %v4658 = vunpack.c.l.b16 %v3393
  %v4659 = vunpack.c.h.b16 %v3393
  %v4660 = vunpack.c.l.b16 %v3394
  %v4661 = vunpack.c.h.b16 %v3394
  %v4662 = vunpack.c.l.b16 %v3395
  %v4663 = vunpack.c.h.b16 %v3395
  %v4664 = vunpack.c.l.b16 %v3396
  %v4665 = vunpack.c.h.b16 %v3396
  %v4666 = vunpack.c.l.b16 %v3397
  %v4667 = vunpack.c.h.b16 %v3397
  %v4668 = vunpack.c.l.b16 %v3398
  %v4669 = vunpack.c.h.b16 %v3398
  %v4670 = vunpack.c.l.b16 %v3399
  %v4671 = vunpack.c.h.b16 %v3399
  %v4672 = vunpack.c.l.b16 %v3400
  %v4673 = vunpack.c.h.b16 %v3400
  %v4674 = vunpack.c.l.b16 %v3401
  %v4675 = vunpack.c.h.b16 %v3401
  %v4676 = vunpack.c.l.b16 %v3402
  %v4677 = vunpack.c.h.b16 %v3402
  %v4678 = vunpack.c.l.b16 %v3403
  %v4679 = vunpack.c.h.b16 %v3403
  %v4680 = vunpack.c.l.b16 %v3404
  %v4681 = vunpack.c.h.b16 %v3404
  %v4682 = vunpack.c.l.b16 %v3405
  %v4683 = vunpack.c.h.b16 %v3405
  %v4684 = vunpack.c.l.b16 %v3406
  %v4685 = vunpack.c.h.b16 %v3406
  %v4686 = vunpack.c.l.b16 %v3407
  %v4687 = vunpack.c.h.b16 %v3407
  %v4688 = vunpack.c.l.b16 %v3408
  %v4689 = vunpack.c.h.b16 %v3408
  %v4690 = vunpack.c.l.b16 %v3409
  %v4691 = vunpack.c.h.b16 %v3409
  %v4692 = vunpack.c.l.b16 %v3410
  %v4693 = vunpack.c.h.b16 %v3410
  %v4694 = vunpack.c.l.b16 %v3411
  %v4695 = vunpack.c.h.b16 %v3411
  %v4696 = vunpack.c.l.b16 %v3412
  %v4697 = vunpack.c.h.b16 %v3412
  %v4698 = vunpack.c.l.b16 %v3413
  %v4699 = vunpack.c.h.b16 %v3413
  %v4700 = vunpack.c.l.b16 %v3414
  %v4701 = vunpack.c.h.b16 %v3414
  %v4702 = vunpack.c.l.b16 %v3415
  %v4703 = vunpack.c.h.b16 %v3415
  %v4704 = vunpack.c.l.b16 %v3416
  %v4705 = vunpack.c.h.b16 %v3416
  %v4706 = vunpack.c.l.b16 %v3417
  %v4707 = vunpack.c.h.b16 %v3417
  %v4708 = vunpack.c.l.b16 %v3418
  %v4709 = vunpack.c.h.b16 %v3418
  %v4710 = vunpack.c.l.b16 %v3419
  %v4711 = vunpack.c.h.b16 %v3419
  %v4712 = vunpack.c.l.b16 %v3420
  %v4713 = vunpack.c.h.b16 %v3420
  %v4714 = vunpack.c.l.b16 %v3421
  %v4715 = vunpack.c.h.b16 %v3421
  %v4716 = vunpack.c.l.b16 %v3422
  %v4717 = vunpack.c.h.b16 %v3422
  %v4718 = vunpack.c.l.b16 %v3423
  %v4719 = vunpack.c.h.b16 %v3423
  %v4720 = vunpack.c.l.b16 %v3424
  %v4721 = vunpack.c.h.b16 %v3424
  %v4722 = vunpack.c.l.b16 %v3425
  %v4723 = vunpack.c.h.b16 %v3425
  %v4724 = vunpack.c.l.b16 %v3426
  %v4725 = vunpack.c.h.b16 %v3426
  %v4726 = vunpack.c.l.b16 %v3427
  %v4727 = vunpack.c.h.b16 %v3427
  %v4728 = vunpack.c.l.b16 %v3428
  %v4729 = vunpack.c.h.b16 %v3428
  %v4730 = vunpack.c.l.b16 %v3429
  %v4731 = vunpack.c.h.b16 %v3429
  %v4732 = vunpack.c.l.b16 %v3430
  %v4733 = vunpack.c.h.b16 %v3430
  %v4734 = vunpack.c.l.b16 %v3431
  %v4735 = vunpack.c.h.b16 %v3431
  %v4736 = vunpack.c.l.b16 %v3432
  %v4737 = vunpack.c.h.b16 %v3432
  %v4738 = vunpack.c.l.b16 %v3433
  %v4739 = vunpack.c.h.b16 %v3433
  %v4740 = vunpack.c.l.b16 %v3434
  %v4741 = vunpack.c.h.b16 %v3434
  %v4742 = vunpack.c.l.b16 %v3435
  %v4743 = vunpack.c.h.b16 %v3435
  %v4744 = vunpack.c.l.b16 %v3436
  %v4745 = vunpack.c.h.b16 %v3436
  %v4746 = vunpack.c.l.b16 %v3437
  %v4747 = vunpack.c.h.b16 %v3437
  %v4748 = vunpack.c.l.b16 %v3438
  %v4749 = vunpack.c.h.b16 %v3438
  %v4750 = vunpack.c.l.b16 %v3439
  %v4751 = vunpack.c.h.b16 %v3439
  %v4752 = vunpack.c.l.b16 %v3440
  %v4753 = vunpack.c.h.b16 %v3440
  %v4754 = vunpack.c.l.b16 %v3441
  %v4755 = vunpack.c.h.b16 %v3441
  %v4756 = vunpack.c.l.b16 %v3442
  %v4757 = vunpack.c.h.b16 %v3442
  %v4758 = vunpack.c.l.b16 %v3443
  %v4759 = vunpack.c.h.b16 %v3443
  %v4760 = vunpack.c.l.b16 %v3444
  %v4761 = vunpack.c.h.b16 %v3444
  %v4762 = vunpack.c.l.b16 %v3445
  %v4763 = vunpack.c.h.b16 %v3445
  %v4764 = vunpack.c.l.b16 %v3446
  %v4765 = vunpack.c.h.b16 %v3446
  %v4766 = vunpack.c.l.b16 %v3447
  %v4767 = vunpack.c.h.b16 %v3447
  %v4768 = vunpack.c.l.b16 %v3448
  %v4769 = vunpack.c.h.b16 %v3448
  %v4770 = vunpack.c.l.b16 %v3449
  %v4771 = vunpack.c.h.b16 %v3449
  %v4772 = vunpack.c.l.b16 %v3450
  %v4773 = vunpack.c.h.b16 %v3450
  %v4774 = vunpack.c.l.b16 %v3451
  %v4775 = vunpack.c.h.b16 %v3451
  %v4776 = vunpack.c.l.b16 %v3452
  %v4777 = vunpack.c.h.b16 %v3452
  %v4778 = vunpack.c.l.b16 %v3453
  %v4779 = vunpack.c.h.b16 %v3453
  %v4780 = vunpack.c.l.b16 %v3454
  %v4781 = vunpack.c.h.b16 %v3454
  %v4782 = vunpack.c.l.b16 %v3455
  %v4783 = vunpack.c.h.b16 %v3455
  %v4784 = vunpack.c.l.b16 %v3456
  %v4785 = vunpack.c.h.b16 %v3456
  %v4786 = vunpack.c.l.b16 %v3457
  %v4787 = vunpack.c.h.b16 %v3457
  %v4788 = vunpack.c.l.b16 %v3458
  %v4789 = vunpack.c.h.b16 %v3458
  %v4790 = vunpack.c.l.b16 %v3459
  %v4791 = vunpack.c.h.b16 %v3459
  %v4792 = vunpack.c.l.b16 %v3460
  %v4793 = vunpack.c.h.b16 %v3460
  %v4794 = vunpack.c.l.b16 %v3461
  %v4795 = vunpack.c.h.b16 %v3461
  %v4796 = vunpack.c.l.b16 %v3462
  %v4797 = vunpack.c.h.b16 %v3462
  %v4798 = vunpack.c.l.b16 %v3463
  %v4799 = vunpack.c.h.b16 %v3463
  %v4800 = vunpack.c.l.b16 %v3464
  %v4801 = vunpack.c.h.b16 %v3464
  %v4802 = vunpack.c.l.b16 %v3465
  %v4803 = vunpack.c.h.b16 %v3465
  %v4804 = vunpack.c.l.b16 %v3466
  %v4805 = vunpack.c.h.b16 %v3466
  %v4806 = vunpack.c.l.b16 %v3467
  %v4807 = vunpack.c.h.b16 %v3467
  %v4808 = vunpack.c.l.b16 %v3468
  %v4809 = vunpack.c.h.b16 %v3468
  %v4810 = vunpack.c.l.b16 %v3469
  %v4811 = vunpack.c.h.b16 %v3469
  %v4812 = vunpack.c.l.b16 %v3470
  %v4813 = vunpack.c.h.b16 %v3470
  %v4814 = vunpack.c.l.b16 %v3471
  %v4815 = vunpack.c.h.b16 %v3471
  %v4816 = vunpack.c.l.b16 %v3472
  %v4817 = vunpack.c.h.b16 %v3472
  %v4818 = vunpack.c.l.b16 %v3473
  %v4819 = vunpack.c.h.b16 %v3473
  %v4820 = vunpack.c.l.b16 %v3474
  %v4821 = vunpack.c.h.b16 %v3474
  %v4822 = vunpack.c.l.b16 %v3475
  %v4823 = vunpack.c.h.b16 %v3475
  %v4824 = vunpack.c.l.b16 %v3476
  %v4825 = vunpack.c.h.b16 %v3476
  %v4826 = vunpack.c.l.b16 %v3477
  %v4827 = vunpack.c.h.b16 %v3477
  %v4828 = vunpack.c.l.b16 %v3478
  %v4829 = vunpack.c.h.b16 %v3478
  %v4830 = vunpack.c.l.b16 %v3479
  %v4831 = vunpack.c.h.b16 %v3479
  %v4832 = vunpack.c.l.b16 %v3480
  %v4833 = vunpack.c.h.b16 %v3480
  %v4834 = vunpack.c.l.b16 %v3481
  %v4835 = vunpack.c.h.b16 %v3481
  %v4836 = vunpack.c.l.b16 %v3482
  %v4837 = vunpack.c.h.b16 %v3482
  %v4838 = vunpack.c.l.b16 %v3483
  %v4839 = vunpack.c.h.b16 %v3483
  %v4840 = vunpack.c.l.b16 %v3484
  %v4841 = vunpack.c.h.b16 %v3484
  %v4842 = vunpack.c.l.b16 %v3485
  %v4843 = vunpack.c.h.b16 %v3485
  %v4844 = vunpack.c.l.b16 %v3486
  %v4845 = vunpack.c.h.b16 %v3486
  %v4846 = vunpack.c.l.b16 %v3487
  %v4847 = vunpack.c.h.b16 %v3487
  %v4848 = vunpack.c.l.b16 %v3488
  %v4849 = vunpack.c.h.b16 %v3488
  %v4850 = vunpack.c.l.b16 %v3489
  %v4851 = vunpack.c.h.b16 %v3489
  %v4852 = vunpack.c.l.b16 %v3490
  %v4853 = vunpack.c.h.b16 %v3490
  %v4854 = vunpack.c.l.b16 %v3491
  %v4855 = vunpack.c.h.b16 %v3491
  %v4856 = vunpack.c.l.b16 %v3492
  %v4857 = vunpack.c.h.b16 %v3492
  %v4858 = vunpack.c.l.b16 %v3493
  %v4859 = vunpack.c.h.b16 %v3493
  %v4860 = vunpack.c.l.b16 %v3494
  %v4861 = vunpack.c.h.b16 %v3494
  %v4862 = vunpack.c.l.b16 %v3495
  %v4863 = vunpack.c.h.b16 %v3495
  %v4864 = vunpack.c.l.b16 %v3496
  %v4865 = vunpack.c.h.b16 %v3496
  %v4866 = vunpack.c.l.b16 %v3497
  %v4867 = vunpack.c.h.b16 %v3497
  %v4868 = vunpack.c.l.b16 %v3498
  %v4869 = vunpack.c.h.b16 %v3498
  %v4870 = vunpack.c.l.b16 %v3499
  %v4871 = vunpack.c.h.b16 %v3499
  %v4872 = vunpack.c.l.b16 %v3500
  %v4873 = vunpack.c.h.b16 %v3500
  %v4874 = vunpack.c.l.b16 %v3501
  %v4875 = vunpack.c.h.b16 %v3501
  %v4876 = vunpack.c.l.b16 %v3502
  %v4877 = vunpack.c.h.b16 %v3502
  %v4878 = vunpack.c.l.b16 %v3503
  %v4879 = vunpack.c.h.b16 %v3503
  %v4880 = vunpack.c.l.b16 %v3504
  %v4881 = vunpack.c.h.b16 %v3504
  %v4882 = vunpack.c.l.b16 %v3505
  %v4883 = vunpack.c.h.b16 %v3505
  %v4884 = vunpack.c.l.b16 %v3506
  %v4885 = vunpack.c.h.b16 %v3506
  %v4886 = vunpack.c.l.b16 %v3507
  %v4887 = vunpack.c.h.b16 %v3507
  %v4888 = vunpack.c.l.b16 %v3508
  %v4889 = vunpack.c.h.b16 %v3508
  %v4890 = vunpack.c.l.b16 %v3509
  %v4891 = vunpack.c.h.b16 %v3509
  %v4892 = vunpack.c.l.b16 %v3510
  %v4893 = vunpack.c.h.b16 %v3510
  %v4894 = vunpack.c.l.b16 %v3511
  %v4895 = vunpack.c.h.b16 %v3511
  %v4896 = vunpack.c.l.b16 %v3512
  %v4897 = vunpack.c.h.b16 %v3512
  %v4898 = vunpack.c.l.b16 %v3513
  %v4899 = vunpack.c.h.b16 %v3513
  %v4900 = vunpack.c.l.b16 %v3514
  %v4901 = vunpack.c.h.b16 %v3514
  %v4902 = vunpack.c.l.b16 %v3515
  %v4903 = vunpack.c.h.b16 %v3515
  %v4904 = vunpack.c.l.b16 %v3516
  %v4905 = vunpack.c.h.b16 %v3516
  %v4906 = vunpack.c.l.b16 %v3517
  %v4907 = vunpack.c.h.b16 %v3517
  %v4908 = vunpack.c.l.b16 %v3518
  %v4909 = vunpack.c.h.b16 %v3518
  %v4910 = vunpack.c.l.b16 %v3519
  %v4911 = vunpack.c.h.b16 %v3519
  %v4912 = vunpack.c.l.b16 %v3520
  %v4913 = vunpack.c.h.b16 %v3520
  %v4914 = vunpack.c.l.b16 %v3521
  %v4915 = vunpack.c.h.b16 %v3521
  %v4916 = vunpack.c.l.b16 %v3522
  %v4917 = vunpack.c.h.b16 %v3522
  %v4918 = vunpack.c.l.b16 %v3523
  %v4919 = vunpack.c.h.b16 %v3523
  %v4920 = vunpack.c.l.b16 %v3524
  %v4921 = vunpack.c.h.b16 %v3524
  %v4922 = vunpack.c.l.b16 %v3525
  %v4923 = vunpack.c.h.b16 %v3525
  %v4924 = vunpack.c.l.b16 %v3526
  %v4925 = vunpack.c.h.b16 %v3526
  %v4926 = vunpack.c.l.b16 %v3527
  %v4927 = vunpack.c.h.b16 %v3527
  %v4928 = vunpack.c.l.b16 %v3528
  %v4929 = vunpack.c.h.b16 %v3528
  %v4930 = vunpack.c.l.b16 %v3529
  %v4931 = vunpack.c.h.b16 %v3529
  %v4932 = vunpack.c.l.b16 %v3530
  %v4933 = vunpack.c.h.b16 %v3530
  %v4934 = vunpack.c.l.b16 %v3531
  %v4935 = vunpack.c.h.b16 %v3531
  %v4936 = vunpack.c.l.b16 %v3532
  %v4937 = vunpack.c.h.b16 %v3532
  %v4938 = vunpack.c.l.b16 %v3533
  %v4939 = vunpack.c.h.b16 %v3533
  %v4940 = vunpack.c.l.b16 %v3534
  %v4941 = vunpack.c.h.b16 %v3534
  %v4942 = vunpack.c.l.b16 %v3535
  %v4943 = vunpack.c.h.b16 %v3535
  %v4944 = vunpack.c.l.b16 %v3536
  %v4945 = vunpack.c.h.b16 %v3536
  %v4946 = vunpack.c.l.b16 %v3537
  %v4947 = vunpack.c.h.b16 %v3537
  %v4948 = vunpack.c.l.b16 %v3538
  %v4949 = vunpack.c.h.b16 %v3538
  %v4950 = vunpack.c.l.b16 %v3539
  %v4951 = vunpack.c.h.b16 %v3539
  %v4952 = vunpack.c.l.b16 %v3540
  %v4953 = vunpack.c.h.b16 %v3540
  %v4954 = vunpack.c.l.b16 %v3541
  %v4955 = vunpack.c.h.b16 %v3541
  %v4956 = vunpack.c.l.b16 %v3542
  %v4957 = vunpack.c.h.b16 %v3542
  %v4958 = vunpack.c.l.b16 %v3543
  %v4959 = vunpack.c.h.b16 %v3543
  %v4960 = vunpack.c.l.b16 %v3544
  %v4961 = vunpack.c.h.b16 %v3544
  %v4962 = vunpack.c.l.b16 %v3545
  %v4963 = vunpack.c.h.b16 %v3545
  %v4964 = vunpack.c.l.b16 %v3546
  %v4965 = vunpack.c.h.b16 %v3546
  %v4966 = vunpack.c.l.b16 %v3547
  %v4967 = vunpack.c.h.b16 %v3547
  %v4968 = vunpack.c.l.b16 %v3548
  %v4969 = vunpack.c.h.b16 %v3548
  %v4970 = vunpack.c.l.b16 %v3549
  %v4971 = vunpack.c.h.b16 %v3549
  %v4972 = vunpack.c.l.b16 %v3550
  %v4973 = vunpack.c.h.b16 %v3550
  %v4974 = vunpack.c.l.b16 %v3551
  %v4975 = vunpack.c.h.b16 %v3551
  %v4976 = vunpack.c.l.b16 %v3552
  %v4977 = vunpack.c.h.b16 %v3552
  %v4978 = vunpack.c.l.b16 %v3553
  %v4979 = vunpack.c.h.b16 %v3553
  %v4980 = vunpack.c.l.b16 %v3554
  %v4981 = vunpack.c.h.b16 %v3554
  %v4982 = vunpack.c.l.b16 %v3555
  %v4983 = vunpack.c.h.b16 %v3555
  %v4984 = vunpack.c.l.b16 %v3556
  %v4985 = vunpack.c.h.b16 %v3556
  %v4986 = vunpack.c.l.b16 %v3557
  %v4987 = vunpack.c.h.b16 %v3557
  %v4988 = vunpack.c.l.b16 %v3558
  %v4989 = vunpack.c.h.b16 %v3558
  %v4990 = vunpack.c.l.b16 %v3559
  %v4991 = vunpack.c.h.b16 %v3559
  %v4992 = vunpack.c.l.b16 %v3560
  %v4993 = vunpack.c.h.b16 %v3560
  %v4994 = vunpack.c.l.b16 %v3561
  %v4995 = vunpack.c.h.b16 %v3561
  %v4996 = vunpack.c.l.b16 %v3562
  %v4997 = vunpack.c.h.b16 %v3562
  %v4998 = vunpack.c.l.b16 %v3563
  %v4999 = vunpack.c.h.b16 %v3563
  %v5000 = vunpack.c.l.b16 %v3564
  %v5001 = vunpack.c.h.b16 %v3564
  %v5002 = vunpack.c.l.b16 %v3565
  %v5003 = vunpack.c.h.b16 %v3565
  %v5004 = vunpack.c.l.b16 %v3566
  %v5005 = vunpack.c.h.b16 %v3566
  %v5006 = vunpack.c.l.b16 %v3567
  %v5007 = vunpack.c.h.b16 %v3567
  %v5008 = vunpack.c.l.b16 %v3568
  %v5009 = vunpack.c.h.b16 %v3568
  %v5010 = vunpack.c.l.b16 %v3569
  %v5011 = vunpack.c.h.b16 %v3569
  %v5012 = vunpack.c.l.b16 %v3570
  %v5013 = vunpack.c.h.b16 %v3570
  %v5014 = vunpack.c.l.b16 %v3571
  %v5015 = vunpack.c.h.b16 %v3571
  %v5016 = vunpack.c.l.b16 %v3572
  %v5017 = vunpack.c.h.b16 %v3572
  %v5018 = vunpack.c.l.b16 %v3573
  %v5019 = vunpack.c.h.b16 %v3573
  %v5020 = vunpack.c.l.b16 %v3574
  %v5021 = vunpack.c.h.b16 %v3574
  %v5022 = vunpack.c.l.b16 %v3575
  %v5023 = vunpack.c.h.b16 %v3575
  %v5024 = vunpack.c.l.b16 %v3576
  %v5025 = vunpack.c.h.b16 %v3576
  %v5026 = vunpack.c.l.b16 %v3577
  %v5027 = vunpack.c.h.b16 %v3577
  %v5028 = vunpack.c.l.b16 %v3578
  %v5029 = vunpack.c.h.b16 %v3578
  %v5030 = vunpack.c.l.b16 %v3579
  %v5031 = vunpack.c.h.b16 %v3579
  %v5032 = vunpack.c.l.b16 %v3580
  %v5033 = vunpack.c.h.b16 %v3580
  %v5034 = vunpack.c.l.b16 %v3581
  %v5035 = vunpack.c.h.b16 %v3581
  %v5036 = vunpack.c.l.b16 %v3582
  %v5037 = vunpack.c.h.b16 %v3582
  %v5038 = vunpack.c.l.b16 %v3583
  %v5039 = vunpack.c.h.b16 %v3583
  %v5040 = vunpack.c.l.b16 %v3584
  %v5041 = vunpack.c.h.b16 %v3584
  %v5042 = vunpack.c.l.b16 %v3585
  %v5043 = vunpack.c.h.b16 %v3585
  %v5044 = vunpack.c.l.b16 %v3586
  %v5045 = vunpack.c.h.b16 %v3586
  %v5046 = vunpack.c.l.b16 %v3587
  %v5047 = vunpack.c.h.b16 %v3587
  %v5048 = vunpack.c.l.b16 %v3588
  %v5049 = vunpack.c.h.b16 %v3588
  %v5050 = vunpack.c.l.b16 %v3589
  %v5051 = vunpack.c.h.b16 %v3589
  %v5052 = vunpack.c.l.b16 %v3590
  %v5053 = vunpack.c.h.b16 %v3590
  %v5054 = vunpack.c.l.b16 %v3591
  %v5055 = vunpack.c.h.b16 %v3591
  %v5056 = vunpack.c.l.b16 %v3592
  %v5057 = vunpack.c.h.b16 %v3592
  %v5058 = vunpack.c.l.b16 %v3593
  %v5059 = vunpack.c.h.b16 %v3593
  %v5060 = vunpack.c.l.b16 %v3594
  %v5061 = vunpack.c.h.b16 %v3594
  %v5062 = vunpack.c.l.b16 %v3595
  %v5063 = vunpack.c.h.b16 %v3595
  %v5064 = vunpack.c.l.b16 %v3596
  %v5065 = vunpack.c.h.b16 %v3596
  %v5066 = vunpack.c.l.b16 %v3597
  %v5067 = vunpack.c.h.b16 %v3597
  %v5068 = vunpack.c.l.b16 %v3598
  %v5069 = vunpack.c.h.b16 %v3598
  %v5070 = vunpack.c.l.b16 %v3599
  %v5071 = vunpack.c.h.b16 %v3599
  %v5072 = vunpack.c.l.b16 %v3600
  %v5073 = vunpack.c.h.b16 %v3600
  %v5074 = vunpack.c.l.b16 %v3601
  %v5075 = vunpack.c.h.b16 %v3601
  %v5076 = vunpack.c.l.b16 %v3602
  %v5077 = vunpack.c.h.b16 %v3602
  %v5078 = vunpack.c.l.b16 %v3603
  %v5079 = vunpack.c.h.b16 %v3603
  %v5080 = vunpack.c.l.b16 %v3604
  %v5081 = vunpack.c.h.b16 %v3604
  %v5082 = vunpack.c.l.b16 %v3605
  %v5083 = vunpack.c.h.b16 %v3605
  %v5084 = vunpack.c.l.b16 %v3606
  %v5085 = vunpack.c.h.b16 %v3606
  %v5086 = vunpack.c.l.b16 %v3607
  %v5087 = vunpack.c.h.b16 %v3607
  %v5088 = vunpack.c.l.b16 %v3608
  %v5089 = vunpack.c.h.b16 %v3608
  %v5090 = vunpack.c.l.b16 %v3609
  %v5091 = vunpack.c.h.b16 %v3609
  %v5092 = vunpack.c.l.b16 %v3610
  %v5093 = vunpack.c.h.b16 %v3610
  %v5094 = vunpack.c.l.b16 %v3611
  %v5095 = vunpack.c.h.b16 %v3611
  %v5096 = vunpack.c.l.b16 %v3612
  %v5097 = vunpack.c.h.b16 %v3612
  %v5098 = vunpack.c.l.b16 %v3613
  %v5099 = vunpack.c.h.b16 %v3613
  %v5100 = vunpack.c.l.b16 %v3614
  %v5101 = vunpack.c.h.b16 %v3614
  %v5102 = vunpack.c.l.b16 %v3615
  %v5103 = vunpack.c.h.b16 %v3615
  %v5104 = vunpack.c.l.b16 %v3616
  %v5105 = vunpack.c.h.b16 %v3616
  %v5106 = vunpack.c.l.b16 %v3617
  %v5107 = vunpack.c.h.b16 %v3617
  %v5108 = vunpack.c.l.b16 %v3618
  %v5109 = vunpack.c.h.b16 %v3618
  %v5110 = vunpack.c.l.b16 %v3619
  %v5111 = vunpack.c.h.b16 %v3619
  %v5112 = vunpack.c.l.b16 %v3620
  %v5113 = vunpack.c.h.b16 %v3620
  %v5114 = vunpack.c.l.b16 %v3621
  %v5115 = vunpack.c.h.b16 %v3621
  %v5116 = vunpack.c.l.b16 %v3622
  %v5117 = vunpack.c.h.b16 %v3622
  %v5118 = vunpack.c.l.b16 %v3623
  %v5119 = vunpack.c.h.b16 %v3623
  %v5120 = vunpack.c.l.b16 %v3624
  %v5121 = vunpack.c.h.b16 %v3624
  %v5122 = vunpack.c.l.b16 %v3625
  %v5123 = vunpack.c.h.b16 %v3625
  %v5124 = vunpack.c.l.b16 %v3626
  %v5125 = vunpack.c.h.b16 %v3626
  %v5126 = vunpack.c.l.b16 %v3627
  %v5127 = vunpack.c.h.b16 %v3627
  %v5128 = vunpack.c.l.b16 %v3628
  %v5129 = vunpack.c.h.b16 %v3628
  %v5130 = vunpack.c.l.b16 %v3629
  %v5131 = vunpack.c.h.b16 %v3629
  %v5132 = vunpack.c.l.b16 %v3630
  %v5133 = vunpack.c.h.b16 %v3630
  %v5134 = vunpack.c.l.b16 %v3631
  %v5135 = vunpack.c.h.b16 %v3631
  %v5136 = vunpack.c.l.b16 %v3632
  %v5137 = vunpack.c.h.b16 %v3632
  %v5138 = vunpack.c.l.b16 %v3633
  %v5139 = vunpack.c.h.b16 %v3633
  %v5140 = vunpack.c.l.b16 %v3634
  %v5141 = vunpack.c.h.b16 %v3634
  %v5142 = vunpack.c.l.b16 %v3635
  %v5143 = vunpack.c.h.b16 %v3635
  %v5144 = vunpack.c.l.b16 %v3636
  %v5145 = vunpack.c.h.b16 %v3636
  %v5146 = vunpack.c.l.b16 %v3637
  %v5147 = vunpack.c.h.b16 %v3637
  %v5148 = vunpack.c.l.b16 %v3638
  %v5149 = vunpack.c.h.b16 %v3638
  %v5150 = vunpack.c.l.b16 %v3639
  %v5151 = vunpack.c.h.b16 %v3639
  %v5152 = vunpack.c.l.b16 %v3640
  %v5153 = vunpack.c.h.b16 %v3640
  %v5154 = vunpack.c.l.b16 %v3641
  %v5155 = vunpack.c.h.b16 %v3641
  %v5156 = vunpack.c.l.b16 %v3642
  %v5157 = vunpack.c.h.b16 %v3642
  %v5158 = vunpack.c.l.b16 %v3643
  %v5159 = vunpack.c.h.b16 %v3643
  %v5160 = vunpack.c.l.b16 %v3644
  %v5161 = vunpack.c.h.b16 %v3644
  %v5162 = vunpack.c.l.b16 %v3645
  %v5163 = vunpack.c.h.b16 %v3645
  %v5164 = vunpack.c.l.b16 %v3646
  %v5165 = vunpack.c.h.b16 %v3646
  %v5166 = vunpack.c.l.b16 %v3647
  %v5167 = vunpack.c.h.b16 %v3647
  %v5168 = vunpack.c.l.b16 %v3648
  %v5169 = vunpack.c.h.b16 %v3648
  %v5170 = vunpack.c.l.b16 %v3649
  %v5171 = vunpack.c.h.b16 %v3649
  %v5172 = vunpack.c.l.b16 %v3650
  %v5173 = vunpack.c.h.b16 %v3650
  %v5174 = vunpack.c.l.b16 %v3651
  %v5175 = vunpack.c.h.b16 %v3651
  %v5176 = vunpack.c.l.b16 %v3652
  %v5177 = vunpack.c.h.b16 %v3652
  %v5178 = vunpack.c.l.b16 %v3653
  %v5179 = vunpack.c.h.b16 %v3653
  %v5180 = vunpack.c.l.b16 %v3654
  %v5181 = vunpack.c.h.b16 %v3654
  %v5182 = vunpack.c.l.b16 %v3655
  %v5183 = vunpack.c.h.b16 %v3655
  %v5184 = vunpack.c.l.b16 %v3656
  %v5185 = vunpack.c.h.b16 %v3656
  %v5186 = vunpack.c.l.b16 %v3657
  %v5187 = vunpack.c.h.b16 %v3657
  %v5188 = vunpack.c.l.b16 %v3658
  %v5189 = vunpack.c.h.b16 %v3658
  %v5190 = vunpack.c.l.b16 %v3659
  %v5191 = vunpack.c.h.b16 %v3659
  %v5192 = vunpack.c.l.b16 %v3660
  %v5193 = vunpack.c.h.b16 %v3660
  %v5194 = vunpack.c.l.b16 %v3661
  %v5195 = vunpack.c.h.b16 %v3661
  %v5196 = vunpack.c.l.b16 %v3662
  %v5197 = vunpack.c.h.b16 %v3662
  %v5198 = vunpack.c.l.b16 %v3663
  %v5199 = vunpack.c.h.b16 %v3663
  %v5200 = vunpack.c.l.b16 %v3664
  %v5201 = vunpack.c.h.b16 %v3664
  %v5202 = vunpack.c.l.b16 %v3665
  %v5203 = vunpack.c.h.b16 %v3665
  %v5204 = vunpack.c.l.b16 %v3666
  %v5205 = vunpack.c.h.b16 %v3666
  %v5206 = vunpack.c.l.b16 %v3667
  %v5207 = vunpack.c.h.b16 %v3667
  %v5208 = vunpack.c.l.b16 %v3668
  %v5209 = vunpack.c.h.b16 %v3668
  %v5210 = vunpack.c.l.b16 %v3669
  %v5211 = vunpack.c.h.b16 %v3669
  %v5212 = vunpack.c.l.b16 %v3670
  %v5213 = vunpack.c.h.b16 %v3670
  %v5214 = vunpack.c.l.b16 %v3671
  %v5215 = vunpack.c.h.b16 %v3671
  %v5216 = vunpack.c.l.b16 %v3672
  %v5217 = vunpack.c.h.b16 %v3672
  %v5218 = vunpack.c.l.b16 %v3673
  %v5219 = vunpack.c.h.b16 %v3673
  %v5220 = vunpack.c.l.b16 %v3674
  %v5221 = vunpack.c.h.b16 %v3674
  %v5222 = vunpack.c.l.b16 %v3675
  %v5223 = vunpack.c.h.b16 %v3675
  %v5224 = vunpack.c.l.b16 %v3676
  %v5225 = vunpack.c.h.b16 %v3676
  %v5226 = vunpack.c.l.b16 %v3677
  %v5227 = vunpack.c.h.b16 %v3677
  %v5228 = vunpack.c.l.b16 %v3678
  %v5229 = vunpack.c.h.b16 %v3678
  %v5230 = vunpack.c.l.b16 %v3679
  %v5231 = vunpack.c.h.b16 %v3679
  %v5232 = vunpack.c.l.b16 %v3680
  %v5233 = vunpack.c.h.b16 %v3680
  %v5234 = vunpack.c.l.b16 %v3681
  %v5235 = vunpack.c.h.b16 %v3681
  %v5236 = vunpack.c.l.b16 %v3682
  %v5237 = vunpack.c.h.b16 %v3682
  %v5238 = vunpack.c.l.b16 %v3683
  %v5239 = vunpack.c.h.b16 %v3683
  %v5240 = vunpack.c.l.b16 %v3684
  %v5241 = vunpack.c.h.b16 %v3684
  %v5242 = vunpack.c.l.b16 %v3685
  %v5243 = vunpack.c.h.b16 %v3685
  %v5244 = vunpack.c.l.b16 %v3686
  %v5245 = vunpack.c.h.b16 %v3686
  %v5246 = vunpack.c.l.b16 %v3687
  %v5247 = vunpack.c.h.b16 %v3687
  %v5248 = vunpack.c.l.b16 %v3688
  %v5249 = vunpack.c.h.b16 %v3688
  %v5250 = vunpack.c.l.b16 %v3689
  %v5251 = vunpack.c.h.b16 %v3689
  %v5252 = vunpack.c.l.b16 %v3690
  %v5253 = vunpack.c.h.b16 %v3690
  %v5254 = vunpack.c.l.b16 %v3691
  %v5255 = vunpack.c.h.b16 %v3691
  %v5256 = vunpack.c.l.b16 %v3692
  %v5257 = vunpack.c.h.b16 %v3692
  %v5258 = vunpack.c.l.b16 %v3693
  %v5259 = vunpack.c.h.b16 %v3693
  %v5260 = vunpack.c.l.b16 %v3694
  %v5261 = vunpack.c.h.b16 %v3694
  %v5262 = vunpack.c.l.b16 %v3695
  %v5263 = vunpack.c.h.b16 %v3695
  %v5264 = vunpack.c.l.b16 %v3696
  %v5265 = vunpack.c.h.b16 %v3696
  %v5266 = vunpack.c.l.b16 %v3697
  %v5267 = vunpack.c.h.b16 %v3697
  %v5268 = vunpack.c.l.b16 %v3698
  %v5269 = vunpack.c.h.b16 %v3698
  %v5270 = vunpack.c.l.b16 %v3699
  %v5271 = vunpack.c.h.b16 %v3699
  %v5272 = vunpack.c.l.b16 %v3700
  %v5273 = vunpack.c.h.b16 %v3700
  %v5274 = vunpack.c.l.b16 %v3701
  %v5275 = vunpack.c.h.b16 %v3701
  %v5276 = vunpack.c.l.b16 %v3702
  %v5277 = vunpack.c.h.b16 %v3702
  %v5278 = vunpack.c.l.b16 %v3703
  %v5279 = vunpack.c.h.b16 %v3703
  %v5280 = vunpack.c.l.b16 %v3704
  %v5281 = vunpack.c.h.b16 %v3704
  %v5282 = vunpack.c.l.b16 %v3705
  %v5283 = vunpack.c.h.b16 %v3705
  %v5284 = vunpack.c.l.b16 %v3706
  %v5285 = vunpack.c.h.b16 %v3706
  %v5286 = vunpack.c.l.b16 %v3707
  %v5287 = vunpack.c.h.b16 %v3707
  %v5288 = vunpack.c.l.b16 %v3708
  %v5289 = vunpack.c.h.b16 %v3708
  %v5290 = vunpack.c.l.b16 %v3709
  %v5291 = vunpack.c.h.b16 %v3709
  %v5292 = vunpack.c.l.b16 %v3710
  %v5293 = vunpack.c.h.b16 %v3710
  %v5294 = vunpack.c.l.b16 %v3711
  %v5295 = vunpack.c.h.b16 %v3711
  %v5296 = vunpack.c.l.b16 %v3712
  %v5297 = vunpack.c.h.b16 %v3712
  %v5298 = vunpack.c.l.b16 %v3713
  %v5299 = vunpack.c.h.b16 %v3713
  %v5300 = vunpack.c.l.b16 %v3714
  %v5301 = vunpack.c.h.b16 %v3714
  %v5302 = vunpack.c.l.b16 %v3715
  %v5303 = vunpack.c.h.b16 %v3715
  %v5304 = vunpack.c.l.b16 %v3716
  %v5305 = vunpack.c.h.b16 %v3716
  %v5306 = vunpack.c.l.b16 %v3717
  %v5307 = vunpack.c.h.b16 %v3717
  %v5308 = vunpack.c.l.b16 %v3718
  %v5309 = vunpack.c.h.b16 %v3718
  %v5310 = vunpack.c.l.b16 %v3719
  %v5311 = vunpack.c.h.b16 %v3719
  %v5312 = vunpack.c.l.b16 %v3720
  %v5313 = vunpack.c.h.b16 %v3720
  %v5314 = vunpack.c.l.b16 %v3721
  %v5315 = vunpack.c.h.b16 %v3721
  %v5316 = vunpack.c.l.b16 %v3722
  %v5317 = vunpack.c.h.b16 %v3722
  %v5318 = vunpack.c.l.b16 %v3723
  %v5319 = vunpack.c.h.b16 %v3723
  %v5320 = vunpack.c.l.b16 %v3724
  %v5321 = vunpack.c.h.b16 %v3724
  %v5322 = vunpack.c.l.b16 %v3725
  %v5323 = vunpack.c.h.b16 %v3725
  %v5324 = vunpack.c.l.b16 %v3726
  %v5325 = vunpack.c.h.b16 %v3726
  %v5326 = vunpack.c.l.b16 %v3727
  %v5327 = vunpack.c.h.b16 %v3727
  %v5328 = vunpack.c.l.b16 %v3728
  %v5329 = vunpack.c.h.b16 %v3728
  %v5330 = vunpack.c.l.b16 %v3729
  %v5331 = vunpack.c.h.b16 %v3729
  %v5332 = vunpack.c.l.b16 %v3730
  %v5333 = vunpack.c.h.b16 %v3730
  %v5334 = vunpack.c.l.b16 %v3731
  %v5335 = vunpack.c.h.b16 %v3731
  %v5336 = vunpack.c.l.b16 %v3732
  %v5337 = vunpack.c.h.b16 %v3732
  %v5338 = vunpack.c.l.b16 %v3733
  %v5339 = vunpack.c.h.b16 %v3733
  %v5340 = vunpack.c.l.b16 %v3734
  %v5341 = vunpack.c.h.b16 %v3734
  %v5342 = vunpack.c.l.b16 %v3735
  %v5343 = vunpack.c.h.b16 %v3735
  %v5344 = vunpack.c.l.b16 %v3736
  %v5345 = vunpack.c.h.b16 %v3736
  %v5346 = vunpack.c.l.b16 %v3737
  %v5347 = vunpack.c.h.b16 %v3737
  %v5348 = vunpack.c.l.b16 %v3738
  %v5349 = vunpack.c.h.b16 %v3738
  %v5350 = vunpack.c.l.b16 %v3739
  %v5351 = vunpack.c.h.b16 %v3739
  %v5352 = vunpack.c.l.b16 %v3740
  %v5353 = vunpack.c.h.b16 %v3740
  %v5354 = vunpack.c.l.b16 %v3741
  %v5355 = vunpack.c.h.b16 %v3741
  %v5356 = vunpack.c.l.b16 %v3742
  %v5357 = vunpack.c.h.b16 %v3742
  %v5358 = vunpack.c.l.b16 %v3743
  %v5359 = vunpack.c.h.b16 %v3743
  %v5360 = vunpack.c.l.b16 %v3744
  %v5361 = vunpack.c.h.b16 %v3744
  %v5362 = vunpack.c.l.b16 %v3745
  %v5363 = vunpack.c.h.b16 %v3745
  %v5364 = vunpack.c.l.b16 %v3746
  %v5365 = vunpack.c.h.b16 %v3746
  %v5366 = vunpack.c.l.b16 %v3747
  %v5367 = vunpack.c.h.b16 %v3747
  %v5368 = vunpack.c.l.b16 %v3748
  %v5369 = vunpack.c.h.b16 %v3748
  %v5370 = vunpack.c.l.b16 %v3749
  %v5371 = vunpack.c.h.b16 %v3749
  %v5372 = vunpack.c.l.b16 %v3750
  %v5373 = vunpack.c.h.b16 %v3750
  %v5374 = vunpack.c.l.b16 %v3751
  %v5375 = vunpack.c.h.b16 %v3751
  %v5376 = vunpack.c.l.b16 %v3752
  %v5377 = vunpack.c.h.b16 %v3752
  %v5378 = vunpack.c.l.b16 %v3753
  %v5379 = vunpack.c.h.b16 %v3753
  %v5380 = vunpack.c.l.b16 %v3754
  %v5381 = vunpack.c.h.b16 %v3754
  %v5382 = vunpack.c.l.b16 %v3755
  %v5383 = vunpack.c.h.b16 %v3755
  %v5384 = vunpack.c.l.b16 %v3756
  %v5385 = vunpack.c.h.b16 %v3756
  %v5386 = vunpack.c.l.b16 %v3757
  %v5387 = vunpack.c.h.b16 %v3757
  %v5388 = vunpack.c.l.b16 %v3758
  %v5389 = vunpack.c.h.b16 %v3758
  %v5390 = vunpack.c.l.b16 %v3759
  %v5391 = vunpack.c.h.b16 %v3759
  %v5392 = vunpack.c.l.b16 %v3760
  %v5393 = vunpack.c.h.b16 %v3760
  %v5394 = vunpack.c.l.b16 %v3761
  %v5395 = vunpack.c.h.b16 %v3761
  %v5396 = vunpack.c.l.b16 %v3762
  %v5397 = vunpack.c.h.b16 %v3762
  %v5398 = vunpack.c.l.b16 %v3763
  %v5399 = vunpack.c.h.b16 %v3763
  %v5400 = vunpack.c.l.b16 %v3764
  %v5401 = vunpack.c.h.b16 %v3764
  %v5402 = vunpack.c.l.b16 %v3765
  %v5403 = vunpack.c.h.b16 %v3765
  %v5404 = vunpack.c.l.b16 %v3766
  %v5405 = vunpack.c.h.b16 %v3766
  %v5406 = vunpack.c.l.b16 %v3767
  %v5407 = vunpack.c.h.b16 %v3767
  %v5408 = vunpack.c.l.b16 %v3768
  %v5409 = vunpack.c.h.b16 %v3768
  %v5410 = vunpack.c.l.b16 %v3769
  %v5411 = vunpack.c.h.b16 %v3769
  %v5412 = vunpack.c.l.b16 %v3770
  %v5413 = vunpack.c.h.b16 %v3770
  %v5414 = vunpack.c.l.b16 %v3771
  %v5415 = vunpack.c.h.b16 %v3771
  %v5416 = vunpack.c.l.b16 %v3772
  %v5417 = vunpack.c.h.b16 %v3772
  %v5418 = vunpack.c.l.b16 %v3773
  %v5419 = vunpack.c.h.b16 %v3773
  %v5420 = vunpack.c.l.b16 %v3774
  %v5421 = vunpack.c.h.b16 %v3774
  %v5422 = vunpack.c.l.b16 %v3775
  %v5423 = vunpack.c.h.b16 %v3775
  %v5424 = vunpack.c.l.b16 %v3776
  %v5425 = vunpack.c.h.b16 %v3776
  %v5426 = vunpack.c.l.b16 %v3777
  %v5427 = vunpack.c.h.b16 %v3777
  %v5428 = vunpack.c.l.b16 %v3778
  %v5429 = vunpack.c.h.b16 %v3778
  %v5430 = vunpack.c.l.b16 %v3779
  %v5431 = vunpack.c.h.b16 %v3779
  %v5432 = vunpack.c.l.b16 %v3780
  %v5433 = vunpack.c.h.b16 %v3780
  %v5434 = vunpack.c.l.b16 %v3781
  %v5435 = vunpack.c.h.b16 %v3781
  %v5436 = vunpack.c.l.b16 %v3782
  %v5437 = vunpack.c.h.b16 %v3782
  %v5438 = vunpack.c.l.b16 %v3783
  %v5439 = vunpack.c.h.b16 %v3783
  %v5440 = vunpack.c.l.b16 %v3784
  %v5441 = vunpack.c.h.b16 %v3784
  %v5442 = vunpack.c.l.b16 %v3785
  %v5443 = vunpack.c.h.b16 %v3785
  %v5444 = vunpack.c.l.b16 %v3786
  %v5445 = vunpack.c.h.b16 %v3786
  %v5446 = vunpack.c.l.b16 %v3787
  %v5447 = vunpack.c.h.b16 %v3787
  %v5448 = vunpack.c.l.b16 %v3788
  %v5449 = vunpack.c.h.b16 %v3788
  %v5450 = vunpack.c.l.b16 %v3789
  %v5451 = vunpack.c.h.b16 %v3789
  %v5452 = vunpack.c.l.b16 %v3790
  %v5453 = vunpack.c.h.b16 %v3790
  %v5454 = vunpack.c.l.b16 %v3791
  %v5455 = vunpack.c.h.b16 %v3791
  %v5456 = vunpack.c.l.b16 %v3792
  %v5457 = vunpack.c.h.b16 %v3792
  %v5458 = vunpack.c.l.b16 %v3793
  %v5459 = vunpack.c.h.b16 %v3793
  %v5460 = vunpack.c.l.b16 %v3794
  %v5461 = vunpack.c.h.b16 %v3794
  %v5462 = vunpack.c.l.b16 %v3795
  %v5463 = vunpack.c.h.b16 %v3795
  %v5464 = vunpack.c.l.b16 %v3796
  %v5465 = vunpack.c.h.b16 %v3796
  %v5466 = vunpack.c.l.b16 %v3797
  %v5467 = vunpack.c.h.b16 %v3797
  %v5468 = vunpack.c.l.b16 %v3798
  %v5469 = vunpack.c.h.b16 %v3798
  %v5470 = vunpack.c.l.b16 %v3799
  %v5471 = vunpack.c.h.b16 %v3799
  %v5472 = vunpack.c.l.b16 %v3800
  %v5473 = vunpack.c.h.b16 %v3800
  %v5474 = vunpack.c.l.b16 %v3801
  %v5475 = vunpack.c.h.b16 %v3801
  %v5476 = vunpack.c.l.b16 %v3802
  %v5477 = vunpack.c.h.b16 %v3802
  %v5478 = vunpack.c.l.b16 %v3803
  %v5479 = vunpack.c.h.b16 %v3803
  %v5480 = vunpack.c.l.b16 %v3804
  %v5481 = vunpack.c.h.b16 %v3804
  %v5482 = vunpack.c.l.b16 %v3805
  %v5483 = vunpack.c.h.b16 %v3805
  %v5484 = vunpack.c.l.b16 %v3806
  %v5485 = vunpack.c.h.b16 %v3806
  %v5486 = vunpack.c.l.b16 %v3807
  %v5487 = vunpack.c.h.b16 %v3807
  %v5488 = vunpack.c.l.b16 %v3808
  %v5489 = vunpack.c.h.b16 %v3808
  %v5490 = vunpack.c.l.b16 %v3809
  %v5491 = vunpack.c.h.b16 %v3809
  %v5492 = vunpack.c.l.b16 %v3810
  %v5493 = vunpack.c.h.b16 %v3810
  %v5494 = vunpack.c.l.b16 %v3811
  %v5495 = vunpack.c.h.b16 %v3811
  %v5496 = vunpack.c.l.b16 %v3812
  %v5497 = vunpack.c.h.b16 %v3812
  %v5498 = vunpack.c.l.b16 %v3813
  %v5499 = vunpack.c.h.b16 %v3813
  %v5500 = vunpack.c.l.b16 %v3814
  %v5501 = vunpack.c.h.b16 %v3814
  %v5502 = vunpack.c.l.b16 %v3815
  %v5503 = vunpack.c.h.b16 %v3815
  %v5504 = vunpack.c.l.b16 %v3816
  %v5505 = vunpack.c.h.b16 %v3816
  %v5506 = vunpack.c.l.b16 %v3817
  %v5507 = vunpack.c.h.b16 %v3817
  %v5508 = vunpack.c.l.b16 %v3818
  %v5509 = vunpack.c.h.b16 %v3818
  %v5510 = vunpack.c.l.b16 %v3819
  %v5511 = vunpack.c.h.b16 %v3819
  %v5512 = vunpack.c.l.b16 %v3820
  %v5513 = vunpack.c.h.b16 %v3820
  %v5514 = vunpack.c.l.b16 %v3821
  %v5515 = vunpack.c.h.b16 %v3821
  %v5516 = vunpack.c.l.b16 %v3822
  %v5517 = vunpack.c.h.b16 %v3822
  %v5518 = vunpack.c.l.b16 %v3823
  %v5519 = vunpack.c.h.b16 %v3823
  %v5520 = vunpack.c.l.b16 %v3824
  %v5521 = vunpack.c.h.b16 %v3824
  %v5522 = vunpack.c.l.b16 %v3825
  %v5523 = vunpack.c.h.b16 %v3825
  %v5524 = vunpack.c.l.b16 %v3826
  %v5525 = vunpack.c.h.b16 %v3826
  %v5526 = vunpack.c.l.b16 %v3827
  %v5527 = vunpack.c.h.b16 %v3827
  %v5528 = vunpack.c.l.b16 %v3828
  %v5529 = vunpack.c.h.b16 %v3828
  %v5530 = vunpack.c.l.b16 %v3829
  %v5531 = vunpack.c.h.b16 %v3829
  %v5532 = vunpack.c.l.b16 %v3830
  %v5533 = vunpack.c.h.b16 %v3830
  %v5534 = vunpack.c.l.b16 %v3831
  %v5535 = vunpack.c.h.b16 %v3831
  %v5536 = vunpack.c.l.b16 %v3832
  %v5537 = vunpack.c.h.b16 %v3832
  %v5538 = vunpack.c.l.b16 %v3833
  %v5539 = vunpack.c.h.b16 %v3833
  %v5540 = vunpack.c.l.b16 %v3834
  %v5541 = vunpack.c.h.b16 %v3834
  %v5542 = vunpack.c.l.b16 %v3835
  %v5543 = vunpack.c.h.b16 %v3835
  %v5544 = vunpack.c.l.b16 %v3836
  %v5545 = vunpack.c.h.b16 %v3836
  %v5546 = vunpack.c.l.b16 %v3837
  %v5547 = vunpack.c.h.b16 %v3837
  %v5548 = vunpack.c.l.b16 %v3838
  %v5549 = vunpack.c.h.b16 %v3838
  %v5550 = vunpack.c.l.b16 %v3839
  %v5551 = vunpack.c.h.b16 %v3839
  %v5552 = vunpack.c.l.b16 %v3840
  %v5553 = vunpack.c.h.b16 %v3840
  %v5554 = vunpack.c.l.b16 %v3841
  %v5555 = vunpack.c.h.b16 %v3841
  %v5556 = vunpack.c.l.b16 %v3842
  %v5557 = vunpack.c.h.b16 %v3842
  %v5558 = vunpack.c.l.b16 %v3843
  %v5559 = vunpack.c.h.b16 %v3843
  %v5560 = vunpack.c.l.b16 %v3844
  %v5561 = vunpack.c.h.b16 %v3844
  %v5562 = vunpack.c.l.b16 %v3845
  %v5563 = vunpack.c.h.b16 %v3845
  %v5564 = vunpack.c.l.b16 %v3846
  %v5565 = vunpack.c.h.b16 %v3846
  %v5566 = vunpack.c.l.b16 %v3847
  %v5567 = vunpack.c.h.b16 %v3847
  %v5568 = vunpack.c.l.b16 %v3848
  %v5569 = vunpack.c.h.b16 %v3848
  %v5570 = vunpack.c.l.b16 %v3849
  %v5571 = vunpack.c.h.b16 %v3849
  %v5572 = vunpack.c.l.b16 %v3850
  %v5573 = vunpack.c.h.b16 %v3850
  %v5574 = vunpack.c.l.b16 %v3851
  %v5575 = vunpack.c.h.b16 %v3851
  %v5576 = vunpack.c.l.b16 %v3852
  %v5577 = vunpack.c.h.b16 %v3852
  %v5578 = vunpack.c.l.b16 %v3853
  %v5579 = vunpack.c.h.b16 %v3853
  %v5580 = vunpack.c.l.b16 %v3854
  %v5581 = vunpack.c.h.b16 %v3854
  %v5582 = vunpack.c.l.b16 %v3855
  %v5583 = vunpack.c.h.b16 %v3855
  %v5584 = vunpack.c.l.b16 %v3856
  %v5585 = vunpack.c.h.b16 %v3856
  %v5586 = vunpack.c.l.b16 %v3857
  %v5587 = vunpack.c.h.b16 %v3857
  %v5588 = vunpack.c.l.b16 %v3858
  %v5589 = vunpack.c.h.b16 %v3858
  %v5590 = vunpack.c.l.b16 %v3859
  %v5591 = vunpack.c.h.b16 %v3859
  %v5592 = vunpack.c.l.b16 %v3860
  %v5593 = vunpack.c.h.b16 %v3860
  %v5594 = vunpack.c.l.b16 %v3861
  %v5595 = vunpack.c.h.b16 %v3861
  %v5596 = vpack.c.b16 %v4452, %v4444
  %v5597 = vpack.c.b16 %v4453, %v4445
  %v5598 = vpack.c.b16 %v4454, %v4446
  %v5599 = vpack.c.b16 %v4455, %v4447
  %v5600 = vpack.c.b16 %v4456, %v4448
  %v5601 = vpack.c.b16 %v4457, %v4449
  %v5602 = vpack.c.b16 %v4458, %v4450
  %v5603 = vpack.c.b16 %v4459, %v4451
  %v5604 = vpack.c.b16 %v4468, %v4460
  %v5605 = vpack.c.b16 %v4469, %v4461
  %v5606 = vpack.c.b16 %v4470, %v4462
  %v5607 = vpack.c.b16 %v4471, %v4463
  %v5608 = vpack.c.b16 %v4472, %v4464
  %v5609 = vpack.c.b16 %v4473, %v4465
  %v5610 = vpack.c.b16 %v4474, %v4466
  %v5611 = vpack.c.b16 %v4475, %v4467
  %v5612 = vpack.c.b16 %v4484, %v4476
  %v5613 = vpack.c.b16 %v4485, %v4477
  %v5614 = vpack.c.b16 %v4486, %v4478
  %v5615 = vpack.c.b16 %v4487, %v4479
  %v5616 = vpack.c.b16 %v4488, %v4480
  %v5617 = vpack.c.b16 %v4489, %v4481
  %v5618 = vpack.c.b16 %v4490, %v4482
  %v5619 = vpack.c.b16 %v4491, %v4483
  %v5620 = vpack.c.b16 %v4500, %v4492
  %v5621 = vpack.c.b16 %v4501, %v4493
  %v5622 = vpack.c.b16 %v4502, %v4494
  %v5623 = vpack.c.b16 %v4503, %v4495
  %v5624 = vpack.c.b16 %v4504, %v4496
  %v5625 = vpack.c.b16 %v4505, %v4497
  %v5626 = vpack.c.b16 %v4506, %v4498
  %v5627 = vpack.c.b16 %v4507, %v4499
  %v5628 = vpack.c.b16 %v4516, %v4508
  %v5629 = vpack.c.b16 %v4517, %v4509
  %v5630 = vpack.c.b16 %v4518, %v4510
  %v5631 = vpack.c.b16 %v4519, %v4511
  %v5632 = vpack.c.b16 %v4520, %v4512
  %v5633 = vpack.c.b16 %v4521, %v4513
  %v5634 = vpack.c.b16 %v4522, %v4514
  %v5635 = vpack.c.b16 %v4523, %v4515
  %v5636 = vpack.c.b16 %v4532, %v4524
  %v5637 = vpack.c.b16 %v4533, %v4525
  %v5638 = vpack.c.b16 %v4534, %v4526
  %v5639 = vpack.c.b16 %v4535, %v4527
  %v5640 = vpack.c.b16 %v4536, %v4528
  %v5641 = vpack.c.b16 %v4537, %v4529
  %v5642 = vpack.c.b16 %v4538, %v4530
  %v5643 = vpack.c.b16 %v4539, %v4531
  %v5644 = vpack.c.b16 %v4548, %v4540
  %v5645 = vpack.c.b16 %v4549, %v4541
  %v5646 = vpack.c.b16 %v4550, %v4542
  %v5647 = vpack.c.b16 %v4551, %v4543
  %v5648 = vpack.c.b16 %v4552, %v4544
  %v5649 = vpack.c.b16 %v4553, %v4545
  %v5650 = vpack.c.b16 %v4554, %v4546
  %v5651 = vpack.c.b16 %v4555, %v4547
  %v5652 = vpack.c.b16 %v4564, %v4556
  %v5653 = vpack.c.b16 %v4565, %v4557
  %v5654 = vpack.c.b16 %v4566, %v4558
  %v5655 = vpack.c.b16 %v4567, %v4559
  %v5656 = vpack.c.b16 %v4568, %v4560
  %v5657 = vpack.c.b16 %v4569, %v4561
  %v5658 = vpack.c.b16 %v4570, %v4562
  %v5659 = vpack.c.b16 %v4571, %v4563
  %v5660 = vpack.c.b16 %v4580, %v4572
  %v5661 = vpack.c.b16 %v4581, %v4573
  %v5662 = vpack.c.b16 %v4582, %v4574
  %v5663 = vpack.c.b16 %v4583, %v4575
  %v5664 = vpack.c.b16 %v4584, %v4576
  %v5665 = vpack.c.b16 %v4585, %v4577
  %v5666 = vpack.c.b16 %v4586, %v4578
  %v5667 = vpack.c.b16 %v4587, %v4579
  %v5668 = vpack.c.b16 %v4596, %v4588
  %v5669 = vpack.c.b16 %v4597, %v4589
  %v5670 = vpack.c.b16 %v4598, %v4590
  %v5671 = vpack.c.b16 %v4599, %v4591
  %v5672 = vpack.c.b16 %v4600, %v4592
  %v5673 = vpack.c.b16 %v4601, %v4593
  %v5674 = vpack.c.b16 %v4602, %v4594
  %v5675 = vpack.c.b16 %v4603, %v4595
  %v5676 = vpack.c.b16 %v4612, %v4604
  %v5677 = vpack.c.b16 %v4613, %v4605
  %v5678 = vpack.c.b16 %v4614, %v4606
  %v5679 = vpack.c.b16 %v4615, %v4607
  %v5680 = vpack.c.b16 %v4616, %v4608
  %v5681 = vpack.c.b16 %v4617, %v4609
  %v5682 = vpack.c.b16 %v4618, %v4610
  %v5683 = vpack.c.b16 %v4619, %v4611
  %v5684 = vpack.c.b16 %v4628, %v4620
  %v5685 = vpack.c.b16 %v4629, %v4621
  %v5686 = vpack.c.b16 %v4630, %v4622
  %v5687 = vpack.c.b16 %v4631, %v4623
  %v5688 = vpack.c.b16 %v4632, %v4624
  %v5689 = vpack.c.b16 %v4633, %v4625
  %v5690 = vpack.c.b16 %v4634, %v4626
  %v5691 = vpack.c.b16 %v4635, %v4627
  %v5692 = vpack.c.b16 %v4644, %v4636
  %v5693 = vpack.c.b16 %v4645, %v4637
  %v5694 = vpack.c.b16 %v4646, %v4638
  %v5695 = vpack.c.b16 %v4647, %v4639
  %v5696 = vpack.c.b16 %v4648, %v4640
  %v5697 = vpack.c.b16 %v4649, %v4641
  %v5698 = vpack.c.b16 %v4650, %v4642
  %v5699 = vpack.c.b16 %v4651, %v4643
  %v5700 = vpack.c.b16 %v4660, %v4652
  %v5701 = vpack.c.b16 %v4661, %v4653
  %v5702 = vpack.c.b16 %v4662, %v4654
  %v5703 = vpack.c.b16 %v4663, %v4655
  %v5704 = vpack.c.b16 %v4664, %v4656
  %v5705 = vpack.c.b16 %v4665, %v4657
  %v5706 = vpack.c.b16 %v4666, %v4658
  %v5707 = vpack.c.b16 %v4667, %v4659
  %v5708 = vpack.c.b16 %v4676, %v4668
  %v5709 = vpack.c.b16 %v4677, %v4669
  %v5710 = vpack.c.b16 %v4678, %v4670
  %v5711 = vpack.c.b16 %v4679, %v4671
  %v5712 = vpack.c.b16 %v4680, %v4672
  %v5713 = vpack.c.b16 %v4681, %v4673
  %v5714 = vpack.c.b16 %v4682, %v4674
  %v5715 = vpack.c.b16 %v4683, %v4675
  %v5716 = vpack.c.b16 %v4692, %v4684
  %v5717 = vpack.c.b16 %v4693, %v4685
  %v5718 = vpack.c.b16 %v4694, %v4686
  %v5719 = vpack.c.b16 %v4695, %v4687
  %v5720 = vpack.c.b16 %v4696, %v4688
  %v5721 = vpack.c.b16 %v4697, %v4689
  %v5722 = vpack.c.b16 %v4698, %v4690
  %v5723 = vpack.c.b16 %v4699, %v4691
  %v5724 = vpack.c.b16 %v4708, %v4700
  %v5725 = vpack.c.b16 %v4709, %v4701
  %v5726 = vpack.c.b16 %v4710, %v4702
  %v5727 = vpack.c.b16 %v4711, %v4703
  %v5728 = vpack.c.b16 %v4712, %v4704
  %v5729 = vpack.c.b16 %v4713, %v4705
  %v5730 = vpack.c.b16 %v4714, %v4706
  %v5731 = vpack.c.b16 %v4715, %v4707
  %v5732 = vpack.c.b16 %v4724, %v4716
  %v5733 = vpack.c.b16 %v4725, %v4717
  %v5734 = vpack.c.b16 %v4726, %v4718
  %v5735 = vpack.c.b16 %v4727, %v4719
  %v5736 = vpack.c.b16 %v4728, %v4720
  %v5737 = vpack.c.b16 %v4729, %v4721
  %v5738 = vpack.c.b16 %v4730, %v4722
  %v5739 = vpack.c.b16 %v4731, %v4723
  %v5740 = vpack.c.b16 %v4740, %v4732
  %v5741 = vpack.c.b16 %v4741, %v4733
  %v5742 = vpack.c.b16 %v4742, %v4734
  %v5743 = vpack.c.b16 %v4743, %v4735
  %v5744 = vpack.c.b16 %v4744, %v4736
  %v5745 = vpack.c.b16 %v4745, %v4737
  %v5746 = vpack.c.b16 %v4746, %v4738
  %v5747 = vpack.c.b16 %v4747, %v4739
  %v5748 = vpack.c.b16 %v4756, %v4748
  %v5749 = vpack.c.b16 %v4757, %v4749
  %v5750 = vpack.c.b16 %v4758, %v4750
  %v5751 = vpack.c.b16 %v4759, %v4751
  %v5752 = vpack.c.b16 %v4760, %v4752
  %v5753 = vpack.c.b16 %v4761, %v4753
  %v5754 = vpack.c.b16 %v4762, %v4754
  %v5755 = vpack.c.b16 %v4763, %v4755
  %v5756 = vpack.c.b16 %v4772, %v4764
  %v5757 = vpack.c.b16 %v4773, %v4765
  %v5758 = vpack.c.b16 %v4774, %v4766
  %v5759 = vpack.c.b16 %v4775, %v4767
  %v5760 = vpack.c.b16 %v4776, %v4768
  %v5761 = vpack.c.b16 %v4777, %v4769
  %v5762 = vpack.c.b16 %v4778, %v4770
  %v5763 = vpack.c.b16 %v4779, %v4771
  %v5764 = vpack.c.b16 %v4788, %v4780
  %v5765 = vpack.c.b16 %v4789, %v4781
  %v5766 = vpack.c.b16 %v4790, %v4782
  %v5767 = vpack.c.b16 %v4791, %v4783
  %v5768 = vpack.c.b16 %v4792, %v4784
  %v5769 = vpack.c.b16 %v4793, %v4785
  %v5770 = vpack.c.b16 %v4794, %v4786
  %v5771 = vpack.c.b16 %v4795, %v4787
  %v5772 = vpack.c.b16 %v4804, %v4796
  %v5773 = vpack.c.b16 %v4805, %v4797
  %v5774 = vpack.c.b16 %v4806, %v4798
  %v5775 = vpack.c.b16 %v4807, %v4799
  %v5776 = vpack.c.b16 %v4808, %v4800
  %v5777 = vpack.c.b16 %v4809, %v4801
  %v5778 = vpack.c.b16 %v4810, %v4802
  %v5779 = vpack.c.b16 %v4811, %v4803
  %v5780 = vpack.c.b16 %v4820, %v4812
  %v5781 = vpack.c.b16 %v4821, %v4813
  %v5782 = vpack.c.b16 %v4822, %v4814
  %v5783 = vpack.c.b16 %v4823, %v4815
  %v5784 = vpack.c.b16 %v4824, %v4816
  %v5785 = vpack.c.b16 %v4825, %v4817
  %v5786 = vpack.c.b16 %v4826, %v4818
  %v5787 = vpack.c.b16 %v4827, %v4819
  %v5788 = vpack.c.b16 %v4836, %v4828
  %v5789 = vpack.c.b16 %v4837, %v4829
  %v5790 = vpack.c.b16 %v4838, %v4830
  %v5791 = vpack.c.b16 %v4839, %v4831
  %v5792 = vpack.c.b16 %v4840, %v4832
  %v5793 = vpack.c.b16 %v4841, %v4833
  %v5794 = vpack.c.b16 %v4842, %v4834
  %v5795 = vpack.c.b16 %v4843, %v4835
  %v5796 = vpack.c.b16 %v4852, %v4844
  %v5797 = vpack.c.b16 %v4853, %v4845
  %v5798 = vpack.c.b16 %v4854, %v4846
  %v5799 = vpack.c.b16 %v4855, %v4847
  %v5800 = vpack.c.b16 %v4856, %v4848
  %v5801 = vpack.c.b16 %v4857, %v4849
  %v5802 = vpack.c.b16 %v4858, %v4850
  %v5803 = vpack.c.b16 %v4859, %v4851
  %v5804 = vpack.c.b16 %v4868, %v4860
  %v5805 = vpack.c.b16 %v4869, %v4861
  %v5806 = vpack.c.b16 %v4870, %v4862
  %v5807 = vpack.c.b16 %v4871, %v4863
  %v5808 = vpack.c.b16 %v4872, %v4864
  %v5809 = vpack.c.b16 %v4873, %v4865
  %v5810 = vpack.c.b16 %v4874, %v4866
  %v5811 = vpack.c.b16 %v4875, %v4867
  %v5812 = vpack.c.b16 %v4884, %v4876
  %v5813 = vpack.c.b16 %v4885, %v4877
  %v5814 = vpack.c.b16 %v4886, %v4878
  %v5815 = vpack.c.b16 %v4887, %v4879
  %v5816 = vpack.c.b16 %v4888, %v4880
  %v5817 = vpack.c.b16 %v4889, %v4881
  %v5818 = vpack.c.b16 %v4890, %v4882
  %v5819 = vpack.c.b16 %v4891, %v4883
  %v5820 = vpack.c.b16 %v4900, %v4892
  %v5821 = vpack.c.b16 %v4901, %v4893
  %v5822 = vpack.c.b16 %v4902, %v4894
  %v5823 = vpack.c.b16 %v4903, %v4895
  %v5824 = vpack.c.b16 %v4904, %v4896
  %v5825 = vpack.c.b16 %v4905, %v4897
  %v5826 = vpack.c.b16 %v4906, %v4898
  %v5827 = vpack.c.b16 %v4907, %v4899
  %v5828 = vpack.c.b16 %v4916, %v4908
  %v5829 = vpack.c.b16 %v4917, %v4909
  %v5830 = vpack.c.b16 %v4918, %v4910
  %v5831 = vpack.c.b16 %v4919, %v4911
  %v5832 = vpack.c.b16 %v4920, %v4912
  %v5833 = vpack.c.b16 %v4921, %v4913
  %v5834 = vpack.c.b16 %v4922, %v4914
  %v5835 = vpack.c.b16 %v4923, %v4915
  %v5836 = vpack.c.b16 %v4932, %v4924
  %v5837 = vpack.c.b16 %v4933, %v4925
  %v5838 = vpack.c.b16 %v4934, %v4926
  %v5839 = vpack.c.b16 %v4935, %v4927
  %v5840 = vpack.c.b16 %v4936, %v4928
  %v5841 = vpack.c.b16 %v4937, %v4929
  %v5842 = vpack.c.b16 %v4938, %v4930
  %v5843 = vpack.c.b16 %v4939, %v4931
  %v5844 = vpack.c.b16 %v4948, %v4940
  %v5845 = vpack.c.b16 %v4949, %v4941
  %v5846 = vpack.c.b16 %v4950, %v4942
  %v5847 = vpack.c.b16 %v4951, %v4943
  %v5848 = vpack.c.b16 %v4952, %v4944
  %v5849 = vpack.c.b16 %v4953, %v4945
  %v5850 = vpack.c.b16 %v4954, %v4946
  %v5851 = vpack.c.b16 %v4955, %v4947
  %v5852 = vpack.c.b16 %v4964, %v4956
  %v5853 = vpack.c.b16 %v4965, %v4957
  %v5854 = vpack.c.b16 %v4966, %v4958
  %v5855 = vpack.c.b16 %v4967, %v4959
  %v5856 = vpack.c.b16 %v4968, %v4960
  %v5857 = vpack.c.b16 %v4969, %v4961
  %v5858 = vpack.c.b16 %v4970, %v4962
  %v5859 = vpack.c.b16 %v4971, %v4963
  %v5860 = vpack.c.b16 %v4980, %v4972
  %v5861 = vpack.c.b16 %v4981, %v4973
  %v5862 = vpack.c.b16 %v4982, %v4974
  %v5863 = vpack.c.b16 %v4983, %v4975
  %v5864 = vpack.c.b16 %v4984, %v4976
  %v5865 = vpack.c.b16 %v4985, %v4977
  %v5866 = vpack.c.b16 %v4986, %v4978
  %v5867 = vpack.c.b16 %v4987, %v4979
  %v5868 = vpack.c.b16 %v4996, %v4988
  %v5869 = vpack.c.b16 %v4997, %v4989
  %v5870 = vpack.c.b16 %v4998, %v4990
  %v5871 = vpack.c.b16 %v4999, %v4991
  %v5872 = vpack.c.b16 %v5000, %v4992
  %v5873 = vpack.c.b16 %v5001, %v4993
  %v5874 = vpack.c.b16 %v5002, %v4994
  %v5875 = vpack.c.b16 %v5003, %v4995
  %v5876 = vpack.c.b16 %v5012, %v5004
  %v5877 = vpack.c.b16 %v5013, %v5005
  %v5878 = vpack.c.b16 %v5014, %v5006
  %v5879 = vpack.c.b16 %v5015, %v5007
  %v5880 = vpack.c.b16 %v5016, %v5008
  %v5881 = vpack.c.b16 %v5017, %v5009
  %v5882 = vpack.c.b16 %v5018, %v5010
  %v5883 = vpack.c.b16 %v5019, %v5011
  %v5884 = vpack.c.b16 %v5028, %v5020
  %v5885 = vpack.c.b16 %v5029, %v5021
  %v5886 = vpack.c.b16 %v5030, %v5022
  %v5887 = vpack.c.b16 %v5031, %v5023
  %v5888 = vpack.c.b16 %v5032, %v5024
  %v5889 = vpack.c.b16 %v5033, %v5025
  %v5890 = vpack.c.b16 %v5034, %v5026
  %v5891 = vpack.c.b16 %v5035, %v5027
  %v5892 = vpack.c.b16 %v5044, %v5036
  %v5893 = vpack.c.b16 %v5045, %v5037
  %v5894 = vpack.c.b16 %v5046, %v5038
  %v5895 = vpack.c.b16 %v5047, %v5039
  %v5896 = vpack.c.b16 %v5048, %v5040
  %v5897 = vpack.c.b16 %v5049, %v5041
  %v5898 = vpack.c.b16 %v5050, %v5042
  %v5899 = vpack.c.b16 %v5051, %v5043
  %v5900 = vpack.c.b16 %v5060, %v5052
  %v5901 = vpack.c.b16 %v5061, %v5053
  %v5902 = vpack.c.b16 %v5062, %v5054
  %v5903 = vpack.c.b16 %v5063, %v5055
  %v5904 = vpack.c.b16 %v5064, %v5056
  %v5905 = vpack.c.b16 %v5065, %v5057
  %v5906 = vpack.c.b16 %v5066, %v5058
  %v5907 = vpack.c.b16 %v5067, %v5059
  %v5908 = vpack.c.b16 %v5076, %v5068
  %v5909 = vpack.c.b16 %v5077, %v5069
  %v5910 = vpack.c.b16 %v5078, %v5070
  %v5911 = vpack.c.b16 %v5079, %v5071
  %v5912 = vpack.c.b16 %v5080, %v5072
  %v5913 = vpack.c.b16 %v5081, %v5073
  %v5914 = vpack.c.b16 %v5082, %v5074
  %v5915 = vpack.c.b16 %v5083, %v5075
  %v5916 = vpack.c.b16 %v5092, %v5084
  %v5917 = vpack.c.b16 %v5093, %v5085
  %v5918 = vpack.c.b16 %v5094, %v5086
  %v5919 = vpack.c.b16 %v5095, %v5087
  %v5920 = vpack.c.b16 %v5096, %v5088
  %v5921 = vpack.c.b16 %v5097, %v5089
  %v5922 = vpack.c.b16 %v5098, %v5090
  %v5923 = vpack.c.b16 %v5099, %v5091
  %v5924 = vpack.c.b16 %v5108, %v5100
  %v5925 = vpack.c.b16 %v5109, %v5101
  %v5926 = vpack.c.b16 %v5110, %v5102
  %v5927 = vpack.c.b16 %v5111, %v5103
  %v5928 = vpack.c.b16 %v5112, %v5104
  %v5929 = vpack.c.b16 %v5113, %v5105
  %v5930 = vpack.c.b16 %v5114, %v5106
  %v5931 = vpack.c.b16 %v5115, %v5107
  %v5932 = vpack.c.b16 %v5124, %v5116
  %v5933 = vpack.c.b16 %v5125, %v5117
  %v5934 = vpack.c.b16 %v5126, %v5118
  %v5935 = vpack.c.b16 %v5127, %v5119
  %v5936 = vpack.c.b16 %v5128, %v5120
  %v5937 = vpack.c.b16 %v5129, %v5121
  %v5938 = vpack.c.b16 %v5130, %v5122
  %v5939 = vpack.c.b16 %v5131, %v5123
  %v5940 = vpack.c.b16 %v5140, %v5132
  %v5941 = vpack.c.b16 %v5141, %v5133
  %v5942 = vpack.c.b16 %v5142, %v5134
  %v5943 = vpack.c.b16 %v5143, %v5135
  %v5944 = vpack.c.b16 %v5144, %v5136
  %v5945 = vpack.c.b16 %v5145, %v5137
  %v5946 = vpack.c.b16 %v5146, %v5138
  %v5947 = vpack.c.b16 %v5147, %v5139
  %v5948 = vpack.c.b16 %v5156, %v5148
  %v5949 = vpack.c.b16 %v5157, %v5149
  %v5950 = vpack.c.b16 %v5158, %v5150
  %v5951 = vpack.c.b16 %v5159, %v5151
  %v5952 = vpack.c.b16 %v5160, %v5152
  %v5953 = vpack.c.b16 %v5161, %v5153
  %v5954 = vpack.c.b16 %v5162, %v5154
  %v5955 = vpack.c.b16 %v5163, %v5155
  %v5956 = vpack.c.b16 %v5172, %v5164
  %v5957 = vpack.c.b16 %v5173, %v5165
  %v5958 = vpack.c.b16 %v5174, %v5166
  %v5959 = vpack.c.b16 %v5175, %v5167
  %v5960 = vpack.c.b16 %v5176, %v5168
  %v5961 = vpack.c.b16 %v5177, %v5169
  %v5962 = vpack.c.b16 %v5178, %v5170
  %v5963 = vpack.c.b16 %v5179, %v5171
  %v5964 = vpack.c.b16 %v5188, %v5180
  %v5965 = vpack.c.b16 %v5189, %v5181
  %v5966 = vpack.c.b16 %v5190, %v5182
  %v5967 = vpack.c.b16 %v5191, %v5183
  %v5968 = vpack.c.b16 %v5192, %v5184
  %v5969 = vpack.c.b16 %v5193, %v5185
  %v5970 = vpack.c.b16 %v5194, %v5186
  %v5971 = vpack.c.b16 %v5195, %v5187
  %v5972 = vpack.c.b16 %v5204, %v5196
  %v5973 = vpack.c.b16 %v5205, %v5197
  %v5974 = vpack.c.b16 %v5206, %v5198
  %v5975 = vpack.c.b16 %v5207, %v5199
  %v5976 = vpack.c.b16 %v5208, %v5200
  %v5977 = vpack.c.b16 %v5209, %v5201
  %v5978 = vpack.c.b16 %v5210, %v5202
  %v5979 = vpack.c.b16 %v5211, %v5203
  %v5980 = vpack.c.b16 %v5220, %v5212
  %v5981 = vpack.c.b16 %v5221, %v5213
  %v5982 = vpack.c.b16 %v5222, %v5214
  %v5983 = vpack.c.b16 %v5223, %v5215
  %v5984 = vpack.c.b16 %v5224, %v5216
  %v5985 = vpack.c.b16 %v5225, %v5217
  %v5986 = vpack.c.b16 %v5226, %v5218
  %v5987 = vpack.c.b16 %v5227, %v5219
  %v5988 = vpack.c.b16 %v5236, %v5228
  %v5989 = vpack.c.b16 %v5237, %v5229
  %v5990 = vpack.c.b16 %v5238, %v5230
  %v5991 = vpack.c.b16 %v5239, %v5231
  %v5992 = vpack.c.b16 %v5240, %v5232
  %v5993 = vpack.c.b16 %v5241, %v5233
  %v5994 = vpack.c.b16 %v5242, %v5234
  %v5995 = vpack.c.b16 %v5243, %v5235
  %v5996 = vpack.c.b16 %v5252, %v5244
  %v5997 = vpack.c.b16 %v5253, %v5245
  %v5998 = vpack.c.b16 %v5254, %v5246
  %v5999 = vpack.c.b16 %v5255, %v5247
  %v6000 = vpack.c.b16 %v5256, %v5248
  %v6001 = vpack.c.b16 %v5257, %v5249
  %v6002 = vpack.c.b16 %v5258, %v5250
  %v6003 = vpack.c.b16 %v5259, %v5251
  %v6004 = vpack.c.b16 %v5268, %v5260
  %v6005 = vpack.c.b16 %v5269, %v5261
  %v6006 = vpack.c.b16 %v5270, %v5262
  %v6007 = vpack.c.b16 %v5271, %v5263
  %v6008 = vpack.c.b16 %v5272, %v5264
  %v6009 = vpack.c.b16 %v5273, %v5265
  %v6010 = vpack.c.b16 %v5274, %v5266
  %v6011 = vpack.c.b16 %v5275, %v5267
  %v6012 = vpack.c.b16 %v5284, %v5276
  %v6013 = vpack.c.b16 %v5285, %v5277
  %v6014 = vpack.c.b16 %v5286, %v5278
  %v6015 = vpack.c.b16 %v5287, %v5279
  %v6016 = vpack.c.b16 %v5288, %v5280
  %v6017 = vpack.c.b16 %v5289, %v5281
  %v6018 = vpack.c.b16 %v5290, %v5282
  %v6019 = vpack.c.b16 %v5291, %v5283
  %v6020 = vpack.c.b16 %v5300, %v5292
  %v6021 = vpack.c.b16 %v5301, %v5293
  %v6022 = vpack.c.b16 %v5302, %v5294
  %v6023 = vpack.c.b16 %v5303, %v5295
  %v6024 = vpack.c.b16 %v5304, %v5296
  %v6025 = vpack.c.b16 %v5305, %v5297
  %v6026 = vpack.c.b16 %v5306, %v5298
  %v6027 = vpack.c.b16 %v5307, %v5299
  %v6028 = vpack.c.b16 %v5316, %v5308
  %v6029 = vpack.c.b16 %v5317, %v5309
  %v6030 = vpack.c.b16 %v5318, %v5310
  %v6031 = vpack.c.b16 %v5319, %v5311
  %v6032 = vpack.c.b16 %v5320, %v5312
  %v6033 = vpack.c.b16 %v5321, %v5313
  %v6034 = vpack.c.b16 %v5322, %v5314
  %v6035 = vpack.c.b16 %v5323, %v5315
  %v6036 = vpack.c.b16 %v5332, %v5324
  %v6037 = vpack.c.b16 %v5333, %v5325
  %v6038 = vpack.c.b16 %v5334, %v5326
  %v6039 = vpack.c.b16 %v5335, %v5327
  %v6040 = vpack.c.b16 %v5336, %v5328
  %v6041 = vpack.c.b16 %v5337, %v5329
  %v6042 = vpack.c.b16 %v5338, %v5330
  %v6043 = vpack.c.b16 %v5339, %v5331
  %v6044 = vpack.c.b16 %v5348, %v5340
  %v6045 = vpack.c.b16 %v5349, %v5341
  %v6046 = vpack.c.b16 %v5350, %v5342
  %v6047 = vpack.c.b16 %v5351, %v5343
  %v6048 = vpack.c.b16 %v5352, %v5344
  %v6049 = vpack.c.b16 %v5353, %v5345
  %v6050 = vpack.c.b16 %v5354, %v5346
  %v6051 = vpack.c.b16 %v5355, %v5347
  %v6052 = vpack.c.b16 %v5364, %v5356
  %v6053 = vpack.c.b16 %v5365, %v5357
  %v6054 = vpack.c.b16 %v5366, %v5358
  %v6055 = vpack.c.b16 %v5367, %v5359
  %v6056 = vpack.c.b16 %v5368, %v5360
  %v6057 = vpack.c.b16 %v5369, %v5361
  %v6058 = vpack.c.b16 %v5370, %v5362
  %v6059 = vpack.c.b16 %v5371, %v5363
  %v6060 = vpack.c.b16 %v5380, %v5372
  %v6061 = vpack.c.b16 %v5381, %v5373
  %v6062 = vpack.c.b16 %v5382, %v5374
  %v6063 = vpack.c.b16 %v5383, %v5375
  %v6064 = vpack.c.b16 %v5384, %v5376
  %v6065 = vpack.c.b16 %v5385, %v5377
  %v6066 = vpack.c.b16 %v5386, %v5378
  %v6067 = vpack.c.b16 %v5387, %v5379
  %v6068 = vpack.c.b16 %v5396, %v5388
  %v6069 = vpack.c.b16 %v5397, %v5389
  %v6070 = vpack.c.b16 %v5398, %v5390
  %v6071 = vpack.c.b16 %v5399, %v5391
  %v6072 = vpack.c.b16 %v5400, %v5392
  %v6073 = vpack.c.b16 %v5401, %v5393
  %v6074 = vpack.c.b16 %v5402, %v5394
  %v6075 = vpack.c.b16 %v5403, %v5395
  %v6076 = vpack.c.b16 %v5412, %v5404
  %v6077 = vpack.c.b16 %v5413, %v5405
  %v6078 = vpack.c.b16 %v5414, %v5406
  %v6079 = vpack.c.b16 %v5415, %v5407
  %v6080 = vpack.c.b16 %v5416, %v5408
  %v6081 = vpack.c.b16 %v5417, %v5409
  %v6082 = vpack.c.b16 %v5418, %v5410
  %v6083 = vpack.c.b16 %v5419, %v5411
  %v6084 = vpack.c.b16 %v5428, %v5420
  %v6085 = vpack.c.b16 %v5429, %v5421
  %v6086 = vpack.c.b16 %v5430, %v5422
  %v6087 = vpack.c.b16 %v5431, %v5423
  %v6088 = vpack.c.b16 %v5432, %v5424
  %v6089 = vpack.c.b16 %v5433, %v5425
  %v6090 = vpack.c.b16 %v5434, %v5426
  %v6091 = vpack.c.b16 %v5435, %v5427
  %v6092 = vpack.c.b16 %v5444, %v5436
  %v6093 = vpack.c.b16 %v5445, %v5437
  %v6094 = vpack.c.b16 %v5446, %v5438
  %v6095 = vpack.c.b16 %v5447, %v5439
  %v6096 = vpack.c.b16 %v5448, %v5440
  %v6097 = vpack.c.b16 %v5449, %v5441
  %v6098 = vpack.c.b16 %v5450, %v5442
  %v6099 = vpack.c.b16 %v5451, %v5443
  %v6100 = vpack.c.b16 %v5460, %v5452
  %v6101 = vpack.c.b16 %v5461, %v5453
  %v6102 = vpack.c.b16 %v5462, %v5454
  %v6103 = vpack.c.b16 %v5463, %v5455
  %v6104 = vpack.c.b16 %v5464, %v5456
  %v6105 = vpack.c.b16 %v5465, %v5457
  %v6106 = vpack.c.b16 %v5466, %v5458
  %v6107 = vpack.c.b16 %v5467, %v5459
  %v6108 = vpack.c.b16 %v5476, %v5468
  %v6109 = vpack.c.b16 %v5477, %v5469
  %v6110 = vpack.c.b16 %v5478, %v5470
  %v6111 = vpack.c.b16 %v5479, %v5471
  %v6112 = vpack.c.b16 %v5480, %v5472
  %v6113 = vpack.c.b16 %v5481, %v5473
  %v6114 = vpack.c.b16 %v5482, %v5474
  %v6115 = vpack.c.b16 %v5483, %v5475
  %v6116 = vpack.c.b16 %v5492, %v5484
  %v6117 = vpack.c.b16 %v5493, %v5485
  %v6118 = vpack.c.b16 %v5494, %v5486
  %v6119 = vpack.c.b16 %v5495, %v5487
  %v6120 = vpack.c.b16 %v5496, %v5488
  %v6121 = vpack.c.b16 %v5497, %v5489
  %v6122 = vpack.c.b16 %v5498, %v5490
  %v6123 = vpack.c.b16 %v5499, %v5491
  %v6124 = vpack.c.b16 %v5508, %v5500
  %v6125 = vpack.c.b16 %v5509, %v5501
  %v6126 = vpack.c.b16 %v5510, %v5502
  %v6127 = vpack.c.b16 %v5511, %v5503
  %v6128 = vpack.c.b16 %v5512, %v5504
  %v6129 = vpack.c.b16 %v5513, %v5505
  %v6130 = vpack.c.b16 %v5514, %v5506
  %v6131 = vpack.c.b16 %v5515, %v5507
  %v6132 = vpack.c.b16 %v5524, %v5516
  %v6133 = vpack.c.b16 %v5525, %v5517
  %v6134 = vpack.c.b16 %v5526, %v5518
  %v6135 = vpack.c.b16 %v5527, %v5519
  %v6136 = vpack.c.b16 %v5528, %v5520
  %v6137 = vpack.c.b16 %v5529, %v5521
  %v6138 = vpack.c.b16 %v5530, %v5522
  %v6139 = vpack.c.b16 %v5531, %v5523
  %v6140 = vpack.c.b16 %v5540, %v5532
  %v6141 = vpack.c.b16 %v5541, %v5533
  %v6142 = vpack.c.b16 %v5542, %v5534
  %v6143 = vpack.c.b16 %v5543, %v5535
  %v6144 = vpack.c.b16 %v5544, %v5536
  %v6145 = vpack.c.b16 %v5545, %v5537
  %v6146 = vpack.c.b16 %v5546, %v5538
  %v6147 = vpack.c.b16 %v5547, %v5539
  %v6148 = vpack.c.b16 %v5556, %v5548
  %v6149 = vpack.c.b16 %v5557, %v5549
  %v6150 = vpack.c.b16 %v5558, %v5550
  %v6151 = vpack.c.b16 %v5559, %v5551
  %v6152 = vpack.c.b16 %v5560, %v5552
  %v6153 = vpack.c.b16 %v5561, %v5553
  %v6154 = vpack.c.b16 %v5562, %v5554
  %v6155 = vpack.c.b16 %v5563, %v5555
  %v6156 = vpack.c.b16 %v5572, %v5564
  %v6157 = vpack.c.b16 %v5573, %v5565
  %v6158 = vpack.c.b16 %v5574, %v5566
  %v6159 = vpack.c.b16 %v5575, %v5567
  %v6160 = vpack.c.b16 %v5576, %v5568
  %v6161 = vpack.c.b16 %v5577, %v5569
  %v6162 = vpack.c.b16 %v5578, %v5570
  %v6163 = vpack.c.b16 %v5579, %v5571
  %v6164 = vpack.c.b16 %v5588, %v5580
  %v6165 = vpack.c.b16 %v5589, %v5581
  %v6166 = vpack.c.b16 %v5590, %v5582
  %v6167 = vpack.c.b16 %v5591, %v5583
  %v6168 = vpack.c.b16 %v5592, %v5584
  %v6169 = vpack.c.b16 %v5593, %v5585
  %v6170 = vpack.c.b16 %v5594, %v5586
  %v6171 = vpack.c.b16 %v5595, %v5587
  %6748 = vmatprep.subr.bf16.mxu0 %v5597
  %6749 = vmatpush1.bf16.msra.mxu0 %v5596
  %6750 = vmatprep.subr.bf16.mxu0 %v5605
  %6751 = vmatpush1.bf16.msra.mxu0 %v5604
  %6752 = vmatprep.subr.bf16.mxu0 %v5613
  %6753 = vmatpush1.bf16.msra.mxu0 %v5612
  %6754 = vmatprep.subr.bf16.mxu0 %v5621
  %6755 = vmatpush1.bf16.msra.mxu0 %v5620
  %6756 = vmatprep.subr.bf16.mxu0 %v5629
  %6757 = vmatpush1.bf16.msra.mxu0 %v5628
  %6758 = vmatprep.subr.bf16.mxu0 %v5637
  %6759 = vmatpush1.bf16.msra.mxu0 %v5636
  %6760 = vmatprep.subr.bf16.mxu0 %v5645
  %6761 = vmatpush1.bf16.msra.mxu0 %v5644
  %6762 = vmatprep.subr.bf16.mxu0 %v5653
  %6763 = vmatpush1.bf16.msra.mxu0 %v5652
  %6764 = vmatprep.subr.bf16.mxu0 %v5661
  %6765 = vmatpush1.bf16.msra.mxu0 %v5660
  %6766 = vmatprep.subr.bf16.mxu0 %v5669
  %6767 = vmatpush1.bf16.msra.mxu0 %v5668
  %6768 = vmatprep.subr.bf16.mxu0 %v5677
  %6769 = vmatpush1.bf16.msra.mxu0 %v5676
  %6770 = vmatprep.subr.bf16.mxu0 %v5685
  %6771 = vmatpush1.bf16.msra.mxu0 %v5684
  %6772 = vmatprep.subr.bf16.mxu0 %v5693
  %6773 = vmatpush1.bf16.msra.mxu0 %v5692
  %6774 = vmatprep.subr.bf16.mxu0 %v5701
  %6775 = vmatpush1.bf16.msra.mxu0 %v5700
  %6776 = vmatprep.subr.bf16.mxu0 %v5709
  %6777 = vmatpush1.bf16.msra.mxu0 %v5708
  %6778 = vmatprep.subr.bf16.mxu0 %v5717
  %6779 = vmatpush1.bf16.msra.mxu0 %v5716
  %6780 = vmatprep.mubr.bf16.mxu0 %v3278
  %6781 = vmatmul.mubr.bf16.gmra.mrb[0].mxu0 %v3277
  %v6782 = vpop.f32.mrb[0].mxu0
  %v6783 = vadd.f32 %v3866, %v6782
  %v6784 = vpop.f32.mrb[0].mxu0
  %v6785 = vadd.f32 %v3866, %v6784
  %v6786 = vpop.f32.mrb[0].mxu0
  %v6787 = vpop.f32.mrb[0].mxu0
  %6788 = vdwg.mxu0
  %6789 = vmatprep.subr.bf16.mxu0 %v5725
  %6790 = vmatpush1.bf16.msra.mxu0 %v5724
  %6791 = vmatprep.subr.bf16.mxu0 %v5733
  %6792 = vmatpush1.bf16.msra.mxu0 %v5732
  %6793 = vmatprep.subr.bf16.mxu0 %v5741
  %6794 = vmatpush1.bf16.msra.mxu0 %v5740
  %6795 = vmatprep.subr.bf16.mxu0 %v5749
  %6796 = vmatpush1.bf16.msra.mxu0 %v5748
  %6797 = vmatprep.subr.bf16.mxu0 %v5757
  %6798 = vmatpush1.bf16.msra.mxu0 %v5756
  %6799 = vmatprep.subr.bf16.mxu0 %v5765
  %6800 = vmatpush1.bf16.msra.mxu0 %v5764
  %6801 = vmatprep.subr.bf16.mxu0 %v5773
  %6802 = vmatpush1.bf16.msra.mxu0 %v5772
  %6803 = vmatprep.subr.bf16.mxu0 %v5781
  %6804 = vmatpush1.bf16.msra.mxu0 %v5780
  %6805 = vmatprep.subr.bf16.mxu0 %v5789
  %6806 = vmatpush1.bf16.msra.mxu0 %v5788
  %6807 = vmatprep.subr.bf16.mxu0 %v5797
  %6808 = vmatpush1.bf16.msra.mxu0 %v5796
  %6809 = vmatprep.subr.bf16.mxu0 %v5805
  %6810 = vmatpush1.bf16.msra.mxu0 %v5804
  %6811 = vmatprep.subr.bf16.mxu0 %v5813
  %6812 = vmatpush1.bf16.msra.mxu0 %v5812
  %6813 = vmatprep.subr.bf16.mxu0 %v5821
  %6814 = vmatpush1.bf16.msra.mxu0 %v5820
  %6815 = vmatprep.subr.bf16.mxu0 %v5829
  %6816 = vmatpush1.bf16.msra.mxu0 %v5828
  %6817 = vmatprep.subr.bf16.mxu0 %v5837
  %6818 = vmatpush1.bf16.msra.mxu0 %v5836
  %6819 = vmatprep.subr.bf16.mxu0 %v5845
  %6820 = vmatpush1.bf16.msra.mxu0 %v5844
  %6821 = vmatprep.mubr.bf16.mxu0 %v3280
  %6822 = vmatmul.mubr.bf16.gmra.mrb[0].mxu0 %v3279
  %v6823 = vpop.f32.mrb[0].mxu0
  %v6824 = vadd.f32 %v6783, %v6823
  %v6825 = vpop.f32.mrb[0].mxu0
  %v6826 = vadd.f32 %v6785, %v6825
  %v6827 = vpop.f32.mrb[0].mxu0
  %v6828 = vpop.f32.mrb[0].mxu0
  %6829 = vdwg.mxu0
  %6830 = vmatprep.subr.bf16.mxu0 %v5853
  %6831 = vmatpush1.bf16.msra.mxu0 %v5852
  %6832 = vmatprep.subr.bf16.mxu0 %v5861
  %6833 = vmatpush1.bf16.msra.mxu0 %v5860
  %6834 = vmatprep.subr.bf16.mxu0 %v5869
  %6835 = vmatpush1.bf16.msra.mxu0 %v5868
  %6836 = vmatprep.subr.bf16.mxu0 %v5877
  %6837 = vmatpush1.bf16.msra.mxu0 %v5876
  %6838 = vmatprep.subr.bf16.mxu0 %v5885
  %6839 = vmatpush1.bf16.msra.mxu0 %v5884
  %6840 = vmatprep.subr.bf16.mxu0 %v5893
  %6841 = vmatpush1.bf16.msra.mxu0 %v5892
  %6842 = vmatprep.subr.bf16.mxu0 %v5901
  %6843 = vmatpush1.bf16.msra.mxu0 %v5900
  %6844 = vmatprep.subr.bf16.mxu0 %v5909
  %6845 = vmatpush1.bf16.msra.mxu0 %v5908
  %6846 = vmatprep.subr.bf16.mxu0 %v5917
  %6847 = vmatpush1.bf16.msra.mxu0 %v5916
  %6848 = vmatprep.subr.bf16.mxu0 %v5925
  %6849 = vmatpush1.bf16.msra.mxu0 %v5924
  %6850 = vmatprep.subr.bf16.mxu0 %v5933
  %6851 = vmatpush1.bf16.msra.mxu0 %v5932
  %6852 = vmatprep.subr.bf16.mxu0 %v5941
  %6853 = vmatpush1.bf16.msra.mxu0 %v5940
  %6854 = vmatprep.subr.bf16.mxu0 %v5949
  %6855 = vmatpush1.bf16.msra.mxu0 %v5948
  %6856 = vmatprep.subr.bf16.mxu0 %v5957
  %6857 = vmatpush1.bf16.msra.mxu0 %v5956
  %6858 = vmatprep.subr.bf16.mxu0 %v5965
  %6859 = vmatpush1.bf16.msra.mxu0 %v5964
  %6860 = vmatprep.subr.bf16.mxu0 %v5973
  %6861 = vmatpush1.bf16.msra.mxu0 %v5972
  %6862 = vmatprep.mubr.bf16.mxu0 %v3282
  %6863 = vmatmul.mubr.bf16.gmra.mrb[0].mxu0 %v3281
  %v6864 = vpop.f32.mrb[0].mxu0
  %v6865 = vadd.f32 %v6824, %v6864
  %v6866 = vpop.f32.mrb[0].mxu0
  %v6867 = vadd.f32 %v6826, %v6866
  %v6868 = vpop.f32.mrb[0].mxu0
  %v6869 = vpop.f32.mrb[0].mxu0
  %6870 = vdwg.mxu0
  %6871 = vmatprep.subr.bf16.mxu0 %v5981
  %6872 = vmatpush1.bf16.msra.mxu0 %v5980
  %6873 = vmatprep.subr.bf16.mxu0 %v5989
  %6874 = vmatpush1.bf16.msra.mxu0 %v5988
  %6875 = vmatprep.subr.bf16.mxu0 %v5997
  %6876 = vmatpush1.bf16.msra.mxu0 %v5996
  %6877 = vmatprep.subr.bf16.mxu0 %v6005
  %6878 = vmatpush1.bf16.msra.mxu0 %v6004
  %6879 = vmatprep.subr.bf16.mxu0 %v6013
  %6880 = vmatpush1.bf16.msra.mxu0 %v6012
  %6881 = vmatprep.subr.bf16.mxu0 %v6021
  %6882 = vmatpush1.bf16.msra.mxu0 %v6020
  %6883 = vmatprep.subr.bf16.mxu0 %v6029
  %6884 = vmatpush1.bf16.msra.mxu0 %v6028
  %6885 = vmatprep.subr.bf16.mxu0 %v6037
  %6886 = vmatpush1.bf16.msra.mxu0 %v6036
  %6887 = vmatprep.subr.bf16.mxu0 %v6045
  %6888 = vmatpush1.bf16.msra.mxu0 %v6044
  %6889 = vmatprep.subr.bf16.mxu0 %v6053
  %6890 = vmatpush1.bf16.msra.mxu0 %v6052
  %6891 = vmatprep.subr.bf16.mxu0 %v6061
  %6892 = vmatpush1.bf16.msra.mxu0 %v6060
  %6893 = vmatprep.subr.bf16.mxu0 %v6069
  %6894 = vmatpush1.bf16.msra.mxu0 %v6068
  %6895 = vmatprep.subr.bf16.mxu0 %v6077
  %6896 = vmatpush1.bf16.msra.mxu0 %v6076
  %6897 = vmatprep.subr.bf16.mxu0 %v6085
  %6898 = vmatpush1.bf16.msra.mxu0 %v6084
  %6899 = vmatprep.subr.bf16.mxu0 %v6093
  %6900 = vmatpush1.bf16.msra.mxu0 %v6092
  %6901 = vmatprep.subr.bf16.mxu0 %v6101
  %6902 = vmatpush1.bf16.msra.mxu0 %v6100
  %6903 = vmatprep.mubr.bf16.mxu0 %v3284
  %6904 = vmatmul.mubr.bf16.gmra.mrb[0].mxu0 %v3283
  %v6905 = vpop.f32.mrb[0].mxu0
  %v6906 = vadd.f32 %v6865, %v6905
  %v6907 = vpop.f32.mrb[0].mxu0
  %v6908 = vadd.f32 %v6867, %v6907
  %v6909 = vpop.f32.mrb[0].mxu0
  %v6910 = vpop.f32.mrb[0].mxu0
  %6911 = vdwg.mxu0
  %6912 = vmatprep.subr.bf16.mxu0 %v6109
  %6913 = vmatpush1.bf16.msra.mxu0 %v6108
  %6914 = vmatprep.subr.bf16.mxu0 %v6117
  %6915 = vmatpush1.bf16.msra.mxu0 %v6116
  %6916 = vmatprep.subr.bf16.mxu0 %v6125
  %6917 = vmatpush1.bf16.msra.mxu0 %v6124
  %6918 = vmatprep.subr.bf16.mxu0 %v6133
  %6919 = vmatpush1.bf16.msra.mxu0 %v6132
  %6920 = vmatprep.subr.bf16.mxu0 %v6141
  %6921 = vmatpush1.bf16.msra.mxu0 %v6140
  %6922 = vmatprep.subr.bf16.mxu0 %v6149
  %6923 = vmatpush1.bf16.msra.mxu0 %v6148
  %6924 = vmatprep.subr.bf16.mxu0 %v6157
  %6925 = vmatpush1.bf16.msra.mxu0 %v6156
  %6926 = vmatprep.subr.bf16.mxu0 %v6165
  %6927 = vmatpush1.bf16.msra.mxu0 %v6164
  %6928 = vmatprep.subr.bf16.mxu0 0
  %6929 = vmatpush1.bf16.msra.mxu0 0
  %6930 = vmatprep.subr.bf16.mxu0 0
  %6931 = vmatpush1.bf16.msra.mxu0 0
  %6932 = vmatprep.subr.bf16.mxu0 0
  %6933 = vmatpush1.bf16.msra.mxu0 0
  %6934 = vmatprep.subr.bf16.mxu0 0
  %6935 = vmatpush1.bf16.msra.mxu0 0
  %6936 = vmatprep.subr.bf16.mxu0 0
  %6937 = vmatpush1.bf16.msra.mxu0 0
  %6938 = vmatprep.subr.bf16.mxu0 0
  %6939 = vmatpush1.bf16.msra.mxu0 0
  %6940 = vmatprep.subr.bf16.mxu0 0
  %6941 = vmatpush1.bf16.msra.mxu0 0
  %6942 = vmatprep.subr.bf16.mxu0 0
  %6943 = vmatpush1.bf16.msra.mxu0 0
  %6944 = vmatprep.mubr.bf16.mxu0 0
  %6945 = vmatmul.mubr.bf16.gmra.mrb[0].mxu0 %v3285
  %v6946 = vpop.f32.mrb[0].mxu0
  %v6947 = vadd.f32 %v6906, %v6946
  %v6948 = vpop.f32.mrb[0].mxu0
  %v6949 = vadd.f32 %v6908, %v6948
  %v6950 = vpop.f32.mrb[0].mxu0
  %v6951 = vpop.f32.mrb[0].mxu0
  %6952 = vdwg.mxu0
  %6953 = vmatprep.subr.bf16.mxu0 %v5599
  %6954 = vmatpush1.bf16.msra.mxu0 %v5598
  %6955 = vmatprep.subr.bf16.mxu0 %v5607
  %6956 = vmatpush1.bf16.msra.mxu0 %v5606
  %6957 = vmatprep.subr.bf16.mxu0 %v5615
  %6958 = vmatpush1.bf16.msra.mxu0 %v5614
  %6959 = vmatprep.subr.bf16.mxu0 %v5623
  %6960 = vmatpush1.bf16.msra.mxu0 %v5622
  %6961 = vmatprep.subr.bf16.mxu0 %v5631
  %6962 = vmatpush1.bf16.msra.mxu0 %v5630
  %6963 = vmatprep.subr.bf16.mxu0 %v5639
  %6964 = vmatpush1.bf16.msra.mxu0 %v5638
  %6965 = vmatprep.subr.bf16.mxu0 %v5647
  %6966 = vmatpush1.bf16.msra.mxu0 %v5646
  %6967 = vmatprep.subr.bf16.mxu0 %v5655
  %6968 = vmatpush1.bf16.msra.mxu0 %v5654
  %6969 = vmatprep.subr.bf16.mxu0 %v5663
  %6970 = vmatpush1.bf16.msra.mxu0 %v5662
  %6971 = vmatprep.subr.bf16.mxu0 %v5671
  %6972 = vmatpush1.bf16.msra.mxu0 %v5670
  %6973 = vmatprep.subr.bf16.mxu0 %v5679
  %6974 = vmatpush1.bf16.msra.mxu0 %v5678
  %6975 = vmatprep.subr.bf16.mxu0 %v5687
  %6976 = vmatpush1.bf16.msra.mxu0 %v5686
  %6977 = vmatprep.subr.bf16.mxu0 %v5695
  %6978 = vmatpush1.bf16.msra.mxu0 %v5694
  %6979 = vmatprep.subr.bf16.mxu0 %v5703
  %6980 = vmatpush1.bf16.msra.mxu0 %v5702
  %6981 = vmatprep.subr.bf16.mxu0 %v5711
  %6982 = vmatpush1.bf16.msra.mxu0 %v5710
  %6983 = vmatprep.subr.bf16.mxu0 %v5719
  %6984 = vmatpush1.bf16.msra.mxu0 %v5718
  %6985 = vmatprep.mubr.bf16.mxu0 %v3278
  %6986 = vmatmul.mubr.bf16.gmra.mrb[0].mxu0 %v3277
  %v6987 = vpop.f32.mrb[0].mxu0
  %v6988 = vadd.f32 %v3866, %v6987
  %v6989 = vpop.f32.mrb[0].mxu0
  %v6990 = vadd.f32 %v3866, %v6989
  %v6991 = vpop.f32.mrb[0].mxu0
  %v6992 = vpop.f32.mrb[0].mxu0
  %6993 = vdwg.mxu0
  %6994 = vmatprep.subr.bf16.mxu0 %v5727
  %6995 = vmatpush1.bf16.msra.mxu0 %v5726
  %6996 = vmatprep.subr.bf16.mxu0 %v5735
  %6997 = vmatpush1.bf16.msra.mxu0 %v5734
  %6998 = vmatprep.subr.bf16.mxu0 %v5743
  %6999 = vmatpush1.bf16.msra.mxu0 %v5742
  %7000 = vmatprep.subr.bf16.mxu0 %v5751
  %7001 = vmatpush1.bf16.msra.mxu0 %v5750
  %7002 = vmatprep.subr.bf16.mxu0 %v5759
  %7003 = vmatpush1.bf16.msra.mxu0 %v5758
  %7004 = vmatprep.subr.bf16.mxu0 %v5767
  %7005 = vmatpush1.bf16.msra.mxu0 %v5766
  %7006 = vmatprep.subr.bf16.mxu0 %v5775
  %7007 = vmatpush1.bf16.msra.mxu0 %v5774
  %7008 = vmatprep.subr.bf16.mxu0 %v5783
  %7009 = vmatpush1.bf16.msra.mxu0 %v5782
  %7010 = vmatprep.subr.bf16.mxu0 %v5791
  %7011 = vmatpush1.bf16.msra.mxu0 %v5790
  %7012 = vmatprep.subr.bf16.mxu0 %v5799
  %7013 = vmatpush1.bf16.msra.mxu0 %v5798
  %7014 = vmatprep.subr.bf16.mxu0 %v5807
  %7015 = vmatpush1.bf16.msra.mxu0 %v5806
  %7016 = vmatprep.subr.bf16.mxu0 %v5815
  %7017 = vmatpush1.bf16.msra.mxu0 %v5814
  %7018 = vmatprep.subr.bf16.mxu0 %v5823
  %7019 = vmatpush1.bf16.msra.mxu0 %v5822
  %7020 = vmatprep.subr.bf16.mxu0 %v5831
  %7021 = vmatpush1.bf16.msra.mxu0 %v5830
  %7022 = vmatprep.subr.bf16.mxu0 %v5839
  %7023 = vmatpush1.bf16.msra.mxu0 %v5838
  %7024 = vmatprep.subr.bf16.mxu0 %v5847
  %7025 = vmatpush1.bf16.msra.mxu0 %v5846
  %7026 = vmatprep.mubr.bf16.mxu0 %v3280
  %7027 = vmatmul.mubr.bf16.gmra.mrb[0].mxu0 %v3279
  %v7028 = vpop.f32.mrb[0].mxu0
  %v7029 = vadd.f32 %v6988, %v7028
  %v7030 = vpop.f32.mrb[0].mxu0
  %v7031 = vadd.f32 %v6990, %v7030
  %v7032 = vpop.f32.mrb[0].mxu0
  %v7033 = vpop.f32.mrb[0].mxu0
  %7034 = vdwg.mxu0
  %7035 = vmatprep.subr.bf16.mxu0 %v5855
  %7036 = vmatpush1.bf16.msra.mxu0 %v5854
  %7037 = vmatprep.subr.bf16.mxu0 %v5863
  %7038 = vmatpush1.bf16.msra.mxu0 %v5862
  %7039 = vmatprep.subr.bf16.mxu0 %v5871
  %7040 = vmatpush1.bf16.msra.mxu0 %v5870
  %7041 = vmatprep.subr.bf16.mxu0 %v5879
  %7042 = vmatpush1.bf16.msra.mxu0 %v5878
  %7043 = vmatprep.subr.bf16.mxu0 %v5887
  %7044 = vmatpush1.bf16.msra.mxu0 %v5886
  %7045 = vmatprep.subr.bf16.mxu0 %v5895
  %7046 = vmatpush1.bf16.msra.mxu0 %v5894
  %7047 = vmatprep.subr.bf16.mxu0 %v5903
  %7048 = vmatpush1.bf16.msra.mxu0 %v5902
  %7049 = vmatprep.subr.bf16.mxu0 %v5911
  %7050 = vmatpush1.bf16.msra.mxu0 %v5910
  %7051 = vmatprep.subr.bf16.mxu0 %v5919
  %7052 = vmatpush1.bf16.msra.mxu0 %v5918
  %7053 = vmatprep.subr.bf16.mxu0 %v5927
  %7054 = vmatpush1.bf16.msra.mxu0 %v5926
  %7055 = vmatprep.subr.bf16.mxu0 %v5935
  %7056 = vmatpush1.bf16.msra.mxu0 %v5934
  %7057 = vmatprep.subr.bf16.mxu0 %v5943
  %7058 = vmatpush1.bf16.msra.mxu0 %v5942
  %7059 = vmatprep.subr.bf16.mxu0 %v5951
  %7060 = vmatpush1.bf16.msra.mxu0 %v5950
  %7061 = vmatprep.subr.bf16.mxu0 %v5959
  %7062 = vmatpush1.bf16.msra.mxu0 %v5958
  %7063 = vmatprep.subr.bf16.mxu0 %v5967
  %7064 = vmatpush1.bf16.msra.mxu0 %v5966
  %7065 = vmatprep.subr.bf16.mxu0 %v5975
  %7066 = vmatpush1.bf16.msra.mxu0 %v5974
  %7067 = vmatprep.mubr.bf16.mxu0 %v3282
  %7068 = vmatmul.mubr.bf16.gmra.mrb[0].mxu0 %v3281
  %v7069 = vpop.f32.mrb[0].mxu0
  %v7070 = vadd.f32 %v7029, %v7069
  %v7071 = vpop.f32.mrb[0].mxu0
  %v7072 = vadd.f32 %v7031, %v7071
  %v7073 = vpop.f32.mrb[0].mxu0
  %v7074 = vpop.f32.mrb[0].mxu0
  %7075 = vdwg.mxu0
  %7076 = vmatprep.subr.bf16.mxu0 %v5983
  %7077 = vmatpush1.bf16.msra.mxu0 %v5982
  %7078 = vmatprep.subr.bf16.mxu0 %v5991
  %7079 = vmatpush1.bf16.msra.mxu0 %v5990
  %7080 = vmatprep.subr.bf16.mxu0 %v5999
  %7081 = vmatpush1.bf16.msra.mxu0 %v5998
  %7082 = vmatprep.subr.bf16.mxu0 %v6007
  %7083 = vmatpush1.bf16.msra.mxu0 %v6006
  %7084 = vmatprep.subr.bf16.mxu0 %v6015
  %7085 = vmatpush1.bf16.msra.mxu0 %v6014
  %7086 = vmatprep.subr.bf16.mxu0 %v6023
  %7087 = vmatpush1.bf16.msra.mxu0 %v6022
  %7088 = vmatprep.subr.bf16.mxu0 %v6031
  %7089 = vmatpush1.bf16.msra.mxu0 %v6030
  %7090 = vmatprep.subr.bf16.mxu0 %v6039
  %7091 = vmatpush1.bf16.msra.mxu0 %v6038
  %7092 = vmatprep.subr.bf16.mxu0 %v6047
  %7093 = vmatpush1.bf16.msra.mxu0 %v6046
  %7094 = vmatprep.subr.bf16.mxu0 %v6055
  %7095 = vmatpush1.bf16.msra.mxu0 %v6054
  %7096 = vmatprep.subr.bf16.mxu0 %v6063
  %7097 = vmatpush1.bf16.msra.mxu0 %v6062
  %7098 = vmatprep.subr.bf16.mxu0 %v6071
  %7099 = vmatpush1.bf16.msra.mxu0 %v6070
  %7100 = vmatprep.subr.bf16.mxu0 %v6079
  %7101 = vmatpush1.bf16.msra.mxu0 %v6078
  %7102 = vmatprep.subr.bf16.mxu0 %v6087
  %7103 = vmatpush1.bf16.msra.mxu0 %v6086
  %7104 = vmatprep.subr.bf16.mxu0 %v6095
  %7105 = vmatpush1.bf16.msra.mxu0 %v6094
  %7106 = vmatprep.subr.bf16.mxu0 %v6103
  %7107 = vmatpush1.bf16.msra.mxu0 %v6102
  %7108 = vmatprep.mubr.bf16.mxu0 %v3284
  %7109 = vmatmul.mubr.bf16.gmra.mrb[0].mxu0 %v3283
  %v7110 = vpop.f32.mrb[0].mxu0
  %v7111 = vadd.f32 %v7070, %v7110
  %v7112 = vpop.f32.mrb[0].mxu0
  %v7113 = vadd.f32 %v7072, %v7112
  %v7114 = vpop.f32.mrb[0].mxu0
  %v7115 = vpop.f32.mrb[0].mxu0
  %7116 = vdwg.mxu0
  %7117 = vmatprep.subr.bf16.mxu0 %v6111
  %7118 = vmatpush1.bf16.msra.mxu0 %v6110
  %7119 = vmatprep.subr.bf16.mxu0 %v6119
  %7120 = vmatpush1.bf16.msra.mxu0 %v6118
  %7121 = vmatprep.subr.bf16.mxu0 %v6127
  %7122 = vmatpush1.bf16.msra.mxu0 %v6126
  %7123 = vmatprep.subr.bf16.mxu0 %v6135
  %7124 = vmatpush1.bf16.msra.mxu0 %v6134
  %7125 = vmatprep.subr.bf16.mxu0 %v6143
  %7126 = vmatpush1.bf16.msra.mxu0 %v6142
  %7127 = vmatprep.subr.bf16.mxu0 %v6151
  %7128 = vmatpush1.bf16.msra.mxu0 %v6150
  %7129 = vmatprep.subr.bf16.mxu0 %v6159
  %7130 = vmatpush1.bf16.msra.mxu0 %v6158
  %7131 = vmatprep.subr.bf16.mxu0 %v6167
  %7132 = vmatpush1.bf16.msra.mxu0 %v6166
  %7133 = vmatprep.subr.bf16.mxu0 0
  %7134 = vmatpush1.bf16.msra.mxu0 0
  %7135 = vmatprep.subr.bf16.mxu0 0
  %7136 = vmatpush1.bf16.msra.mxu0 0
  %7137 = vmatprep.subr.bf16.mxu0 0
  %7138 = vmatpush1.bf16.msra.mxu0 0
  %7139 = vmatprep.subr.bf16.mxu0 0
  %7140 = vmatpush1.bf16.msra.mxu0 0
  %7141 = vmatprep.subr.bf16.mxu0 0
  %7142 = vmatpush1.bf16.msra.mxu0 0
  %7143 = vmatprep.subr.bf16.mxu0 0
  %7144 = vmatpush1.bf16.msra.mxu0 0
  %7145 = vmatprep.subr.bf16.mxu0 0
  %7146 = vmatpush1.bf16.msra.mxu0 0
  %7147 = vmatprep.subr.bf16.mxu0 0
  %7148 = vmatpush1.bf16.msra.mxu0 0
  %7149 = vmatprep.mubr.bf16.mxu0 0
  %7150 = vmatmul.mubr.bf16.gmra.mrb[0].mxu0 %v3285
  %v7151 = vpop.f32.mrb[0].mxu0
  %v7152 = vadd.f32 %v7111, %v7151
  %v7153 = vpop.f32.mrb[0].mxu0
  %v7154 = vadd.f32 %v7113, %v7153
  %v7155 = vpop.f32.mrb[0].mxu0
  %v7156 = vpop.f32.mrb[0].mxu0
  %7157 = vdwg.mxu0
  %7158 = vmatprep.subr.bf16.mxu0 %v5601
  %7159 = vmatpush1.bf16.msra.mxu0 %v5600
  %7160 = vmatprep.subr.bf16.mxu0 %v5609
  %7161 = vmatpush1.bf16.msra.mxu0 %v5608
  %7162 = vmatprep.subr.bf16.mxu0 %v5617
  %7163 = vmatpush1.bf16.msra.mxu0 %v5616
  %7164 = vmatprep.subr.bf16.mxu0 %v5625
  %7165 = vmatpush1.bf16.msra.mxu0 %v5624
  %7166 = vmatprep.subr.bf16.mxu0 %v5633
  %7167 = vmatpush1.bf16.msra.mxu0 %v5632
  %7168 = vmatprep.subr.bf16.mxu0 %v5641
  %7169 = vmatpush1.bf16.msra.mxu0 %v5640
  %7170 = vmatprep.subr.bf16.mxu0 %v5649
  %7171 = vmatpush1.bf16.msra.mxu0 %v5648
  %7172 = vmatprep.subr.bf16.mxu0 %v5657
  %7173 = vmatpush1.bf16.msra.mxu0 %v5656
  %7174 = vmatprep.subr.bf16.mxu0 %v5665
  %7175 = vmatpush1.bf16.msra.mxu0 %v5664
  %7176 = vmatprep.subr.bf16.mxu0 %v5673
  %7177 = vmatpush1.bf16.msra.mxu0 %v5672
  %7178 = vmatprep.subr.bf16.mxu0 %v5681
  %7179 = vmatpush1.bf16.msra.mxu0 %v5680
  %7180 = vmatprep.subr.bf16.mxu0 %v5689
  %7181 = vmatpush1.bf16.msra.mxu0 %v5688
  %7182 = vmatprep.subr.bf16.mxu0 %v5697
  %7183 = vmatpush1.bf16.msra.mxu0 %v5696
  %7184 = vmatprep.subr.bf16.mxu0 %v5705
  %7185 = vmatpush1.bf16.msra.mxu0 %v5704
  %7186 = vmatprep.subr.bf16.mxu0 %v5713
  %7187 = vmatpush1.bf16.msra.mxu0 %v5712
  %7188 = vmatprep.subr.bf16.mxu0 %v5721
  %7189 = vmatpush1.bf16.msra.mxu0 %v5720
  %7190 = vmatprep.mubr.bf16.mxu0 %v3278
  %7191 = vmatmul.mubr.bf16.gmra.mrb[0].mxu0 %v3277
  %v7192 = vpop.f32.mrb[0].mxu0
  %v7193 = vadd.f32 %v3866, %v7192
  %v7194 = vpop.f32.mrb[0].mxu0
  %v7195 = vadd.f32 %v3866, %v7194
  %v7196 = vpop.f32.mrb[0].mxu0
  %v7197 = vpop.f32.mrb[0].mxu0
  %7198 = vdwg.mxu0
  %7199 = vmatprep.subr.bf16.mxu0 %v5729
  %7200 = vmatpush1.bf16.msra.mxu0 %v5728
  %7201 = vmatprep.subr.bf16.mxu0 %v5737
  %7202 = vmatpush1.bf16.msra.mxu0 %v5736
  %7203 = vmatprep.subr.bf16.mxu0 %v5745
  %7204 = vmatpush1.bf16.msra.mxu0 %v5744
  %7205 = vmatprep.subr.bf16.mxu0 %v5753
  %7206 = vmatpush1.bf16.msra.mxu0 %v5752
  %7207 = vmatprep.subr.bf16.mxu0 %v5761
  %7208 = vmatpush1.bf16.msra.mxu0 %v5760
  %7209 = vmatprep.subr.bf16.mxu0 %v5769
  %7210 = vmatpush1.bf16.msra.mxu0 %v5768
  %7211 = vmatprep.subr.bf16.mxu0 %v5777
  %7212 = vmatpush1.bf16.msra.mxu0 %v5776
  %7213 = vmatprep.subr.bf16.mxu0 %v5785
  %7214 = vmatpush1.bf16.msra.mxu0 %v5784
  %7215 = vmatprep.subr.bf16.mxu0 %v5793
  %7216 = vmatpush1.bf16.msra.mxu0 %v5792
  %7217 = vmatprep.subr.bf16.mxu0 %v5801
  %7218 = vmatpush1.bf16.msra.mxu0 %v5800
  %7219 = vmatprep.subr.bf16.mxu0 %v5809
  %7220 = vmatpush1.bf16.msra.mxu0 %v5808
  %7221 = vmatprep.subr.bf16.mxu0 %v5817
  %7222 = vmatpush1.bf16.msra.mxu0 %v5816
  %7223 = vmatprep.subr.bf16.mxu0 %v5825
  %7224 = vmatpush1.bf16.msra.mxu0 %v5824
  %7225 = vmatprep.subr.bf16.mxu0 %v5833
  %7226 = vmatpush1.bf16.msra.mxu0 %v5832
  %7227 = vmatprep.subr.bf16.mxu0 %v5841
  %7228 = vmatpush1.bf16.msra.mxu0 %v5840
  %7229 = vmatprep.subr.bf16.mxu0 %v5849
  %7230 = vmatpush1.bf16.msra.mxu0 %v5848
  %7231 = vmatprep.mubr.bf16.mxu0 %v3280
  %7232 = vmatmul.mubr.bf16.gmra.mrb[0].mxu0 %v3279
  %v7233 = vpop.f32.mrb[0].mxu0
  %v7234 = vadd.f32 %v7193, %v7233
  %v7235 = vpop.f32.mrb[0].mxu0
  %v7236 = vadd.f32 %v7195, %v7235
  %v7237 = vpop.f32.mrb[0].mxu0
  %v7238 = vpop.f32.mrb[0].mxu0
  %7239 = vdwg.mxu0
  %7240 = vmatprep.subr.bf16.mxu0 %v5857
  %7241 = vmatpush1.bf16.msra.mxu0 %v5856
  %7242 = vmatprep.subr.bf16.mxu0 %v5865
  %7243 = vmatpush1.bf16.msra.mxu0 %v5864
  %7244 = vmatprep.subr.bf16.mxu0 %v5873
  %7245 = vmatpush1.bf16.msra.mxu0 %v5872
  %7246 = vmatprep.subr.bf16.mxu0 %v5881
  %7247 = vmatpush1.bf16.msra.mxu0 %v5880
  %7248 = vmatprep.subr.bf16.mxu0 %v5889
  %7249 = vmatpush1.bf16.msra.mxu0 %v5888
  %7250 = vmatprep.subr.bf16.mxu0 %v5897
  %7251 = vmatpush1.bf16.msra.mxu0 %v5896
  %7252 = vmatprep.subr.bf16.mxu0 %v5905
  %7253 = vmatpush1.bf16.msra.mxu0 %v5904
  %7254 = vmatprep.subr.bf16.mxu0 %v5913
  %7255 = vmatpush1.bf16.msra.mxu0 %v5912
  %7256 = vmatprep.subr.bf16.mxu0 %v5921
  %7257 = vmatpush1.bf16.msra.mxu0 %v5920
  %7258 = vmatprep.subr.bf16.mxu0 %v5929
  %7259 = vmatpush1.bf16.msra.mxu0 %v5928
  %7260 = vmatprep.subr.bf16.mxu0 %v5937
  %7261 = vmatpush1.bf16.msra.mxu0 %v5936
  %7262 = vmatprep.subr.bf16.mxu0 %v5945
  %7263 = vmatpush1.bf16.msra.mxu0 %v5944
  %7264 = vmatprep.subr.bf16.mxu0 %v5953
  %7265 = vmatpush1.bf16.msra.mxu0 %v5952
  %7266 = vmatprep.subr.bf16.mxu0 %v5961
  %7267 = vmatpush1.bf16.msra.mxu0 %v5960
  %7268 = vmatprep.subr.bf16.mxu0 %v5969
  %7269 = vmatpush1.bf16.msra.mxu0 %v5968
  %7270 = vmatprep.subr.bf16.mxu0 %v5977
  %7271 = vmatpush1.bf16.msra.mxu0 %v5976
  %7272 = vmatprep.mubr.bf16.mxu0 %v3282
  %7273 = vmatmul.mubr.bf16.gmra.mrb[0].mxu0 %v3281
  %v7274 = vpop.f32.mrb[0].mxu0
  %v7275 = vadd.f32 %v7234, %v7274
  %v7276 = vpop.f32.mrb[0].mxu0
  %v7277 = vadd.f32 %v7236, %v7276
  %v7278 = vpop.f32.mrb[0].mxu0
  %v7279 = vpop.f32.mrb[0].mxu0
  %7280 = vdwg.mxu0
  %7281 = vmatprep.subr.bf16.mxu0 %v5985
  %7282 = vmatpush1.bf16.msra.mxu0 %v5984
  %7283 = vmatprep.subr.bf16.mxu0 %v5993
  %7284 = vmatpush1.bf16.msra.mxu0 %v5992
  %7285 = vmatprep.subr.bf16.mxu0 %v6001
  %7286 = vmatpush1.bf16.msra.mxu0 %v6000
  %7287 = vmatprep.subr.bf16.mxu0 %v6009
  %7288 = vmatpush1.bf16.msra.mxu0 %v6008
  %7289 = vmatprep.subr.bf16.mxu0 %v6017
  %7290 = vmatpush1.bf16.msra.mxu0 %v6016
  %7291 = vmatprep.subr.bf16.mxu0 %v6025
  %7292 = vmatpush1.bf16.msra.mxu0 %v6024
  %7293 = vmatprep.subr.bf16.mxu0 %v6033
  %7294 = vmatpush1.bf16.msra.mxu0 %v6032
  %7295 = vmatprep.subr.bf16.mxu0 %v6041
  %7296 = vmatpush1.bf16.msra.mxu0 %v6040
  %7297 = vmatprep.subr.bf16.mxu0 %v6049
  %7298 = vmatpush1.bf16.msra.mxu0 %v6048
  %7299 = vmatprep.subr.bf16.mxu0 %v6057
  %7300 = vmatpush1.bf16.msra.mxu0 %v6056
  %7301 = vmatprep.subr.bf16.mxu0 %v6065
  %7302 = vmatpush1.bf16.msra.mxu0 %v6064
  %7303 = vmatprep.subr.bf16.mxu0 %v6073
  %7304 = vmatpush1.bf16.msra.mxu0 %v6072
  %7305 = vmatprep.subr.bf16.mxu0 %v6081
  %7306 = vmatpush1.bf16.msra.mxu0 %v6080
  %7307 = vmatprep.subr.bf16.mxu0 %v6089
  %7308 = vmatpush1.bf16.msra.mxu0 %v6088
  %7309 = vmatprep.subr.bf16.mxu0 %v6097
  %7310 = vmatpush1.bf16.msra.mxu0 %v6096
  %7311 = vmatprep.subr.bf16.mxu0 %v6105
  %7312 = vmatpush1.bf16.msra.mxu0 %v6104
  %7313 = vmatprep.mubr.bf16.mxu0 %v3284
  %7314 = vmatmul.mubr.bf16.gmra.mrb[0].mxu0 %v3283
  %v7315 = vpop.f32.mrb[0].mxu0
  %v7316 = vadd.f32 %v7275, %v7315
  %v7317 = vpop.f32.mrb[0].mxu0
  %v7318 = vadd.f32 %v7277, %v7317
  %v7319 = vpop.f32.mrb[0].mxu0
  %v7320 = vpop.f32.mrb[0].mxu0
  %7321 = vdwg.mxu0
  %7322 = vmatprep.subr.bf16.mxu0 %v6113
  %7323 = vmatpush1.bf16.msra.mxu0 %v6112
  %7324 = vmatprep.subr.bf16.mxu0 %v6121
  %7325 = vmatpush1.bf16.msra.mxu0 %v6120
  %7326 = vmatprep.subr.bf16.mxu0 %v6129
  %7327 = vmatpush1.bf16.msra.mxu0 %v6128
  %7328 = vmatprep.subr.bf16.mxu0 %v6137
  %7329 = vmatpush1.bf16.msra.mxu0 %v6136
  %7330 = vmatprep.subr.bf16.mxu0 %v6145
  %7331 = vmatpush1.bf16.msra.mxu0 %v6144
  %7332 = vmatprep.subr.bf16.mxu0 %v6153
  %7333 = vmatpush1.bf16.msra.mxu0 %v6152
  %7334 = vmatprep.subr.bf16.mxu0 %v6161
  %7335 = vmatpush1.bf16.msra.mxu0 %v6160
  %7336 = vmatprep.subr.bf16.mxu0 %v6169
  %7337 = vmatpush1.bf16.msra.mxu0 %v6168
  %7338 = vmatprep.subr.bf16.mxu0 0
  %7339 = vmatpush1.bf16.msra.mxu0 0
  %7340 = vmatprep.subr.bf16.mxu0 0
  %7341 = vmatpush1.bf16.msra.mxu0 0
  %7342 = vmatprep.subr.bf16.mxu0 0
  %7343 = vmatpush1.bf16.msra.mxu0 0
  %7344 = vmatprep.subr.bf16.mxu0 0
  %7345 = vmatpush1.bf16.msra.mxu0 0
  %7346 = vmatprep.subr.bf16.mxu0 0
  %7347 = vmatpush1.bf16.msra.mxu0 0
  %7348 = vmatprep.subr.bf16.mxu0 0
  %7349 = vmatpush1.bf16.msra.mxu0 0
  %7350 = vmatprep.subr.bf16.mxu0 0
  %7351 = vmatpush1.bf16.msra.mxu0 0
  %7352 = vmatprep.subr.bf16.mxu0 0
  %7353 = vmatpush1.bf16.msra.mxu0 0
  %7354 = vmatprep.mubr.bf16.mxu0 0
  %7355 = vmatmul.mubr.bf16.gmra.mrb[0].mxu0 %v3285
  %v7356 = vpop.f32.mrb[0].mxu0
  %v7357 = vadd.f32 %v7316, %v7356
  %v7358 = vpop.f32.mrb[0].mxu0
  %v7359 = vadd.f32 %v7318, %v7358
  %v7360 = vpop.f32.mrb[0].mxu0
  %v7361 = vpop.f32.mrb[0].mxu0
  %7362 = vdwg.mxu0
  %7363 = vmatprep.subr.bf16.mxu0 %v5603
  %7364 = vmatpush1.bf16.msra.mxu0 %v5602
  %7365 = vmatprep.subr.bf16.mxu0 %v5611
  %7366 = vmatpush1.bf16.msra.mxu0 %v5610
  %7367 = vmatprep.subr.bf16.mxu0 %v5619
  %7368 = vmatpush1.bf16.msra.mxu0 %v5618
  %7369 = vmatprep.subr.bf16.mxu0 %v5627
  %7370 = vmatpush1.bf16.msra.mxu0 %v5626
  %7371 = vmatprep.subr.bf16.mxu0 %v5635
  %7372 = vmatpush1.bf16.msra.mxu0 %v5634
  %7373 = vmatprep.subr.bf16.mxu0 %v5643
  %7374 = vmatpush1.bf16.msra.mxu0 %v5642
  %7375 = vmatprep.subr.bf16.mxu0 %v5651
  %7376 = vmatpush1.bf16.msra.mxu0 %v5650
  %7377 = vmatprep.subr.bf16.mxu0 %v5659
  %7378 = vmatpush1.bf16.msra.mxu0 %v5658
  %7379 = vmatprep.subr.bf16.mxu0 %v5667
  %7380 = vmatpush1.bf16.msra.mxu0 %v5666
  %7381 = vmatprep.subr.bf16.mxu0 %v5675
  %7382 = vmatpush1.bf16.msra.mxu0 %v5674
  %7383 = vmatprep.subr.bf16.mxu0 %v5683
  %7384 = vmatpush1.bf16.msra.mxu0 %v5682
  %7385 = vmatprep.subr.bf16.mxu0 %v5691
  %7386 = vmatpush1.bf16.msra.mxu0 %v5690
  %7387 = vmatprep.subr.bf16.mxu0 %v5699
  %7388 = vmatpush1.bf16.msra.mxu0 %v5698
  %7389 = vmatprep.subr.bf16.mxu0 %v5707
  %7390 = vmatpush1.bf16.msra.mxu0 %v5706
  %7391 = vmatprep.subr.bf16.mxu0 %v5715
  %7392 = vmatpush1.bf16.msra.mxu0 %v5714
  %7393 = vmatprep.subr.bf16.mxu0 %v5723
  %7394 = vmatpush1.bf16.msra.mxu0 %v5722
  %7395 = vmatprep.mubr.bf16.mxu0 %v3278
  %7396 = vmatmul.mubr.bf16.gmra.mrb[0].mxu0 %v3277
  %v7397 = vpop.f32.mrb[0].mxu0
  %v7398 = vadd.f32 %v3866, %v7397
  %v7399 = vpop.f32.mrb[0].mxu0
  %v7400 = vadd.f32 %v3866, %v7399
  %v7401 = vpop.f32.mrb[0].mxu0
  %v7402 = vpop.f32.mrb[0].mxu0
  %7403 = vdwg.mxu0
  %7404 = vmatprep.subr.bf16.mxu0 %v5731
  %7405 = vmatpush1.bf16.msra.mxu0 %v5730
  %7406 = vmatprep.subr.bf16.mxu0 %v5739
  %7407 = vmatpush1.bf16.msra.mxu0 %v5738
  %7408 = vmatprep.subr.bf16.mxu0 %v5747
  %7409 = vmatpush1.bf16.msra.mxu0 %v5746
  %7410 = vmatprep.subr.bf16.mxu0 %v5755
  %7411 = vmatpush1.bf16.msra.mxu0 %v5754
  %7412 = vmatprep.subr.bf16.mxu0 %v5763
  %7413 = vmatpush1.bf16.msra.mxu0 %v5762
  %7414 = vmatprep.subr.bf16.mxu0 %v5771
  %7415 = vmatpush1.bf16.msra.mxu0 %v5770
  %7416 = vmatprep.subr.bf16.mxu0 %v5779
  %7417 = vmatpush1.bf16.msra.mxu0 %v5778
  %7418 = vmatprep.subr.bf16.mxu0 %v5787
  %7419 = vmatpush1.bf16.msra.mxu0 %v5786
  %7420 = vmatprep.subr.bf16.mxu0 %v5795
  %7421 = vmatpush1.bf16.msra.mxu0 %v5794
  %7422 = vmatprep.subr.bf16.mxu0 %v5803
  %7423 = vmatpush1.bf16.msra.mxu0 %v5802
  %7424 = vmatprep.subr.bf16.mxu0 %v5811
  %7425 = vmatpush1.bf16.msra.mxu0 %v5810
  %7426 = vmatprep.subr.bf16.mxu0 %v5819
  %7427 = vmatpush1.bf16.msra.mxu0 %v5818
  %7428 = vmatprep.subr.bf16.mxu0 %v5827
  %7429 = vmatpush1.bf16.msra.mxu0 %v5826
  %7430 = vmatprep.subr.bf16.mxu0 %v5835
  %7431 = vmatpush1.bf16.msra.mxu0 %v5834
  %7432 = vmatprep.subr.bf16.mxu0 %v5843
  %7433 = vmatpush1.bf16.msra.mxu0 %v5842
  %7434 = vmatprep.subr.bf16.mxu0 %v5851
  %7435 = vmatpush1.bf16.msra.mxu0 %v5850
  %7436 = vmatprep.mubr.bf16.mxu0 %v3280
  %7437 = vmatmul.mubr.bf16.gmra.mrb[0].mxu0 %v3279
  %v7438 = vpop.f32.mrb[0].mxu0
  %v7439 = vadd.f32 %v7398, %v7438
  %v7440 = vpop.f32.mrb[0].mxu0
  %v7441 = vadd.f32 %v7400, %v7440
  %v7442 = vpop.f32.mrb[0].mxu0
  %v7443 = vpop.f32.mrb[0].mxu0
  %7444 = vdwg.mxu0
  %7445 = vmatprep.subr.bf16.mxu0 %v5859
  %7446 = vmatpush1.bf16.msra.mxu0 %v5858
  %7447 = vmatprep.subr.bf16.mxu0 %v5867
  %7448 = vmatpush1.bf16.msra.mxu0 %v5866
  %7449 = vmatprep.subr.bf16.mxu0 %v5875
  %7450 = vmatpush1.bf16.msra.mxu0 %v5874
  %7451 = vmatprep.subr.bf16.mxu0 %v5883
  %7452 = vmatpush1.bf16.msra.mxu0 %v5882
  %7453 = vmatprep.subr.bf16.mxu0 %v5891
  %7454 = vmatpush1.bf16.msra.mxu0 %v5890
  %7455 = vmatprep.subr.bf16.mxu0 %v5899
  %7456 = vmatpush1.bf16.msra.mxu0 %v5898
  %7457 = vmatprep.subr.bf16.mxu0 %v5907
  %7458 = vmatpush1.bf16.msra.mxu0 %v5906
  %7459 = vmatprep.subr.bf16.mxu0 %v5915
  %7460 = vmatpush1.bf16.msra.mxu0 %v5914
  %7461 = vmatprep.subr.bf16.mxu0 %v5923
  %7462 = vmatpush1.bf16.msra.mxu0 %v5922
  %7463 = vmatprep.subr.bf16.mxu0 %v5931
  %7464 = vmatpush1.bf16.msra.mxu0 %v5930
  %7465 = vmatprep.subr.bf16.mxu0 %v5939
  %7466 = vmatpush1.bf16.msra.mxu0 %v5938
  %7467 = vmatprep.subr.bf16.mxu0 %v5947
  %7468 = vmatpush1.bf16.msra.mxu0 %v5946
  %7469 = vmatprep.subr.bf16.mxu0 %v5955
  %7470 = vmatpush1.bf16.msra.mxu0 %v5954
  %7471 = vmatprep.subr.bf16.mxu0 %v5963
  %7472 = vmatpush1.bf16.msra.mxu0 %v5962
  %7473 = vmatprep.subr.bf16.mxu0 %v5971
  %7474 = vmatpush1.bf16.msra.mxu0 %v5970
  %7475 = vmatprep.subr.bf16.mxu0 %v5979
  %7476 = vmatpush1.bf16.msra.mxu0 %v5978
  %7477 = vmatprep.mubr.bf16.mxu0 %v3282
  %7478 = vmatmul.mubr.bf16.gmra.mrb[0].mxu0 %v3281
  %v7479 = vpop.f32.mrb[0].mxu0
  %v7480 = vadd.f32 %v7439, %v7479
  %v7481 = vpop.f32.mrb[0].mxu0
  %v7482 = vadd.f32 %v7441, %v7481
  %v7483 = vpop.f32.mrb[0].mxu0
  %v7484 = vpop.f32.mrb[0].mxu0
  %7485 = vdwg.mxu0
  %7486 = vmatprep.subr.bf16.mxu0 %v5987
  %7487 = vmatpush1.bf16.msra.mxu0 %v5986
  %7488 = vmatprep.subr.bf16.mxu0 %v5995
  %7489 = vmatpush1.bf16.msra.mxu0 %v5994
  %7490 = vmatprep.subr.bf16.mxu0 %v6003
  %7491 = vmatpush1.bf16.msra.mxu0 %v6002
  %7492 = vmatprep.subr.bf16.mxu0 %v6011
  %7493 = vmatpush1.bf16.msra.mxu0 %v6010
  %7494 = vmatprep.subr.bf16.mxu0 %v6019
  %7495 = vmatpush1.bf16.msra.mxu0 %v6018
  %7496 = vmatprep.subr.bf16.mxu0 %v6027
  %7497 = vmatpush1.bf16.msra.mxu0 %v6026
  %7498 = vmatprep.subr.bf16.mxu0 %v6035
  %7499 = vmatpush1.bf16.msra.mxu0 %v6034
  %7500 = vmatprep.subr.bf16.mxu0 %v6043
  %7501 = vmatpush1.bf16.msra.mxu0 %v6042
  %7502 = vmatprep.subr.bf16.mxu0 %v6051
  %7503 = vmatpush1.bf16.msra.mxu0 %v6050
  %7504 = vmatprep.subr.bf16.mxu0 %v6059
  %7505 = vmatpush1.bf16.msra.mxu0 %v6058
  %7506 = vmatprep.subr.bf16.mxu0 %v6067
  %7507 = vmatpush1.bf16.msra.mxu0 %v6066
  %7508 = vmatprep.subr.bf16.mxu0 %v6075
  %7509 = vmatpush1.bf16.msra.mxu0 %v6074
  %7510 = vmatprep.subr.bf16.mxu0 %v6083
  %7511 = vmatpush1.bf16.msra.mxu0 %v6082
  %7512 = vmatprep.subr.bf16.mxu0 %v6091
  %7513 = vmatpush1.bf16.msra.mxu0 %v6090
  %7514 = vmatprep.subr.bf16.mxu0 %v6099
  %7515 = vmatpush1.bf16.msra.mxu0 %v6098
  %7516 = vmatprep.subr.bf16.mxu0 %v6107
  %7517 = vmatpush1.bf16.msra.mxu0 %v6106
  %7518 = vmatprep.mubr.bf16.mxu0 %v3284
  %7519 = vmatmul.mubr.bf16.gmra.mrb[0].mxu0 %v3283
  %v7520 = vpop.f32.mrb[0].mxu0
  %v7521 = vadd.f32 %v7480, %v7520
  %v7522 = vpop.f32.mrb[0].mxu0
  %v7523 = vadd.f32 %v7482, %v7522
  %v7524 = vpop.f32.mrb[0].mxu0
  %v7525 = vpop.f32.mrb[0].mxu0
  %7526 = vdwg.mxu0
  %7527 = vmatprep.subr.bf16.mxu0 %v6115
  %7528 = vmatpush1.bf16.msra.mxu0 %v6114
  %7529 = vmatprep.subr.bf16.mxu0 %v6123
  %7530 = vmatpush1.bf16.msra.mxu0 %v6122
  %7531 = vmatprep.subr.bf16.mxu0 %v6131
  %7532 = vmatpush1.bf16.msra.mxu0 %v6130
  %7533 = vmatprep.subr.bf16.mxu0 %v6139
  %7534 = vmatpush1.bf16.msra.mxu0 %v6138
  %7535 = vmatprep.subr.bf16.mxu0 %v6147
  %7536 = vmatpush1.bf16.msra.mxu0 %v6146
  %7537 = vmatprep.subr.bf16.mxu0 %v6155
  %7538 = vmatpush1.bf16.msra.mxu0 %v6154
  %7539 = vmatprep.subr.bf16.mxu0 %v6163
  %7540 = vmatpush1.bf16.msra.mxu0 %v6162
  %7541 = vmatprep.subr.bf16.mxu0 %v6171
  %7542 = vmatpush1.bf16.msra.mxu0 %v6170
  %7543 = vmatprep.subr.bf16.mxu0 0
  %7544 = vmatpush1.bf16.msra.mxu0 0
  %7545 = vmatprep.subr.bf16.mxu0 0
  %7546 = vmatpush1.bf16.msra.mxu0 0
  %7547 = vmatprep.subr.bf16.mxu0 0
  %7548 = vmatpush1.bf16.msra.mxu0 0
  %7549 = vmatprep.subr.bf16.mxu0 0
  %7550 = vmatpush1.bf16.msra.mxu0 0
  %7551 = vmatprep.subr.bf16.mxu0 0
  %7552 = vmatpush1.bf16.msra.mxu0 0
  %7553 = vmatprep.subr.bf16.mxu0 0
  %7554 = vmatpush1.bf16.msra.mxu0 0
  %7555 = vmatprep.subr.bf16.mxu0 0
  %7556 = vmatpush1.bf16.msra.mxu0 0
  %7557 = vmatprep.subr.bf16.mxu0 0
  %7558 = vmatpush1.bf16.msra.mxu0 0
  %7559 = vmatprep.mubr.bf16.mxu0 0
  %7560 = vmatmul.mubr.bf16.gmra.mrb[0].mxu0 %v3285
  %v7561 = vpop.f32.mrb[0].mxu0
  %v7562 = vadd.f32 %v7521, %v7561
  %v7563 = vpop.f32.mrb[0].mxu0
  %v7564 = vadd.f32 %v7523, %v7563
  %v7565 = vpop.f32.mrb[0].mxu0
  %v7566 = vpop.f32.mrb[0].mxu0
  %7567 = vdwg.mxu0
  %v7568 = vtanh.pop %v6947
  %v7569 = vtanh.pop %v6949
  %v7570 = vtanh.pop %v7152
  %v7571 = vtanh.pop %v7154
  %v7572 = vtanh.pop %v7357
  %v7573 = vtanh.pop %v7359
  %v7574 = vtanh.pop %v7562
  %v7575 = vtanh.pop %v7564
  %7576 = vst [vmem:[%s11] sm:$0x3f] %v7568
  %7577 = vst [vmem:[%s11 + $0x8] sm:$0x3f] %v7569
  %7578 = vst [vmem:[%s11 + $0x10] sm:$0x3f] %v7570
  %7579 = vst [vmem:[%s11 + $0x18] sm:$0x3f] %v7571
  %7580 = vst [vmem:[%s11 + $0x20] sm:$0x3f] %v7572
  %7581 = vst [vmem:[%s11 + $0x28] sm:$0x3f] %v7573
  %7582 = vst [vmem:[%s11 + $0x30] sm:$0x3f] %v7574
  %7583 = vst [vmem:[%s11 + $0x38] sm:$0x3f] %v7575
  // Predicated region
  $region46: #{decoder_forward.1} parent=0 // pred_check
    _
  $region47: #{decoder_forward.1} parent=0 // pred_check_branch
    %7585 = sbr.rel (0) target = $region49
  $region48: #{decoder_forward.1} parent=0 // pred_region
    _
  $region49: #{decoder_forward.1} parent=0 // pred_fallthru
    _
  // Predicated region
  $region50: #{decoder_forward.1} parent=0 // pred_check
    _
  $region51: #{decoder_forward.1} parent=0 // pred_check_branch
    %7587 = sbr.rel (0) target = $region53
  $region52: #{decoder_forward.1} parent=0 // pred_region
    _
  $region53: #{decoder_forward.1} parent=0 // pred_fallthru
    _

</llo_original>
